<compile_context>
chip_gen: v5e
topology: v5e:2x2
jax: 0.10.0
libtpu: 0.0.40
codegen_flags: <defaults>
</compile_context>

<pallas_src>
import numpy as np

import jax
import jax.numpy as jnp
from jax.experimental import pallas as pl
from jax.experimental.pallas import tpu as pltpu

LEAKY_SLOPE = 0.01  # F.leaky_relu default negative_slope

# conv stack geometry: 30x30x1 (pad 1 -> 32) -> 15x15x16 -> 7x7x32 -> 3x3x64 -> 1x1x128
# (w_in_row, c_in, w_out, c_out, n_out_rows)
_CONV_GEOM = (
    (32, 1, 15, 16, 15),   # conv1 (input rows already zero-padded to width 32)
    (15, 16, 7, 32, 7),    # conv2
    (7, 32, 3, 64, 3),     # conv3
    (3, 64, 1, 128, 1),    # conv4
)

_PARAM_ORDER = ("w1d", "b1d", "w2d", "b2d", "w3d", "b3d", "w4d", "b4d",
                "w1a", "w1b", "bf1", "w2f", "bf2", "w3f", "bf3")


# ----------------------------------------------------------------------------
# Fused Pallas kernel: whole forward pass for one batch tile
# ----------------------------------------------------------------------------
def _fused_kernel(x_ref, cond_ref,
                  w1_ref, b1_ref, w2_ref, b2_ref, w3_ref, b3_ref, w4_ref, b4_ref,
                  w1a_ref, w1b_ref, bf1_ref, w2f_ref, bf2_ref, w3f_ref, bf3_ref,
                  o_ref,
                  h1_ref, h2_ref, h3_ref):

    def conv_layer(read_row, w_ref, b_ref, n_out, out_ref):
        """Row-dense stride-2 3x3 conv: out_row(oy) = sum_dy in_row(2oy+dy) @ W[dy]."""
        bias = b_ref[...]                                    # (1, Wout*Cout) f32
        last = None
        for oy in range(n_out):                              # static loop (<=15)
            acc = jnp.dot(read_row(2 * oy), w_ref[0],
                          preferred_element_type=jnp.float32)
            acc = acc + jnp.dot(read_row(2 * oy + 1), w_ref[1],
                                preferred_element_type=jnp.float32)
            acc = acc + jnp.dot(read_row(2 * oy + 2), w_ref[2],
                                preferred_element_type=jnp.float32)
            y = acc + bias
            y = jnp.where(y > 0.0, y, LEAKY_SLOPE * y)       # leaky_relu in f32
            if out_ref is not None:
                out_ref[oy] = y
            last = y
        return last

    # conv stack; activations stay in VMEM scratch, MXU operands in bf16
    conv_layer(lambda r: x_ref[r].astype(jnp.bfloat16), w1_ref, b1_ref, 15, h1_ref)
    conv_layer(lambda r: h1_ref[r].astype(jnp.bfloat16), w2_ref, b2_ref, 7, h2_ref)
    conv_layer(lambda r: h2_ref[r].astype(jnp.bfloat16), w3_ref, b3_ref, 3, h3_ref)
    feats = conv_layer(lambda r: h3_ref[r].astype(jnp.bfloat16),
                       w4_ref, b4_ref, 1, None)              # (TB, 128) f32

    # fc1 split: K=128 on conv features + K=8 on the (zero-padded) condition
    h = jnp.dot(feats.astype(jnp.bfloat16), w1a_ref[...],
                preferred_element_type=jnp.float32)
    h = h + jnp.dot(cond_ref[...].astype(jnp.bfloat16), w1b_ref[...],
                    preferred_element_type=jnp.float32)
    h = h + bf1_ref[...]
    h = jnp.where(h > 0.0, h, LEAKY_SLOPE * h)
    h = jnp.dot(h.astype(jnp.bfloat16), w2f_ref[...],
                preferred_element_type=jnp.float32) + bf2_ref[...]
    h = jnp.where(h > 0.0, h, LEAKY_SLOPE * h)
    # fc3 has N=1: do it as a VPU multiply + lane reduction
    o_ref[...] = jnp.sum(h * w3f_ref[...], axis=-1, keepdims=True) + bf3_ref[...]


# ----------------------------------------------------------------------------
# Weight preparation (plain JAX, tiny): row-dense conv weights, fc1 split, bf16
# ----------------------------------------------------------------------------
def _row_dense_conv_weight(w_oihw, w_in, w_out):
    """(Cout,Cin,3,3) -> (3, w_in*Cin, w_out*Cout) with
    D[dy, win*Cin+ci, wout*Cout+co] = w[co, ci, dy, win-2*wout] if 0<=win-2*wout<=2."""
    c_out, c_in, kh, kw = w_oihw.shape
    sel = np.zeros((kw, w_in, w_out), np.float32)
    for dx in range(kw):
        for ox in range(w_out):
            sel[dx, 2 * ox + dx, ox] = 1.0
    dense = jnp.einsum("xiw,ocdx->dicwo", jnp.asarray(sel), w_oihw)
    return dense.reshape(kh, w_in * c_in, w_out * c_out)


def _prepare_kernel_params(params):
    kp = {}
    for li, (w_in, c_in, w_out, c_out, _n) in enumerate(_CONV_GEOM, start=1):
        kp[f"w{li}d"] = _row_dense_conv_weight(
            params[f"conv{li}_w"], w_in, w_out).astype(jnp.bfloat16)
        kp[f"b{li}d"] = jnp.tile(params[f"conv{li}_b"], w_out).reshape(
            1, w_out * c_out).astype(jnp.float32)
    # fc1 rows 0:128 act on conv features; rows 128:135 on [momentum, point4];
    # pad the condition block to K=8 with a zero row (matches zero-padded cond).
    fc1_w = params["fc1_w"]
    kp["w1a"] = fc1_w[:128].astype(jnp.bfloat16)
    kp["w1b"] = jnp.concatenate(
        [fc1_w[128:135], jnp.zeros((1, 64), fc1_w.dtype)], axis=0).astype(jnp.bfloat16)
    kp["bf1"] = params["fc1_b"].reshape(1, 64).astype(jnp.float32)
    kp["w2f"] = params["fc2_w"].astype(jnp.bfloat16)
    kp["bf2"] = params["fc2_b"].reshape(1, 32).astype(jnp.float32)
    kp["w3f"] = params["fc3_w"].reshape(1, 32).astype(jnp.float32)
    kp["bf3"] = params["fc3_b"].reshape(1, 1).astype(jnp.float32)
    return kp


# ----------------------------------------------------------------------------
# pallas_call wrapper
# ----------------------------------------------------------------------------
def _fused_forward(kp, x_hbw, cond, tb):
    b_pad = x_hbw.shape[1]
    grid = (b_pad // tb,)
    weights = [kp[name] for name in _PARAM_ORDER]

    def _const_spec(arr):
        return pl.BlockSpec(arr.shape, lambda i, _nd=arr.ndim: (0,) * _nd)

    in_specs = ([pl.BlockSpec((32, tb, 32), lambda i: (0, i, 0)),   # input rows
                 pl.BlockSpec((tb, 8), lambda i: (i, 0))]           # condition
                + [_const_spec(w) for w in weights])                # resident weights
    out_specs = pl.BlockSpec((tb, 1), lambda i: (i, 0))
    scratch = [pltpu.VMEM((n, tb, wo * co), jnp.float32)
               for (_wi, _ci, wo, co, n) in _CONV_GEOM[:3]]

    macs_per_img = sum(3 * n * wi * ci * wo * co
                       for (wi, ci, wo, co, n) in _CONV_GEOM)
    macs_per_img += 128 * 64 + 8 * 64 + 64 * 32 + 32
    bytes_accessed = sum(int(a.size) * a.dtype.itemsize
                         for a in [x_hbw, cond] + weights) + b_pad * 4

    return pl.pallas_call(
        _fused_kernel,
        out_shape=jax.ShapeDtypeStruct((b_pad, 1), jnp.float32),
        grid_spec=pltpu.PrefetchScalarGridSpec(
            num_scalar_prefetch=0,
            grid=grid,
            in_specs=in_specs,
            out_specs=out_specs,
            scratch_shapes=scratch),
        compiler_params=pltpu.CompilerParams(
            dimension_semantics=("parallel",),           # megacore on v7x
            vmem_limit_bytes=32 * 1024 * 1024),
        cost_estimate=pl.CostEstimate(
            flops=int(2 * macs_per_img * b_pad),
            transcendentals=0,
            bytes_accessed=int(bytes_accessed)),
    )(x_hbw, cond, *weights)


# ----------------------------------------------------------------------------
# Condition preprocessing & full forward
# ----------------------------------------------------------------------------
def add_angle_and_norm(point):
    # TODO(synk): exact aux.add_angle_and_norm source unavailable; using
    # [x, y, atan2(y, x), ||(x, y)||], the 2 -> 4 expansion implied by
    # condition_dim = 7.
    angle = jnp.arctan2(point[:, 1], point[:, 0])[:, None]
    norm = jnp.sqrt(jnp.sum(point ** 2, axis=1, keepdims=True))
    return jnp.concatenate([point, angle, norm], axis=1)


def _round_up(v, m):
    return ((v + m - 1) // m) * m


def discriminator_forward(params, energy_deposit_nchw, point, momentum):
    b = energy_deposit_nchw.shape[0]

    # batch tiling: <=128 rows per grid step, multiple of 8 (f32 sublane)
    num_tiles = -(-b // 128)
    tb = _round_up(-(-b // num_tiles), 8)
    b_pad = tb * num_tiles

    # conv1 padding (padding=1) folded in; layout (H, B, W) so the kernel reads
    # each image row as a (batch_tile, width) 2-D tile via static H indexing.
    x = energy_deposit_nchw.reshape(b, 30, 30).astype(jnp.float32)
    x = jnp.pad(x, ((0, b_pad - b), (1, 1), (1, 1)))     # (b_pad, 32, 32)
    x = jnp.transpose(x, (1, 0, 2))                      # (32, b_pad, 32)

    point4 = add_angle_and_norm(point.astype(jnp.float32))
    cond = jnp.concatenate(
        [momentum.astype(jnp.float32), point4, jnp.zeros((b, 1), jnp.float32)],
        axis=1)                                          # (b, 8) zero-padded K
    cond = jnp.pad(cond, ((0, b_pad - b), (0, 0)))

    kp = _prepare_kernel_params(params)  # tiny; could be hoisted/cached per-params
    out = _fused_forward(kp, x, cond, tb)
    return out[:b]


# ----------------------------------------------------------------------------
# Pure-XLA reference (for numerical validation only)
# ----------------------------------------------------------------------------
def _reference_forward(params, energy_deposit_nchw, point, momentum):
    def leaky(v):
        return jnp.where(v > 0, v, LEAKY_SLOPE * v)

    def conv(x, w, bias, stride, pad):
        y = jax.lax.conv_general_dilated(
            x, w, window_strides=(stride, stride),
            padding=[(pad, pad), (pad, pad)],
            dimension_numbers=("NCHW", "OIHW", "NCHW"))
        return leaky(y + bias[None, :, None, None])

    x = conv(energy_deposit_nchw, params["conv1_w"], params["conv1_b"], 2, 1)
    x = conv(x, params["conv2_w"], params["conv2_b"], 2, 0)
    x = conv(x, params["conv3_w"], params["conv3_b"], 2, 0)
    x = conv(x, params["conv4_w"], params["conv4_b"], 2, 0)
    x = x.reshape(x.shape[0], 128)
    feats = jnp.concatenate([x, momentum, add_angle_and_norm(point)], axis=1)
    h = leaky(feats @ params["fc1_w"] + params["fc1_b"])
    h = leaky(h @ params["fc2_w"] + params["fc2_b"])
    return h @ params["fc3_w"] + params["fc3_b"]


# ----------------------------------------------------------------------------
# Deterministic parameter initialization (shapes from the module __init__)
# ----------------------------------------------------------------------------
def init_params(key):
    def _layer(k, fan_in, w_shape, b_shape):
        k1, k2 = jax.random.split(k)
        bound = 1.0 / jnp.sqrt(jnp.float32(fan_in))
        w = jax.random.uniform(k1, w_shape, jnp.float32, -bound, bound)
        b = jax.random.uniform(k2, b_shape, jnp.float32, -bound, bound)
        return w, b

    keys = jax.random.split(key, 7)
    p = {}
    p["conv1_w"], p["conv1_b"] = _layer(keys[0], 1 * 9, (16, 1, 3, 3), (16,))
    p["conv2_w"], p["conv2_b"] = _layer(keys[1], 16 * 9, (32, 16, 3, 3), (32,))
    p["conv3_w"], p["conv3_b"] = _layer(keys[2], 32 * 9, (64, 32, 3, 3), (64,))
    p["conv4_w"], p["conv4_b"] = _layer(keys[3], 64 * 9, (128, 64, 3, 3), (128,))
    # FC weights stored as (in, out) for x @ w
    p["fc1_w"], p["fc1_b"] = _layer(keys[4], 135, (135, 64), (64,))
    p["fc2_w"], p["fc2_b"] = _layer(keys[5], 64, (64, 32), (32,))
    p["fc3_w"], p["fc3_b"] = _layer(keys[6], 32, (32, 1), (1,))
    return p


if __name__ == "__main__":
    key = jax.random.PRNGKey(0)
    kparam, kx, kpt, km = jax.random.split(key, 4)

    params = init_params(kparam)

    B = 2
    energy_deposit = jax.random.normal(kx, (B, 1, 30, 30), jnp.float32)  # NCHW
    point = jax.random.normal(kpt, (B, 2), jnp.float32)                  # impact point
    momentum = jax.random.normal(km, (B, 3), jnp.float32)                # momentum

    fwd = jax.jit(discriminator_forward)
    out = jax.block_until_ready(fwd(params, energy_deposit, point, momentum))

    assert out.shape == (B, 1), out.shape
    assert out.dtype == jnp.float32

    # numerical sanity check vs pure-XLA reference (bf16 MXU operands => loose tol)
    ref = jax.jit(_reference_forward)(params, energy_deposit, point, momentum)
    max_err = float(jnp.max(jnp.abs(out - ref)))
    tol = 5e-2 * (1.0 + float(jnp.max(jnp.abs(ref))))
    assert max_err < tol, (max_err, tol)

    print("KERNEL_OK")
</pallas_src>

<mosaic_0001>
module attributes {stable_mosaic.version = 11 : i64} {
  func.func @_fused_kernel(%arg0: i32, %arg1: memref<32x8x32xf32, #tpu.memory_space<vmem>>, %arg2: memref<8x8xf32, #tpu.memory_space<vmem>>, %arg3: memref<3x32x240xbf16, #tpu.memory_space<vmem>>, %arg4: memref<1x240xf32, #tpu.memory_space<vmem>>, %arg5: memref<3x240x224xbf16, #tpu.memory_space<vmem>>, %arg6: memref<1x224xf32, #tpu.memory_space<vmem>>, %arg7: memref<3x224x192xbf16, #tpu.memory_space<vmem>>, %arg8: memref<1x192xf32, #tpu.memory_space<vmem>>, %arg9: memref<3x192x128xbf16, #tpu.memory_space<vmem>>, %arg10: memref<1x128xf32, #tpu.memory_space<vmem>>, %arg11: memref<128x64xbf16, #tpu.memory_space<vmem>>, %arg12: memref<8x64xbf16, #tpu.memory_space<vmem>>, %arg13: memref<1x64xf32, #tpu.memory_space<vmem>>, %arg14: memref<64x32xbf16, #tpu.memory_space<vmem>>, %arg15: memref<1x32xf32, #tpu.memory_space<vmem>>, %arg16: memref<1x32xf32, #tpu.memory_space<vmem>>, %arg17: memref<1x1xf32, #tpu.memory_space<vmem>>, %arg18: memref<8x1xf32, #tpu.memory_space<vmem>>, %arg19: memref<15x8x240xf32, #tpu.memory_space<vmem>>, %arg20: memref<7x8x224xf32, #tpu.memory_space<vmem>>, %arg21: memref<3x8x192xf32, #tpu.memory_space<vmem>>) attributes {dimension_semantics = [#tpu.dimension_semantics<parallel>], iteration_bounds = array<i64: 1>, scalar_prefetch = 0 : i64, scratch_operands = 3 : i64, tpu.core_type = #tpu.core_type<tc>, window_params = [{transform_indices = @transform_0, window_bounds = array<i64: 32, 8, 32>}, {transform_indices = @transform_1, window_bounds = array<i64: 8, 8>}, {pipeline_mode = #tpu.pipeline_mode<synchronous>, transform_indices = @transform_2, window_bounds = array<i64: 3, 32, 240>}, {pipeline_mode = #tpu.pipeline_mode<synchronous>, transform_indices = @transform_3, window_bounds = array<i64: 1, 240>}, {pipeline_mode = #tpu.pipeline_mode<synchronous>, transform_indices = @transform_4, window_bounds = array<i64: 3, 240, 224>}, {pipeline_mode = #tpu.pipeline_mode<synchronous>, transform_indices = @transform_5, window_bounds = array<i64: 1, 224>}, {pipeline_mode = #tpu.pipeline_mode<synchronous>, transform_indices = @transform_6, window_bounds = array<i64: 3, 224, 192>}, {pipeline_mode = #tpu.pipeline_mode<synchronous>, transform_indices = @transform_7, window_bounds = array<i64: 1, 192>}, {pipeline_mode = #tpu.pipeline_mode<synchronous>, transform_indices = @transform_8, window_bounds = array<i64: 3, 192, 128>}, {pipeline_mode = #tpu.pipeline_mode<synchronous>, transform_indices = @transform_9, window_bounds = array<i64: 1, 128>}, {pipeline_mode = #tpu.pipeline_mode<synchronous>, transform_indices = @transform_10, window_bounds = array<i64: 128, 64>}, {pipeline_mode = #tpu.pipeline_mode<synchronous>, transform_indices = @transform_11, window_bounds = array<i64: 8, 64>}, {pipeline_mode = #tpu.pipeline_mode<synchronous>, transform_indices = @transform_12, window_bounds = array<i64: 1, 64>}, {pipeline_mode = #tpu.pipeline_mode<synchronous>, transform_indices = @transform_13, window_bounds = array<i64: 64, 32>}, {pipeline_mode = #tpu.pipeline_mode<synchronous>, transform_indices = @transform_14, window_bounds = array<i64: 1, 32>}, {pipeline_mode = #tpu.pipeline_mode<synchronous>, transform_indices = @transform_15, window_bounds = array<i64: 1, 32>}, {pipeline_mode = #tpu.pipeline_mode<synchronous>, transform_indices = @transform_16, window_bounds = array<i64: 1, 1>}, {transform_indices = @transform_17, window_bounds = array<i64: 8, 1>}]} {
    %c0 = arith.constant 0 : index
    %c0_0 = arith.constant 0 : index
    %0 = vector.load %arg4[%c0, %c0_0] : memref<1x240xf32, #tpu.memory_space<vmem>>, vector<1x240xf32>
    %c0_1 = arith.constant 0 : index
    %c0_2 = arith.constant 0 : index
    %c0_3 = arith.constant 0 : index
    %1 = vector.load %arg1[%c0_1, %c0_2, %c0_3] : memref<32x8x32xf32, #tpu.memory_space<vmem>>, vector<1x8x32xf32>
    %2 = vector.shape_cast %1 : vector<1x8x32xf32> to vector<8x32xf32>
    %3 = arith.truncf %2 : vector<8x32xf32> to vector<8x32xbf16>
    %c0_4 = arith.constant 0 : index
    %c0_5 = arith.constant 0 : index
    %c0_6 = arith.constant 0 : index
    %4 = vector.load %arg3[%c0_4, %c0_5, %c0_6] : memref<3x32x240xbf16, #tpu.memory_space<vmem>>, vector<1x32x240xbf16>
    %5 = vector.shape_cast %4 : vector<1x32x240xbf16> to vector<32x240xbf16>
    %cst = arith.constant dense<0.000000e+00> : vector<8x240xf32>
    %6 = tpu.matmul %3, %5, %cst {dimension_numbers = #tpu.dot_dimension_numbers<[1], [0], [0], [1], [0, 0, 1, 1], [], []>} : vector<8x32xbf16>, vector<32x240xbf16>, vector<8x240xf32> -> vector<8x240xf32>
    %c1 = arith.constant 1 : index
    %c0_7 = arith.constant 0 : index
    %c0_8 = arith.constant 0 : index
    %7 = vector.load %arg1[%c1, %c0_7, %c0_8] : memref<32x8x32xf32, #tpu.memory_space<vmem>>, vector<1x8x32xf32>
    %8 = vector.shape_cast %7 : vector<1x8x32xf32> to vector<8x32xf32>
    %9 = arith.truncf %8 : vector<8x32xf32> to vector<8x32xbf16>
    %c1_9 = arith.constant 1 : index
    %c0_10 = arith.constant 0 : index
    %c0_11 = arith.constant 0 : index
    %10 = vector.load %arg3[%c1_9, %c0_10, %c0_11] : memref<3x32x240xbf16, #tpu.memory_space<vmem>>, vector<1x32x240xbf16>
    %11 = vector.shape_cast %10 : vector<1x32x240xbf16> to vector<32x240xbf16>
    %cst_12 = arith.constant dense<0.000000e+00> : vector<8x240xf32>
    %12 = tpu.matmul %9, %11, %cst_12 {dimension_numbers = #tpu.dot_dimension_numbers<[1], [0], [0], [1], [0, 0, 1, 1], [], []>} : vector<8x32xbf16>, vector<32x240xbf16>, vector<8x240xf32> -> vector<8x240xf32>
    %13 = arith.addf %6, %12 : vector<8x240xf32>
    %c2 = arith.constant 2 : index
    %c0_13 = arith.constant 0 : index
    %c0_14 = arith.constant 0 : index
    %14 = vector.load %arg1[%c2, %c0_13, %c0_14] : memref<32x8x32xf32, #tpu.memory_space<vmem>>, vector<1x8x32xf32>
    %15 = vector.shape_cast %14 : vector<1x8x32xf32> to vector<8x32xf32>
    %16 = arith.truncf %15 : vector<8x32xf32> to vector<8x32xbf16>
    %c2_15 = arith.constant 2 : index
    %c0_16 = arith.constant 0 : index
    %c0_17 = arith.constant 0 : index
    %17 = vector.load %arg3[%c2_15, %c0_16, %c0_17] : memref<3x32x240xbf16, #tpu.memory_space<vmem>>, vector<1x32x240xbf16>
    %18 = vector.shape_cast %17 : vector<1x32x240xbf16> to vector<32x240xbf16>
    %cst_18 = arith.constant dense<0.000000e+00> : vector<8x240xf32>
    %19 = tpu.matmul %16, %18, %cst_18 {dimension_numbers = #tpu.dot_dimension_numbers<[1], [0], [0], [1], [0, 0, 1, 1], [], []>} : vector<8x32xbf16>, vector<32x240xbf16>, vector<8x240xf32> -> vector<8x240xf32>
    %20 = arith.addf %13, %19 : vector<8x240xf32>
    %21 = vector.broadcast %0 : vector<1x240xf32> to vector<8x240xf32>
    %22 = arith.addf %20, %21 : vector<8x240xf32>
    %cst_19 = arith.constant 0.000000e+00 : f32
    %23 = vector.broadcast %cst_19 : f32 to vector<8x240xf32>
    %24 = arith.cmpf ogt, %22, %23 : vector<8x240xf32>
    %cst_20 = arith.constant 0.00999999977 : f32
    %25 = vector.broadcast %cst_20 : f32 to vector<8x240xf32>
    %26 = arith.mulf %25, %22 : vector<8x240xf32>
    %27 = arith.select %24, %22, %26 : vector<8x240xi1>, vector<8x240xf32>
    %c0_21 = arith.constant 0 : index
    %c0_22 = arith.constant 0 : index
    %c0_23 = arith.constant 0 : index
    %28 = vector.load %arg19[%c0_21, %c0_22, %c0_23] : memref<15x8x240xf32, #tpu.memory_space<vmem>>, vector<1x8x240xf32>
    %29 = vector.shape_cast %28 : vector<1x8x240xf32> to vector<8x240xf32>
    %30 = vector.shape_cast %27 : vector<8x240xf32> to vector<1x8x240xf32>
    tpu.vector_store %arg19[%c0_21, %c0_22, %c0_23], %30 {strides = array<i32>} : memref<15x8x240xf32, #tpu.memory_space<vmem>>, vector<1x8x240xf32>,
    %c2_24 = arith.constant 2 : index
    %c0_25 = arith.constant 0 : index
    %c0_26 = arith.constant 0 : index
    %31 = vector.load %arg1[%c2_24, %c0_25, %c0_26] : memref<32x8x32xf32, #tpu.memory_space<vmem>>, vector<1x8x32xf32>
    %32 = vector.shape_cast %31 : vector<1x8x32xf32> to vector<8x32xf32>
    %33 = arith.truncf %32 : vector<8x32xf32> to vector<8x32xbf16>
    %c0_27 = arith.constant 0 : index
    %c0_28 = arith.constant 0 : index
    %c0_29 = arith.constant 0 : index
    %34 = vector.load %arg3[%c0_27, %c0_28, %c0_29] : memref<3x32x240xbf16, #tpu.memory_space<vmem>>, vector<1x32x240xbf16>
    %35 = vector.shape_cast %34 : vector<1x32x240xbf16> to vector<32x240xbf16>
    %cst_30 = arith.constant dense<0.000000e+00> : vector<8x240xf32>
    %36 = tpu.matmul %33, %35, %cst_30 {dimension_numbers = #tpu.dot_dimension_numbers<[1], [0], [0], [1], [0, 0, 1, 1], [], []>} : vector<8x32xbf16>, vector<32x240xbf16>, vector<8x240xf32> -> vector<8x240xf32>
    %c3 = arith.constant 3 : index
    %c0_31 = arith.constant 0 : index
    %c0_32 = arith.constant 0 : index
    %37 = vector.load %arg1[%c3, %c0_31, %c0_32] : memref<32x8x32xf32, #tpu.memory_space<vmem>>, vector<1x8x32xf32>
    %38 = vector.shape_cast %37 : vector<1x8x32xf32> to vector<8x32xf32>
    %39 = arith.truncf %38 : vector<8x32xf32> to vector<8x32xbf16>
    %c1_33 = arith.constant 1 : index
    %c0_34 = arith.constant 0 : index
    %c0_35 = arith.constant 0 : index
    %40 = vector.load %arg3[%c1_33, %c0_34, %c0_35] : memref<3x32x240xbf16, #tpu.memory_space<vmem>>, vector<1x32x240xbf16>
    %41 = vector.shape_cast %40 : vector<1x32x240xbf16> to vector<32x240xbf16>
    %cst_36 = arith.constant dense<0.000000e+00> : vector<8x240xf32>
    %42 = tpu.matmul %39, %41, %cst_36 {dimension_numbers = #tpu.dot_dimension_numbers<[1], [0], [0], [1], [0, 0, 1, 1], [], []>} : vector<8x32xbf16>, vector<32x240xbf16>, vector<8x240xf32> -> vector<8x240xf32>
    %43 = arith.addf %36, %42 : vector<8x240xf32>
    %c4 = arith.constant 4 : index
    %c0_37 = arith.constant 0 : index
    %c0_38 = arith.constant 0 : index
    %44 = vector.load %arg1[%c4, %c0_37, %c0_38] : memref<32x8x32xf32, #tpu.memory_space<vmem>>, vector<1x8x32xf32>
    %45 = vector.shape_cast %44 : vector<1x8x32xf32> to vector<8x32xf32>
    %46 = arith.truncf %45 : vector<8x32xf32> to vector<8x32xbf16>
    %c2_39 = arith.constant 2 : index
    %c0_40 = arith.constant 0 : index
    %c0_41 = arith.constant 0 : index
    %47 = vector.load %arg3[%c2_39, %c0_40, %c0_41] : memref<3x32x240xbf16, #tpu.memory_space<vmem>>, vector<1x32x240xbf16>
    %48 = vector.shape_cast %47 : vector<1x32x240xbf16> to vector<32x240xbf16>
    %cst_42 = arith.constant dense<0.000000e+00> : vector<8x240xf32>
    %49 = tpu.matmul %46, %48, %cst_42 {dimension_numbers = #tpu.dot_dimension_numbers<[1], [0], [0], [1], [0, 0, 1, 1], [], []>} : vector<8x32xbf16>, vector<32x240xbf16>, vector<8x240xf32> -> vector<8x240xf32>
    %50 = arith.addf %43, %49 : vector<8x240xf32>
    %51 = vector.broadcast %0 : vector<1x240xf32> to vector<8x240xf32>
    %52 = arith.addf %50, %51 : vector<8x240xf32>
    %cst_43 = arith.constant 0.000000e+00 : f32
    %53 = vector.broadcast %cst_43 : f32 to vector<8x240xf32>
    %54 = arith.cmpf ogt, %52, %53 : vector<8x240xf32>
    %cst_44 = arith.constant 0.00999999977 : f32
    %55 = vector.broadcast %cst_44 : f32 to vector<8x240xf32>
    %56 = arith.mulf %55, %52 : vector<8x240xf32>
    %57 = arith.select %54, %52, %56 : vector<8x240xi1>, vector<8x240xf32>
    %c1_45 = arith.constant 1 : index
    %c0_46 = arith.constant 0 : index
    %c0_47 = arith.constant 0 : index
    %58 = vector.load %arg19[%c1_45, %c0_46, %c0_47] : memref<15x8x240xf32, #tpu.memory_space<vmem>>, vector<1x8x240xf32>
    %59 = vector.shape_cast %58 : vector<1x8x240xf32> to vector<8x240xf32>
    %60 = vector.shape_cast %57 : vector<8x240xf32> to vector<1x8x240xf32>
    tpu.vector_store %arg19[%c1_45, %c0_46, %c0_47], %60 {strides = array<i32>} : memref<15x8x240xf32, #tpu.memory_space<vmem>>, vector<1x8x240xf32>,
    %c4_48 = arith.constant 4 : index
    %c0_49 = arith.constant 0 : index
    %c0_50 = arith.constant 0 : index
    %61 = vector.load %arg1[%c4_48, %c0_49, %c0_50] : memref<32x8x32xf32, #tpu.memory_space<vmem>>, vector<1x8x32xf32>
    %62 = vector.shape_cast %61 : vector<1x8x32xf32> to vector<8x32xf32>
    %63 = arith.truncf %62 : vector<8x32xf32> to vector<8x32xbf16>
    %c0_51 = arith.constant 0 : index
    %c0_52 = arith.constant 0 : index
    %c0_53 = arith.constant 0 : index
    %64 = vector.load %arg3[%c0_51, %c0_52, %c0_53] : memref<3x32x240xbf16, #tpu.memory_space<vmem>>, vector<1x32x240xbf16>
    %65 = vector.shape_cast %64 : vector<1x32x240xbf16> to vector<32x240xbf16>
    %cst_54 = arith.constant dense<0.000000e+00> : vector<8x240xf32>
    %66 = tpu.matmul %63, %65, %cst_54 {dimension_numbers = #tpu.dot_dimension_numbers<[1], [0], [0], [1], [0, 0, 1, 1], [], []>} : vector<8x32xbf16>, vector<32x240xbf16>, vector<8x240xf32> -> vector<8x240xf32>
    %c5 = arith.constant 5 : index
    %c0_55 = arith.constant 0 : index
    %c0_56 = arith.constant 0 : index
    %67 = vector.load %arg1[%c5, %c0_55, %c0_56] : memref<32x8x32xf32, #tpu.memory_space<vmem>>, vector<1x8x32xf32>
    %68 = vector.shape_cast %67 : vector<1x8x32xf32> to vector<8x32xf32>
    %69 = arith.truncf %68 : vector<8x32xf32> to vector<8x32xbf16>
    %c1_57 = arith.constant 1 : index
    %c0_58 = arith.constant 0 : index
    %c0_59 = arith.constant 0 : index
    %70 = vector.load %arg3[%c1_57, %c0_58, %c0_59] : memref<3x32x240xbf16, #tpu.memory_space<vmem>>, vector<1x32x240xbf16>
    %71 = vector.shape_cast %70 : vector<1x32x240xbf16> to vector<32x240xbf16>
    %cst_60 = arith.constant dense<0.000000e+00> : vector<8x240xf32>
    %72 = tpu.matmul %69, %71, %cst_60 {dimension_numbers = #tpu.dot_dimension_numbers<[1], [0], [0], [1], [0, 0, 1, 1], [], []>} : vector<8x32xbf16>, vector<32x240xbf16>, vector<8x240xf32> -> vector<8x240xf32>
    %73 = arith.addf %66, %72 : vector<8x240xf32>
    %c6 = arith.constant 6 : index
    %c0_61 = arith.constant 0 : index
    %c0_62 = arith.constant 0 : index
    %74 = vector.load %arg1[%c6, %c0_61, %c0_62] : memref<32x8x32xf32, #tpu.memory_space<vmem>>, vector<1x8x32xf32>
    %75 = vector.shape_cast %74 : vector<1x8x32xf32> to vector<8x32xf32>
    %76 = arith.truncf %75 : vector<8x32xf32> to vector<8x32xbf16>
    %c2_63 = arith.constant 2 : index
    %c0_64 = arith.constant 0 : index
    %c0_65 = arith.constant 0 : index
    %77 = vector.load %arg3[%c2_63, %c0_64, %c0_65] : memref<3x32x240xbf16, #tpu.memory_space<vmem>>, vector<1x32x240xbf16>
    %78 = vector.shape_cast %77 : vector<1x32x240xbf16> to vector<32x240xbf16>
    %cst_66 = arith.constant dense<0.000000e+00> : vector<8x240xf32>
    %79 = tpu.matmul %76, %78, %cst_66 {dimension_numbers = #tpu.dot_dimension_numbers<[1], [0], [0], [1], [0, 0, 1, 1], [], []>} : vector<8x32xbf16>, vector<32x240xbf16>, vector<8x240xf32> -> vector<8x240xf32>
    %80 = arith.addf %73, %79 : vector<8x240xf32>
    %81 = vector.broadcast %0 : vector<1x240xf32> to vector<8x240xf32>
    %82 = arith.addf %80, %81 : vector<8x240xf32>
    %cst_67 = arith.constant 0.000000e+00 : f32
    %83 = vector.broadcast %cst_67 : f32 to vector<8x240xf32>
    %84 = arith.cmpf ogt, %82, %83 : vector<8x240xf32>
    %cst_68 = arith.constant 0.00999999977 : f32
    %85 = vector.broadcast %cst_68 : f32 to vector<8x240xf32>
    %86 = arith.mulf %85, %82 : vector<8x240xf32>
    %87 = arith.select %84, %82, %86 : vector<8x240xi1>, vector<8x240xf32>
    %c2_69 = arith.constant 2 : index
    %c0_70 = arith.constant 0 : index
    %c0_71 = arith.constant 0 : index
    %88 = vector.load %arg19[%c2_69, %c0_70, %c0_71] : memref<15x8x240xf32, #tpu.memory_space<vmem>>, vector<1x8x240xf32>
    %89 = vector.shape_cast %88 : vector<1x8x240xf32> to vector<8x240xf32>
    %90 = vector.shape_cast %87 : vector<8x240xf32> to vector<1x8x240xf32>
    tpu.vector_store %arg19[%c2_69, %c0_70, %c0_71], %90 {strides = array<i32>} : memref<15x8x240xf32, #tpu.memory_space<vmem>>, vector<1x8x240xf32>,
    %c6_72 = arith.constant 6 : index
    %c0_73 = arith.constant 0 : index
    %c0_74 = arith.constant 0 : index
    %91 = vector.load %arg1[%c6_72, %c0_73, %c0_74] : memref<32x8x32xf32, #tpu.memory_space<vmem>>, vector<1x8x32xf32>
    %92 = vector.shape_cast %91 : vector<1x8x32xf32> to vector<8x32xf32>
    %93 = arith.truncf %92 : vector<8x32xf32> to vector<8x32xbf16>
    %c0_75 = arith.constant 0 : index
    %c0_76 = arith.constant 0 : index
    %c0_77 = arith.constant 0 : index
    %94 = vector.load %arg3[%c0_75, %c0_76, %c0_77] : memref<3x32x240xbf16, #tpu.memory_space<vmem>>, vector<1x32x240xbf16>
    %95 = vector.shape_cast %94 : vector<1x32x240xbf16> to vector<32x240xbf16>
    %cst_78 = arith.constant dense<0.000000e+00> : vector<8x240xf32>
    %96 = tpu.matmul %93, %95, %cst_78 {dimension_numbers = #tpu.dot_dimension_numbers<[1], [0], [0], [1], [0, 0, 1, 1], [], []>} : vector<8x32xbf16>, vector<32x240xbf16>, vector<8x240xf32> -> vector<8x240xf32>
    %c7 = arith.constant 7 : index
    %c0_79 = arith.constant 0 : index
    %c0_80 = arith.constant 0 : index
    %97 = vector.load %arg1[%c7, %c0_79, %c0_80] : memref<32x8x32xf32, #tpu.memory_space<vmem>>, vector<1x8x32xf32>
    %98 = vector.shape_cast %97 : vector<1x8x32xf32> to vector<8x32xf32>
    %99 = arith.truncf %98 : vector<8x32xf32> to vector<8x32xbf16>
    %c1_81 = arith.constant 1 : index
    %c0_82 = arith.constant 0 : index
    %c0_83 = arith.constant 0 : index
    %100 = vector.load %arg3[%c1_81, %c0_82, %c0_83] : memref<3x32x240xbf16, #tpu.memory_space<vmem>>, vector<1x32x240xbf16>
    %101 = vector.shape_cast %100 : vector<1x32x240xbf16> to vector<32x240xbf16>
    %cst_84 = arith.constant dense<0.000000e+00> : vector<8x240xf32>
    %102 = tpu.matmul %99, %101, %cst_84 {dimension_numbers = #tpu.dot_dimension_numbers<[1], [0], [0], [1], [0, 0, 1, 1], [], []>} : vector<8x32xbf16>, vector<32x240xbf16>, vector<8x240xf32> -> vector<8x240xf32>
    %103 = arith.addf %96, %102 : vector<8x240xf32>
    %c8 = arith.constant 8 : index
    %c0_85 = arith.constant 0 : index
    %c0_86 = arith.constant 0 : index
    %104 = vector.load %arg1[%c8, %c0_85, %c0_86] : memref<32x8x32xf32, #tpu.memory_space<vmem>>, vector<1x8x32xf32>
    %105 = vector.shape_cast %104 : vector<1x8x32xf32> to vector<8x32xf32>
    %106 = arith.truncf %105 : vector<8x32xf32> to vector<8x32xbf16>
    %c2_87 = arith.constant 2 : index
    %c0_88 = arith.constant 0 : index
    %c0_89 = arith.constant 0 : index
    %107 = vector.load %arg3[%c2_87, %c0_88, %c0_89] : memref<3x32x240xbf16, #tpu.memory_space<vmem>>, vector<1x32x240xbf16>
    %108 = vector.shape_cast %107 : vector<1x32x240xbf16> to vector<32x240xbf16>
    %cst_90 = arith.constant dense<0.000000e+00> : vector<8x240xf32>
    %109 = tpu.matmul %106, %108, %cst_90 {dimension_numbers = #tpu.dot_dimension_numbers<[1], [0], [0], [1], [0, 0, 1, 1], [], []>} : vector<8x32xbf16>, vector<32x240xbf16>, vector<8x240xf32> -> vector<8x240xf32>
    %110 = arith.addf %103, %109 : vector<8x240xf32>
    %111 = vector.broadcast %0 : vector<1x240xf32> to vector<8x240xf32>
    %112 = arith.addf %110, %111 : vector<8x240xf32>
    %cst_91 = arith.constant 0.000000e+00 : f32
    %113 = vector.broadcast %cst_91 : f32 to vector<8x240xf32>
    %114 = arith.cmpf ogt, %112, %113 : vector<8x240xf32>
    %cst_92 = arith.constant 0.00999999977 : f32
    %115 = vector.broadcast %cst_92 : f32 to vector<8x240xf32>
    %116 = arith.mulf %115, %112 : vector<8x240xf32>
    %117 = arith.select %114, %112, %116 : vector<8x240xi1>, vector<8x240xf32>
    %c3_93 = arith.constant 3 : index
    %c0_94 = arith.constant 0 : index
    %c0_95 = arith.constant 0 : index
    %118 = vector.load %arg19[%c3_93, %c0_94, %c0_95] : memref<15x8x240xf32, #tpu.memory_space<vmem>>, vector<1x8x240xf32>
    %119 = vector.shape_cast %118 : vector<1x8x240xf32> to vector<8x240xf32>
    %120 = vector.shape_cast %117 : vector<8x240xf32> to vector<1x8x240xf32>
    tpu.vector_store %arg19[%c3_93, %c0_94, %c0_95], %120 {strides = array<i32>} : memref<15x8x240xf32, #tpu.memory_space<vmem>>, vector<1x8x240xf32>,
    %c8_96 = arith.constant 8 : index
    %c0_97 = arith.constant 0 : index
    %c0_98 = arith.constant 0 : index
    %121 = vector.load %arg1[%c8_96, %c0_97, %c0_98] : memref<32x8x32xf32, #tpu.memory_space<vmem>>, vector<1x8x32xf32>
    %122 = vector.shape_cast %121 : vector<1x8x32xf32> to vector<8x32xf32>
    %123 = arith.truncf %122 : vector<8x32xf32> to vector<8x32xbf16>
    %c0_99 = arith.constant 0 : index
    %c0_100 = arith.constant 0 : index
    %c0_101 = arith.constant 0 : index
    %124 = vector.load %arg3[%c0_99, %c0_100, %c0_101] : memref<3x32x240xbf16, #tpu.memory_space<vmem>>, vector<1x32x240xbf16>
    %125 = vector.shape_cast %124 : vector<1x32x240xbf16> to vector<32x240xbf16>
    %cst_102 = arith.constant dense<0.000000e+00> : vector<8x240xf32>
    %126 = tpu.matmul %123, %125, %cst_102 {dimension_numbers = #tpu.dot_dimension_numbers<[1], [0], [0], [1], [0, 0, 1, 1], [], []>} : vector<8x32xbf16>, vector<32x240xbf16>, vector<8x240xf32> -> vector<8x240xf32>
    %c9 = arith.constant 9 : index
    %c0_103 = arith.constant 0 : index
    %c0_104 = arith.constant 0 : index
    %127 = vector.load %arg1[%c9, %c0_103, %c0_104] : memref<32x8x32xf32, #tpu.memory_space<vmem>>, vector<1x8x32xf32>
    %128 = vector.shape_cast %127 : vector<1x8x32xf32> to vector<8x32xf32>
    %129 = arith.truncf %128 : vector<8x32xf32> to vector<8x32xbf16>
    %c1_105 = arith.constant 1 : index
    %c0_106 = arith.constant 0 : index
    %c0_107 = arith.constant 0 : index
    %130 = vector.load %arg3[%c1_105, %c0_106, %c0_107] : memref<3x32x240xbf16, #tpu.memory_space<vmem>>, vector<1x32x240xbf16>
    %131 = vector.shape_cast %130 : vector<1x32x240xbf16> to vector<32x240xbf16>
    %cst_108 = arith.constant dense<0.000000e+00> : vector<8x240xf32>
    %132 = tpu.matmul %129, %131, %cst_108 {dimension_numbers = #tpu.dot_dimension_numbers<[1], [0], [0], [1], [0, 0, 1, 1], [], []>} : vector<8x32xbf16>, vector<32x240xbf16>, vector<8x240xf32> -> vector<8x240xf32>
    %133 = arith.addf %126, %132 : vector<8x240xf32>
    %c10 = arith.constant 10 : index
    %c0_109 = arith.constant 0 : index
    %c0_110 = arith.constant 0 : index
    %134 = vector.load %arg1[%c10, %c0_109, %c0_110] : memref<32x8x32xf32, #tpu.memory_space<vmem>>, vector<1x8x32xf32>
    %135 = vector.shape_cast %134 : vector<1x8x32xf32> to vector<8x32xf32>
    %136 = arith.truncf %135 : vector<8x32xf32> to vector<8x32xbf16>
    %c2_111 = arith.constant 2 : index
    %c0_112 = arith.constant 0 : index
    %c0_113 = arith.constant 0 : index
    %137 = vector.load %arg3[%c2_111, %c0_112, %c0_113] : memref<3x32x240xbf16, #tpu.memory_space<vmem>>, vector<1x32x240xbf16>
    %138 = vector.shape_cast %137 : vector<1x32x240xbf16> to vector<32x240xbf16>
    %cst_114 = arith.constant dense<0.000000e+00> : vector<8x240xf32>
    %139 = tpu.matmul %136, %138, %cst_114 {dimension_numbers = #tpu.dot_dimension_numbers<[1], [0], [0], [1], [0, 0, 1, 1], [], []>} : vector<8x32xbf16>, vector<32x240xbf16>, vector<8x240xf32> -> vector<8x240xf32>
    %140 = arith.addf %133, %139 : vector<8x240xf32>
    %141 = vector.broadcast %0 : vector<1x240xf32> to vector<8x240xf32>
    %142 = arith.addf %140, %141 : vector<8x240xf32>
    %cst_115 = arith.constant 0.000000e+00 : f32
    %143 = vector.broadcast %cst_115 : f32 to vector<8x240xf32>
    %144 = arith.cmpf ogt, %142, %143 : vector<8x240xf32>
    %cst_116 = arith.constant 0.00999999977 : f32
    %145 = vector.broadcast %cst_116 : f32 to vector<8x240xf32>
    %146 = arith.mulf %145, %142 : vector<8x240xf32>
    %147 = arith.select %144, %142, %146 : vector<8x240xi1>, vector<8x240xf32>
    %c4_117 = arith.constant 4 : index
    %c0_118 = arith.constant 0 : index
    %c0_119 = arith.constant 0 : index
    %148 = vector.load %arg19[%c4_117, %c0_118, %c0_119] : memref<15x8x240xf32, #tpu.memory_space<vmem>>, vector<1x8x240xf32>
    %149 = vector.shape_cast %148 : vector<1x8x240xf32> to vector<8x240xf32>
    %150 = vector.shape_cast %147 : vector<8x240xf32> to vector<1x8x240xf32>
    tpu.vector_store %arg19[%c4_117, %c0_118, %c0_119], %150 {strides = array<i32>} : memref<15x8x240xf32, #tpu.memory_space<vmem>>, vector<1x8x240xf32>,
    %c10_120 = arith.constant 10 : index
    %c0_121 = arith.constant 0 : index
    %c0_122 = arith.constant 0 : index
    %151 = vector.load %arg1[%c10_120, %c0_121, %c0_122] : memref<32x8x32xf32, #tpu.memory_space<vmem>>, vector<1x8x32xf32>
    %152 = vector.shape_cast %151 : vector<1x8x32xf32> to vector<8x32xf32>
    %153 = arith.truncf %152 : vector<8x32xf32> to vector<8x32xbf16>
    %c0_123 = arith.constant 0 : index
    %c0_124 = arith.constant 0 : index
    %c0_125 = arith.constant 0 : index
    %154 = vector.load %arg3[%c0_123, %c0_124, %c0_125] : memref<3x32x240xbf16, #tpu.memory_space<vmem>>, vector<1x32x240xbf16>
    %155 = vector.shape_cast %154 : vector<1x32x240xbf16> to vector<32x240xbf16>
    %cst_126 = arith.constant dense<0.000000e+00> : vector<8x240xf32>
    %156 = tpu.matmul %153, %155, %cst_126 {dimension_numbers = #tpu.dot_dimension_numbers<[1], [0], [0], [1], [0, 0, 1, 1], [], []>} : vector<8x32xbf16>, vector<32x240xbf16>, vector<8x240xf32> -> vector<8x240xf32>
    %c11 = arith.constant 11 : index
    %c0_127 = arith.constant 0 : index
    %c0_128 = arith.constant 0 : index
    %157 = vector.load %arg1[%c11, %c0_127, %c0_128] : memref<32x8x32xf32, #tpu.memory_space<vmem>>, vector<1x8x32xf32>
    %158 = vector.shape_cast %157 : vector<1x8x32xf32> to vector<8x32xf32>
    %159 = arith.truncf %158 : vector<8x32xf32> to vector<8x32xbf16>
    %c1_129 = arith.constant 1 : index
    %c0_130 = arith.constant 0 : index
    %c0_131 = arith.constant 0 : index
    %160 = vector.load %arg3[%c1_129, %c0_130, %c0_131] : memref<3x32x240xbf16, #tpu.memory_space<vmem>>, vector<1x32x240xbf16>
    %161 = vector.shape_cast %160 : vector<1x32x240xbf16> to vector<32x240xbf16>
    %cst_132 = arith.constant dense<0.000000e+00> : vector<8x240xf32>
    %162 = tpu.matmul %159, %161, %cst_132 {dimension_numbers = #tpu.dot_dimension_numbers<[1], [0], [0], [1], [0, 0, 1, 1], [], []>} : vector<8x32xbf16>, vector<32x240xbf16>, vector<8x240xf32> -> vector<8x240xf32>
    %163 = arith.addf %156, %162 : vector<8x240xf32>
    %c12 = arith.constant 12 : index
    %c0_133 = arith.constant 0 : index
    %c0_134 = arith.constant 0 : index
    %164 = vector.load %arg1[%c12, %c0_133, %c0_134] : memref<32x8x32xf32, #tpu.memory_space<vmem>>, vector<1x8x32xf32>
    %165 = vector.shape_cast %164 : vector<1x8x32xf32> to vector<8x32xf32>
    %166 = arith.truncf %165 : vector<8x32xf32> to vector<8x32xbf16>
    %c2_135 = arith.constant 2 : index
    %c0_136 = arith.constant 0 : index
    %c0_137 = arith.constant 0 : index
    %167 = vector.load %arg3[%c2_135, %c0_136, %c0_137] : memref<3x32x240xbf16, #tpu.memory_space<vmem>>, vector<1x32x240xbf16>
    %168 = vector.shape_cast %167 : vector<1x32x240xbf16> to vector<32x240xbf16>
    %cst_138 = arith.constant dense<0.000000e+00> : vector<8x240xf32>
    %169 = tpu.matmul %166, %168, %cst_138 {dimension_numbers = #tpu.dot_dimension_numbers<[1], [0], [0], [1], [0, 0, 1, 1], [], []>} : vector<8x32xbf16>, vector<32x240xbf16>, vector<8x240xf32> -> vector<8x240xf32>
    %170 = arith.addf %163, %169 : vector<8x240xf32>
    %171 = vector.broadcast %0 : vector<1x240xf32> to vector<8x240xf32>
    %172 = arith.addf %170, %171 : vector<8x240xf32>
    %cst_139 = arith.constant 0.000000e+00 : f32
    %173 = vector.broadcast %cst_139 : f32 to vector<8x240xf32>
    %174 = arith.cmpf ogt, %172, %173 : vector<8x240xf32>
    %cst_140 = arith.constant 0.00999999977 : f32
    %175 = vector.broadcast %cst_140 : f32 to vector<8x240xf32>
    %176 = arith.mulf %175, %172 : vector<8x240xf32>
    %177 = arith.select %174, %172, %176 : vector<8x240xi1>, vector<8x240xf32>
    %c5_141 = arith.constant 5 : index
    %c0_142 = arith.constant 0 : index
    %c0_143 = arith.constant 0 : index
    %178 = vector.load %arg19[%c5_141, %c0_142, %c0_143] : memref<15x8x240xf32, #tpu.memory_space<vmem>>, vector<1x8x240xf32>
    %179 = vector.shape_cast %178 : vector<1x8x240xf32> to vector<8x240xf32>
    %180 = vector.shape_cast %177 : vector<8x240xf32> to vector<1x8x240xf32>
    tpu.vector_store %arg19[%c5_141, %c0_142, %c0_143], %180 {strides = array<i32>} : memref<15x8x240xf32, #tpu.memory_space<vmem>>, vector<1x8x240xf32>,
    %c12_144 = arith.constant 12 : index
    %c0_145 = arith.constant 0 : index
    %c0_146 = arith.constant 0 : index
    %181 = vector.load %arg1[%c12_144, %c0_145, %c0_146] : memref<32x8x32xf32, #tpu.memory_space<vmem>>, vector<1x8x32xf32>
    %182 = vector.shape_cast %181 : vector<1x8x32xf32> to vector<8x32xf32>
    %183 = arith.truncf %182 : vector<8x32xf32> to vector<8x32xbf16>
    %c0_147 = arith.constant 0 : index
    %c0_148 = arith.constant 0 : index
    %c0_149 = arith.constant 0 : index
    %184 = vector.load %arg3[%c0_147, %c0_148, %c0_149] : memref<3x32x240xbf16, #tpu.memory_space<vmem>>, vector<1x32x240xbf16>
    %185 = vector.shape_cast %184 : vector<1x32x240xbf16> to vector<32x240xbf16>
    %cst_150 = arith.constant dense<0.000000e+00> : vector<8x240xf32>
    %186 = tpu.matmul %183, %185, %cst_150 {dimension_numbers = #tpu.dot_dimension_numbers<[1], [0], [0], [1], [0, 0, 1, 1], [], []>} : vector<8x32xbf16>, vector<32x240xbf16>, vector<8x240xf32> -> vector<8x240xf32>
    %c13 = arith.constant 13 : index
    %c0_151 = arith.constant 0 : index
    %c0_152 = arith.constant 0 : index
    %187 = vector.load %arg1[%c13, %c0_151, %c0_152] : memref<32x8x32xf32, #tpu.memory_space<vmem>>, vector<1x8x32xf32>
    %188 = vector.shape_cast %187 : vector<1x8x32xf32> to vector<8x32xf32>
    %189 = arith.truncf %188 : vector<8x32xf32> to vector<8x32xbf16>
    %c1_153 = arith.constant 1 : index
    %c0_154 = arith.constant 0 : index
    %c0_155 = arith.constant 0 : index
    %190 = vector.load %arg3[%c1_153, %c0_154, %c0_155] : memref<3x32x240xbf16, #tpu.memory_space<vmem>>, vector<1x32x240xbf16>
    %191 = vector.shape_cast %190 : vector<1x32x240xbf16> to vector<32x240xbf16>
    %cst_156 = arith.constant dense<0.000000e+00> : vector<8x240xf32>
    %192 = tpu.matmul %189, %191, %cst_156 {dimension_numbers = #tpu.dot_dimension_numbers<[1], [0], [0], [1], [0, 0, 1, 1], [], []>} : vector<8x32xbf16>, vector<32x240xbf16>, vector<8x240xf32> -> vector<8x240xf32>
    %193 = arith.addf %186, %192 : vector<8x240xf32>
    %c14 = arith.constant 14 : index
    %c0_157 = arith.constant 0 : index
    %c0_158 = arith.constant 0 : index
    %194 = vector.load %arg1[%c14, %c0_157, %c0_158] : memref<32x8x32xf32, #tpu.memory_space<vmem>>, vector<1x8x32xf32>
    %195 = vector.shape_cast %194 : vector<1x8x32xf32> to vector<8x32xf32>
    %196 = arith.truncf %195 : vector<8x32xf32> to vector<8x32xbf16>
    %c2_159 = arith.constant 2 : index
    %c0_160 = arith.constant 0 : index
    %c0_161 = arith.constant 0 : index
    %197 = vector.load %arg3[%c2_159, %c0_160, %c0_161] : memref<3x32x240xbf16, #tpu.memory_space<vmem>>, vector<1x32x240xbf16>
    %198 = vector.shape_cast %197 : vector<1x32x240xbf16> to vector<32x240xbf16>
    %cst_162 = arith.constant dense<0.000000e+00> : vector<8x240xf32>
    %199 = tpu.matmul %196, %198, %cst_162 {dimension_numbers = #tpu.dot_dimension_numbers<[1], [0], [0], [1], [0, 0, 1, 1], [], []>} : vector<8x32xbf16>, vector<32x240xbf16>, vector<8x240xf32> -> vector<8x240xf32>
    %200 = arith.addf %193, %199 : vector<8x240xf32>
    %201 = vector.broadcast %0 : vector<1x240xf32> to vector<8x240xf32>
    %202 = arith.addf %200, %201 : vector<8x240xf32>
    %cst_163 = arith.constant 0.000000e+00 : f32
    %203 = vector.broadcast %cst_163 : f32 to vector<8x240xf32>
    %204 = arith.cmpf ogt, %202, %203 : vector<8x240xf32>
    %cst_164 = arith.constant 0.00999999977 : f32
    %205 = vector.broadcast %cst_164 : f32 to vector<8x240xf32>
    %206 = arith.mulf %205, %202 : vector<8x240xf32>
    %207 = arith.select %204, %202, %206 : vector<8x240xi1>, vector<8x240xf32>
    %c6_165 = arith.constant 6 : index
    %c0_166 = arith.constant 0 : index
    %c0_167 = arith.constant 0 : index
    %208 = vector.load %arg19[%c6_165, %c0_166, %c0_167] : memref<15x8x240xf32, #tpu.memory_space<vmem>>, vector<1x8x240xf32>
    %209 = vector.shape_cast %208 : vector<1x8x240xf32> to vector<8x240xf32>
    %210 = vector.shape_cast %207 : vector<8x240xf32> to vector<1x8x240xf32>
    tpu.vector_store %arg19[%c6_165, %c0_166, %c0_167], %210 {strides = array<i32>} : memref<15x8x240xf32, #tpu.memory_space<vmem>>, vector<1x8x240xf32>,
    %c14_168 = arith.constant 14 : index
    %c0_169 = arith.constant 0 : index
    %c0_170 = arith.constant 0 : index
    %211 = vector.load %arg1[%c14_168, %c0_169, %c0_170] : memref<32x8x32xf32, #tpu.memory_space<vmem>>, vector<1x8x32xf32>
    %212 = vector.shape_cast %211 : vector<1x8x32xf32> to vector<8x32xf32>
    %213 = arith.truncf %212 : vector<8x32xf32> to vector<8x32xbf16>
    %c0_171 = arith.constant 0 : index
    %c0_172 = arith.constant 0 : index
    %c0_173 = arith.constant 0 : index
    %214 = vector.load %arg3[%c0_171, %c0_172, %c0_173] : memref<3x32x240xbf16, #tpu.memory_space<vmem>>, vector<1x32x240xbf16>
    %215 = vector.shape_cast %214 : vector<1x32x240xbf16> to vector<32x240xbf16>
    %cst_174 = arith.constant dense<0.000000e+00> : vector<8x240xf32>
    %216 = tpu.matmul %213, %215, %cst_174 {dimension_numbers = #tpu.dot_dimension_numbers<[1], [0], [0], [1], [0, 0, 1, 1], [], []>} : vector<8x32xbf16>, vector<32x240xbf16>, vector<8x240xf32> -> vector<8x240xf32>
    %c15 = arith.constant 15 : index
    %c0_175 = arith.constant 0 : index
    %c0_176 = arith.constant 0 : index
    %217 = vector.load %arg1[%c15, %c0_175, %c0_176] : memref<32x8x32xf32, #tpu.memory_space<vmem>>, vector<1x8x32xf32>
    %218 = vector.shape_cast %217 : vector<1x8x32xf32> to vector<8x32xf32>
    %219 = arith.truncf %218 : vector<8x32xf32> to vector<8x32xbf16>
    %c1_177 = arith.constant 1 : index
    %c0_178 = arith.constant 0 : index
    %c0_179 = arith.constant 0 : index
    %220 = vector.load %arg3[%c1_177, %c0_178, %c0_179] : memref<3x32x240xbf16, #tpu.memory_space<vmem>>, vector<1x32x240xbf16>
    %221 = vector.shape_cast %220 : vector<1x32x240xbf16> to vector<32x240xbf16>
    %cst_180 = arith.constant dense<0.000000e+00> : vector<8x240xf32>
    %222 = tpu.matmul %219, %221, %cst_180 {dimension_numbers = #tpu.dot_dimension_numbers<[1], [0], [0], [1], [0, 0, 1, 1], [], []>} : vector<8x32xbf16>, vector<32x240xbf16>, vector<8x240xf32> -> vector<8x240xf32>
    %223 = arith.addf %216, %222 : vector<8x240xf32>
    %c16 = arith.constant 16 : index
    %c0_181 = arith.constant 0 : index
    %c0_182 = arith.constant 0 : index
    %224 = vector.load %arg1[%c16, %c0_181, %c0_182] : memref<32x8x32xf32, #tpu.memory_space<vmem>>, vector<1x8x32xf32>
    %225 = vector.shape_cast %224 : vector<1x8x32xf32> to vector<8x32xf32>
    %226 = arith.truncf %225 : vector<8x32xf32> to vector<8x32xbf16>
    %c2_183 = arith.constant 2 : index
    %c0_184 = arith.constant 0 : index
    %c0_185 = arith.constant 0 : index
    %227 = vector.load %arg3[%c2_183, %c0_184, %c0_185] : memref<3x32x240xbf16, #tpu.memory_space<vmem>>, vector<1x32x240xbf16>
    %228 = vector.shape_cast %227 : vector<1x32x240xbf16> to vector<32x240xbf16>
    %cst_186 = arith.constant dense<0.000000e+00> : vector<8x240xf32>
    %229 = tpu.matmul %226, %228, %cst_186 {dimension_numbers = #tpu.dot_dimension_numbers<[1], [0], [0], [1], [0, 0, 1, 1], [], []>} : vector<8x32xbf16>, vector<32x240xbf16>, vector<8x240xf32> -> vector<8x240xf32>
    %230 = arith.addf %223, %229 : vector<8x240xf32>
    %231 = vector.broadcast %0 : vector<1x240xf32> to vector<8x240xf32>
    %232 = arith.addf %230, %231 : vector<8x240xf32>
    %cst_187 = arith.constant 0.000000e+00 : f32
    %233 = vector.broadcast %cst_187 : f32 to vector<8x240xf32>
    %234 = arith.cmpf ogt, %232, %233 : vector<8x240xf32>
    %cst_188 = arith.constant 0.00999999977 : f32
    %235 = vector.broadcast %cst_188 : f32 to vector<8x240xf32>
    %236 = arith.mulf %235, %232 : vector<8x240xf32>
    %237 = arith.select %234, %232, %236 : vector<8x240xi1>, vector<8x240xf32>
    %c7_189 = arith.constant 7 : index
    %c0_190 = arith.constant 0 : index
    %c0_191 = arith.constant 0 : index
    %238 = vector.load %arg19[%c7_189, %c0_190, %c0_191] : memref<15x8x240xf32, #tpu.memory_space<vmem>>, vector<1x8x240xf32>
    %239 = vector.shape_cast %238 : vector<1x8x240xf32> to vector<8x240xf32>
    %240 = vector.shape_cast %237 : vector<8x240xf32> to vector<1x8x240xf32>
    tpu.vector_store %arg19[%c7_189, %c0_190, %c0_191], %240 {strides = array<i32>} : memref<15x8x240xf32, #tpu.memory_space<vmem>>, vector<1x8x240xf32>,
    %c16_192 = arith.constant 16 : index
    %c0_193 = arith.constant 0 : index
    %c0_194 = arith.constant 0 : index
    %241 = vector.load %arg1[%c16_192, %c0_193, %c0_194] : memref<32x8x32xf32, #tpu.memory_space<vmem>>, vector<1x8x32xf32>
    %242 = vector.shape_cast %241 : vector<1x8x32xf32> to vector<8x32xf32>
    %243 = arith.truncf %242 : vector<8x32xf32> to vector<8x32xbf16>
    %c0_195 = arith.constant 0 : index
    %c0_196 = arith.constant 0 : index
    %c0_197 = arith.constant 0 : index
    %244 = vector.load %arg3[%c0_195, %c0_196, %c0_197] : memref<3x32x240xbf16, #tpu.memory_space<vmem>>, vector<1x32x240xbf16>
    %245 = vector.shape_cast %244 : vector<1x32x240xbf16> to vector<32x240xbf16>
    %cst_198 = arith.constant dense<0.000000e+00> : vector<8x240xf32>
    %246 = tpu.matmul %243, %245, %cst_198 {dimension_numbers = #tpu.dot_dimension_numbers<[1], [0], [0], [1], [0, 0, 1, 1], [], []>} : vector<8x32xbf16>, vector<32x240xbf16>, vector<8x240xf32> -> vector<8x240xf32>
    %c17 = arith.constant 17 : index
    %c0_199 = arith.constant 0 : index
    %c0_200 = arith.constant 0 : index
    %247 = vector.load %arg1[%c17, %c0_199, %c0_200] : memref<32x8x32xf32, #tpu.memory_space<vmem>>, vector<1x8x32xf32>
    %248 = vector.shape_cast %247 : vector<1x8x32xf32> to vector<8x32xf32>
    %249 = arith.truncf %248 : vector<8x32xf32> to vector<8x32xbf16>
    %c1_201 = arith.constant 1 : index
    %c0_202 = arith.constant 0 : index
    %c0_203 = arith.constant 0 : index
    %250 = vector.load %arg3[%c1_201, %c0_202, %c0_203] : memref<3x32x240xbf16, #tpu.memory_space<vmem>>, vector<1x32x240xbf16>
    %251 = vector.shape_cast %250 : vector<1x32x240xbf16> to vector<32x240xbf16>
    %cst_204 = arith.constant dense<0.000000e+00> : vector<8x240xf32>
    %252 = tpu.matmul %249, %251, %cst_204 {dimension_numbers = #tpu.dot_dimension_numbers<[1], [0], [0], [1], [0, 0, 1, 1], [], []>} : vector<8x32xbf16>, vector<32x240xbf16>, vector<8x240xf32> -> vector<8x240xf32>
    %253 = arith.addf %246, %252 : vector<8x240xf32>
    %c18 = arith.constant 18 : index
    %c0_205 = arith.constant 0 : index
    %c0_206 = arith.constant 0 : index
    %254 = vector.load %arg1[%c18, %c0_205, %c0_206] : memref<32x8x32xf32, #tpu.memory_space<vmem>>, vector<1x8x32xf32>
    %255 = vector.shape_cast %254 : vector<1x8x32xf32> to vector<8x32xf32>
    %256 = arith.truncf %255 : vector<8x32xf32> to vector<8x32xbf16>
    %c2_207 = arith.constant 2 : index
    %c0_208 = arith.constant 0 : index
    %c0_209 = arith.constant 0 : index
    %257 = vector.load %arg3[%c2_207, %c0_208, %c0_209] : memref<3x32x240xbf16, #tpu.memory_space<vmem>>, vector<1x32x240xbf16>
    %258 = vector.shape_cast %257 : vector<1x32x240xbf16> to vector<32x240xbf16>
    %cst_210 = arith.constant dense<0.000000e+00> : vector<8x240xf32>
    %259 = tpu.matmul %256, %258, %cst_210 {dimension_numbers = #tpu.dot_dimension_numbers<[1], [0], [0], [1], [0, 0, 1, 1], [], []>} : vector<8x32xbf16>, vector<32x240xbf16>, vector<8x240xf32> -> vector<8x240xf32>
    %260 = arith.addf %253, %259 : vector<8x240xf32>
    %261 = vector.broadcast %0 : vector<1x240xf32> to vector<8x240xf32>
    %262 = arith.addf %260, %261 : vector<8x240xf32>
    %cst_211 = arith.constant 0.000000e+00 : f32
    %263 = vector.broadcast %cst_211 : f32 to vector<8x240xf32>
    %264 = arith.cmpf ogt, %262, %263 : vector<8x240xf32>
    %cst_212 = arith.constant 0.00999999977 : f32
    %265 = vector.broadcast %cst_212 : f32 to vector<8x240xf32>
    %266 = arith.mulf %265, %262 : vector<8x240xf32>
    %267 = arith.select %264, %262, %266 : vector<8x240xi1>, vector<8x240xf32>
    %c8_213 = arith.constant 8 : index
    %c0_214 = arith.constant 0 : index
    %c0_215 = arith.constant 0 : index
    %268 = vector.load %arg19[%c8_213, %c0_214, %c0_215] : memref<15x8x240xf32, #tpu.memory_space<vmem>>, vector<1x8x240xf32>
    %269 = vector.shape_cast %268 : vector<1x8x240xf32> to vector<8x240xf32>
    %270 = vector.shape_cast %267 : vector<8x240xf32> to vector<1x8x240xf32>
    tpu.vector_store %arg19[%c8_213, %c0_214, %c0_215], %270 {strides = array<i32>} : memref<15x8x240xf32, #tpu.memory_space<vmem>>, vector<1x8x240xf32>,
    %c18_216 = arith.constant 18 : index
    %c0_217 = arith.constant 0 : index
    %c0_218 = arith.constant 0 : index
    %271 = vector.load %arg1[%c18_216, %c0_217, %c0_218] : memref<32x8x32xf32, #tpu.memory_space<vmem>>, vector<1x8x32xf32>
    %272 = vector.shape_cast %271 : vector<1x8x32xf32> to vector<8x32xf32>
    %273 = arith.truncf %272 : vector<8x32xf32> to vector<8x32xbf16>
    %c0_219 = arith.constant 0 : index
    %c0_220 = arith.constant 0 : index
    %c0_221 = arith.constant 0 : index
    %274 = vector.load %arg3[%c0_219, %c0_220, %c0_221] : memref<3x32x240xbf16, #tpu.memory_space<vmem>>, vector<1x32x240xbf16>
    %275 = vector.shape_cast %274 : vector<1x32x240xbf16> to vector<32x240xbf16>
    %cst_222 = arith.constant dense<0.000000e+00> : vector<8x240xf32>
    %276 = tpu.matmul %273, %275, %cst_222 {dimension_numbers = #tpu.dot_dimension_numbers<[1], [0], [0], [1], [0, 0, 1, 1], [], []>} : vector<8x32xbf16>, vector<32x240xbf16>, vector<8x240xf32> -> vector<8x240xf32>
    %c19 = arith.constant 19 : index
    %c0_223 = arith.constant 0 : index
    %c0_224 = arith.constant 0 : index
    %277 = vector.load %arg1[%c19, %c0_223, %c0_224] : memref<32x8x32xf32, #tpu.memory_space<vmem>>, vector<1x8x32xf32>
    %278 = vector.shape_cast %277 : vector<1x8x32xf32> to vector<8x32xf32>
    %279 = arith.truncf %278 : vector<8x32xf32> to vector<8x32xbf16>
    %c1_225 = arith.constant 1 : index
    %c0_226 = arith.constant 0 : index
    %c0_227 = arith.constant 0 : index
    %280 = vector.load %arg3[%c1_225, %c0_226, %c0_227] : memref<3x32x240xbf16, #tpu.memory_space<vmem>>, vector<1x32x240xbf16>
    %281 = vector.shape_cast %280 : vector<1x32x240xbf16> to vector<32x240xbf16>
    %cst_228 = arith.constant dense<0.000000e+00> : vector<8x240xf32>
    %282 = tpu.matmul %279, %281, %cst_228 {dimension_numbers = #tpu.dot_dimension_numbers<[1], [0], [0], [1], [0, 0, 1, 1], [], []>} : vector<8x32xbf16>, vector<32x240xbf16>, vector<8x240xf32> -> vector<8x240xf32>
    %283 = arith.addf %276, %282 : vector<8x240xf32>
    %c20 = arith.constant 20 : index
    %c0_229 = arith.constant 0 : index
    %c0_230 = arith.constant 0 : index
    %284 = vector.load %arg1[%c20, %c0_229, %c0_230] : memref<32x8x32xf32, #tpu.memory_space<vmem>>, vector<1x8x32xf32>
    %285 = vector.shape_cast %284 : vector<1x8x32xf32> to vector<8x32xf32>
    %286 = arith.truncf %285 : vector<8x32xf32> to vector<8x32xbf16>
    %c2_231 = arith.constant 2 : index
    %c0_232 = arith.constant 0 : index
    %c0_233 = arith.constant 0 : index
    %287 = vector.load %arg3[%c2_231, %c0_232, %c0_233] : memref<3x32x240xbf16, #tpu.memory_space<vmem>>, vector<1x32x240xbf16>
    %288 = vector.shape_cast %287 : vector<1x32x240xbf16> to vector<32x240xbf16>
    %cst_234 = arith.constant dense<0.000000e+00> : vector<8x240xf32>
    %289 = tpu.matmul %286, %288, %cst_234 {dimension_numbers = #tpu.dot_dimension_numbers<[1], [0], [0], [1], [0, 0, 1, 1], [], []>} : vector<8x32xbf16>, vector<32x240xbf16>, vector<8x240xf32> -> vector<8x240xf32>
    %290 = arith.addf %283, %289 : vector<8x240xf32>
    %291 = vector.broadcast %0 : vector<1x240xf32> to vector<8x240xf32>
    %292 = arith.addf %290, %291 : vector<8x240xf32>
    %cst_235 = arith.constant 0.000000e+00 : f32
    %293 = vector.broadcast %cst_235 : f32 to vector<8x240xf32>
    %294 = arith.cmpf ogt, %292, %293 : vector<8x240xf32>
    %cst_236 = arith.constant 0.00999999977 : f32
    %295 = vector.broadcast %cst_236 : f32 to vector<8x240xf32>
    %296 = arith.mulf %295, %292 : vector<8x240xf32>
    %297 = arith.select %294, %292, %296 : vector<8x240xi1>, vector<8x240xf32>
    %c9_237 = arith.constant 9 : index
    %c0_238 = arith.constant 0 : index
    %c0_239 = arith.constant 0 : index
    %298 = vector.load %arg19[%c9_237, %c0_238, %c0_239] : memref<15x8x240xf32, #tpu.memory_space<vmem>>, vector<1x8x240xf32>
    %299 = vector.shape_cast %298 : vector<1x8x240xf32> to vector<8x240xf32>
    %300 = vector.shape_cast %297 : vector<8x240xf32> to vector<1x8x240xf32>
    tpu.vector_store %arg19[%c9_237, %c0_238, %c0_239], %300 {strides = array<i32>} : memref<15x8x240xf32, #tpu.memory_space<vmem>>, vector<1x8x240xf32>,
    %c20_240 = arith.constant 20 : index
    %c0_241 = arith.constant 0 : index
    %c0_242 = arith.constant 0 : index
    %301 = vector.load %arg1[%c20_240, %c0_241, %c0_242] : memref<32x8x32xf32, #tpu.memory_space<vmem>>, vector<1x8x32xf32>
    %302 = vector.shape_cast %301 : vector<1x8x32xf32> to vector<8x32xf32>
    %303 = arith.truncf %302 : vector<8x32xf32> to vector<8x32xbf16>
    %c0_243 = arith.constant 0 : index
    %c0_244 = arith.constant 0 : index
    %c0_245 = arith.constant 0 : index
    %304 = vector.load %arg3[%c0_243, %c0_244, %c0_245] : memref<3x32x240xbf16, #tpu.memory_space<vmem>>, vector<1x32x240xbf16>
    %305 = vector.shape_cast %304 : vector<1x32x240xbf16> to vector<32x240xbf16>
    %cst_246 = arith.constant dense<0.000000e+00> : vector<8x240xf32>
    %306 = tpu.matmul %303, %305, %cst_246 {dimension_numbers = #tpu.dot_dimension_numbers<[1], [0], [0], [1], [0, 0, 1, 1], [], []>} : vector<8x32xbf16>, vector<32x240xbf16>, vector<8x240xf32> -> vector<8x240xf32>
    %c21 = arith.constant 21 : index
    %c0_247 = arith.constant 0 : index
    %c0_248 = arith.constant 0 : index
    %307 = vector.load %arg1[%c21, %c0_247, %c0_248] : memref<32x8x32xf32, #tpu.memory_space<vmem>>, vector<1x8x32xf32>
    %308 = vector.shape_cast %307 : vector<1x8x32xf32> to vector<8x32xf32>
    %309 = arith.truncf %308 : vector<8x32xf32> to vector<8x32xbf16>
    %c1_249 = arith.constant 1 : index
    %c0_250 = arith.constant 0 : index
    %c0_251 = arith.constant 0 : index
    %310 = vector.load %arg3[%c1_249, %c0_250, %c0_251] : memref<3x32x240xbf16, #tpu.memory_space<vmem>>, vector<1x32x240xbf16>
    %311 = vector.shape_cast %310 : vector<1x32x240xbf16> to vector<32x240xbf16>
    %cst_252 = arith.constant dense<0.000000e+00> : vector<8x240xf32>
    %312 = tpu.matmul %309, %311, %cst_252 {dimension_numbers = #tpu.dot_dimension_numbers<[1], [0], [0], [1], [0, 0, 1, 1], [], []>} : vector<8x32xbf16>, vector<32x240xbf16>, vector<8x240xf32> -> vector<8x240xf32>
    %313 = arith.addf %306, %312 : vector<8x240xf32>
    %c22 = arith.constant 22 : index
    %c0_253 = arith.constant 0 : index
    %c0_254 = arith.constant 0 : index
    %314 = vector.load %arg1[%c22, %c0_253, %c0_254] : memref<32x8x32xf32, #tpu.memory_space<vmem>>, vector<1x8x32xf32>
    %315 = vector.shape_cast %314 : vector<1x8x32xf32> to vector<8x32xf32>
    %316 = arith.truncf %315 : vector<8x32xf32> to vector<8x32xbf16>
    %c2_255 = arith.constant 2 : index
    %c0_256 = arith.constant 0 : index
    %c0_257 = arith.constant 0 : index
    %317 = vector.load %arg3[%c2_255, %c0_256, %c0_257] : memref<3x32x240xbf16, #tpu.memory_space<vmem>>, vector<1x32x240xbf16>
    %318 = vector.shape_cast %317 : vector<1x32x240xbf16> to vector<32x240xbf16>
    %cst_258 = arith.constant dense<0.000000e+00> : vector<8x240xf32>
    %319 = tpu.matmul %316, %318, %cst_258 {dimension_numbers = #tpu.dot_dimension_numbers<[1], [0], [0], [1], [0, 0, 1, 1], [], []>} : vector<8x32xbf16>, vector<32x240xbf16>, vector<8x240xf32> -> vector<8x240xf32>
    %320 = arith.addf %313, %319 : vector<8x240xf32>
    %321 = vector.broadcast %0 : vector<1x240xf32> to vector<8x240xf32>
    %322 = arith.addf %320, %321 : vector<8x240xf32>
    %cst_259 = arith.constant 0.000000e+00 : f32
    %323 = vector.broadcast %cst_259 : f32 to vector<8x240xf32>
    %324 = arith.cmpf ogt, %322, %323 : vector<8x240xf32>
    %cst_260 = arith.constant 0.00999999977 : f32
    %325 = vector.broadcast %cst_260 : f32 to vector<8x240xf32>
    %326 = arith.mulf %325, %322 : vector<8x240xf32>
    %327 = arith.select %324, %322, %326 : vector<8x240xi1>, vector<8x240xf32>
    %c10_261 = arith.constant 10 : index
    %c0_262 = arith.constant 0 : index
    %c0_263 = arith.constant 0 : index
    %328 = vector.load %arg19[%c10_261, %c0_262, %c0_263] : memref<15x8x240xf32, #tpu.memory_space<vmem>>, vector<1x8x240xf32>
    %329 = vector.shape_cast %328 : vector<1x8x240xf32> to vector<8x240xf32>
    %330 = vector.shape_cast %327 : vector<8x240xf32> to vector<1x8x240xf32>
    tpu.vector_store %arg19[%c10_261, %c0_262, %c0_263], %330 {strides = array<i32>} : memref<15x8x240xf32, #tpu.memory_space<vmem>>, vector<1x8x240xf32>,
    %c22_264 = arith.constant 22 : index
    %c0_265 = arith.constant 0 : index
    %c0_266 = arith.constant 0 : index
    %331 = vector.load %arg1[%c22_264, %c0_265, %c0_266] : memref<32x8x32xf32, #tpu.memory_space<vmem>>, vector<1x8x32xf32>
    %332 = vector.shape_cast %331 : vector<1x8x32xf32> to vector<8x32xf32>
    %333 = arith.truncf %332 : vector<8x32xf32> to vector<8x32xbf16>
    %c0_267 = arith.constant 0 : index
    %c0_268 = arith.constant 0 : index
    %c0_269 = arith.constant 0 : index
    %334 = vector.load %arg3[%c0_267, %c0_268, %c0_269] : memref<3x32x240xbf16, #tpu.memory_space<vmem>>, vector<1x32x240xbf16>
    %335 = vector.shape_cast %334 : vector<1x32x240xbf16> to vector<32x240xbf16>
    %cst_270 = arith.constant dense<0.000000e+00> : vector<8x240xf32>
    %336 = tpu.matmul %333, %335, %cst_270 {dimension_numbers = #tpu.dot_dimension_numbers<[1], [0], [0], [1], [0, 0, 1, 1], [], []>} : vector<8x32xbf16>, vector<32x240xbf16>, vector<8x240xf32> -> vector<8x240xf32>
    %c23 = arith.constant 23 : index
    %c0_271 = arith.constant 0 : index
    %c0_272 = arith.constant 0 : index
    %337 = vector.load %arg1[%c23, %c0_271, %c0_272] : memref<32x8x32xf32, #tpu.memory_space<vmem>>, vector<1x8x32xf32>
    %338 = vector.shape_cast %337 : vector<1x8x32xf32> to vector<8x32xf32>
    %339 = arith.truncf %338 : vector<8x32xf32> to vector<8x32xbf16>
    %c1_273 = arith.constant 1 : index
    %c0_274 = arith.constant 0 : index
    %c0_275 = arith.constant 0 : index
    %340 = vector.load %arg3[%c1_273, %c0_274, %c0_275] : memref<3x32x240xbf16, #tpu.memory_space<vmem>>, vector<1x32x240xbf16>
    %341 = vector.shape_cast %340 : vector<1x32x240xbf16> to vector<32x240xbf16>
    %cst_276 = arith.constant dense<0.000000e+00> : vector<8x240xf32>
    %342 = tpu.matmul %339, %341, %cst_276 {dimension_numbers = #tpu.dot_dimension_numbers<[1], [0], [0], [1], [0, 0, 1, 1], [], []>} : vector<8x32xbf16>, vector<32x240xbf16>, vector<8x240xf32> -> vector<8x240xf32>
    %343 = arith.addf %336, %342 : vector<8x240xf32>
    %c24 = arith.constant 24 : index
    %c0_277 = arith.constant 0 : index
    %c0_278 = arith.constant 0 : index
    %344 = vector.load %arg1[%c24, %c0_277, %c0_278] : memref<32x8x32xf32, #tpu.memory_space<vmem>>, vector<1x8x32xf32>
    %345 = vector.shape_cast %344 : vector<1x8x32xf32> to vector<8x32xf32>
    %346 = arith.truncf %345 : vector<8x32xf32> to vector<8x32xbf16>
    %c2_279 = arith.constant 2 : index
    %c0_280 = arith.constant 0 : index
    %c0_281 = arith.constant 0 : index
    %347 = vector.load %arg3[%c2_279, %c0_280, %c0_281] : memref<3x32x240xbf16, #tpu.memory_space<vmem>>, vector<1x32x240xbf16>
    %348 = vector.shape_cast %347 : vector<1x32x240xbf16> to vector<32x240xbf16>
    %cst_282 = arith.constant dense<0.000000e+00> : vector<8x240xf32>
    %349 = tpu.matmul %346, %348, %cst_282 {dimension_numbers = #tpu.dot_dimension_numbers<[1], [0], [0], [1], [0, 0, 1, 1], [], []>} : vector<8x32xbf16>, vector<32x240xbf16>, vector<8x240xf32> -> vector<8x240xf32>
    %350 = arith.addf %343, %349 : vector<8x240xf32>
    %351 = vector.broadcast %0 : vector<1x240xf32> to vector<8x240xf32>
    %352 = arith.addf %350, %351 : vector<8x240xf32>
    %cst_283 = arith.constant 0.000000e+00 : f32
    %353 = vector.broadcast %cst_283 : f32 to vector<8x240xf32>
    %354 = arith.cmpf ogt, %352, %353 : vector<8x240xf32>
    %cst_284 = arith.constant 0.00999999977 : f32
    %355 = vector.broadcast %cst_284 : f32 to vector<8x240xf32>
    %356 = arith.mulf %355, %352 : vector<8x240xf32>
    %357 = arith.select %354, %352, %356 : vector<8x240xi1>, vector<8x240xf32>
    %c11_285 = arith.constant 11 : index
    %c0_286 = arith.constant 0 : index
    %c0_287 = arith.constant 0 : index
    %358 = vector.load %arg19[%c11_285, %c0_286, %c0_287] : memref<15x8x240xf32, #tpu.memory_space<vmem>>, vector<1x8x240xf32>
    %359 = vector.shape_cast %358 : vector<1x8x240xf32> to vector<8x240xf32>
    %360 = vector.shape_cast %357 : vector<8x240xf32> to vector<1x8x240xf32>
    tpu.vector_store %arg19[%c11_285, %c0_286, %c0_287], %360 {strides = array<i32>} : memref<15x8x240xf32, #tpu.memory_space<vmem>>, vector<1x8x240xf32>,
    %c24_288 = arith.constant 24 : index
    %c0_289 = arith.constant 0 : index
    %c0_290 = arith.constant 0 : index
    %361 = vector.load %arg1[%c24_288, %c0_289, %c0_290] : memref<32x8x32xf32, #tpu.memory_space<vmem>>, vector<1x8x32xf32>
    %362 = vector.shape_cast %361 : vector<1x8x32xf32> to vector<8x32xf32>
    %363 = arith.truncf %362 : vector<8x32xf32> to vector<8x32xbf16>
    %c0_291 = arith.constant 0 : index
    %c0_292 = arith.constant 0 : index
    %c0_293 = arith.constant 0 : index
    %364 = vector.load %arg3[%c0_291, %c0_292, %c0_293] : memref<3x32x240xbf16, #tpu.memory_space<vmem>>, vector<1x32x240xbf16>
    %365 = vector.shape_cast %364 : vector<1x32x240xbf16> to vector<32x240xbf16>
    %cst_294 = arith.constant dense<0.000000e+00> : vector<8x240xf32>
    %366 = tpu.matmul %363, %365, %cst_294 {dimension_numbers = #tpu.dot_dimension_numbers<[1], [0], [0], [1], [0, 0, 1, 1], [], []>} : vector<8x32xbf16>, vector<32x240xbf16>, vector<8x240xf32> -> vector<8x240xf32>
    %c25 = arith.constant 25 : index
    %c0_295 = arith.constant 0 : index
    %c0_296 = arith.constant 0 : index
    %367 = vector.load %arg1[%c25, %c0_295, %c0_296] : memref<32x8x32xf32, #tpu.memory_space<vmem>>, vector<1x8x32xf32>
    %368 = vector.shape_cast %367 : vector<1x8x32xf32> to vector<8x32xf32>
    %369 = arith.truncf %368 : vector<8x32xf32> to vector<8x32xbf16>
    %c1_297 = arith.constant 1 : index
    %c0_298 = arith.constant 0 : index
    %c0_299 = arith.constant 0 : index
    %370 = vector.load %arg3[%c1_297, %c0_298, %c0_299] : memref<3x32x240xbf16, #tpu.memory_space<vmem>>, vector<1x32x240xbf16>
    %371 = vector.shape_cast %370 : vector<1x32x240xbf16> to vector<32x240xbf16>
    %cst_300 = arith.constant dense<0.000000e+00> : vector<8x240xf32>
    %372 = tpu.matmul %369, %371, %cst_300 {dimension_numbers = #tpu.dot_dimension_numbers<[1], [0], [0], [1], [0, 0, 1, 1], [], []>} : vector<8x32xbf16>, vector<32x240xbf16>, vector<8x240xf32> -> vector<8x240xf32>
    %373 = arith.addf %366, %372 : vector<8x240xf32>
    %c26 = arith.constant 26 : index
    %c0_301 = arith.constant 0 : index
    %c0_302 = arith.constant 0 : index
    %374 = vector.load %arg1[%c26, %c0_301, %c0_302] : memref<32x8x32xf32, #tpu.memory_space<vmem>>, vector<1x8x32xf32>
    %375 = vector.shape_cast %374 : vector<1x8x32xf32> to vector<8x32xf32>
    %376 = arith.truncf %375 : vector<8x32xf32> to vector<8x32xbf16>
    %c2_303 = arith.constant 2 : index
    %c0_304 = arith.constant 0 : index
    %c0_305 = arith.constant 0 : index
    %377 = vector.load %arg3[%c2_303, %c0_304, %c0_305] : memref<3x32x240xbf16, #tpu.memory_space<vmem>>, vector<1x32x240xbf16>
    %378 = vector.shape_cast %377 : vector<1x32x240xbf16> to vector<32x240xbf16>
    %cst_306 = arith.constant dense<0.000000e+00> : vector<8x240xf32>
    %379 = tpu.matmul %376, %378, %cst_306 {dimension_numbers = #tpu.dot_dimension_numbers<[1], [0], [0], [1], [0, 0, 1, 1], [], []>} : vector<8x32xbf16>, vector<32x240xbf16>, vector<8x240xf32> -> vector<8x240xf32>
    %380 = arith.addf %373, %379 : vector<8x240xf32>
    %381 = vector.broadcast %0 : vector<1x240xf32> to vector<8x240xf32>
    %382 = arith.addf %380, %381 : vector<8x240xf32>
    %cst_307 = arith.constant 0.000000e+00 : f32
    %383 = vector.broadcast %cst_307 : f32 to vector<8x240xf32>
    %384 = arith.cmpf ogt, %382, %383 : vector<8x240xf32>
    %cst_308 = arith.constant 0.00999999977 : f32
    %385 = vector.broadcast %cst_308 : f32 to vector<8x240xf32>
    %386 = arith.mulf %385, %382 : vector<8x240xf32>
    %387 = arith.select %384, %382, %386 : vector<8x240xi1>, vector<8x240xf32>
    %c12_309 = arith.constant 12 : index
    %c0_310 = arith.constant 0 : index
    %c0_311 = arith.constant 0 : index
    %388 = vector.load %arg19[%c12_309, %c0_310, %c0_311] : memref<15x8x240xf32, #tpu.memory_space<vmem>>, vector<1x8x240xf32>
    %389 = vector.shape_cast %388 : vector<1x8x240xf32> to vector<8x240xf32>
    %390 = vector.shape_cast %387 : vector<8x240xf32> to vector<1x8x240xf32>
    tpu.vector_store %arg19[%c12_309, %c0_310, %c0_311], %390 {strides = array<i32>} : memref<15x8x240xf32, #tpu.memory_space<vmem>>, vector<1x8x240xf32>,
    %c26_312 = arith.constant 26 : index
    %c0_313 = arith.constant 0 : index
    %c0_314 = arith.constant 0 : index
    %391 = vector.load %arg1[%c26_312, %c0_313, %c0_314] : memref<32x8x32xf32, #tpu.memory_space<vmem>>, vector<1x8x32xf32>
    %392 = vector.shape_cast %391 : vector<1x8x32xf32> to vector<8x32xf32>
    %393 = arith.truncf %392 : vector<8x32xf32> to vector<8x32xbf16>
    %c0_315 = arith.constant 0 : index
    %c0_316 = arith.constant 0 : index
    %c0_317 = arith.constant 0 : index
    %394 = vector.load %arg3[%c0_315, %c0_316, %c0_317] : memref<3x32x240xbf16, #tpu.memory_space<vmem>>, vector<1x32x240xbf16>
    %395 = vector.shape_cast %394 : vector<1x32x240xbf16> to vector<32x240xbf16>
    %cst_318 = arith.constant dense<0.000000e+00> : vector<8x240xf32>
    %396 = tpu.matmul %393, %395, %cst_318 {dimension_numbers = #tpu.dot_dimension_numbers<[1], [0], [0], [1], [0, 0, 1, 1], [], []>} : vector<8x32xbf16>, vector<32x240xbf16>, vector<8x240xf32> -> vector<8x240xf32>
    %c27 = arith.constant 27 : index
    %c0_319 = arith.constant 0 : index
    %c0_320 = arith.constant 0 : index
    %397 = vector.load %arg1[%c27, %c0_319, %c0_320] : memref<32x8x32xf32, #tpu.memory_space<vmem>>, vector<1x8x32xf32>
    %398 = vector.shape_cast %397 : vector<1x8x32xf32> to vector<8x32xf32>
    %399 = arith.truncf %398 : vector<8x32xf32> to vector<8x32xbf16>
    %c1_321 = arith.constant 1 : index
    %c0_322 = arith.constant 0 : index
    %c0_323 = arith.constant 0 : index
    %400 = vector.load %arg3[%c1_321, %c0_322, %c0_323] : memref<3x32x240xbf16, #tpu.memory_space<vmem>>, vector<1x32x240xbf16>
    %401 = vector.shape_cast %400 : vector<1x32x240xbf16> to vector<32x240xbf16>
    %cst_324 = arith.constant dense<0.000000e+00> : vector<8x240xf32>
    %402 = tpu.matmul %399, %401, %cst_324 {dimension_numbers = #tpu.dot_dimension_numbers<[1], [0], [0], [1], [0, 0, 1, 1], [], []>} : vector<8x32xbf16>, vector<32x240xbf16>, vector<8x240xf32> -> vector<8x240xf32>
    %403 = arith.addf %396, %402 : vector<8x240xf32>
    %c28 = arith.constant 28 : index
    %c0_325 = arith.constant 0 : index
    %c0_326 = arith.constant 0 : index
    %404 = vector.load %arg1[%c28, %c0_325, %c0_326] : memref<32x8x32xf32, #tpu.memory_space<vmem>>, vector<1x8x32xf32>
    %405 = vector.shape_cast %404 : vector<1x8x32xf32> to vector<8x32xf32>
    %406 = arith.truncf %405 : vector<8x32xf32> to vector<8x32xbf16>
    %c2_327 = arith.constant 2 : index
    %c0_328 = arith.constant 0 : index
    %c0_329 = arith.constant 0 : index
    %407 = vector.load %arg3[%c2_327, %c0_328, %c0_329] : memref<3x32x240xbf16, #tpu.memory_space<vmem>>, vector<1x32x240xbf16>
    %408 = vector.shape_cast %407 : vector<1x32x240xbf16> to vector<32x240xbf16>
    %cst_330 = arith.constant dense<0.000000e+00> : vector<8x240xf32>
    %409 = tpu.matmul %406, %408, %cst_330 {dimension_numbers = #tpu.dot_dimension_numbers<[1], [0], [0], [1], [0, 0, 1, 1], [], []>} : vector<8x32xbf16>, vector<32x240xbf16>, vector<8x240xf32> -> vector<8x240xf32>
    %410 = arith.addf %403, %409 : vector<8x240xf32>
    %411 = vector.broadcast %0 : vector<1x240xf32> to vector<8x240xf32>
    %412 = arith.addf %410, %411 : vector<8x240xf32>
    %cst_331 = arith.constant 0.000000e+00 : f32
    %413 = vector.broadcast %cst_331 : f32 to vector<8x240xf32>
    %414 = arith.cmpf ogt, %412, %413 : vector<8x240xf32>
    %cst_332 = arith.constant 0.00999999977 : f32
    %415 = vector.broadcast %cst_332 : f32 to vector<8x240xf32>
    %416 = arith.mulf %415, %412 : vector<8x240xf32>
    %417 = arith.select %414, %412, %416 : vector<8x240xi1>, vector<8x240xf32>
    %c13_333 = arith.constant 13 : index
    %c0_334 = arith.constant 0 : index
    %c0_335 = arith.constant 0 : index
    %418 = vector.load %arg19[%c13_333, %c0_334, %c0_335] : memref<15x8x240xf32, #tpu.memory_space<vmem>>, vector<1x8x240xf32>
    %419 = vector.shape_cast %418 : vector<1x8x240xf32> to vector<8x240xf32>
    %420 = vector.shape_cast %417 : vector<8x240xf32> to vector<1x8x240xf32>
    tpu.vector_store %arg19[%c13_333, %c0_334, %c0_335], %420 {strides = array<i32>} : memref<15x8x240xf32, #tpu.memory_space<vmem>>, vector<1x8x240xf32>,
    %c28_336 = arith.constant 28 : index
    %c0_337 = arith.constant 0 : index
    %c0_338 = arith.constant 0 : index
    %421 = vector.load %arg1[%c28_336, %c0_337, %c0_338] : memref<32x8x32xf32, #tpu.memory_space<vmem>>, vector<1x8x32xf32>
    %422 = vector.shape_cast %421 : vector<1x8x32xf32> to vector<8x32xf32>
    %423 = arith.truncf %422 : vector<8x32xf32> to vector<8x32xbf16>
    %c0_339 = arith.constant 0 : index
    %c0_340 = arith.constant 0 : index
    %c0_341 = arith.constant 0 : index
    %424 = vector.load %arg3[%c0_339, %c0_340, %c0_341] : memref<3x32x240xbf16, #tpu.memory_space<vmem>>, vector<1x32x240xbf16>
    %425 = vector.shape_cast %424 : vector<1x32x240xbf16> to vector<32x240xbf16>
    %cst_342 = arith.constant dense<0.000000e+00> : vector<8x240xf32>
    %426 = tpu.matmul %423, %425, %cst_342 {dimension_numbers = #tpu.dot_dimension_numbers<[1], [0], [0], [1], [0, 0, 1, 1], [], []>} : vector<8x32xbf16>, vector<32x240xbf16>, vector<8x240xf32> -> vector<8x240xf32>
    %c29 = arith.constant 29 : index
    %c0_343 = arith.constant 0 : index
    %c0_344 = arith.constant 0 : index
    %427 = vector.load %arg1[%c29, %c0_343, %c0_344] : memref<32x8x32xf32, #tpu.memory_space<vmem>>, vector<1x8x32xf32>
    %428 = vector.shape_cast %427 : vector<1x8x32xf32> to vector<8x32xf32>
    %429 = arith.truncf %428 : vector<8x32xf32> to vector<8x32xbf16>
    %c1_345 = arith.constant 1 : index
    %c0_346 = arith.constant 0 : index
    %c0_347 = arith.constant 0 : index
    %430 = vector.load %arg3[%c1_345, %c0_346, %c0_347] : memref<3x32x240xbf16, #tpu.memory_space<vmem>>, vector<1x32x240xbf16>
    %431 = vector.shape_cast %430 : vector<1x32x240xbf16> to vector<32x240xbf16>
    %cst_348 = arith.constant dense<0.000000e+00> : vector<8x240xf32>
    %432 = tpu.matmul %429, %431, %cst_348 {dimension_numbers = #tpu.dot_dimension_numbers<[1], [0], [0], [1], [0, 0, 1, 1], [], []>} : vector<8x32xbf16>, vector<32x240xbf16>, vector<8x240xf32> -> vector<8x240xf32>
    %433 = arith.addf %426, %432 : vector<8x240xf32>
    %c30 = arith.constant 30 : index
    %c0_349 = arith.constant 0 : index
    %c0_350 = arith.constant 0 : index
    %434 = vector.load %arg1[%c30, %c0_349, %c0_350] : memref<32x8x32xf32, #tpu.memory_space<vmem>>, vector<1x8x32xf32>
    %435 = vector.shape_cast %434 : vector<1x8x32xf32> to vector<8x32xf32>
    %436 = arith.truncf %435 : vector<8x32xf32> to vector<8x32xbf16>
    %c2_351 = arith.constant 2 : index
    %c0_352 = arith.constant 0 : index
    %c0_353 = arith.constant 0 : index
    %437 = vector.load %arg3[%c2_351, %c0_352, %c0_353] : memref<3x32x240xbf16, #tpu.memory_space<vmem>>, vector<1x32x240xbf16>
    %438 = vector.shape_cast %437 : vector<1x32x240xbf16> to vector<32x240xbf16>
    %cst_354 = arith.constant dense<0.000000e+00> : vector<8x240xf32>
    %439 = tpu.matmul %436, %438, %cst_354 {dimension_numbers = #tpu.dot_dimension_numbers<[1], [0], [0], [1], [0, 0, 1, 1], [], []>} : vector<8x32xbf16>, vector<32x240xbf16>, vector<8x240xf32> -> vector<8x240xf32>
    %440 = arith.addf %433, %439 : vector<8x240xf32>
    %441 = vector.broadcast %0 : vector<1x240xf32> to vector<8x240xf32>
    %442 = arith.addf %440, %441 : vector<8x240xf32>
    %cst_355 = arith.constant 0.000000e+00 : f32
    %443 = vector.broadcast %cst_355 : f32 to vector<8x240xf32>
    %444 = arith.cmpf ogt, %442, %443 : vector<8x240xf32>
    %cst_356 = arith.constant 0.00999999977 : f32
    %445 = vector.broadcast %cst_356 : f32 to vector<8x240xf32>
    %446 = arith.mulf %445, %442 : vector<8x240xf32>
    %447 = arith.select %444, %442, %446 : vector<8x240xi1>, vector<8x240xf32>
    %c14_357 = arith.constant 14 : index
    %c0_358 = arith.constant 0 : index
    %c0_359 = arith.constant 0 : index
    %448 = vector.load %arg19[%c14_357, %c0_358, %c0_359] : memref<15x8x240xf32, #tpu.memory_space<vmem>>, vector<1x8x240xf32>
    %449 = vector.shape_cast %448 : vector<1x8x240xf32> to vector<8x240xf32>
    %450 = vector.shape_cast %447 : vector<8x240xf32> to vector<1x8x240xf32>
    tpu.vector_store %arg19[%c14_357, %c0_358, %c0_359], %450 {strides = array<i32>} : memref<15x8x240xf32, #tpu.memory_space<vmem>>, vector<1x8x240xf32>,
    %c0_360 = arith.constant 0 : index
    %c0_361 = arith.constant 0 : index
    %451 = vector.load %arg6[%c0_360, %c0_361] : memref<1x224xf32, #tpu.memory_space<vmem>>, vector<1x224xf32>
    %c0_362 = arith.constant 0 : index
    %c0_363 = arith.constant 0 : index
    %c0_364 = arith.constant 0 : index
    %452 = vector.load %arg19[%c0_362, %c0_363, %c0_364] : memref<15x8x240xf32, #tpu.memory_space<vmem>>, vector<1x8x240xf32>
    %453 = vector.shape_cast %452 : vector<1x8x240xf32> to vector<8x240xf32>
    %454 = arith.truncf %453 : vector<8x240xf32> to vector<8x240xbf16>
    %c0_365 = arith.constant 0 : index
    %c0_366 = arith.constant 0 : index
    %c0_367 = arith.constant 0 : index
    %455 = vector.load %arg5[%c0_365, %c0_366, %c0_367] : memref<3x240x224xbf16, #tpu.memory_space<vmem>>, vector<1x240x224xbf16>
    %456 = vector.shape_cast %455 : vector<1x240x224xbf16> to vector<240x224xbf16>
    %cst_368 = arith.constant dense<0.000000e+00> : vector<8x224xf32>
    %457 = tpu.matmul %454, %456, %cst_368 {dimension_numbers = #tpu.dot_dimension_numbers<[1], [0], [0], [1], [0, 0, 1, 1], [], []>} : vector<8x240xbf16>, vector<240x224xbf16>, vector<8x224xf32> -> vector<8x224xf32>
    %c1_369 = arith.constant 1 : index
    %c0_370 = arith.constant 0 : index
    %c0_371 = arith.constant 0 : index
    %458 = vector.load %arg19[%c1_369, %c0_370, %c0_371] : memref<15x8x240xf32, #tpu.memory_space<vmem>>, vector<1x8x240xf32>
    %459 = vector.shape_cast %458 : vector<1x8x240xf32> to vector<8x240xf32>
    %460 = arith.truncf %459 : vector<8x240xf32> to vector<8x240xbf16>
    %c1_372 = arith.constant 1 : index
    %c0_373 = arith.constant 0 : index
    %c0_374 = arith.constant 0 : index
    %461 = vector.load %arg5[%c1_372, %c0_373, %c0_374] : memref<3x240x224xbf16, #tpu.memory_space<vmem>>, vector<1x240x224xbf16>
    %462 = vector.shape_cast %461 : vector<1x240x224xbf16> to vector<240x224xbf16>
    %cst_375 = arith.constant dense<0.000000e+00> : vector<8x224xf32>
    %463 = tpu.matmul %460, %462, %cst_375 {dimension_numbers = #tpu.dot_dimension_numbers<[1], [0], [0], [1], [0, 0, 1, 1], [], []>} : vector<8x240xbf16>, vector<240x224xbf16>, vector<8x224xf32> -> vector<8x224xf32>
    %464 = arith.addf %457, %463 : vector<8x224xf32>
    %c2_376 = arith.constant 2 : index
    %c0_377 = arith.constant 0 : index
    %c0_378 = arith.constant 0 : index
    %465 = vector.load %arg19[%c2_376, %c0_377, %c0_378] : memref<15x8x240xf32, #tpu.memory_space<vmem>>, vector<1x8x240xf32>
    %466 = vector.shape_cast %465 : vector<1x8x240xf32> to vector<8x240xf32>
    %467 = arith.truncf %466 : vector<8x240xf32> to vector<8x240xbf16>
    %c2_379 = arith.constant 2 : index
    %c0_380 = arith.constant 0 : index
    %c0_381 = arith.constant 0 : index
    %468 = vector.load %arg5[%c2_379, %c0_380, %c0_381] : memref<3x240x224xbf16, #tpu.memory_space<vmem>>, vector<1x240x224xbf16>
    %469 = vector.shape_cast %468 : vector<1x240x224xbf16> to vector<240x224xbf16>
    %cst_382 = arith.constant dense<0.000000e+00> : vector<8x224xf32>
    %470 = tpu.matmul %467, %469, %cst_382 {dimension_numbers = #tpu.dot_dimension_numbers<[1], [0], [0], [1], [0, 0, 1, 1], [], []>} : vector<8x240xbf16>, vector<240x224xbf16>, vector<8x224xf32> -> vector<8x224xf32>
    %471 = arith.addf %464, %470 : vector<8x224xf32>
    %472 = vector.broadcast %451 : vector<1x224xf32> to vector<8x224xf32>
    %473 = arith.addf %471, %472 : vector<8x224xf32>
    %cst_383 = arith.constant 0.000000e+00 : f32
    %474 = vector.broadcast %cst_383 : f32 to vector<8x224xf32>
    %475 = arith.cmpf ogt, %473, %474 : vector<8x224xf32>
    %cst_384 = arith.constant 0.00999999977 : f32
    %476 = vector.broadcast %cst_384 : f32 to vector<8x224xf32>
    %477 = arith.mulf %476, %473 : vector<8x224xf32>
    %478 = arith.select %475, %473, %477 : vector<8x224xi1>, vector<8x224xf32>
    %c0_385 = arith.constant 0 : index
    %c0_386 = arith.constant 0 : index
    %c0_387 = arith.constant 0 : index
    %479 = vector.load %arg20[%c0_385, %c0_386, %c0_387] : memref<7x8x224xf32, #tpu.memory_space<vmem>>, vector<1x8x224xf32>
    %480 = vector.shape_cast %479 : vector<1x8x224xf32> to vector<8x224xf32>
    %481 = vector.shape_cast %478 : vector<8x224xf32> to vector<1x8x224xf32>
    tpu.vector_store %arg20[%c0_385, %c0_386, %c0_387], %481 {strides = array<i32>} : memref<7x8x224xf32, #tpu.memory_space<vmem>>, vector<1x8x224xf32>,
    %c2_388 = arith.constant 2 : index
    %c0_389 = arith.constant 0 : index
    %c0_390 = arith.constant 0 : index
    %482 = vector.load %arg19[%c2_388, %c0_389, %c0_390] : memref<15x8x240xf32, #tpu.memory_space<vmem>>, vector<1x8x240xf32>
    %483 = vector.shape_cast %482 : vector<1x8x240xf32> to vector<8x240xf32>
    %484 = arith.truncf %483 : vector<8x240xf32> to vector<8x240xbf16>
    %c0_391 = arith.constant 0 : index
    %c0_392 = arith.constant 0 : index
    %c0_393 = arith.constant 0 : index
    %485 = vector.load %arg5[%c0_391, %c0_392, %c0_393] : memref<3x240x224xbf16, #tpu.memory_space<vmem>>, vector<1x240x224xbf16>
    %486 = vector.shape_cast %485 : vector<1x240x224xbf16> to vector<240x224xbf16>
    %cst_394 = arith.constant dense<0.000000e+00> : vector<8x224xf32>
    %487 = tpu.matmul %484, %486, %cst_394 {dimension_numbers = #tpu.dot_dimension_numbers<[1], [0], [0], [1], [0, 0, 1, 1], [], []>} : vector<8x240xbf16>, vector<240x224xbf16>, vector<8x224xf32> -> vector<8x224xf32>
    %c3_395 = arith.constant 3 : index
    %c0_396 = arith.constant 0 : index
    %c0_397 = arith.constant 0 : index
    %488 = vector.load %arg19[%c3_395, %c0_396, %c0_397] : memref<15x8x240xf32, #tpu.memory_space<vmem>>, vector<1x8x240xf32>
    %489 = vector.shape_cast %488 : vector<1x8x240xf32> to vector<8x240xf32>
    %490 = arith.truncf %489 : vector<8x240xf32> to vector<8x240xbf16>
    %c1_398 = arith.constant 1 : index
    %c0_399 = arith.constant 0 : index
    %c0_400 = arith.constant 0 : index
    %491 = vector.load %arg5[%c1_398, %c0_399, %c0_400] : memref<3x240x224xbf16, #tpu.memory_space<vmem>>, vector<1x240x224xbf16>
    %492 = vector.shape_cast %491 : vector<1x240x224xbf16> to vector<240x224xbf16>
    %cst_401 = arith.constant dense<0.000000e+00> : vector<8x224xf32>
    %493 = tpu.matmul %490, %492, %cst_401 {dimension_numbers = #tpu.dot_dimension_numbers<[1], [0], [0], [1], [0, 0, 1, 1], [], []>} : vector<8x240xbf16>, vector<240x224xbf16>, vector<8x224xf32> -> vector<8x224xf32>
    %494 = arith.addf %487, %493 : vector<8x224xf32>
    %c4_402 = arith.constant 4 : index
    %c0_403 = arith.constant 0 : index
    %c0_404 = arith.constant 0 : index
    %495 = vector.load %arg19[%c4_402, %c0_403, %c0_404] : memref<15x8x240xf32, #tpu.memory_space<vmem>>, vector<1x8x240xf32>
    %496 = vector.shape_cast %495 : vector<1x8x240xf32> to vector<8x240xf32>
    %497 = arith.truncf %496 : vector<8x240xf32> to vector<8x240xbf16>
    %c2_405 = arith.constant 2 : index
    %c0_406 = arith.constant 0 : index
    %c0_407 = arith.constant 0 : index
    %498 = vector.load %arg5[%c2_405, %c0_406, %c0_407] : memref<3x240x224xbf16, #tpu.memory_space<vmem>>, vector<1x240x224xbf16>
    %499 = vector.shape_cast %498 : vector<1x240x224xbf16> to vector<240x224xbf16>
    %cst_408 = arith.constant dense<0.000000e+00> : vector<8x224xf32>
    %500 = tpu.matmul %497, %499, %cst_408 {dimension_numbers = #tpu.dot_dimension_numbers<[1], [0], [0], [1], [0, 0, 1, 1], [], []>} : vector<8x240xbf16>, vector<240x224xbf16>, vector<8x224xf32> -> vector<8x224xf32>
    %501 = arith.addf %494, %500 : vector<8x224xf32>
    %502 = vector.broadcast %451 : vector<1x224xf32> to vector<8x224xf32>
    %503 = arith.addf %501, %502 : vector<8x224xf32>
    %cst_409 = arith.constant 0.000000e+00 : f32
    %504 = vector.broadcast %cst_409 : f32 to vector<8x224xf32>
    %505 = arith.cmpf ogt, %503, %504 : vector<8x224xf32>
    %cst_410 = arith.constant 0.00999999977 : f32
    %506 = vector.broadcast %cst_410 : f32 to vector<8x224xf32>
    %507 = arith.mulf %506, %503 : vector<8x224xf32>
    %508 = arith.select %505, %503, %507 : vector<8x224xi1>, vector<8x224xf32>
    %c1_411 = arith.constant 1 : index
    %c0_412 = arith.constant 0 : index
    %c0_413 = arith.constant 0 : index
    %509 = vector.load %arg20[%c1_411, %c0_412, %c0_413] : memref<7x8x224xf32, #tpu.memory_space<vmem>>, vector<1x8x224xf32>
    %510 = vector.shape_cast %509 : vector<1x8x224xf32> to vector<8x224xf32>
    %511 = vector.shape_cast %508 : vector<8x224xf32> to vector<1x8x224xf32>
    tpu.vector_store %arg20[%c1_411, %c0_412, %c0_413], %511 {strides = array<i32>} : memref<7x8x224xf32, #tpu.memory_space<vmem>>, vector<1x8x224xf32>,
    %c4_414 = arith.constant 4 : index
    %c0_415 = arith.constant 0 : index
    %c0_416 = arith.constant 0 : index
    %512 = vector.load %arg19[%c4_414, %c0_415, %c0_416] : memref<15x8x240xf32, #tpu.memory_space<vmem>>, vector<1x8x240xf32>
    %513 = vector.shape_cast %512 : vector<1x8x240xf32> to vector<8x240xf32>
    %514 = arith.truncf %513 : vector<8x240xf32> to vector<8x240xbf16>
    %c0_417 = arith.constant 0 : index
    %c0_418 = arith.constant 0 : index
    %c0_419 = arith.constant 0 : index
    %515 = vector.load %arg5[%c0_417, %c0_418, %c0_419] : memref<3x240x224xbf16, #tpu.memory_space<vmem>>, vector<1x240x224xbf16>
    %516 = vector.shape_cast %515 : vector<1x240x224xbf16> to vector<240x224xbf16>
    %cst_420 = arith.constant dense<0.000000e+00> : vector<8x224xf32>
    %517 = tpu.matmul %514, %516, %cst_420 {dimension_numbers = #tpu.dot_dimension_numbers<[1], [0], [0], [1], [0, 0, 1, 1], [], []>} : vector<8x240xbf16>, vector<240x224xbf16>, vector<8x224xf32> -> vector<8x224xf32>
    %c5_421 = arith.constant 5 : index
    %c0_422 = arith.constant 0 : index
    %c0_423 = arith.constant 0 : index
    %518 = vector.load %arg19[%c5_421, %c0_422, %c0_423] : memref<15x8x240xf32, #tpu.memory_space<vmem>>, vector<1x8x240xf32>
    %519 = vector.shape_cast %518 : vector<1x8x240xf32> to vector<8x240xf32>
    %520 = arith.truncf %519 : vector<8x240xf32> to vector<8x240xbf16>
    %c1_424 = arith.constant 1 : index
    %c0_425 = arith.constant 0 : index
    %c0_426 = arith.constant 0 : index
    %521 = vector.load %arg5[%c1_424, %c0_425, %c0_426] : memref<3x240x224xbf16, #tpu.memory_space<vmem>>, vector<1x240x224xbf16>
    %522 = vector.shape_cast %521 : vector<1x240x224xbf16> to vector<240x224xbf16>
    %cst_427 = arith.constant dense<0.000000e+00> : vector<8x224xf32>
    %523 = tpu.matmul %520, %522, %cst_427 {dimension_numbers = #tpu.dot_dimension_numbers<[1], [0], [0], [1], [0, 0, 1, 1], [], []>} : vector<8x240xbf16>, vector<240x224xbf16>, vector<8x224xf32> -> vector<8x224xf32>
    %524 = arith.addf %517, %523 : vector<8x224xf32>
    %c6_428 = arith.constant 6 : index
    %c0_429 = arith.constant 0 : index
    %c0_430 = arith.constant 0 : index
    %525 = vector.load %arg19[%c6_428, %c0_429, %c0_430] : memref<15x8x240xf32, #tpu.memory_space<vmem>>, vector<1x8x240xf32>
    %526 = vector.shape_cast %525 : vector<1x8x240xf32> to vector<8x240xf32>
    %527 = arith.truncf %526 : vector<8x240xf32> to vector<8x240xbf16>
    %c2_431 = arith.constant 2 : index
    %c0_432 = arith.constant 0 : index
    %c0_433 = arith.constant 0 : index
    %528 = vector.load %arg5[%c2_431, %c0_432, %c0_433] : memref<3x240x224xbf16, #tpu.memory_space<vmem>>, vector<1x240x224xbf16>
    %529 = vector.shape_cast %528 : vector<1x240x224xbf16> to vector<240x224xbf16>
    %cst_434 = arith.constant dense<0.000000e+00> : vector<8x224xf32>
    %530 = tpu.matmul %527, %529, %cst_434 {dimension_numbers = #tpu.dot_dimension_numbers<[1], [0], [0], [1], [0, 0, 1, 1], [], []>} : vector<8x240xbf16>, vector<240x224xbf16>, vector<8x224xf32> -> vector<8x224xf32>
    %531 = arith.addf %524, %530 : vector<8x224xf32>
    %532 = vector.broadcast %451 : vector<1x224xf32> to vector<8x224xf32>
    %533 = arith.addf %531, %532 : vector<8x224xf32>
    %cst_435 = arith.constant 0.000000e+00 : f32
    %534 = vector.broadcast %cst_435 : f32 to vector<8x224xf32>
    %535 = arith.cmpf ogt, %533, %534 : vector<8x224xf32>
    %cst_436 = arith.constant 0.00999999977 : f32
    %536 = vector.broadcast %cst_436 : f32 to vector<8x224xf32>
    %537 = arith.mulf %536, %533 : vector<8x224xf32>
    %538 = arith.select %535, %533, %537 : vector<8x224xi1>, vector<8x224xf32>
    %c2_437 = arith.constant 2 : index
    %c0_438 = arith.constant 0 : index
    %c0_439 = arith.constant 0 : index
    %539 = vector.load %arg20[%c2_437, %c0_438, %c0_439] : memref<7x8x224xf32, #tpu.memory_space<vmem>>, vector<1x8x224xf32>
    %540 = vector.shape_cast %539 : vector<1x8x224xf32> to vector<8x224xf32>
    %541 = vector.shape_cast %538 : vector<8x224xf32> to vector<1x8x224xf32>
    tpu.vector_store %arg20[%c2_437, %c0_438, %c0_439], %541 {strides = array<i32>} : memref<7x8x224xf32, #tpu.memory_space<vmem>>, vector<1x8x224xf32>,
    %c6_440 = arith.constant 6 : index
    %c0_441 = arith.constant 0 : index
    %c0_442 = arith.constant 0 : index
    %542 = vector.load %arg19[%c6_440, %c0_441, %c0_442] : memref<15x8x240xf32, #tpu.memory_space<vmem>>, vector<1x8x240xf32>
    %543 = vector.shape_cast %542 : vector<1x8x240xf32> to vector<8x240xf32>
    %544 = arith.truncf %543 : vector<8x240xf32> to vector<8x240xbf16>
    %c0_443 = arith.constant 0 : index
    %c0_444 = arith.constant 0 : index
    %c0_445 = arith.constant 0 : index
    %545 = vector.load %arg5[%c0_443, %c0_444, %c0_445] : memref<3x240x224xbf16, #tpu.memory_space<vmem>>, vector<1x240x224xbf16>
    %546 = vector.shape_cast %545 : vector<1x240x224xbf16> to vector<240x224xbf16>
    %cst_446 = arith.constant dense<0.000000e+00> : vector<8x224xf32>
    %547 = tpu.matmul %544, %546, %cst_446 {dimension_numbers = #tpu.dot_dimension_numbers<[1], [0], [0], [1], [0, 0, 1, 1], [], []>} : vector<8x240xbf16>, vector<240x224xbf16>, vector<8x224xf32> -> vector<8x224xf32>
    %c7_447 = arith.constant 7 : index
    %c0_448 = arith.constant 0 : index
    %c0_449 = arith.constant 0 : index
    %548 = vector.load %arg19[%c7_447, %c0_448, %c0_449] : memref<15x8x240xf32, #tpu.memory_space<vmem>>, vector<1x8x240xf32>
    %549 = vector.shape_cast %548 : vector<1x8x240xf32> to vector<8x240xf32>
    %550 = arith.truncf %549 : vector<8x240xf32> to vector<8x240xbf16>
    %c1_450 = arith.constant 1 : index
    %c0_451 = arith.constant 0 : index
    %c0_452 = arith.constant 0 : index
    %551 = vector.load %arg5[%c1_450, %c0_451, %c0_452] : memref<3x240x224xbf16, #tpu.memory_space<vmem>>, vector<1x240x224xbf16>
    %552 = vector.shape_cast %551 : vector<1x240x224xbf16> to vector<240x224xbf16>
    %cst_453 = arith.constant dense<0.000000e+00> : vector<8x224xf32>
    %553 = tpu.matmul %550, %552, %cst_453 {dimension_numbers = #tpu.dot_dimension_numbers<[1], [0], [0], [1], [0, 0, 1, 1], [], []>} : vector<8x240xbf16>, vector<240x224xbf16>, vector<8x224xf32> -> vector<8x224xf32>
    %554 = arith.addf %547, %553 : vector<8x224xf32>
    %c8_454 = arith.constant 8 : index
    %c0_455 = arith.constant 0 : index
    %c0_456 = arith.constant 0 : index
    %555 = vector.load %arg19[%c8_454, %c0_455, %c0_456] : memref<15x8x240xf32, #tpu.memory_space<vmem>>, vector<1x8x240xf32>
    %556 = vector.shape_cast %555 : vector<1x8x240xf32> to vector<8x240xf32>
    %557 = arith.truncf %556 : vector<8x240xf32> to vector<8x240xbf16>
    %c2_457 = arith.constant 2 : index
    %c0_458 = arith.constant 0 : index
    %c0_459 = arith.constant 0 : index
    %558 = vector.load %arg5[%c2_457, %c0_458, %c0_459] : memref<3x240x224xbf16, #tpu.memory_space<vmem>>, vector<1x240x224xbf16>
    %559 = vector.shape_cast %558 : vector<1x240x224xbf16> to vector<240x224xbf16>
    %cst_460 = arith.constant dense<0.000000e+00> : vector<8x224xf32>
    %560 = tpu.matmul %557, %559, %cst_460 {dimension_numbers = #tpu.dot_dimension_numbers<[1], [0], [0], [1], [0, 0, 1, 1], [], []>} : vector<8x240xbf16>, vector<240x224xbf16>, vector<8x224xf32> -> vector<8x224xf32>
    %561 = arith.addf %554, %560 : vector<8x224xf32>
    %562 = vector.broadcast %451 : vector<1x224xf32> to vector<8x224xf32>
    %563 = arith.addf %561, %562 : vector<8x224xf32>
    %cst_461 = arith.constant 0.000000e+00 : f32
    %564 = vector.broadcast %cst_461 : f32 to vector<8x224xf32>
    %565 = arith.cmpf ogt, %563, %564 : vector<8x224xf32>
    %cst_462 = arith.constant 0.00999999977 : f32
    %566 = vector.broadcast %cst_462 : f32 to vector<8x224xf32>
    %567 = arith.mulf %566, %563 : vector<8x224xf32>
    %568 = arith.select %565, %563, %567 : vector<8x224xi1>, vector<8x224xf32>
    %c3_463 = arith.constant 3 : index
    %c0_464 = arith.constant 0 : index
    %c0_465 = arith.constant 0 : index
    %569 = vector.load %arg20[%c3_463, %c0_464, %c0_465] : memref<7x8x224xf32, #tpu.memory_space<vmem>>, vector<1x8x224xf32>
    %570 = vector.shape_cast %569 : vector<1x8x224xf32> to vector<8x224xf32>
    %571 = vector.shape_cast %568 : vector<8x224xf32> to vector<1x8x224xf32>
    tpu.vector_store %arg20[%c3_463, %c0_464, %c0_465], %571 {strides = array<i32>} : memref<7x8x224xf32, #tpu.memory_space<vmem>>, vector<1x8x224xf32>,
    %c8_466 = arith.constant 8 : index
    %c0_467 = arith.constant 0 : index
    %c0_468 = arith.constant 0 : index
    %572 = vector.load %arg19[%c8_466, %c0_467, %c0_468] : memref<15x8x240xf32, #tpu.memory_space<vmem>>, vector<1x8x240xf32>
    %573 = vector.shape_cast %572 : vector<1x8x240xf32> to vector<8x240xf32>
    %574 = arith.truncf %573 : vector<8x240xf32> to vector<8x240xbf16>
    %c0_469 = arith.constant 0 : index
    %c0_470 = arith.constant 0 : index
    %c0_471 = arith.constant 0 : index
    %575 = vector.load %arg5[%c0_469, %c0_470, %c0_471] : memref<3x240x224xbf16, #tpu.memory_space<vmem>>, vector<1x240x224xbf16>
    %576 = vector.shape_cast %575 : vector<1x240x224xbf16> to vector<240x224xbf16>
    %cst_472 = arith.constant dense<0.000000e+00> : vector<8x224xf32>
    %577 = tpu.matmul %574, %576, %cst_472 {dimension_numbers = #tpu.dot_dimension_numbers<[1], [0], [0], [1], [0, 0, 1, 1], [], []>} : vector<8x240xbf16>, vector<240x224xbf16>, vector<8x224xf32> -> vector<8x224xf32>
    %c9_473 = arith.constant 9 : index
    %c0_474 = arith.constant 0 : index
    %c0_475 = arith.constant 0 : index
    %578 = vector.load %arg19[%c9_473, %c0_474, %c0_475] : memref<15x8x240xf32, #tpu.memory_space<vmem>>, vector<1x8x240xf32>
    %579 = vector.shape_cast %578 : vector<1x8x240xf32> to vector<8x240xf32>
    %580 = arith.truncf %579 : vector<8x240xf32> to vector<8x240xbf16>
    %c1_476 = arith.constant 1 : index
    %c0_477 = arith.constant 0 : index
    %c0_478 = arith.constant 0 : index
    %581 = vector.load %arg5[%c1_476, %c0_477, %c0_478] : memref<3x240x224xbf16, #tpu.memory_space<vmem>>, vector<1x240x224xbf16>
    %582 = vector.shape_cast %581 : vector<1x240x224xbf16> to vector<240x224xbf16>
    %cst_479 = arith.constant dense<0.000000e+00> : vector<8x224xf32>
    %583 = tpu.matmul %580, %582, %cst_479 {dimension_numbers = #tpu.dot_dimension_numbers<[1], [0], [0], [1], [0, 0, 1, 1], [], []>} : vector<8x240xbf16>, vector<240x224xbf16>, vector<8x224xf32> -> vector<8x224xf32>
    %584 = arith.addf %577, %583 : vector<8x224xf32>
    %c10_480 = arith.constant 10 : index
    %c0_481 = arith.constant 0 : index
    %c0_482 = arith.constant 0 : index
    %585 = vector.load %arg19[%c10_480, %c0_481, %c0_482] : memref<15x8x240xf32, #tpu.memory_space<vmem>>, vector<1x8x240xf32>
    %586 = vector.shape_cast %585 : vector<1x8x240xf32> to vector<8x240xf32>
    %587 = arith.truncf %586 : vector<8x240xf32> to vector<8x240xbf16>
    %c2_483 = arith.constant 2 : index
    %c0_484 = arith.constant 0 : index
    %c0_485 = arith.constant 0 : index
    %588 = vector.load %arg5[%c2_483, %c0_484, %c0_485] : memref<3x240x224xbf16, #tpu.memory_space<vmem>>, vector<1x240x224xbf16>
    %589 = vector.shape_cast %588 : vector<1x240x224xbf16> to vector<240x224xbf16>
    %cst_486 = arith.constant dense<0.000000e+00> : vector<8x224xf32>
    %590 = tpu.matmul %587, %589, %cst_486 {dimension_numbers = #tpu.dot_dimension_numbers<[1], [0], [0], [1], [0, 0, 1, 1], [], []>} : vector<8x240xbf16>, vector<240x224xbf16>, vector<8x224xf32> -> vector<8x224xf32>
    %591 = arith.addf %584, %590 : vector<8x224xf32>
    %592 = vector.broadcast %451 : vector<1x224xf32> to vector<8x224xf32>
    %593 = arith.addf %591, %592 : vector<8x224xf32>
    %cst_487 = arith.constant 0.000000e+00 : f32
    %594 = vector.broadcast %cst_487 : f32 to vector<8x224xf32>
    %595 = arith.cmpf ogt, %593, %594 : vector<8x224xf32>
    %cst_488 = arith.constant 0.00999999977 : f32
    %596 = vector.broadcast %cst_488 : f32 to vector<8x224xf32>
    %597 = arith.mulf %596, %593 : vector<8x224xf32>
    %598 = arith.select %595, %593, %597 : vector<8x224xi1>, vector<8x224xf32>
    %c4_489 = arith.constant 4 : index
    %c0_490 = arith.constant 0 : index
    %c0_491 = arith.constant 0 : index
    %599 = vector.load %arg20[%c4_489, %c0_490, %c0_491] : memref<7x8x224xf32, #tpu.memory_space<vmem>>, vector<1x8x224xf32>
    %600 = vector.shape_cast %599 : vector<1x8x224xf32> to vector<8x224xf32>
    %601 = vector.shape_cast %598 : vector<8x224xf32> to vector<1x8x224xf32>
    tpu.vector_store %arg20[%c4_489, %c0_490, %c0_491], %601 {strides = array<i32>} : memref<7x8x224xf32, #tpu.memory_space<vmem>>, vector<1x8x224xf32>,
    %c10_492 = arith.constant 10 : index
    %c0_493 = arith.constant 0 : index
    %c0_494 = arith.constant 0 : index
    %602 = vector.load %arg19[%c10_492, %c0_493, %c0_494] : memref<15x8x240xf32, #tpu.memory_space<vmem>>, vector<1x8x240xf32>
    %603 = vector.shape_cast %602 : vector<1x8x240xf32> to vector<8x240xf32>
    %604 = arith.truncf %603 : vector<8x240xf32> to vector<8x240xbf16>
    %c0_495 = arith.constant 0 : index
    %c0_496 = arith.constant 0 : index
    %c0_497 = arith.constant 0 : index
    %605 = vector.load %arg5[%c0_495, %c0_496, %c0_497] : memref<3x240x224xbf16, #tpu.memory_space<vmem>>, vector<1x240x224xbf16>
    %606 = vector.shape_cast %605 : vector<1x240x224xbf16> to vector<240x224xbf16>
    %cst_498 = arith.constant dense<0.000000e+00> : vector<8x224xf32>
    %607 = tpu.matmul %604, %606, %cst_498 {dimension_numbers = #tpu.dot_dimension_numbers<[1], [0], [0], [1], [0, 0, 1, 1], [], []>} : vector<8x240xbf16>, vector<240x224xbf16>, vector<8x224xf32> -> vector<8x224xf32>
    %c11_499 = arith.constant 11 : index
    %c0_500 = arith.constant 0 : index
    %c0_501 = arith.constant 0 : index
    %608 = vector.load %arg19[%c11_499, %c0_500, %c0_501] : memref<15x8x240xf32, #tpu.memory_space<vmem>>, vector<1x8x240xf32>
    %609 = vector.shape_cast %608 : vector<1x8x240xf32> to vector<8x240xf32>
    %610 = arith.truncf %609 : vector<8x240xf32> to vector<8x240xbf16>
    %c1_502 = arith.constant 1 : index
    %c0_503 = arith.constant 0 : index
    %c0_504 = arith.constant 0 : index
    %611 = vector.load %arg5[%c1_502, %c0_503, %c0_504] : memref<3x240x224xbf16, #tpu.memory_space<vmem>>, vector<1x240x224xbf16>
    %612 = vector.shape_cast %611 : vector<1x240x224xbf16> to vector<240x224xbf16>
    %cst_505 = arith.constant dense<0.000000e+00> : vector<8x224xf32>
    %613 = tpu.matmul %610, %612, %cst_505 {dimension_numbers = #tpu.dot_dimension_numbers<[1], [0], [0], [1], [0, 0, 1, 1], [], []>} : vector<8x240xbf16>, vector<240x224xbf16>, vector<8x224xf32> -> vector<8x224xf32>
    %614 = arith.addf %607, %613 : vector<8x224xf32>
    %c12_506 = arith.constant 12 : index
    %c0_507 = arith.constant 0 : index
    %c0_508 = arith.constant 0 : index
    %615 = vector.load %arg19[%c12_506, %c0_507, %c0_508] : memref<15x8x240xf32, #tpu.memory_space<vmem>>, vector<1x8x240xf32>
    %616 = vector.shape_cast %615 : vector<1x8x240xf32> to vector<8x240xf32>
    %617 = arith.truncf %616 : vector<8x240xf32> to vector<8x240xbf16>
    %c2_509 = arith.constant 2 : index
    %c0_510 = arith.constant 0 : index
    %c0_511 = arith.constant 0 : index
    %618 = vector.load %arg5[%c2_509, %c0_510, %c0_511] : memref<3x240x224xbf16, #tpu.memory_space<vmem>>, vector<1x240x224xbf16>
    %619 = vector.shape_cast %618 : vector<1x240x224xbf16> to vector<240x224xbf16>
    %cst_512 = arith.constant dense<0.000000e+00> : vector<8x224xf32>
    %620 = tpu.matmul %617, %619, %cst_512 {dimension_numbers = #tpu.dot_dimension_numbers<[1], [0], [0], [1], [0, 0, 1, 1], [], []>} : vector<8x240xbf16>, vector<240x224xbf16>, vector<8x224xf32> -> vector<8x224xf32>
    %621 = arith.addf %614, %620 : vector<8x224xf32>
    %622 = vector.broadcast %451 : vector<1x224xf32> to vector<8x224xf32>
    %623 = arith.addf %621, %622 : vector<8x224xf32>
    %cst_513 = arith.constant 0.000000e+00 : f32
    %624 = vector.broadcast %cst_513 : f32 to vector<8x224xf32>
    %625 = arith.cmpf ogt, %623, %624 : vector<8x224xf32>
    %cst_514 = arith.constant 0.00999999977 : f32
    %626 = vector.broadcast %cst_514 : f32 to vector<8x224xf32>
    %627 = arith.mulf %626, %623 : vector<8x224xf32>
    %628 = arith.select %625, %623, %627 : vector<8x224xi1>, vector<8x224xf32>
    %c5_515 = arith.constant 5 : index
    %c0_516 = arith.constant 0 : index
    %c0_517 = arith.constant 0 : index
    %629 = vector.load %arg20[%c5_515, %c0_516, %c0_517] : memref<7x8x224xf32, #tpu.memory_space<vmem>>, vector<1x8x224xf32>
    %630 = vector.shape_cast %629 : vector<1x8x224xf32> to vector<8x224xf32>
    %631 = vector.shape_cast %628 : vector<8x224xf32> to vector<1x8x224xf32>
    tpu.vector_store %arg20[%c5_515, %c0_516, %c0_517], %631 {strides = array<i32>} : memref<7x8x224xf32, #tpu.memory_space<vmem>>, vector<1x8x224xf32>,
    %c12_518 = arith.constant 12 : index
    %c0_519 = arith.constant 0 : index
    %c0_520 = arith.constant 0 : index
    %632 = vector.load %arg19[%c12_518, %c0_519, %c0_520] : memref<15x8x240xf32, #tpu.memory_space<vmem>>, vector<1x8x240xf32>
    %633 = vector.shape_cast %632 : vector<1x8x240xf32> to vector<8x240xf32>
    %634 = arith.truncf %633 : vector<8x240xf32> to vector<8x240xbf16>
    %c0_521 = arith.constant 0 : index
    %c0_522 = arith.constant 0 : index
    %c0_523 = arith.constant 0 : index
    %635 = vector.load %arg5[%c0_521, %c0_522, %c0_523] : memref<3x240x224xbf16, #tpu.memory_space<vmem>>, vector<1x240x224xbf16>
    %636 = vector.shape_cast %635 : vector<1x240x224xbf16> to vector<240x224xbf16>
    %cst_524 = arith.constant dense<0.000000e+00> : vector<8x224xf32>
    %637 = tpu.matmul %634, %636, %cst_524 {dimension_numbers = #tpu.dot_dimension_numbers<[1], [0], [0], [1], [0, 0, 1, 1], [], []>} : vector<8x240xbf16>, vector<240x224xbf16>, vector<8x224xf32> -> vector<8x224xf32>
    %c13_525 = arith.constant 13 : index
    %c0_526 = arith.constant 0 : index
    %c0_527 = arith.constant 0 : index
    %638 = vector.load %arg19[%c13_525, %c0_526, %c0_527] : memref<15x8x240xf32, #tpu.memory_space<vmem>>, vector<1x8x240xf32>
    %639 = vector.shape_cast %638 : vector<1x8x240xf32> to vector<8x240xf32>
    %640 = arith.truncf %639 : vector<8x240xf32> to vector<8x240xbf16>
    %c1_528 = arith.constant 1 : index
    %c0_529 = arith.constant 0 : index
    %c0_530 = arith.constant 0 : index
    %641 = vector.load %arg5[%c1_528, %c0_529, %c0_530] : memref<3x240x224xbf16, #tpu.memory_space<vmem>>, vector<1x240x224xbf16>
    %642 = vector.shape_cast %641 : vector<1x240x224xbf16> to vector<240x224xbf16>
    %cst_531 = arith.constant dense<0.000000e+00> : vector<8x224xf32>
    %643 = tpu.matmul %640, %642, %cst_531 {dimension_numbers = #tpu.dot_dimension_numbers<[1], [0], [0], [1], [0, 0, 1, 1], [], []>} : vector<8x240xbf16>, vector<240x224xbf16>, vector<8x224xf32> -> vector<8x224xf32>
    %644 = arith.addf %637, %643 : vector<8x224xf32>
    %c14_532 = arith.constant 14 : index
    %c0_533 = arith.constant 0 : index
    %c0_534 = arith.constant 0 : index
    %645 = vector.load %arg19[%c14_532, %c0_533, %c0_534] : memref<15x8x240xf32, #tpu.memory_space<vmem>>, vector<1x8x240xf32>
    %646 = vector.shape_cast %645 : vector<1x8x240xf32> to vector<8x240xf32>
    %647 = arith.truncf %646 : vector<8x240xf32> to vector<8x240xbf16>
    %c2_535 = arith.constant 2 : index
    %c0_536 = arith.constant 0 : index
    %c0_537 = arith.constant 0 : index
    %648 = vector.load %arg5[%c2_535, %c0_536, %c0_537] : memref<3x240x224xbf16, #tpu.memory_space<vmem>>, vector<1x240x224xbf16>
    %649 = vector.shape_cast %648 : vector<1x240x224xbf16> to vector<240x224xbf16>
    %cst_538 = arith.constant dense<0.000000e+00> : vector<8x224xf32>
    %650 = tpu.matmul %647, %649, %cst_538 {dimension_numbers = #tpu.dot_dimension_numbers<[1], [0], [0], [1], [0, 0, 1, 1], [], []>} : vector<8x240xbf16>, vector<240x224xbf16>, vector<8x224xf32> -> vector<8x224xf32>
    %651 = arith.addf %644, %650 : vector<8x224xf32>
    %652 = vector.broadcast %451 : vector<1x224xf32> to vector<8x224xf32>
    %653 = arith.addf %651, %652 : vector<8x224xf32>
    %cst_539 = arith.constant 0.000000e+00 : f32
    %654 = vector.broadcast %cst_539 : f32 to vector<8x224xf32>
    %655 = arith.cmpf ogt, %653, %654 : vector<8x224xf32>
    %cst_540 = arith.constant 0.00999999977 : f32
    %656 = vector.broadcast %cst_540 : f32 to vector<8x224xf32>
    %657 = arith.mulf %656, %653 : vector<8x224xf32>
    %658 = arith.select %655, %653, %657 : vector<8x224xi1>, vector<8x224xf32>
    %c6_541 = arith.constant 6 : index
    %c0_542 = arith.constant 0 : index
    %c0_543 = arith.constant 0 : index
    %659 = vector.load %arg20[%c6_541, %c0_542, %c0_543] : memref<7x8x224xf32, #tpu.memory_space<vmem>>, vector<1x8x224xf32>
    %660 = vector.shape_cast %659 : vector<1x8x224xf32> to vector<8x224xf32>
    %661 = vector.shape_cast %658 : vector<8x224xf32> to vector<1x8x224xf32>
    tpu.vector_store %arg20[%c6_541, %c0_542, %c0_543], %661 {strides = array<i32>} : memref<7x8x224xf32, #tpu.memory_space<vmem>>, vector<1x8x224xf32>,
    %c0_544 = arith.constant 0 : index
    %c0_545 = arith.constant 0 : index
    %662 = vector.load %arg8[%c0_544, %c0_545] : memref<1x192xf32, #tpu.memory_space<vmem>>, vector<1x192xf32>
    %c0_546 = arith.constant 0 : index
    %c0_547 = arith.constant 0 : index
    %c0_548 = arith.constant 0 : index
    %663 = vector.load %arg20[%c0_546, %c0_547, %c0_548] : memref<7x8x224xf32, #tpu.memory_space<vmem>>, vector<1x8x224xf32>
    %664 = vector.shape_cast %663 : vector<1x8x224xf32> to vector<8x224xf32>
    %665 = arith.truncf %664 : vector<8x224xf32> to vector<8x224xbf16>
    %c0_549 = arith.constant 0 : index
    %c0_550 = arith.constant 0 : index
    %c0_551 = arith.constant 0 : index
    %666 = vector.load %arg7[%c0_549, %c0_550, %c0_551] : memref<3x224x192xbf16, #tpu.memory_space<vmem>>, vector<1x224x192xbf16>
    %667 = vector.shape_cast %666 : vector<1x224x192xbf16> to vector<224x192xbf16>
    %cst_552 = arith.constant dense<0.000000e+00> : vector<8x192xf32>
    %668 = tpu.matmul %665, %667, %cst_552 {dimension_numbers = #tpu.dot_dimension_numbers<[1], [0], [0], [1], [0, 0, 1, 1], [], []>} : vector<8x224xbf16>, vector<224x192xbf16>, vector<8x192xf32> -> vector<8x192xf32>
    %c1_553 = arith.constant 1 : index
    %c0_554 = arith.constant 0 : index
    %c0_555 = arith.constant 0 : index
    %669 = vector.load %arg20[%c1_553, %c0_554, %c0_555] : memref<7x8x224xf32, #tpu.memory_space<vmem>>, vector<1x8x224xf32>
    %670 = vector.shape_cast %669 : vector<1x8x224xf32> to vector<8x224xf32>
    %671 = arith.truncf %670 : vector<8x224xf32> to vector<8x224xbf16>
    %c1_556 = arith.constant 1 : index
    %c0_557 = arith.constant 0 : index
    %c0_558 = arith.constant 0 : index
    %672 = vector.load %arg7[%c1_556, %c0_557, %c0_558] : memref<3x224x192xbf16, #tpu.memory_space<vmem>>, vector<1x224x192xbf16>
    %673 = vector.shape_cast %672 : vector<1x224x192xbf16> to vector<224x192xbf16>
    %cst_559 = arith.constant dense<0.000000e+00> : vector<8x192xf32>
    %674 = tpu.matmul %671, %673, %cst_559 {dimension_numbers = #tpu.dot_dimension_numbers<[1], [0], [0], [1], [0, 0, 1, 1], [], []>} : vector<8x224xbf16>, vector<224x192xbf16>, vector<8x192xf32> -> vector<8x192xf32>
    %675 = arith.addf %668, %674 : vector<8x192xf32>
    %c2_560 = arith.constant 2 : index
    %c0_561 = arith.constant 0 : index
    %c0_562 = arith.constant 0 : index
    %676 = vector.load %arg20[%c2_560, %c0_561, %c0_562] : memref<7x8x224xf32, #tpu.memory_space<vmem>>, vector<1x8x224xf32>
    %677 = vector.shape_cast %676 : vector<1x8x224xf32> to vector<8x224xf32>
    %678 = arith.truncf %677 : vector<8x224xf32> to vector<8x224xbf16>
    %c2_563 = arith.constant 2 : index
    %c0_564 = arith.constant 0 : index
    %c0_565 = arith.constant 0 : index
    %679 = vector.load %arg7[%c2_563, %c0_564, %c0_565] : memref<3x224x192xbf16, #tpu.memory_space<vmem>>, vector<1x224x192xbf16>
    %680 = vector.shape_cast %679 : vector<1x224x192xbf16> to vector<224x192xbf16>
    %cst_566 = arith.constant dense<0.000000e+00> : vector<8x192xf32>
    %681 = tpu.matmul %678, %680, %cst_566 {dimension_numbers = #tpu.dot_dimension_numbers<[1], [0], [0], [1], [0, 0, 1, 1], [], []>} : vector<8x224xbf16>, vector<224x192xbf16>, vector<8x192xf32> -> vector<8x192xf32>
    %682 = arith.addf %675, %681 : vector<8x192xf32>
    %683 = vector.broadcast %662 : vector<1x192xf32> to vector<8x192xf32>
    %684 = arith.addf %682, %683 : vector<8x192xf32>
    %cst_567 = arith.constant 0.000000e+00 : f32
    %685 = vector.broadcast %cst_567 : f32 to vector<8x192xf32>
    %686 = arith.cmpf ogt, %684, %685 : vector<8x192xf32>
    %cst_568 = arith.constant 0.00999999977 : f32
    %687 = vector.broadcast %cst_568 : f32 to vector<8x192xf32>
    %688 = arith.mulf %687, %684 : vector<8x192xf32>
    %689 = arith.select %686, %684, %688 : vector<8x192xi1>, vector<8x192xf32>
    %c0_569 = arith.constant 0 : index
    %c0_570 = arith.constant 0 : index
    %c0_571 = arith.constant 0 : index
    %690 = vector.load %arg21[%c0_569, %c0_570, %c0_571] : memref<3x8x192xf32, #tpu.memory_space<vmem>>, vector<1x8x192xf32>
    %691 = vector.shape_cast %690 : vector<1x8x192xf32> to vector<8x192xf32>
    %692 = vector.shape_cast %689 : vector<8x192xf32> to vector<1x8x192xf32>
    tpu.vector_store %arg21[%c0_569, %c0_570, %c0_571], %692 {strides = array<i32>} : memref<3x8x192xf32, #tpu.memory_space<vmem>>, vector<1x8x192xf32>,
    %c2_572 = arith.constant 2 : index
    %c0_573 = arith.constant 0 : index
    %c0_574 = arith.constant 0 : index
    %693 = vector.load %arg20[%c2_572, %c0_573, %c0_574] : memref<7x8x224xf32, #tpu.memory_space<vmem>>, vector<1x8x224xf32>
    %694 = vector.shape_cast %693 : vector<1x8x224xf32> to vector<8x224xf32>
    %695 = arith.truncf %694 : vector<8x224xf32> to vector<8x224xbf16>
    %c0_575 = arith.constant 0 : index
    %c0_576 = arith.constant 0 : index
    %c0_577 = arith.constant 0 : index
    %696 = vector.load %arg7[%c0_575, %c0_576, %c0_577] : memref<3x224x192xbf16, #tpu.memory_space<vmem>>, vector<1x224x192xbf16>
    %697 = vector.shape_cast %696 : vector<1x224x192xbf16> to vector<224x192xbf16>
    %cst_578 = arith.constant dense<0.000000e+00> : vector<8x192xf32>
    %698 = tpu.matmul %695, %697, %cst_578 {dimension_numbers = #tpu.dot_dimension_numbers<[1], [0], [0], [1], [0, 0, 1, 1], [], []>} : vector<8x224xbf16>, vector<224x192xbf16>, vector<8x192xf32> -> vector<8x192xf32>
    %c3_579 = arith.constant 3 : index
    %c0_580 = arith.constant 0 : index
    %c0_581 = arith.constant 0 : index
    %699 = vector.load %arg20[%c3_579, %c0_580, %c0_581] : memref<7x8x224xf32, #tpu.memory_space<vmem>>, vector<1x8x224xf32>
    %700 = vector.shape_cast %699 : vector<1x8x224xf32> to vector<8x224xf32>
    %701 = arith.truncf %700 : vector<8x224xf32> to vector<8x224xbf16>
    %c1_582 = arith.constant 1 : index
    %c0_583 = arith.constant 0 : index
    %c0_584 = arith.constant 0 : index
    %702 = vector.load %arg7[%c1_582, %c0_583, %c0_584] : memref<3x224x192xbf16, #tpu.memory_space<vmem>>, vector<1x224x192xbf16>
    %703 = vector.shape_cast %702 : vector<1x224x192xbf16> to vector<224x192xbf16>
    %cst_585 = arith.constant dense<0.000000e+00> : vector<8x192xf32>
    %704 = tpu.matmul %701, %703, %cst_585 {dimension_numbers = #tpu.dot_dimension_numbers<[1], [0], [0], [1], [0, 0, 1, 1], [], []>} : vector<8x224xbf16>, vector<224x192xbf16>, vector<8x192xf32> -> vector<8x192xf32>
    %705 = arith.addf %698, %704 : vector<8x192xf32>
    %c4_586 = arith.constant 4 : index
    %c0_587 = arith.constant 0 : index
    %c0_588 = arith.constant 0 : index
    %706 = vector.load %arg20[%c4_586, %c0_587, %c0_588] : memref<7x8x224xf32, #tpu.memory_space<vmem>>, vector<1x8x224xf32>
    %707 = vector.shape_cast %706 : vector<1x8x224xf32> to vector<8x224xf32>
    %708 = arith.truncf %707 : vector<8x224xf32> to vector<8x224xbf16>
    %c2_589 = arith.constant 2 : index
    %c0_590 = arith.constant 0 : index
    %c0_591 = arith.constant 0 : index
    %709 = vector.load %arg7[%c2_589, %c0_590, %c0_591] : memref<3x224x192xbf16, #tpu.memory_space<vmem>>, vector<1x224x192xbf16>
    %710 = vector.shape_cast %709 : vector<1x224x192xbf16> to vector<224x192xbf16>
    %cst_592 = arith.constant dense<0.000000e+00> : vector<8x192xf32>
    %711 = tpu.matmul %708, %710, %cst_592 {dimension_numbers = #tpu.dot_dimension_numbers<[1], [0], [0], [1], [0, 0, 1, 1], [], []>} : vector<8x224xbf16>, vector<224x192xbf16>, vector<8x192xf32> -> vector<8x192xf32>
    %712 = arith.addf %705, %711 : vector<8x192xf32>
    %713 = vector.broadcast %662 : vector<1x192xf32> to vector<8x192xf32>
    %714 = arith.addf %712, %713 : vector<8x192xf32>
    %cst_593 = arith.constant 0.000000e+00 : f32
    %715 = vector.broadcast %cst_593 : f32 to vector<8x192xf32>
    %716 = arith.cmpf ogt, %714, %715 : vector<8x192xf32>
    %cst_594 = arith.constant 0.00999999977 : f32
    %717 = vector.broadcast %cst_594 : f32 to vector<8x192xf32>
    %718 = arith.mulf %717, %714 : vector<8x192xf32>
    %719 = arith.select %716, %714, %718 : vector<8x192xi1>, vector<8x192xf32>
    %c1_595 = arith.constant 1 : index
    %c0_596 = arith.constant 0 : index
    %c0_597 = arith.constant 0 : index
    %720 = vector.load %arg21[%c1_595, %c0_596, %c0_597] : memref<3x8x192xf32, #tpu.memory_space<vmem>>, vector<1x8x192xf32>
    %721 = vector.shape_cast %720 : vector<1x8x192xf32> to vector<8x192xf32>
    %722 = vector.shape_cast %719 : vector<8x192xf32> to vector<1x8x192xf32>
    tpu.vector_store %arg21[%c1_595, %c0_596, %c0_597], %722 {strides = array<i32>} : memref<3x8x192xf32, #tpu.memory_space<vmem>>, vector<1x8x192xf32>,
    %c4_598 = arith.constant 4 : index
    %c0_599 = arith.constant 0 : index
    %c0_600 = arith.constant 0 : index
    %723 = vector.load %arg20[%c4_598, %c0_599, %c0_600] : memref<7x8x224xf32, #tpu.memory_space<vmem>>, vector<1x8x224xf32>
    %724 = vector.shape_cast %723 : vector<1x8x224xf32> to vector<8x224xf32>
    %725 = arith.truncf %724 : vector<8x224xf32> to vector<8x224xbf16>
    %c0_601 = arith.constant 0 : index
    %c0_602 = arith.constant 0 : index
    %c0_603 = arith.constant 0 : index
    %726 = vector.load %arg7[%c0_601, %c0_602, %c0_603] : memref<3x224x192xbf16, #tpu.memory_space<vmem>>, vector<1x224x192xbf16>
    %727 = vector.shape_cast %726 : vector<1x224x192xbf16> to vector<224x192xbf16>
    %cst_604 = arith.constant dense<0.000000e+00> : vector<8x192xf32>
    %728 = tpu.matmul %725, %727, %cst_604 {dimension_numbers = #tpu.dot_dimension_numbers<[1], [0], [0], [1], [0, 0, 1, 1], [], []>} : vector<8x224xbf16>, vector<224x192xbf16>, vector<8x192xf32> -> vector<8x192xf32>
    %c5_605 = arith.constant 5 : index
    %c0_606 = arith.constant 0 : index
    %c0_607 = arith.constant 0 : index
    %729 = vector.load %arg20[%c5_605, %c0_606, %c0_607] : memref<7x8x224xf32, #tpu.memory_space<vmem>>, vector<1x8x224xf32>
    %730 = vector.shape_cast %729 : vector<1x8x224xf32> to vector<8x224xf32>
    %731 = arith.truncf %730 : vector<8x224xf32> to vector<8x224xbf16>
    %c1_608 = arith.constant 1 : index
    %c0_609 = arith.constant 0 : index
    %c0_610 = arith.constant 0 : index
    %732 = vector.load %arg7[%c1_608, %c0_609, %c0_610] : memref<3x224x192xbf16, #tpu.memory_space<vmem>>, vector<1x224x192xbf16>
    %733 = vector.shape_cast %732 : vector<1x224x192xbf16> to vector<224x192xbf16>
    %cst_611 = arith.constant dense<0.000000e+00> : vector<8x192xf32>
    %734 = tpu.matmul %731, %733, %cst_611 {dimension_numbers = #tpu.dot_dimension_numbers<[1], [0], [0], [1], [0, 0, 1, 1], [], []>} : vector<8x224xbf16>, vector<224x192xbf16>, vector<8x192xf32> -> vector<8x192xf32>
    %735 = arith.addf %728, %734 : vector<8x192xf32>
    %c6_612 = arith.constant 6 : index
    %c0_613 = arith.constant 0 : index
    %c0_614 = arith.constant 0 : index
    %736 = vector.load %arg20[%c6_612, %c0_613, %c0_614] : memref<7x8x224xf32, #tpu.memory_space<vmem>>, vector<1x8x224xf32>
    %737 = vector.shape_cast %736 : vector<1x8x224xf32> to vector<8x224xf32>
    %738 = arith.truncf %737 : vector<8x224xf32> to vector<8x224xbf16>
    %c2_615 = arith.constant 2 : index
    %c0_616 = arith.constant 0 : index
    %c0_617 = arith.constant 0 : index
    %739 = vector.load %arg7[%c2_615, %c0_616, %c0_617] : memref<3x224x192xbf16, #tpu.memory_space<vmem>>, vector<1x224x192xbf16>
    %740 = vector.shape_cast %739 : vector<1x224x192xbf16> to vector<224x192xbf16>
    %cst_618 = arith.constant dense<0.000000e+00> : vector<8x192xf32>
    %741 = tpu.matmul %738, %740, %cst_618 {dimension_numbers = #tpu.dot_dimension_numbers<[1], [0], [0], [1], [0, 0, 1, 1], [], []>} : vector<8x224xbf16>, vector<224x192xbf16>, vector<8x192xf32> -> vector<8x192xf32>
    %742 = arith.addf %735, %741 : vector<8x192xf32>
    %743 = vector.broadcast %662 : vector<1x192xf32> to vector<8x192xf32>
    %744 = arith.addf %742, %743 : vector<8x192xf32>
    %cst_619 = arith.constant 0.000000e+00 : f32
    %745 = vector.broadcast %cst_619 : f32 to vector<8x192xf32>
    %746 = arith.cmpf ogt, %744, %745 : vector<8x192xf32>
    %cst_620 = arith.constant 0.00999999977 : f32
    %747 = vector.broadcast %cst_620 : f32 to vector<8x192xf32>
    %748 = arith.mulf %747, %744 : vector<8x192xf32>
    %749 = arith.select %746, %744, %748 : vector<8x192xi1>, vector<8x192xf32>
    %c2_621 = arith.constant 2 : index
    %c0_622 = arith.constant 0 : index
    %c0_623 = arith.constant 0 : index
    %750 = vector.load %arg21[%c2_621, %c0_622, %c0_623] : memref<3x8x192xf32, #tpu.memory_space<vmem>>, vector<1x8x192xf32>
    %751 = vector.shape_cast %750 : vector<1x8x192xf32> to vector<8x192xf32>
    %752 = vector.shape_cast %749 : vector<8x192xf32> to vector<1x8x192xf32>
    tpu.vector_store %arg21[%c2_621, %c0_622, %c0_623], %752 {strides = array<i32>} : memref<3x8x192xf32, #tpu.memory_space<vmem>>, vector<1x8x192xf32>,
    %c0_624 = arith.constant 0 : index
    %c0_625 = arith.constant 0 : index
    %753 = vector.load %arg10[%c0_624, %c0_625] : memref<1x128xf32, #tpu.memory_space<vmem>>, vector<1x128xf32>
    %c0_626 = arith.constant 0 : index
    %c0_627 = arith.constant 0 : index
    %c0_628 = arith.constant 0 : index
    %754 = vector.load %arg21[%c0_626, %c0_627, %c0_628] : memref<3x8x192xf32, #tpu.memory_space<vmem>>, vector<1x8x192xf32>
    %755 = vector.shape_cast %754 : vector<1x8x192xf32> to vector<8x192xf32>
    %756 = arith.truncf %755 : vector<8x192xf32> to vector<8x192xbf16>
    %c0_629 = arith.constant 0 : index
    %c0_630 = arith.constant 0 : index
    %c0_631 = arith.constant 0 : index
    %757 = vector.load %arg9[%c0_629, %c0_630, %c0_631] : memref<3x192x128xbf16, #tpu.memory_space<vmem>>, vector<1x192x128xbf16>
    %758 = vector.shape_cast %757 : vector<1x192x128xbf16> to vector<192x128xbf16>
    %cst_632 = arith.constant dense<0.000000e+00> : vector<8x128xf32>
    %759 = tpu.matmul %756, %758, %cst_632 {dimension_numbers = #tpu.dot_dimension_numbers<[1], [0], [0], [1], [0, 0, 1, 1], [], []>} : vector<8x192xbf16>, vector<192x128xbf16>, vector<8x128xf32> -> vector<8x128xf32>
    %c1_633 = arith.constant 1 : index
    %c0_634 = arith.constant 0 : index
    %c0_635 = arith.constant 0 : index
    %760 = vector.load %arg21[%c1_633, %c0_634, %c0_635] : memref<3x8x192xf32, #tpu.memory_space<vmem>>, vector<1x8x192xf32>
    %761 = vector.shape_cast %760 : vector<1x8x192xf32> to vector<8x192xf32>
    %762 = arith.truncf %761 : vector<8x192xf32> to vector<8x192xbf16>
    %c1_636 = arith.constant 1 : index
    %c0_637 = arith.constant 0 : index
    %c0_638 = arith.constant 0 : index
    %763 = vector.load %arg9[%c1_636, %c0_637, %c0_638] : memref<3x192x128xbf16, #tpu.memory_space<vmem>>, vector<1x192x128xbf16>
    %764 = vector.shape_cast %763 : vector<1x192x128xbf16> to vector<192x128xbf16>
    %cst_639 = arith.constant dense<0.000000e+00> : vector<8x128xf32>
    %765 = tpu.matmul %762, %764, %cst_639 {dimension_numbers = #tpu.dot_dimension_numbers<[1], [0], [0], [1], [0, 0, 1, 1], [], []>} : vector<8x192xbf16>, vector<192x128xbf16>, vector<8x128xf32> -> vector<8x128xf32>
    %766 = arith.addf %759, %765 : vector<8x128xf32>
    %c2_640 = arith.constant 2 : index
    %c0_641 = arith.constant 0 : index
    %c0_642 = arith.constant 0 : index
    %767 = vector.load %arg21[%c2_640, %c0_641, %c0_642] : memref<3x8x192xf32, #tpu.memory_space<vmem>>, vector<1x8x192xf32>
    %768 = vector.shape_cast %767 : vector<1x8x192xf32> to vector<8x192xf32>
    %769 = arith.truncf %768 : vector<8x192xf32> to vector<8x192xbf16>
    %c2_643 = arith.constant 2 : index
    %c0_644 = arith.constant 0 : index
    %c0_645 = arith.constant 0 : index
    %770 = vector.load %arg9[%c2_643, %c0_644, %c0_645] : memref<3x192x128xbf16, #tpu.memory_space<vmem>>, vector<1x192x128xbf16>
    %771 = vector.shape_cast %770 : vector<1x192x128xbf16> to vector<192x128xbf16>
    %cst_646 = arith.constant dense<0.000000e+00> : vector<8x128xf32>
    %772 = tpu.matmul %769, %771, %cst_646 {dimension_numbers = #tpu.dot_dimension_numbers<[1], [0], [0], [1], [0, 0, 1, 1], [], []>} : vector<8x192xbf16>, vector<192x128xbf16>, vector<8x128xf32> -> vector<8x128xf32>
    %773 = arith.addf %766, %772 : vector<8x128xf32>
    %774 = vector.broadcast %753 : vector<1x128xf32> to vector<8x128xf32>
    %775 = arith.addf %773, %774 : vector<8x128xf32>
    %cst_647 = arith.constant 0.000000e+00 : f32
    %776 = vector.broadcast %cst_647 : f32 to vector<8x128xf32>
    %777 = arith.cmpf ogt, %775, %776 : vector<8x128xf32>
    %cst_648 = arith.constant 0.00999999977 : f32
    %778 = vector.broadcast %cst_648 : f32 to vector<8x128xf32>
    %779 = arith.mulf %778, %775 : vector<8x128xf32>
    %780 = arith.select %777, %775, %779 : vector<8x128xi1>, vector<8x128xf32>
    %781 = arith.truncf %780 : vector<8x128xf32> to vector<8x128xbf16>
    %c0_649 = arith.constant 0 : index
    %c0_650 = arith.constant 0 : index
    %782 = vector.load %arg11[%c0_649, %c0_650] : memref<128x64xbf16, #tpu.memory_space<vmem>>, vector<128x64xbf16>
    %cst_651 = arith.constant dense<0.000000e+00> : vector<8x64xf32>
    %783 = tpu.matmul %781, %782, %cst_651 {dimension_numbers = #tpu.dot_dimension_numbers<[1], [0], [0], [1], [0, 0, 1, 1], [], []>} : vector<8x128xbf16>, vector<128x64xbf16>, vector<8x64xf32> -> vector<8x64xf32>
    %c0_652 = arith.constant 0 : index
    %c0_653 = arith.constant 0 : index
    %784 = vector.load %arg2[%c0_652, %c0_653] : memref<8x8xf32, #tpu.memory_space<vmem>>, vector<8x8xf32>
    %785 = arith.truncf %784 : vector<8x8xf32> to vector<8x8xbf16>
    %c0_654 = arith.constant 0 : index
    %c0_655 = arith.constant 0 : index
    %786 = vector.load %arg12[%c0_654, %c0_655] : memref<8x64xbf16, #tpu.memory_space<vmem>>, vector<8x64xbf16>
    %cst_656 = arith.constant dense<0.000000e+00> : vector<8x64xf32>
    %787 = tpu.matmul %785, %786, %cst_656 {dimension_numbers = #tpu.dot_dimension_numbers<[1], [0], [0], [1], [0, 0, 1, 1], [], []>} : vector<8x8xbf16>, vector<8x64xbf16>, vector<8x64xf32> -> vector<8x64xf32>
    %788 = arith.addf %783, %787 : vector<8x64xf32>
    %c0_657 = arith.constant 0 : index
    %c0_658 = arith.constant 0 : index
    %789 = vector.load %arg13[%c0_657, %c0_658] : memref<1x64xf32, #tpu.memory_space<vmem>>, vector<1x64xf32>
    %790 = vector.broadcast %789 : vector<1x64xf32> to vector<8x64xf32>
    %791 = arith.addf %788, %790 : vector<8x64xf32>
    %cst_659 = arith.constant 0.000000e+00 : f32
    %792 = vector.broadcast %cst_659 : f32 to vector<8x64xf32>
    %793 = arith.cmpf ogt, %791, %792 : vector<8x64xf32>
    %cst_660 = arith.constant 0.00999999977 : f32
    %794 = vector.broadcast %cst_660 : f32 to vector<8x64xf32>
    %795 = arith.mulf %794, %791 : vector<8x64xf32>
    %796 = arith.select %793, %791, %795 : vector<8x64xi1>, vector<8x64xf32>
    %797 = arith.truncf %796 : vector<8x64xf32> to vector<8x64xbf16>
    %c0_661 = arith.constant 0 : index
    %c0_662 = arith.constant 0 : index
    %798 = vector.load %arg14[%c0_661, %c0_662] : memref<64x32xbf16, #tpu.memory_space<vmem>>, vector<64x32xbf16>
    %cst_663 = arith.constant dense<0.000000e+00> : vector<8x32xf32>
    %799 = tpu.matmul %797, %798, %cst_663 {dimension_numbers = #tpu.dot_dimension_numbers<[1], [0], [0], [1], [0, 0, 1, 1], [], []>} : vector<8x64xbf16>, vector<64x32xbf16>, vector<8x32xf32> -> vector<8x32xf32>
    %c0_664 = arith.constant 0 : index
    %c0_665 = arith.constant 0 : index
    %800 = vector.load %arg15[%c0_664, %c0_665] : memref<1x32xf32, #tpu.memory_space<vmem>>, vector<1x32xf32>
    %801 = vector.broadcast %800 : vector<1x32xf32> to vector<8x32xf32>
    %802 = arith.addf %799, %801 : vector<8x32xf32>
    %cst_666 = arith.constant 0.000000e+00 : f32
    %803 = vector.broadcast %cst_666 : f32 to vector<8x32xf32>
    %804 = arith.cmpf ogt, %802, %803 : vector<8x32xf32>
    %cst_667 = arith.constant 0.00999999977 : f32
    %805 = vector.broadcast %cst_667 : f32 to vector<8x32xf32>
    %806 = arith.mulf %805, %802 : vector<8x32xf32>
    %807 = arith.select %804, %802, %806 : vector<8x32xi1>, vector<8x32xf32>
    %c0_668 = arith.constant 0 : index
    %c0_669 = arith.constant 0 : index
    %808 = vector.load %arg16[%c0_668, %c0_669] : memref<1x32xf32, #tpu.memory_space<vmem>>, vector<1x32xf32>
    %809 = vector.broadcast %808 : vector<1x32xf32> to vector<8x32xf32>
    %810 = arith.mulf %807, %809 : vector<8x32xf32>
    %cst_670 = arith.constant dense<0.000000e+00> : vector<8xf32>
    %811 = vector.multi_reduction <add>, %810, %cst_670 [1] : vector<8x32xf32> to vector<8xf32>
    %812 = vector.shape_cast %811 : vector<8xf32> to vector<8x1xf32>
    %c0_671 = arith.constant 0 : index
    %c0_672 = arith.constant 0 : index
    %813 = vector.load %arg17[%c0_671, %c0_672] : memref<1x1xf32, #tpu.memory_space<vmem>>, vector<1x1xf32>
    %814 = vector.broadcast %813 : vector<1x1xf32> to vector<8x1xf32>
    %815 = arith.addf %812, %814 : vector<8x1xf32>
    %c0_673 = arith.constant 0 : index
    %c0_674 = arith.constant 0 : index
    %816 = vector.load %arg18[%c0_673, %c0_674] : memref<8x1xf32, #tpu.memory_space<vmem>>, vector<8x1xf32>
    tpu.vector_store %arg18[%c0_673, %c0_674], %815 {strides = array<i32>} : memref<8x1xf32, #tpu.memory_space<vmem>>, vector<8x1xf32>,
    return
  }
  func.func @transform_0(%arg0: i32) -> (i32, i32, i32) {
    %c0_i32 = arith.constant 0 : i32
    %c0_i32_0 = arith.constant 0 : i32
    %c0_i32_1 = arith.constant 0 : i32
    return %c0_i32, %arg0, %c0_i32_0 : i32, i32, i32
  }
  func.func @transform_1(%arg0: i32) -> (i32, i32) {
    %c0_i32 = arith.constant 0 : i32
    %c0_i32_0 = arith.constant 0 : i32
    return %arg0, %c0_i32 : i32, i32
  }
  func.func @transform_2(%arg0: i32) -> (i32, i32, i32) {
    %c0_i32 = arith.constant 0 : i32
    %c0_i32_0 = arith.constant 0 : i32
    %c0_i32_1 = arith.constant 0 : i32
    %c0_i32_2 = arith.constant 0 : i32
    return %c0_i32, %c0_i32_0, %c0_i32_1 : i32, i32, i32
  }
  func.func @transform_3(%arg0: i32) -> (i32, i32) {
    %c0_i32 = arith.constant 0 : i32
    %c0_i32_0 = arith.constant 0 : i32
    %c0_i32_1 = arith.constant 0 : i32
    return %c0_i32, %c0_i32_0 : i32, i32
  }
  func.func @transform_4(%arg0: i32) -> (i32, i32, i32) {
    %c0_i32 = arith.constant 0 : i32
    %c0_i32_0 = arith.constant 0 : i32
    %c0_i32_1 = arith.constant 0 : i32
    %c0_i32_2 = arith.constant 0 : i32
    return %c0_i32, %c0_i32_0, %c0_i32_1 : i32, i32, i32
  }
  func.func @transform_5(%arg0: i32) -> (i32, i32) {
    %c0_i32 = arith.constant 0 : i32
    %c0_i32_0 = arith.constant 0 : i32
    %c0_i32_1 = arith.constant 0 : i32
    return %c0_i32, %c0_i32_0 : i32, i32
  }
  func.func @transform_6(%arg0: i32) -> (i32, i32, i32) {
    %c0_i32 = arith.constant 0 : i32
    %c0_i32_0 = arith.constant 0 : i32
    %c0_i32_1 = arith.constant 0 : i32
    %c0_i32_2 = arith.constant 0 : i32
    return %c0_i32, %c0_i32_0, %c0_i32_1 : i32, i32, i32
  }
  func.func @transform_7(%arg0: i32) -> (i32, i32) {
    %c0_i32 = arith.constant 0 : i32
    %c0_i32_0 = arith.constant 0 : i32
    %c0_i32_1 = arith.constant 0 : i32
    return %c0_i32, %c0_i32_0 : i32, i32
  }
  func.func @transform_8(%arg0: i32) -> (i32, i32, i32) {
    %c0_i32 = arith.constant 0 : i32
    %c0_i32_0 = arith.constant 0 : i32
    %c0_i32_1 = arith.constant 0 : i32
    %c0_i32_2 = arith.constant 0 : i32
    return %c0_i32, %c0_i32_0, %c0_i32_1 : i32, i32, i32
  }
  func.func @transform_9(%arg0: i32) -> (i32, i32) {
    %c0_i32 = arith.constant 0 : i32
    %c0_i32_0 = arith.constant 0 : i32
    %c0_i32_1 = arith.constant 0 : i32
    return %c0_i32, %c0_i32_0 : i32, i32
  }
  func.func @transform_10(%arg0: i32) -> (i32, i32) {
    %c0_i32 = arith.constant 0 : i32
    %c0_i32_0 = arith.constant 0 : i32
    %c0_i32_1 = arith.constant 0 : i32
    return %c0_i32, %c0_i32_0 : i32, i32
  }
  func.func @transform_11(%arg0: i32) -> (i32, i32) {
    %c0_i32 = arith.constant 0 : i32
    %c0_i32_0 = arith.constant 0 : i32
    %c0_i32_1 = arith.constant 0 : i32
    return %c0_i32, %c0_i32_0 : i32, i32
  }
  func.func @transform_12(%arg0: i32) -> (i32, i32) {
    %c0_i32 = arith.constant 0 : i32
    %c0_i32_0 = arith.constant 0 : i32
    %c0_i32_1 = arith.constant 0 : i32
    return %c0_i32, %c0_i32_0 : i32, i32
  }
  func.func @transform_13(%arg0: i32) -> (i32, i32) {
    %c0_i32 = arith.constant 0 : i32
    %c0_i32_0 = arith.constant 0 : i32
    %c0_i32_1 = arith.constant 0 : i32
    return %c0_i32, %c0_i32_0 : i32, i32
  }
  func.func @transform_14(%arg0: i32) -> (i32, i32) {
    %c0_i32 = arith.constant 0 : i32
    %c0_i32_0 = arith.constant 0 : i32
    %c0_i32_1 = arith.constant 0 : i32
    return %c0_i32, %c0_i32_0 : i32, i32
  }
  func.func @transform_15(%arg0: i32) -> (i32, i32) {
    %c0_i32 = arith.constant 0 : i32
    %c0_i32_0 = arith.constant 0 : i32
    %c0_i32_1 = arith.constant 0 : i32
    return %c0_i32, %c0_i32_0 : i32, i32
  }
  func.func @transform_16(%arg0: i32) -> (i32, i32) {
    %c0_i32 = arith.constant 0 : i32
    %c0_i32_0 = arith.constant 0 : i32
    %c0_i32_1 = arith.constant 0 : i32
    return %c0_i32, %c0_i32_0 : i32, i32
  }
  func.func @transform_17(%arg0: i32) -> (i32, i32) {
    %c0_i32 = arith.constant 0 : i32
    %c0_i32_0 = arith.constant 0 : i32
    return %arg0, %c0_i32 : i32, i32
  }
}

</mosaic_0001>

<llo_original>
// kernel: tile.19
$region0: #{tile.19}
  #allocation0 [shape = 's32[1]{0}', space=sflag, size = 0x4, scoped, tag = 'scoped memory for tile.19']
  %s0 = inlined_call_operand.vmem [shape: f32[16], index: 0, kind: input, shape index: {}]
  %s1 = inlined_call_operand.vmem [shape: f32[15,16], index: 1, kind: output, shape index: {}]
  // Predicated region
  $region2: #{tile.19} parent=0 // pred_check
    _
  $region3: #{tile.19} parent=0 // pred_check_branch
    %3 = sbr.rel (0) target = $region5
  $region4: #{tile.19} parent=0 // pred_region
    _
  $region5: #{tile.19} parent=0 // pred_fallthru
    _
  %v4 = vld [vmem:[%s0] ss:$0 sm:$0xff]
  %5 = vst [vmem:[%s1] sm:$0xff] %v4
  %s6 = scalar_lea.vmem %s1, 8
  %7 = vst [vmem:[%s6] sm:$0xff] %v4

// kernel: tile.20
$region0: #{tile.20}
  %s0 = inlined_call_operand.vmem [shape: f32[15,16], index: 0, kind: input, shape index: {}]
  %s1 = inlined_call_operand.vmem [shape: f32[1,240], index: 1, kind: output, shape index: {}]
  $region1: #{tile.20} parent=0
    #allocation0 [shape = 'u8[8192]{0}', space=vmem, size = 0x2000, scoped, tag = 'scoped mem for output reshape']
    %s2 = smov 3
    %v3 = vld [vmem:[%s0] ss:$8 sm:%s2]
    %vm4 = vcmask 130048
    %5 = vst.msk [vmem:[#allocation0] ss:$8 sm:$0x3] %vm4, %v3
    %s6 = scalar_lea.vmem %s0, 7
    %v7 = vld [vmem:[%s6] sm:$0x1]
    %8 = vrot.lane.b32.xlu0 %v7, 112
    %v9 = vpop.permute.xlu0 %8
    %vm10 = vcmask 1048448
    %11 = vst.msk [vmem:[#allocation0] sm:$0x1] %vm10, %v9
    %s12 = scalar_lea.vmem %s0, 6
    %s13 = smov 3
    %v14 = vld [vmem:[%s12] ss:$8 sm:%s13]
    %15 = vrot.lane.b32.xlu0 %v14, 96
    %v16 = vpop.permute.xlu0 %15
    %vm17 = vcmask 917248
    %18 = vst.msk [vmem:[#allocation0] ss:$8 sm:$0x3] %vm17, %v16
    %s19 = scalar_lea.vmem %s0, 5
    %s20 = smov 3
    %v21 = vld [vmem:[%s19] ss:$8 sm:%s20]
    %22 = vrot.lane.b32.xlu0 %v21, 80
    %v23 = vpop.permute.xlu0 %22
    %vm24 = vcmask 786048
    %25 = vst.msk [vmem:[#allocation0] ss:$8 sm:$0x3] %vm24, %v23
    %s26 = scalar_lea.vmem %s0, 4
    %s27 = smov 3
    %v28 = vld [vmem:[%s26] ss:$8 sm:%s27]
    %29 = vrot.lane.b32.xlu0 %v28, 64
    %v30 = vpop.permute.xlu0 %29
    %vm31 = vcmask 654848
    %32 = vst.msk [vmem:[#allocation0] ss:$8 sm:$0x3] %vm31, %v30
    %s33 = scalar_lea.vmem %s0, 3
    %s34 = smov 3
    %v35 = vld [vmem:[%s33] ss:$8 sm:%s34]
    %36 = vrot.lane.b32.xlu0 %v35, 48
    %v37 = vpop.permute.xlu0 %36
    %vm38 = vcmask 523648
    %39 = vst.msk [vmem:[#allocation0] ss:$8 sm:$0x3] %vm38, %v37
    %s40 = scalar_lea.vmem %s0, 2
    %s41 = smov 3
    %v42 = vld [vmem:[%s40] ss:$8 sm:%s41]
    %43 = vrot.lane.b32.xlu0 %v42, 32
    %v44 = vpop.permute.xlu0 %43
    %vm45 = vcmask 392448
    %46 = vst.msk [vmem:[#allocation0] ss:$8 sm:$0x3] %vm45, %v44
    %s47 = scalar_lea.vmem %s0, 1
    %s48 = smov 3
    %v49 = vld [vmem:[%s47] ss:$8 sm:%s48]
    %50 = vrot.lane.b32.xlu0 %v49, 16
    %v51 = vpop.permute.xlu0 %50
    %vm52 = vcmask 261248
    %53 = vst.msk [vmem:[#allocation0] ss:$8 sm:$0x3] %vm52, %v51
    %s55 = ssub.s32 2, 1
    %v56 = vld [vmem:[#allocation0] sm:%s55]
    %s58 = ssub.s32 2, 1
    %59 = vst [vmem:[%s1] sm:%s58] %v56
    %s60 = scalar_lea.vmem [#allocation0], 8
    %v61 = vld [vmem:[%s60] sm:%s55]
    %s63 = ssub.s32 2, 1
    %s64 = scalar_lea.vmem %s1, 1
    %65 = vst [vmem:[%s64] sm:%s63] %v61

// kernel: tile.24
$region0: #{tile.24}
  #allocation0 [shape = 's32[1]{0}', space=sflag, size = 0x4, scoped, tag = 'scoped memory for tile.24']
  %s0 = inlined_call_operand.vmem [shape: f32[32], index: 0, kind: input, shape index: {}]
  %s1 = inlined_call_operand.vmem [shape: f32[7,32], index: 1, kind: output, shape index: {}]
  // Predicated region
  $region2: #{tile.24} parent=0 // pred_check
    _
  $region3: #{tile.24} parent=0 // pred_check_branch
    %3 = sbr.rel (0) target = $region5
  $region4: #{tile.24} parent=0 // pred_region
    _
  $region5: #{tile.24} parent=0 // pred_fallthru
    _
  %v4 = vld [vmem:[%s0] ss:$0 sm:$0xff]
  %5 = vst [vmem:[%s1] sm:$0xff] %v4

// kernel: tile.25
$region0: #{tile.25}
  %s0 = inlined_call_operand.vmem [shape: f32[7,32], index: 0, kind: input, shape index: {}]
  %s1 = inlined_call_operand.vmem [shape: f32[1,224], index: 1, kind: output, shape index: {}]
  $region1: #{tile.25} parent=0
    #allocation0 [shape = 'u8[8192]{0}', space=vmem, size = 0x2000, scoped, tag = 'scoped mem for output reshape']
    %s2 = smov 3
    %v3 = vld [vmem:[%s0] ss:$4 sm:%s2]
    %vm4 = vcmask 261120
    %5 = vst.msk [vmem:[#allocation0] ss:$8 sm:$0x3] %vm4, %v3
    %s6 = scalar_lea.vmem %s0, 3
    %v7 = vld [vmem:[%s6] sm:$0x1]
    %8 = vrot.lane.b32.xlu0 %v7, 96
    %v9 = vpop.permute.xlu0 %8
    %vm10 = vcmask 1048320
    %11 = vst.msk [vmem:[#allocation0] sm:$0x1] %vm10, %v9
    %s12 = scalar_lea.vmem %s0, 2
    %s13 = smov 3
    %v14 = vld [vmem:[%s12] ss:$4 sm:%s13]
    %15 = vrot.lane.b32.xlu0 %v14, 64
    %v16 = vpop.permute.xlu0 %15
    %vm17 = vcmask 785920
    %18 = vst.msk [vmem:[#allocation0] ss:$8 sm:$0x3] %vm17, %v16
    %s19 = scalar_lea.vmem %s0, 1
    %s20 = smov 3
    %v21 = vld [vmem:[%s19] ss:$4 sm:%s20]
    %22 = vrot.lane.b32.xlu0 %v21, 32
    %v23 = vpop.permute.xlu0 %22
    %vm24 = vcmask 523520
    %25 = vst.msk [vmem:[#allocation0] ss:$8 sm:$0x3] %vm24, %v23
    %s27 = ssub.s32 2, 1
    %v28 = vld [vmem:[#allocation0] sm:%s27]
    %s30 = ssub.s32 2, 1
    %31 = vst [vmem:[%s1] sm:%s30] %v28
    %s32 = scalar_lea.vmem [#allocation0], 8
    %v33 = vld [vmem:[%s32] sm:%s27]
    %s35 = ssub.s32 2, 1
    %s36 = scalar_lea.vmem %s1, 1
    %37 = vst [vmem:[%s36] sm:%s35] %v33

// kernel: tile.29
$region0: #{tile.29}
  #allocation0 [shape = 's32[1]{0}', space=sflag, size = 0x4, scoped, tag = 'scoped memory for tile.29']
  %s0 = inlined_call_operand.vmem [shape: f32[64], index: 0, kind: input, shape index: {}]
  %s1 = inlined_call_operand.vmem [shape: f32[3,64], index: 1, kind: output, shape index: {}]
  // Predicated region
  $region2: #{tile.29} parent=0 // pred_check
    _
  $region3: #{tile.29} parent=0 // pred_check_branch
    %3 = sbr.rel (0) target = $region5
  $region4: #{tile.29} parent=0 // pred_region
    _
  $region5: #{tile.29} parent=0 // pred_fallthru
    _
  %v4 = vld [vmem:[%s0] ss:$0 sm:$0xff]
  %5 = vst [vmem:[%s1] sm:$0xf] %v4

// kernel: tile.30
$region0: #{tile.30}
  %s0 = inlined_call_operand.vmem [shape: f32[3,64], index: 0, kind: input, shape index: {}]
  %s1 = inlined_call_operand.vmem [shape: f32[1,192], index: 1, kind: output, shape index: {}]
  $region1: #{tile.30} parent=0
    #allocation0 [shape = 'u8[8192]{0}', space=vmem, size = 0x2000, scoped, tag = 'scoped mem for output reshape']
    #allocation1 [shape = 'u8[4096]{0}', space=vmem, size = 0x1000, scoped, tag = 'scoped mem for input reshape']
    %s3 = ssub.s32 16, 1
    %v4 = vld [vmem:[%s0] sm:%s3]
    %5 = vst [vmem:[#allocation1] sm:%s3] %v4
    %s6 = smov 3
    %v7 = vld [vmem:[#allocation1] ss:$2 sm:%s6]
    %vm8 = vcmask 523264
    %9 = vst.msk [vmem:[#allocation0] ss:$8 sm:$0x3] %vm8, %v7
    %s10 = scalar_lea.vmem [#allocation1], 1
    %v11 = vld [vmem:[%s10] sm:$0x1]
    %12 = vrot.lane.b32.xlu0 %v11, 64
    %v13 = vpop.permute.xlu0 %12
    %vm14 = vcmask 1048064
    %15 = vst.msk [vmem:[#allocation0] sm:$0x1] %vm14, %v13
    %s17 = ssub.s32 2, 1
    %v18 = vld [vmem:[#allocation0] sm:%s17]
    %s20 = ssub.s32 2, 1
    %21 = vst [vmem:[%s1] sm:%s20] %v18
    %s22 = scalar_lea.vmem [#allocation0], 8
    %v23 = vld [vmem:[%s22] sm:%s17]
    %s25 = ssub.s32 2, 1
    %s26 = scalar_lea.vmem %s1, 1
    %27 = vst [vmem:[%s26] sm:%s25] %v23

// kernel: discriminator_forward.1
$region0: #{discriminator_forward.1}
  #allocation0 [shape = 'u32[]', space=smem, size = 0x4, offset = 0x4, fixed_abs, tag = 'smem constant byte address 0x4 - core index']
  #allocation1 [shape = 'u32[72,128]{1,0:T(1,128)}', space=vmem, size = 0x9000, scoped, tag = 'internal scratch']
  #allocation2 [shape = 'f32[15,8,240]{2,1,0:T(8,128)}', space=vmem, size = 0x1e000, scoped, tag = 'scratch operand']
  #allocation3 [shape = 'f32[7,8,224]{2,1,0:T(8,128)}', space=vmem, size = 0xe000, scoped, tag = 'scratch operand']
  #allocation4 [shape = 'f32[3,8,192]{2,1,0:T(8,128)}', space=vmem, size = 0x6000, scoped, tag = 'scratch operand']
  #allocation5 [shape = 'f32[1,1]{1,0:T(1,128)S(1)}', space=vmem, size = 0x200, scoped, tag = 'scoped memory for discriminator_forward.1']
  %s0 = inlined_call_operand.vmem [shape: f32[32,8,32], index: 0, kind: input, shape index: {}]
  %s1 = inlined_call_operand.vmem [shape: f32[8,8], index: 1, kind: input, shape index: {}]
  %s2 = inlined_call_operand.vmem [shape: bf16[3,32,240], index: 2, kind: input, shape index: {}]
  %s3 = inlined_call_operand.vmem [shape: f32[1,240], index: 3, kind: input, shape index: {}]
  %s4 = inlined_call_operand.vmem [shape: bf16[3,240,224], index: 4, kind: input, shape index: {}]
  %s5 = inlined_call_operand.vmem [shape: f32[1,224], index: 5, kind: input, shape index: {}]
  %s6 = inlined_call_operand.vmem [shape: bf16[3,224,192], index: 6, kind: input, shape index: {}]
  %s7 = inlined_call_operand.vmem [shape: f32[1,192], index: 7, kind: input, shape index: {}]
  %s8 = inlined_call_operand.vmem [shape: bf16[3,192,128], index: 8, kind: input, shape index: {}]
  %s9 = inlined_call_operand.vmem [shape: f32[1,128], index: 9, kind: input, shape index: {}]
  %s10 = inlined_call_operand.vmem [shape: bf16[128,64], index: 10, kind: input, shape index: {}]
  %s11 = inlined_call_operand.vmem [shape: bf16[8,64], index: 11, kind: input, shape index: {}]
  %s12 = inlined_call_operand.vmem [shape: f32[1,64], index: 12, kind: input, shape index: {}]
  %s13 = inlined_call_operand.vmem [shape: bf16[64,32], index: 13, kind: input, shape index: {}]
  %s14 = inlined_call_operand.vmem [shape: f32[1,32], index: 14, kind: input, shape index: {}]
  %s15 = inlined_call_operand.vmem [shape: f32[1,32], index: 15, kind: input, shape index: {}]
  %s16 = inlined_call_operand.<no memory space> [shape: f32[1,1], index: 16, kind: input, shape index: {}]
  %s17 = inlined_call_operand.vmem [shape: f32[8,1], index: 17, kind: output, shape index: {}]
  %s18 = sld [smem:[#allocation0]]
  $region78: #{discriminator_forward.1} parent=0
    _
  %s20 = ssub.s32 1, %s18
  %s21 = scalar_select 0, %s20, %s18
  %v22 = vstv %s16
  %23 = vst [vmem:[#allocation5] sm:$0x1] %v22
  // Predicated region
  $region2: #{discriminator_forward.1} parent=0 // pred_check
    _
  $region3: #{discriminator_forward.1} parent=0 // pred_check_branch
    %25 = sbr.rel (0) target = $region5
  $region4: #{discriminator_forward.1} parent=0 // pred_region
    _
  $region5: #{discriminator_forward.1} parent=0 // pred_fallthru
    _
  // Predicated region
  $region6: #{discriminator_forward.1} parent=0 // pred_check
    _
  $region7: #{discriminator_forward.1} parent=0 // pred_check_branch
    %27 = sbr.rel (0) target = $region9
  $region8: #{discriminator_forward.1} parent=0 // pred_region
    _
  $region9: #{discriminator_forward.1} parent=0 // pred_fallthru
    _
  // Predicated region
  $region10: #{discriminator_forward.1} parent=0 // pred_check
    _
  $region11: #{discriminator_forward.1} parent=0 // pred_check_branch
    %29 = sbr.rel (0) target = $region13
  $region12: #{discriminator_forward.1} parent=0 // pred_region
    _
  $region13: #{discriminator_forward.1} parent=0 // pred_fallthru
    _
  // Predicated region
  $region14: #{discriminator_forward.1} parent=0 // pred_check
    _
  $region15: #{discriminator_forward.1} parent=0 // pred_check_branch
    %31 = sbr.rel (0) target = $region17
  $region16: #{discriminator_forward.1} parent=0 // pred_region
    _
  $region17: #{discriminator_forward.1} parent=0 // pred_fallthru
    _
  // Predicated region
  $region18: #{discriminator_forward.1} parent=0 // pred_check
    _
  $region19: #{discriminator_forward.1} parent=0 // pred_check_branch
    %33 = sbr.rel (0) target = $region21
  $region20: #{discriminator_forward.1} parent=0 // pred_region
    _
  $region21: #{discriminator_forward.1} parent=0 // pred_fallthru
    _
  // Predicated region
  $region22: #{discriminator_forward.1} parent=0 // pred_check
    _
  $region23: #{discriminator_forward.1} parent=0 // pred_check_branch
    %35 = sbr.rel (0) target = $region25
  $region24: #{discriminator_forward.1} parent=0 // pred_region
    _
  $region25: #{discriminator_forward.1} parent=0 // pred_fallthru
    _
  // Predicated region
  $region26: #{discriminator_forward.1} parent=0 // pred_check
    _
  $region27: #{discriminator_forward.1} parent=0 // pred_check_branch
    %37 = sbr.rel (0) target = $region29
  $region28: #{discriminator_forward.1} parent=0 // pred_region
    _
  $region29: #{discriminator_forward.1} parent=0 // pred_fallthru
    _
  // Predicated region
  $region30: #{discriminator_forward.1} parent=0 // pred_check
    _
  $region31: #{discriminator_forward.1} parent=0 // pred_check_branch
    %39 = sbr.rel (0) target = $region33
  $region32: #{discriminator_forward.1} parent=0 // pred_region
    _
  $region33: #{discriminator_forward.1} parent=0 // pred_fallthru
    _
  // Predicated region
  $region34: #{discriminator_forward.1} parent=0 // pred_check
    _
  $region35: #{discriminator_forward.1} parent=0 // pred_check_branch
    %41 = sbr.rel (0) target = $region37
  $region36: #{discriminator_forward.1} parent=0 // pred_region
    _
  $region37: #{discriminator_forward.1} parent=0 // pred_fallthru
    _
  // Predicated region
  $region38: #{discriminator_forward.1} parent=0 // pred_check
    _
  $region39: #{discriminator_forward.1} parent=0 // pred_check_branch
    %43 = sbr.rel (0) target = $region41
  $region40: #{discriminator_forward.1} parent=0 // pred_region
    _
  $region41: #{discriminator_forward.1} parent=0 // pred_fallthru
    _
  // Predicated region
  $region42: #{discriminator_forward.1} parent=0 // pred_check
    _
  $region43: #{discriminator_forward.1} parent=0 // pred_check_branch
    %45 = sbr.rel (0) target = $region45
  $region44: #{discriminator_forward.1} parent=0 // pred_region
    _
  $region45: #{discriminator_forward.1} parent=0 // pred_fallthru
    _
  // Predicated region
  $region46: #{discriminator_forward.1} parent=0 // pred_check
    _
  $region47: #{discriminator_forward.1} parent=0 // pred_check_branch
    %47 = sbr.rel (0) target = $region49
  $region48: #{discriminator_forward.1} parent=0 // pred_region
    _
  $region49: #{discriminator_forward.1} parent=0 // pred_fallthru
    _
  // Predicated region
  $region50: #{discriminator_forward.1} parent=0 // pred_check
    _
  $region51: #{discriminator_forward.1} parent=0 // pred_check_branch
    %49 = sbr.rel (0) target = $region53
  $region52: #{discriminator_forward.1} parent=0 // pred_region
    _
  $region53: #{discriminator_forward.1} parent=0 // pred_fallthru
    _
  // Predicated region
  $region54: #{discriminator_forward.1} parent=0 // pred_check
    _
  $region55: #{discriminator_forward.1} parent=0 // pred_check_branch
    %51 = sbr.rel (0) target = $region57
  $region56: #{discriminator_forward.1} parent=0 // pred_region
    _
  $region57: #{discriminator_forward.1} parent=0 // pred_fallthru
    _
  // Predicated region
  $region58: #{discriminator_forward.1} parent=0 // pred_check
    _
  $region59: #{discriminator_forward.1} parent=0 // pred_check_branch
    %53 = sbr.rel (0) target = $region61
  $region60: #{discriminator_forward.1} parent=0 // pred_region
    _
  $region61: #{discriminator_forward.1} parent=0 // pred_fallthru
    _
  // Predicated region
  $region62: #{discriminator_forward.1} parent=0 // pred_check
    _
  $region63: #{discriminator_forward.1} parent=0 // pred_check_branch
    %55 = sbr.rel (0) target = $region65
  $region64: #{discriminator_forward.1} parent=0 // pred_region
    _
  $region65: #{discriminator_forward.1} parent=0 // pred_fallthru
    _
  // Predicated region
  $region66: #{discriminator_forward.1} parent=0 // pred_check
    _
  $region67: #{discriminator_forward.1} parent=0 // pred_check_branch
    %57 = sbr.rel (0) target = $region69
  $region68: #{discriminator_forward.1} parent=0 // pred_region
    _
  $region69: #{discriminator_forward.1} parent=0 // pred_fallthru
    _
  %v59 = vld [vmem:[%s3] sm:$0x3]
  %v60 = vld [vmem:[%s0] sm:$0xff]
  %v61 = vpack.c.bf16 %v60, %v60
  %v62 = vld [vmem:[%s2] sm:$0xff]
  %v63 = vld [vmem:[%s2 + $0x8] sm:$0xff]
  %v64 = vld [vmem:[%s2 + $0x10] sm:$0xff]
  %v65 = vld [vmem:[%s2 + $0x18] sm:$0xff]
  %s66 = scalar_lea.vmem %s0, 8
  %v67 = vld [vmem:[%s66] sm:$0xff]
  %v68 = vpack.c.bf16 %v67, %v67
  %s69 = scalar_lea.vmem %s2, 32
  %v70 = vld [vmem:[%s69] sm:$0xff]
  %v71 = vld [vmem:[%s69 + $0x8] sm:$0xff]
  %v72 = vld [vmem:[%s69 + $0x10] sm:$0xff]
  %v73 = vld [vmem:[%s69 + $0x18] sm:$0xff]
  %v78 = vunpack.c.l.b16 %v70
  %v79 = vunpack.c.h.b16 %v70
  %v80 = vunpack.c.l.b16 %v71
  %v81 = vunpack.c.h.b16 %v71
  %v82 = vunpack.c.l.b16 %v72
  %v83 = vunpack.c.h.b16 %v72
  %v84 = vunpack.c.l.b16 %v73
  %v85 = vunpack.c.h.b16 %v73
  %v86 = vpack.c.b16 %v80, %v78
  %v87 = vpack.c.b16 %v81, %v79
  %v88 = vpack.c.b16 %v84, %v82
  %v89 = vpack.c.b16 %v85, %v83
  %vm94 = vcmask 261120
  %v96 = vsel %vm94, %v68, 0
  %98 = vmatpush.bf16.msra.mxu0 0
  %99 = vmatpush.bf16.msra.mxu0 0
  %100 = vmatpush.bf16.msra.mxu0 0
  %101 = vmatpush.bf16.msra.mxu0 0
  %102 = vmatpush.bf16.msra.mxu0 0
  %103 = vmatpush.bf16.msra.mxu0 0
  %104 = vmatpush.bf16.msra.mxu0 %v88
  %105 = vmatpush.bf16.msra.mxu0 %v86
  %106 = vmatmul.bf16.gmra.mxu0 %v96
  %v107 = vpop.f32.mrf.mxu0
  %v108 = vadd.f32 0.0, %v107
  %v109 = vpop.f32.mrf.mxu0
  %110 = vdwg.mxu0
  %111 = vmatpush.bf16.msra.mxu0 0
  %112 = vmatpush.bf16.msra.mxu0 0
  %113 = vmatpush.bf16.msra.mxu0 0
  %114 = vmatpush.bf16.msra.mxu0 0
  %115 = vmatpush.bf16.msra.mxu0 0
  %116 = vmatpush.bf16.msra.mxu0 0
  %117 = vmatpush.bf16.msra.mxu0 %v89
  %118 = vmatpush.bf16.msra.mxu0 %v87
  %119 = vmatmul.bf16.gmra.mxu0 %v96
  %v120 = vpop.f32.mrf.mxu0
  %v121 = vadd.f32 0.0, %v120
  %v122 = vpop.f32.mrf.mxu0
  %123 = vdwg.mxu0
  %v128 = vunpack.c.l.b16 %v62
  %v129 = vunpack.c.h.b16 %v62
  %v130 = vunpack.c.l.b16 %v63
  %v131 = vunpack.c.h.b16 %v63
  %v132 = vunpack.c.l.b16 %v64
  %v133 = vunpack.c.h.b16 %v64
  %v134 = vunpack.c.l.b16 %v65
  %v135 = vunpack.c.h.b16 %v65
  %v136 = vpack.c.b16 %v130, %v128
  %v137 = vpack.c.b16 %v131, %v129
  %v138 = vpack.c.b16 %v134, %v132
  %v139 = vpack.c.b16 %v135, %v133
  %v145 = vsel %vm94, %v61, 0
  %147 = vmatpush.bf16.msra.mxu0 0
  %148 = vmatpush.bf16.msra.mxu0 0
  %149 = vmatpush.bf16.msra.mxu0 0
  %150 = vmatpush.bf16.msra.mxu0 0
  %151 = vmatpush.bf16.msra.mxu0 0
  %152 = vmatpush.bf16.msra.mxu0 0
  %153 = vmatpush.bf16.msra.mxu0 %v138
  %154 = vmatpush.bf16.msra.mxu0 %v136
  %155 = vmatmul.bf16.gmra.mxu0 %v145
  %v156 = vpop.f32.mrf.mxu0
  %v157 = vadd.f32 %v108, %v156
  %v158 = vpop.f32.mrf.mxu0
  %159 = vdwg.mxu0
  %160 = vmatpush.bf16.msra.mxu0 0
  %161 = vmatpush.bf16.msra.mxu0 0
  %162 = vmatpush.bf16.msra.mxu0 0
  %163 = vmatpush.bf16.msra.mxu0 0
  %164 = vmatpush.bf16.msra.mxu0 0
  %165 = vmatpush.bf16.msra.mxu0 0
  %166 = vmatpush.bf16.msra.mxu0 %v139
  %167 = vmatpush.bf16.msra.mxu0 %v137
  %168 = vmatmul.bf16.gmra.mxu0 %v145
  %v169 = vpop.f32.mrf.mxu0
  %v170 = vadd.f32 %v121, %v169
  %v171 = vpop.f32.mrf.mxu0
  %172 = vdwg.mxu0
  %s173 = scalar_lea.vmem %s0, 16
  %v174 = vld [vmem:[%s173] sm:$0xff]
  %v175 = vpack.c.bf16 %v174, %v174
  %s176 = scalar_lea.vmem %s2, 64
  %v177 = vld [vmem:[%s176] sm:$0xff]
  %v178 = vld [vmem:[%s176 + $0x8] sm:$0xff]
  %v179 = vld [vmem:[%s176 + $0x10] sm:$0xff]
  %v180 = vld [vmem:[%s176 + $0x18] sm:$0xff]
  %v185 = vunpack.c.l.b16 %v177
  %v186 = vunpack.c.h.b16 %v177
  %v187 = vunpack.c.l.b16 %v178
  %v188 = vunpack.c.h.b16 %v178
  %v189 = vunpack.c.l.b16 %v179
  %v190 = vunpack.c.h.b16 %v179
  %v191 = vunpack.c.l.b16 %v180
  %v192 = vunpack.c.h.b16 %v180
  %v193 = vpack.c.b16 %v187, %v185
  %v194 = vpack.c.b16 %v188, %v186
  %v195 = vpack.c.b16 %v191, %v189
  %v196 = vpack.c.b16 %v192, %v190
  %v202 = vsel %vm94, %v175, 0
  %204 = vmatpush.bf16.msra.mxu0 0
  %205 = vmatpush.bf16.msra.mxu0 0
  %206 = vmatpush.bf16.msra.mxu0 0
  %207 = vmatpush.bf16.msra.mxu0 0
  %208 = vmatpush.bf16.msra.mxu0 0
  %209 = vmatpush.bf16.msra.mxu0 0
  %210 = vmatpush.bf16.msra.mxu0 %v195
  %211 = vmatpush.bf16.msra.mxu0 %v193
  %212 = vmatmul.bf16.gmra.mxu0 %v202
  %v213 = vpop.f32.mrf.mxu0
  %v214 = vadd.f32 0.0, %v213
  %v215 = vpop.f32.mrf.mxu0
  %216 = vdwg.mxu0
  %217 = vmatpush.bf16.msra.mxu0 0
  %218 = vmatpush.bf16.msra.mxu0 0
  %219 = vmatpush.bf16.msra.mxu0 0
  %220 = vmatpush.bf16.msra.mxu0 0
  %221 = vmatpush.bf16.msra.mxu0 0
  %222 = vmatpush.bf16.msra.mxu0 0
  %223 = vmatpush.bf16.msra.mxu0 %v196
  %224 = vmatpush.bf16.msra.mxu0 %v194
  %225 = vmatmul.bf16.gmra.mxu0 %v202
  %v226 = vpop.f32.mrf.mxu0
  %v227 = vadd.f32 0.0, %v226
  %v228 = vpop.f32.mrf.mxu0
  %229 = vdwg.mxu0
  %v230 = vadd.f32 %v157, %v214
  %v231 = vadd.f32 %v170, %v227
  %v233 = vperm.slane %v59, 0
  %v234 = vperm.slane %v59, 1
  %v237 = vadd.f32 %v230, %v233
  %v238 = vadd.f32 %v231, %v234
  %vm239 = vcmp.gt.f32.partialorder %v237, 0.0
  %vm240 = vcmp.gt.f32.partialorder %v238, 0.0
  %v241 = vmul.f32 %v237, 0.01
  %v242 = vmul.f32 %v238, 0.01
  %v243 = vsel %vm239, %v237, %v241
  %v244 = vsel %vm240, %v238, %v242
  %245 = vst [vmem:[#allocation2] sm:$0xff] %v243
  %vm246 = vcmask 916480
  %247 = vst.msk [vmem:[#allocation2 + $0x8] sm:$0xff] %vm246, %v244
  %v248 = vld [vmem:[%s173] sm:$0xff]
  %v249 = vpack.c.bf16 %v248, %v248
  %v250 = vld [vmem:[%s2] sm:$0xff]
  %v251 = vld [vmem:[%s2 + $0x8] sm:$0xff]
  %v252 = vld [vmem:[%s2 + $0x10] sm:$0xff]
  %v253 = vld [vmem:[%s2 + $0x18] sm:$0xff]
  %s254 = scalar_lea.vmem %s0, 24
  %v255 = vld [vmem:[%s254] sm:$0xff]
  %v256 = vpack.c.bf16 %v255, %v255
  %v257 = vld [vmem:[%s69] sm:$0xff]
  %v258 = vld [vmem:[%s69 + $0x8] sm:$0xff]
  %v259 = vld [vmem:[%s69 + $0x10] sm:$0xff]
  %v260 = vld [vmem:[%s69 + $0x18] sm:$0xff]
  %v265 = vunpack.c.l.b16 %v257
  %v266 = vunpack.c.h.b16 %v257
  %v267 = vunpack.c.l.b16 %v258
  %v268 = vunpack.c.h.b16 %v258
  %v269 = vunpack.c.l.b16 %v259
  %v270 = vunpack.c.h.b16 %v259
  %v271 = vunpack.c.l.b16 %v260
  %v272 = vunpack.c.h.b16 %v260
  %v273 = vpack.c.b16 %v267, %v265
  %v274 = vpack.c.b16 %v268, %v266
  %v275 = vpack.c.b16 %v271, %v269
  %v276 = vpack.c.b16 %v272, %v270
  %v282 = vsel %vm94, %v256, 0
  %284 = vmatpush.bf16.msra.mxu0 0
  %285 = vmatpush.bf16.msra.mxu0 0
  %286 = vmatpush.bf16.msra.mxu0 0
  %287 = vmatpush.bf16.msra.mxu0 0
  %288 = vmatpush.bf16.msra.mxu0 0
  %289 = vmatpush.bf16.msra.mxu0 0
  %290 = vmatpush.bf16.msra.mxu0 %v275
  %291 = vmatpush.bf16.msra.mxu0 %v273
  %292 = vmatmul.bf16.gmra.mxu0 %v282
  %v293 = vpop.f32.mrf.mxu0
  %v294 = vadd.f32 0.0, %v293
  %v295 = vpop.f32.mrf.mxu0
  %296 = vdwg.mxu0
  %297 = vmatpush.bf16.msra.mxu0 0
  %298 = vmatpush.bf16.msra.mxu0 0
  %299 = vmatpush.bf16.msra.mxu0 0
  %300 = vmatpush.bf16.msra.mxu0 0
  %301 = vmatpush.bf16.msra.mxu0 0
  %302 = vmatpush.bf16.msra.mxu0 0
  %303 = vmatpush.bf16.msra.mxu0 %v276
  %304 = vmatpush.bf16.msra.mxu0 %v274
  %305 = vmatmul.bf16.gmra.mxu0 %v282
  %v306 = vpop.f32.mrf.mxu0
  %v307 = vadd.f32 0.0, %v306
  %v308 = vpop.f32.mrf.mxu0
  %309 = vdwg.mxu0
  %v314 = vunpack.c.l.b16 %v250
  %v315 = vunpack.c.h.b16 %v250
  %v316 = vunpack.c.l.b16 %v251
  %v317 = vunpack.c.h.b16 %v251
  %v318 = vunpack.c.l.b16 %v252
  %v319 = vunpack.c.h.b16 %v252
  %v320 = vunpack.c.l.b16 %v253
  %v321 = vunpack.c.h.b16 %v253
  %v322 = vpack.c.b16 %v316, %v314
  %v323 = vpack.c.b16 %v317, %v315
  %v324 = vpack.c.b16 %v320, %v318
  %v325 = vpack.c.b16 %v321, %v319
  %v331 = vsel %vm94, %v249, 0
  %333 = vmatpush.bf16.msra.mxu0 0
  %334 = vmatpush.bf16.msra.mxu0 0
  %335 = vmatpush.bf16.msra.mxu0 0
  %336 = vmatpush.bf16.msra.mxu0 0
  %337 = vmatpush.bf16.msra.mxu0 0
  %338 = vmatpush.bf16.msra.mxu0 0
  %339 = vmatpush.bf16.msra.mxu0 %v324
  %340 = vmatpush.bf16.msra.mxu0 %v322
  %341 = vmatmul.bf16.gmra.mxu0 %v331
  %v342 = vpop.f32.mrf.mxu0
  %v343 = vadd.f32 %v294, %v342
  %v344 = vpop.f32.mrf.mxu0
  %345 = vdwg.mxu0
  %346 = vmatpush.bf16.msra.mxu0 0
  %347 = vmatpush.bf16.msra.mxu0 0
  %348 = vmatpush.bf16.msra.mxu0 0
  %349 = vmatpush.bf16.msra.mxu0 0
  %350 = vmatpush.bf16.msra.mxu0 0
  %351 = vmatpush.bf16.msra.mxu0 0
  %352 = vmatpush.bf16.msra.mxu0 %v325
  %353 = vmatpush.bf16.msra.mxu0 %v323
  %354 = vmatmul.bf16.gmra.mxu0 %v331
  %v355 = vpop.f32.mrf.mxu0
  %v356 = vadd.f32 %v307, %v355
  %v357 = vpop.f32.mrf.mxu0
  %358 = vdwg.mxu0
  %s359 = scalar_lea.vmem %s0, 32
  %v360 = vld [vmem:[%s359] sm:$0xff]
  %v361 = vpack.c.bf16 %v360, %v360
  %v362 = vld [vmem:[%s176] sm:$0xff]
  %v363 = vld [vmem:[%s176 + $0x8] sm:$0xff]
  %v364 = vld [vmem:[%s176 + $0x10] sm:$0xff]
  %v365 = vld [vmem:[%s176 + $0x18] sm:$0xff]
  %v370 = vunpack.c.l.b16 %v362
  %v371 = vunpack.c.h.b16 %v362
  %v372 = vunpack.c.l.b16 %v363
  %v373 = vunpack.c.h.b16 %v363
  %v374 = vunpack.c.l.b16 %v364
  %v375 = vunpack.c.h.b16 %v364
  %v376 = vunpack.c.l.b16 %v365
  %v377 = vunpack.c.h.b16 %v365
  %v378 = vpack.c.b16 %v372, %v370
  %v379 = vpack.c.b16 %v373, %v371
  %v380 = vpack.c.b16 %v376, %v374
  %v381 = vpack.c.b16 %v377, %v375
  %v387 = vsel %vm94, %v361, 0
  %389 = vmatpush.bf16.msra.mxu0 0
  %390 = vmatpush.bf16.msra.mxu0 0
  %391 = vmatpush.bf16.msra.mxu0 0
  %392 = vmatpush.bf16.msra.mxu0 0
  %393 = vmatpush.bf16.msra.mxu0 0
  %394 = vmatpush.bf16.msra.mxu0 0
  %395 = vmatpush.bf16.msra.mxu0 %v380
  %396 = vmatpush.bf16.msra.mxu0 %v378
  %397 = vmatmul.bf16.gmra.mxu0 %v387
  %v398 = vpop.f32.mrf.mxu0
  %v399 = vadd.f32 0.0, %v398
  %v400 = vpop.f32.mrf.mxu0
  %401 = vdwg.mxu0
  %402 = vmatpush.bf16.msra.mxu0 0
  %403 = vmatpush.bf16.msra.mxu0 0
  %404 = vmatpush.bf16.msra.mxu0 0
  %405 = vmatpush.bf16.msra.mxu0 0
  %406 = vmatpush.bf16.msra.mxu0 0
  %407 = vmatpush.bf16.msra.mxu0 0
  %408 = vmatpush.bf16.msra.mxu0 %v381
  %409 = vmatpush.bf16.msra.mxu0 %v379
  %410 = vmatmul.bf16.gmra.mxu0 %v387
  %v411 = vpop.f32.mrf.mxu0
  %v412 = vadd.f32 0.0, %v411
  %v413 = vpop.f32.mrf.mxu0
  %414 = vdwg.mxu0
  %v415 = vadd.f32 %v343, %v399
  %v416 = vadd.f32 %v356, %v412
  %v417 = vadd.f32 %v415, %v233
  %v418 = vadd.f32 %v416, %v234
  %vm419 = vcmp.gt.f32.partialorder %v417, 0.0
  %vm420 = vcmp.gt.f32.partialorder %v418, 0.0
  %v421 = vmul.f32 %v417, 0.01
  %v422 = vmul.f32 %v418, 0.01
  %v423 = vsel %vm419, %v417, %v421
  %v424 = vsel %vm420, %v418, %v422
  %s425 = scalar_lea.vmem [#allocation2], 16
  %426 = vst [vmem:[%s425] sm:$0xff] %v423
  %427 = vst.msk [vmem:[%s425 + $0x8] sm:$0xff] %vm246, %v424
  %v428 = vld [vmem:[%s359] sm:$0xff]
  %v429 = vpack.c.bf16 %v428, %v428
  %v430 = vld [vmem:[%s2] sm:$0xff]
  %v431 = vld [vmem:[%s2 + $0x8] sm:$0xff]
  %v432 = vld [vmem:[%s2 + $0x10] sm:$0xff]
  %v433 = vld [vmem:[%s2 + $0x18] sm:$0xff]
  %s434 = scalar_lea.vmem %s0, 40
  %v435 = vld [vmem:[%s434] sm:$0xff]
  %v436 = vpack.c.bf16 %v435, %v435
  %v437 = vld [vmem:[%s69] sm:$0xff]
  %v438 = vld [vmem:[%s69 + $0x8] sm:$0xff]
  %v439 = vld [vmem:[%s69 + $0x10] sm:$0xff]
  %v440 = vld [vmem:[%s69 + $0x18] sm:$0xff]
  %v445 = vunpack.c.l.b16 %v437
  %v446 = vunpack.c.h.b16 %v437
  %v447 = vunpack.c.l.b16 %v438
  %v448 = vunpack.c.h.b16 %v438
  %v449 = vunpack.c.l.b16 %v439
  %v450 = vunpack.c.h.b16 %v439
  %v451 = vunpack.c.l.b16 %v440
  %v452 = vunpack.c.h.b16 %v440
  %v453 = vpack.c.b16 %v447, %v445
  %v454 = vpack.c.b16 %v448, %v446
  %v455 = vpack.c.b16 %v451, %v449
  %v456 = vpack.c.b16 %v452, %v450
  %v462 = vsel %vm94, %v436, 0
  %464 = vmatpush.bf16.msra.mxu0 0
  %465 = vmatpush.bf16.msra.mxu0 0
  %466 = vmatpush.bf16.msra.mxu0 0
  %467 = vmatpush.bf16.msra.mxu0 0
  %468 = vmatpush.bf16.msra.mxu0 0
  %469 = vmatpush.bf16.msra.mxu0 0
  %470 = vmatpush.bf16.msra.mxu0 %v455
  %471 = vmatpush.bf16.msra.mxu0 %v453
  %472 = vmatmul.bf16.gmra.mxu0 %v462
  %v473 = vpop.f32.mrf.mxu0
  %v474 = vadd.f32 0.0, %v473
  %v475 = vpop.f32.mrf.mxu0
  %476 = vdwg.mxu0
  %477 = vmatpush.bf16.msra.mxu0 0
  %478 = vmatpush.bf16.msra.mxu0 0
  %479 = vmatpush.bf16.msra.mxu0 0
  %480 = vmatpush.bf16.msra.mxu0 0
  %481 = vmatpush.bf16.msra.mxu0 0
  %482 = vmatpush.bf16.msra.mxu0 0
  %483 = vmatpush.bf16.msra.mxu0 %v456
  %484 = vmatpush.bf16.msra.mxu0 %v454
  %485 = vmatmul.bf16.gmra.mxu0 %v462
  %v486 = vpop.f32.mrf.mxu0
  %v487 = vadd.f32 0.0, %v486
  %v488 = vpop.f32.mrf.mxu0
  %489 = vdwg.mxu0
  %v494 = vunpack.c.l.b16 %v430
  %v495 = vunpack.c.h.b16 %v430
  %v496 = vunpack.c.l.b16 %v431
  %v497 = vunpack.c.h.b16 %v431
  %v498 = vunpack.c.l.b16 %v432
  %v499 = vunpack.c.h.b16 %v432
  %v500 = vunpack.c.l.b16 %v433
  %v501 = vunpack.c.h.b16 %v433
  %v502 = vpack.c.b16 %v496, %v494
  %v503 = vpack.c.b16 %v497, %v495
  %v504 = vpack.c.b16 %v500, %v498
  %v505 = vpack.c.b16 %v501, %v499
  %v511 = vsel %vm94, %v429, 0
  %513 = vmatpush.bf16.msra.mxu0 0
  %514 = vmatpush.bf16.msra.mxu0 0
  %515 = vmatpush.bf16.msra.mxu0 0
  %516 = vmatpush.bf16.msra.mxu0 0
  %517 = vmatpush.bf16.msra.mxu0 0
  %518 = vmatpush.bf16.msra.mxu0 0
  %519 = vmatpush.bf16.msra.mxu0 %v504
  %520 = vmatpush.bf16.msra.mxu0 %v502
  %521 = vmatmul.bf16.gmra.mxu0 %v511
  %v522 = vpop.f32.mrf.mxu0
  %v523 = vadd.f32 %v474, %v522
  %v524 = vpop.f32.mrf.mxu0
  %525 = vdwg.mxu0
  %526 = vmatpush.bf16.msra.mxu0 0
  %527 = vmatpush.bf16.msra.mxu0 0
  %528 = vmatpush.bf16.msra.mxu0 0
  %529 = vmatpush.bf16.msra.mxu0 0
  %530 = vmatpush.bf16.msra.mxu0 0
  %531 = vmatpush.bf16.msra.mxu0 0
  %532 = vmatpush.bf16.msra.mxu0 %v505
  %533 = vmatpush.bf16.msra.mxu0 %v503
  %534 = vmatmul.bf16.gmra.mxu0 %v511
  %v535 = vpop.f32.mrf.mxu0
  %v536 = vadd.f32 %v487, %v535
  %v537 = vpop.f32.mrf.mxu0
  %538 = vdwg.mxu0
  %s539 = scalar_lea.vmem %s0, 48
  %v540 = vld [vmem:[%s539] sm:$0xff]
  %v541 = vpack.c.bf16 %v540, %v540
  %v542 = vld [vmem:[%s176] sm:$0xff]
  %v543 = vld [vmem:[%s176 + $0x8] sm:$0xff]
  %v544 = vld [vmem:[%s176 + $0x10] sm:$0xff]
  %v545 = vld [vmem:[%s176 + $0x18] sm:$0xff]
  %v550 = vunpack.c.l.b16 %v542
  %v551 = vunpack.c.h.b16 %v542
  %v552 = vunpack.c.l.b16 %v543
  %v553 = vunpack.c.h.b16 %v543
  %v554 = vunpack.c.l.b16 %v544
  %v555 = vunpack.c.h.b16 %v544
  %v556 = vunpack.c.l.b16 %v545
  %v557 = vunpack.c.h.b16 %v545
  %v558 = vpack.c.b16 %v552, %v550
  %v559 = vpack.c.b16 %v553, %v551
  %v560 = vpack.c.b16 %v556, %v554
  %v561 = vpack.c.b16 %v557, %v555
  %v567 = vsel %vm94, %v541, 0
  %569 = vmatpush.bf16.msra.mxu0 0
  %570 = vmatpush.bf16.msra.mxu0 0
  %571 = vmatpush.bf16.msra.mxu0 0
  %572 = vmatpush.bf16.msra.mxu0 0
  %573 = vmatpush.bf16.msra.mxu0 0
  %574 = vmatpush.bf16.msra.mxu0 0
  %575 = vmatpush.bf16.msra.mxu0 %v560
  %576 = vmatpush.bf16.msra.mxu0 %v558
  %577 = vmatmul.bf16.gmra.mxu0 %v567
  %v578 = vpop.f32.mrf.mxu0
  %v579 = vadd.f32 0.0, %v578
  %v580 = vpop.f32.mrf.mxu0
  %581 = vdwg.mxu0
  %582 = vmatpush.bf16.msra.mxu0 0
  %583 = vmatpush.bf16.msra.mxu0 0
  %584 = vmatpush.bf16.msra.mxu0 0
  %585 = vmatpush.bf16.msra.mxu0 0
  %586 = vmatpush.bf16.msra.mxu0 0
  %587 = vmatpush.bf16.msra.mxu0 0
  %588 = vmatpush.bf16.msra.mxu0 %v561
  %589 = vmatpush.bf16.msra.mxu0 %v559
  %590 = vmatmul.bf16.gmra.mxu0 %v567
  %v591 = vpop.f32.mrf.mxu0
  %v592 = vadd.f32 0.0, %v591
  %v593 = vpop.f32.mrf.mxu0
  %594 = vdwg.mxu0
  %v595 = vadd.f32 %v523, %v579
  %v596 = vadd.f32 %v536, %v592
  %v597 = vadd.f32 %v595, %v233
  %v598 = vadd.f32 %v596, %v234
  %vm599 = vcmp.gt.f32.partialorder %v597, 0.0
  %vm600 = vcmp.gt.f32.partialorder %v598, 0.0
  %v601 = vmul.f32 %v597, 0.01
  %v602 = vmul.f32 %v598, 0.01
  %v603 = vsel %vm599, %v597, %v601
  %v604 = vsel %vm600, %v598, %v602
  %s605 = scalar_lea.vmem [#allocation2], 32
  %606 = vst [vmem:[%s605] sm:$0xff] %v603
  %607 = vst.msk [vmem:[%s605 + $0x8] sm:$0xff] %vm246, %v604
  %v608 = vld [vmem:[%s539] sm:$0xff]
  %v609 = vpack.c.bf16 %v608, %v608
  %v610 = vld [vmem:[%s2] sm:$0xff]
  %v611 = vld [vmem:[%s2 + $0x8] sm:$0xff]
  %v612 = vld [vmem:[%s2 + $0x10] sm:$0xff]
  %v613 = vld [vmem:[%s2 + $0x18] sm:$0xff]
  %s614 = scalar_lea.vmem %s0, 56
  %v615 = vld [vmem:[%s614] sm:$0xff]
  %v616 = vpack.c.bf16 %v615, %v615
  %v617 = vld [vmem:[%s69] sm:$0xff]
  %v618 = vld [vmem:[%s69 + $0x8] sm:$0xff]
  %v619 = vld [vmem:[%s69 + $0x10] sm:$0xff]
  %v620 = vld [vmem:[%s69 + $0x18] sm:$0xff]
  %v625 = vunpack.c.l.b16 %v617
  %v626 = vunpack.c.h.b16 %v617
  %v627 = vunpack.c.l.b16 %v618
  %v628 = vunpack.c.h.b16 %v618
  %v629 = vunpack.c.l.b16 %v619
  %v630 = vunpack.c.h.b16 %v619
  %v631 = vunpack.c.l.b16 %v620
  %v632 = vunpack.c.h.b16 %v620
  %v633 = vpack.c.b16 %v627, %v625
  %v634 = vpack.c.b16 %v628, %v626
  %v635 = vpack.c.b16 %v631, %v629
  %v636 = vpack.c.b16 %v632, %v630
  %v642 = vsel %vm94, %v616, 0
  %644 = vmatpush.bf16.msra.mxu0 0
  %645 = vmatpush.bf16.msra.mxu0 0
  %646 = vmatpush.bf16.msra.mxu0 0
  %647 = vmatpush.bf16.msra.mxu0 0
  %648 = vmatpush.bf16.msra.mxu0 0
  %649 = vmatpush.bf16.msra.mxu0 0
  %650 = vmatpush.bf16.msra.mxu0 %v635
  %651 = vmatpush.bf16.msra.mxu0 %v633
  %652 = vmatmul.bf16.gmra.mxu0 %v642
  %v653 = vpop.f32.mrf.mxu0
  %v654 = vadd.f32 0.0, %v653
  %v655 = vpop.f32.mrf.mxu0
  %656 = vdwg.mxu0
  %657 = vmatpush.bf16.msra.mxu0 0
  %658 = vmatpush.bf16.msra.mxu0 0
  %659 = vmatpush.bf16.msra.mxu0 0
  %660 = vmatpush.bf16.msra.mxu0 0
  %661 = vmatpush.bf16.msra.mxu0 0
  %662 = vmatpush.bf16.msra.mxu0 0
  %663 = vmatpush.bf16.msra.mxu0 %v636
  %664 = vmatpush.bf16.msra.mxu0 %v634
  %665 = vmatmul.bf16.gmra.mxu0 %v642
  %v666 = vpop.f32.mrf.mxu0
  %v667 = vadd.f32 0.0, %v666
  %v668 = vpop.f32.mrf.mxu0
  %669 = vdwg.mxu0
  %v674 = vunpack.c.l.b16 %v610
  %v675 = vunpack.c.h.b16 %v610
  %v676 = vunpack.c.l.b16 %v611
  %v677 = vunpack.c.h.b16 %v611
  %v678 = vunpack.c.l.b16 %v612
  %v679 = vunpack.c.h.b16 %v612
  %v680 = vunpack.c.l.b16 %v613
  %v681 = vunpack.c.h.b16 %v613
  %v682 = vpack.c.b16 %v676, %v674
  %v683 = vpack.c.b16 %v677, %v675
  %v684 = vpack.c.b16 %v680, %v678
  %v685 = vpack.c.b16 %v681, %v679
  %v691 = vsel %vm94, %v609, 0
  %693 = vmatpush.bf16.msra.mxu0 0
  %694 = vmatpush.bf16.msra.mxu0 0
  %695 = vmatpush.bf16.msra.mxu0 0
  %696 = vmatpush.bf16.msra.mxu0 0
  %697 = vmatpush.bf16.msra.mxu0 0
  %698 = vmatpush.bf16.msra.mxu0 0
  %699 = vmatpush.bf16.msra.mxu0 %v684
  %700 = vmatpush.bf16.msra.mxu0 %v682
  %701 = vmatmul.bf16.gmra.mxu0 %v691
  %v702 = vpop.f32.mrf.mxu0
  %v703 = vadd.f32 %v654, %v702
  %v704 = vpop.f32.mrf.mxu0
  %705 = vdwg.mxu0
  %706 = vmatpush.bf16.msra.mxu0 0
  %707 = vmatpush.bf16.msra.mxu0 0
  %708 = vmatpush.bf16.msra.mxu0 0
  %709 = vmatpush.bf16.msra.mxu0 0
  %710 = vmatpush.bf16.msra.mxu0 0
  %711 = vmatpush.bf16.msra.mxu0 0
  %712 = vmatpush.bf16.msra.mxu0 %v685
  %713 = vmatpush.bf16.msra.mxu0 %v683
  %714 = vmatmul.bf16.gmra.mxu0 %v691
  %v715 = vpop.f32.mrf.mxu0
  %v716 = vadd.f32 %v667, %v715
  %v717 = vpop.f32.mrf.mxu0
  %718 = vdwg.mxu0
  %s719 = scalar_lea.vmem %s0, 64
  %v720 = vld [vmem:[%s719] sm:$0xff]
  %v721 = vpack.c.bf16 %v720, %v720
  %v722 = vld [vmem:[%s176] sm:$0xff]
  %v723 = vld [vmem:[%s176 + $0x8] sm:$0xff]
  %v724 = vld [vmem:[%s176 + $0x10] sm:$0xff]
  %v725 = vld [vmem:[%s176 + $0x18] sm:$0xff]
  %v730 = vunpack.c.l.b16 %v722
  %v731 = vunpack.c.h.b16 %v722
  %v732 = vunpack.c.l.b16 %v723
  %v733 = vunpack.c.h.b16 %v723
  %v734 = vunpack.c.l.b16 %v724
  %v735 = vunpack.c.h.b16 %v724
  %v736 = vunpack.c.l.b16 %v725
  %v737 = vunpack.c.h.b16 %v725
  %v738 = vpack.c.b16 %v732, %v730
  %v739 = vpack.c.b16 %v733, %v731
  %v740 = vpack.c.b16 %v736, %v734
  %v741 = vpack.c.b16 %v737, %v735
  %v747 = vsel %vm94, %v721, 0
  %749 = vmatpush.bf16.msra.mxu0 0
  %750 = vmatpush.bf16.msra.mxu0 0
  %751 = vmatpush.bf16.msra.mxu0 0
  %752 = vmatpush.bf16.msra.mxu0 0
  %753 = vmatpush.bf16.msra.mxu0 0
  %754 = vmatpush.bf16.msra.mxu0 0
  %755 = vmatpush.bf16.msra.mxu0 %v740
  %756 = vmatpush.bf16.msra.mxu0 %v738
  %757 = vmatmul.bf16.gmra.mxu0 %v747
  %v758 = vpop.f32.mrf.mxu0
  %v759 = vadd.f32 0.0, %v758
  %v760 = vpop.f32.mrf.mxu0
  %761 = vdwg.mxu0
  %762 = vmatpush.bf16.msra.mxu0 0
  %763 = vmatpush.bf16.msra.mxu0 0
  %764 = vmatpush.bf16.msra.mxu0 0
  %765 = vmatpush.bf16.msra.mxu0 0
  %766 = vmatpush.bf16.msra.mxu0 0
  %767 = vmatpush.bf16.msra.mxu0 0
  %768 = vmatpush.bf16.msra.mxu0 %v741
  %769 = vmatpush.bf16.msra.mxu0 %v739
  %770 = vmatmul.bf16.gmra.mxu0 %v747
  %v771 = vpop.f32.mrf.mxu0
  %v772 = vadd.f32 0.0, %v771
  %v773 = vpop.f32.mrf.mxu0
  %774 = vdwg.mxu0
  %v775 = vadd.f32 %v703, %v759
  %v776 = vadd.f32 %v716, %v772
  %v777 = vadd.f32 %v775, %v233
  %v778 = vadd.f32 %v776, %v234
  %vm779 = vcmp.gt.f32.partialorder %v777, 0.0
  %vm780 = vcmp.gt.f32.partialorder %v778, 0.0
  %v781 = vmul.f32 %v777, 0.01
  %v782 = vmul.f32 %v778, 0.01
  %v783 = vsel %vm779, %v777, %v781
  %v784 = vsel %vm780, %v778, %v782
  %s785 = scalar_lea.vmem [#allocation2], 48
  %786 = vst [vmem:[%s785] sm:$0xff] %v783
  %787 = vst.msk [vmem:[%s785 + $0x8] sm:$0xff] %vm246, %v784
  %v788 = vld [vmem:[%s719] sm:$0xff]
  %v789 = vpack.c.bf16 %v788, %v788
  %v790 = vld [vmem:[%s2] sm:$0xff]
  %v791 = vld [vmem:[%s2 + $0x8] sm:$0xff]
  %v792 = vld [vmem:[%s2 + $0x10] sm:$0xff]
  %v793 = vld [vmem:[%s2 + $0x18] sm:$0xff]
  %s794 = scalar_lea.vmem %s0, 72
  %v795 = vld [vmem:[%s794] sm:$0xff]
  %v796 = vpack.c.bf16 %v795, %v795
  %v797 = vld [vmem:[%s69] sm:$0xff]
  %v798 = vld [vmem:[%s69 + $0x8] sm:$0xff]
  %v799 = vld [vmem:[%s69 + $0x10] sm:$0xff]
  %v800 = vld [vmem:[%s69 + $0x18] sm:$0xff]
  %v805 = vunpack.c.l.b16 %v797
  %v806 = vunpack.c.h.b16 %v797
  %v807 = vunpack.c.l.b16 %v798
  %v808 = vunpack.c.h.b16 %v798
  %v809 = vunpack.c.l.b16 %v799
  %v810 = vunpack.c.h.b16 %v799
  %v811 = vunpack.c.l.b16 %v800
  %v812 = vunpack.c.h.b16 %v800
  %v813 = vpack.c.b16 %v807, %v805
  %v814 = vpack.c.b16 %v808, %v806
  %v815 = vpack.c.b16 %v811, %v809
  %v816 = vpack.c.b16 %v812, %v810
  %v822 = vsel %vm94, %v796, 0
  %824 = vmatpush.bf16.msra.mxu0 0
  %825 = vmatpush.bf16.msra.mxu0 0
  %826 = vmatpush.bf16.msra.mxu0 0
  %827 = vmatpush.bf16.msra.mxu0 0
  %828 = vmatpush.bf16.msra.mxu0 0
  %829 = vmatpush.bf16.msra.mxu0 0
  %830 = vmatpush.bf16.msra.mxu0 %v815
  %831 = vmatpush.bf16.msra.mxu0 %v813
  %832 = vmatmul.bf16.gmra.mxu0 %v822
  %v833 = vpop.f32.mrf.mxu0
  %v834 = vadd.f32 0.0, %v833
  %v835 = vpop.f32.mrf.mxu0
  %836 = vdwg.mxu0
  %837 = vmatpush.bf16.msra.mxu0 0
  %838 = vmatpush.bf16.msra.mxu0 0
  %839 = vmatpush.bf16.msra.mxu0 0
  %840 = vmatpush.bf16.msra.mxu0 0
  %841 = vmatpush.bf16.msra.mxu0 0
  %842 = vmatpush.bf16.msra.mxu0 0
  %843 = vmatpush.bf16.msra.mxu0 %v816
  %844 = vmatpush.bf16.msra.mxu0 %v814
  %845 = vmatmul.bf16.gmra.mxu0 %v822
  %v846 = vpop.f32.mrf.mxu0
  %v847 = vadd.f32 0.0, %v846
  %v848 = vpop.f32.mrf.mxu0
  %849 = vdwg.mxu0
  %v854 = vunpack.c.l.b16 %v790
  %v855 = vunpack.c.h.b16 %v790
  %v856 = vunpack.c.l.b16 %v791
  %v857 = vunpack.c.h.b16 %v791
  %v858 = vunpack.c.l.b16 %v792
  %v859 = vunpack.c.h.b16 %v792
  %v860 = vunpack.c.l.b16 %v793
  %v861 = vunpack.c.h.b16 %v793
  %v862 = vpack.c.b16 %v856, %v854
  %v863 = vpack.c.b16 %v857, %v855
  %v864 = vpack.c.b16 %v860, %v858
  %v865 = vpack.c.b16 %v861, %v859
  %v871 = vsel %vm94, %v789, 0
  %873 = vmatpush.bf16.msra.mxu0 0
  %874 = vmatpush.bf16.msra.mxu0 0
  %875 = vmatpush.bf16.msra.mxu0 0
  %876 = vmatpush.bf16.msra.mxu0 0
  %877 = vmatpush.bf16.msra.mxu0 0
  %878 = vmatpush.bf16.msra.mxu0 0
  %879 = vmatpush.bf16.msra.mxu0 %v864
  %880 = vmatpush.bf16.msra.mxu0 %v862
  %881 = vmatmul.bf16.gmra.mxu0 %v871
  %v882 = vpop.f32.mrf.mxu0
  %v883 = vadd.f32 %v834, %v882
  %v884 = vpop.f32.mrf.mxu0
  %885 = vdwg.mxu0
  %886 = vmatpush.bf16.msra.mxu0 0
  %887 = vmatpush.bf16.msra.mxu0 0
  %888 = vmatpush.bf16.msra.mxu0 0
  %889 = vmatpush.bf16.msra.mxu0 0
  %890 = vmatpush.bf16.msra.mxu0 0
  %891 = vmatpush.bf16.msra.mxu0 0
  %892 = vmatpush.bf16.msra.mxu0 %v865
  %893 = vmatpush.bf16.msra.mxu0 %v863
  %894 = vmatmul.bf16.gmra.mxu0 %v871
  %v895 = vpop.f32.mrf.mxu0
  %v896 = vadd.f32 %v847, %v895
  %v897 = vpop.f32.mrf.mxu0
  %898 = vdwg.mxu0
  %s899 = scalar_lea.vmem %s0, 80
  %v900 = vld [vmem:[%s899] sm:$0xff]
  %v901 = vpack.c.bf16 %v900, %v900
  %v902 = vld [vmem:[%s176] sm:$0xff]
  %v903 = vld [vmem:[%s176 + $0x8] sm:$0xff]
  %v904 = vld [vmem:[%s176 + $0x10] sm:$0xff]
  %v905 = vld [vmem:[%s176 + $0x18] sm:$0xff]
  %v910 = vunpack.c.l.b16 %v902
  %v911 = vunpack.c.h.b16 %v902
  %v912 = vunpack.c.l.b16 %v903
  %v913 = vunpack.c.h.b16 %v903
  %v914 = vunpack.c.l.b16 %v904
  %v915 = vunpack.c.h.b16 %v904
  %v916 = vunpack.c.l.b16 %v905
  %v917 = vunpack.c.h.b16 %v905
  %v918 = vpack.c.b16 %v912, %v910
  %v919 = vpack.c.b16 %v913, %v911
  %v920 = vpack.c.b16 %v916, %v914
  %v921 = vpack.c.b16 %v917, %v915
  %v927 = vsel %vm94, %v901, 0
  %929 = vmatpush.bf16.msra.mxu0 0
  %930 = vmatpush.bf16.msra.mxu0 0
  %931 = vmatpush.bf16.msra.mxu0 0
  %932 = vmatpush.bf16.msra.mxu0 0
  %933 = vmatpush.bf16.msra.mxu0 0
  %934 = vmatpush.bf16.msra.mxu0 0
  %935 = vmatpush.bf16.msra.mxu0 %v920
  %936 = vmatpush.bf16.msra.mxu0 %v918
  %937 = vmatmul.bf16.gmra.mxu0 %v927
  %v938 = vpop.f32.mrf.mxu0
  %v939 = vadd.f32 0.0, %v938
  %v940 = vpop.f32.mrf.mxu0
  %941 = vdwg.mxu0
  %942 = vmatpush.bf16.msra.mxu0 0
  %943 = vmatpush.bf16.msra.mxu0 0
  %944 = vmatpush.bf16.msra.mxu0 0
  %945 = vmatpush.bf16.msra.mxu0 0
  %946 = vmatpush.bf16.msra.mxu0 0
  %947 = vmatpush.bf16.msra.mxu0 0
  %948 = vmatpush.bf16.msra.mxu0 %v921
  %949 = vmatpush.bf16.msra.mxu0 %v919
  %950 = vmatmul.bf16.gmra.mxu0 %v927
  %v951 = vpop.f32.mrf.mxu0
  %v952 = vadd.f32 0.0, %v951
  %v953 = vpop.f32.mrf.mxu0
  %954 = vdwg.mxu0
  %v955 = vadd.f32 %v883, %v939
  %v956 = vadd.f32 %v896, %v952
  %v957 = vadd.f32 %v955, %v233
  %v958 = vadd.f32 %v956, %v234
  %vm959 = vcmp.gt.f32.partialorder %v957, 0.0
  %vm960 = vcmp.gt.f32.partialorder %v958, 0.0
  %v961 = vmul.f32 %v957, 0.01
  %v962 = vmul.f32 %v958, 0.01
  %v963 = vsel %vm959, %v957, %v961
  %v964 = vsel %vm960, %v958, %v962
  %s965 = scalar_lea.vmem [#allocation2], 64
  %966 = vst [vmem:[%s965] sm:$0xff] %v963
  %967 = vst.msk [vmem:[%s965 + $0x8] sm:$0xff] %vm246, %v964
  %v968 = vld [vmem:[%s899] sm:$0xff]
  %v969 = vpack.c.bf16 %v968, %v968
  %v970 = vld [vmem:[%s2] sm:$0xff]
  %v971 = vld [vmem:[%s2 + $0x8] sm:$0xff]
  %v972 = vld [vmem:[%s2 + $0x10] sm:$0xff]
  %v973 = vld [vmem:[%s2 + $0x18] sm:$0xff]
  %s974 = scalar_lea.vmem %s0, 88
  %v975 = vld [vmem:[%s974] sm:$0xff]
  %v976 = vpack.c.bf16 %v975, %v975
  %v977 = vld [vmem:[%s69] sm:$0xff]
  %v978 = vld [vmem:[%s69 + $0x8] sm:$0xff]
  %v979 = vld [vmem:[%s69 + $0x10] sm:$0xff]
  %v980 = vld [vmem:[%s69 + $0x18] sm:$0xff]
  %v985 = vunpack.c.l.b16 %v977
  %v986 = vunpack.c.h.b16 %v977
  %v987 = vunpack.c.l.b16 %v978
  %v988 = vunpack.c.h.b16 %v978
  %v989 = vunpack.c.l.b16 %v979
  %v990 = vunpack.c.h.b16 %v979
  %v991 = vunpack.c.l.b16 %v980
  %v992 = vunpack.c.h.b16 %v980
  %v993 = vpack.c.b16 %v987, %v985
  %v994 = vpack.c.b16 %v988, %v986
  %v995 = vpack.c.b16 %v991, %v989
  %v996 = vpack.c.b16 %v992, %v990
  %v1002 = vsel %vm94, %v976, 0
  %1004 = vmatpush.bf16.msra.mxu0 0
  %1005 = vmatpush.bf16.msra.mxu0 0
  %1006 = vmatpush.bf16.msra.mxu0 0
  %1007 = vmatpush.bf16.msra.mxu0 0
  %1008 = vmatpush.bf16.msra.mxu0 0
  %1009 = vmatpush.bf16.msra.mxu0 0
  %1010 = vmatpush.bf16.msra.mxu0 %v995
  %1011 = vmatpush.bf16.msra.mxu0 %v993
  %1012 = vmatmul.bf16.gmra.mxu0 %v1002
  %v1013 = vpop.f32.mrf.mxu0
  %v1014 = vadd.f32 0.0, %v1013
  %v1015 = vpop.f32.mrf.mxu0
  %1016 = vdwg.mxu0
  %1017 = vmatpush.bf16.msra.mxu0 0
  %1018 = vmatpush.bf16.msra.mxu0 0
  %1019 = vmatpush.bf16.msra.mxu0 0
  %1020 = vmatpush.bf16.msra.mxu0 0
  %1021 = vmatpush.bf16.msra.mxu0 0
  %1022 = vmatpush.bf16.msra.mxu0 0
  %1023 = vmatpush.bf16.msra.mxu0 %v996
  %1024 = vmatpush.bf16.msra.mxu0 %v994
  %1025 = vmatmul.bf16.gmra.mxu0 %v1002
  %v1026 = vpop.f32.mrf.mxu0
  %v1027 = vadd.f32 0.0, %v1026
  %v1028 = vpop.f32.mrf.mxu0
  %1029 = vdwg.mxu0
  %v1034 = vunpack.c.l.b16 %v970
  %v1035 = vunpack.c.h.b16 %v970
  %v1036 = vunpack.c.l.b16 %v971
  %v1037 = vunpack.c.h.b16 %v971
  %v1038 = vunpack.c.l.b16 %v972
  %v1039 = vunpack.c.h.b16 %v972
  %v1040 = vunpack.c.l.b16 %v973
  %v1041 = vunpack.c.h.b16 %v973
  %v1042 = vpack.c.b16 %v1036, %v1034
  %v1043 = vpack.c.b16 %v1037, %v1035
  %v1044 = vpack.c.b16 %v1040, %v1038
  %v1045 = vpack.c.b16 %v1041, %v1039
  %v1051 = vsel %vm94, %v969, 0
  %1053 = vmatpush.bf16.msra.mxu0 0
  %1054 = vmatpush.bf16.msra.mxu0 0
  %1055 = vmatpush.bf16.msra.mxu0 0
  %1056 = vmatpush.bf16.msra.mxu0 0
  %1057 = vmatpush.bf16.msra.mxu0 0
  %1058 = vmatpush.bf16.msra.mxu0 0
  %1059 = vmatpush.bf16.msra.mxu0 %v1044
  %1060 = vmatpush.bf16.msra.mxu0 %v1042
  %1061 = vmatmul.bf16.gmra.mxu0 %v1051
  %v1062 = vpop.f32.mrf.mxu0
  %v1063 = vadd.f32 %v1014, %v1062
  %v1064 = vpop.f32.mrf.mxu0
  %1065 = vdwg.mxu0
  %1066 = vmatpush.bf16.msra.mxu0 0
  %1067 = vmatpush.bf16.msra.mxu0 0
  %1068 = vmatpush.bf16.msra.mxu0 0
  %1069 = vmatpush.bf16.msra.mxu0 0
  %1070 = vmatpush.bf16.msra.mxu0 0
  %1071 = vmatpush.bf16.msra.mxu0 0
  %1072 = vmatpush.bf16.msra.mxu0 %v1045
  %1073 = vmatpush.bf16.msra.mxu0 %v1043
  %1074 = vmatmul.bf16.gmra.mxu0 %v1051
  %v1075 = vpop.f32.mrf.mxu0
  %v1076 = vadd.f32 %v1027, %v1075
  %v1077 = vpop.f32.mrf.mxu0
  %1078 = vdwg.mxu0
  %s1079 = scalar_lea.vmem %s0, 96
  %v1080 = vld [vmem:[%s1079] sm:$0xff]
  %v1081 = vpack.c.bf16 %v1080, %v1080
  %v1082 = vld [vmem:[%s176] sm:$0xff]
  %v1083 = vld [vmem:[%s176 + $0x8] sm:$0xff]
  %v1084 = vld [vmem:[%s176 + $0x10] sm:$0xff]
  %v1085 = vld [vmem:[%s176 + $0x18] sm:$0xff]
  %v1090 = vunpack.c.l.b16 %v1082
  %v1091 = vunpack.c.h.b16 %v1082
  %v1092 = vunpack.c.l.b16 %v1083
  %v1093 = vunpack.c.h.b16 %v1083
  %v1094 = vunpack.c.l.b16 %v1084
  %v1095 = vunpack.c.h.b16 %v1084
  %v1096 = vunpack.c.l.b16 %v1085
  %v1097 = vunpack.c.h.b16 %v1085
  %v1098 = vpack.c.b16 %v1092, %v1090
  %v1099 = vpack.c.b16 %v1093, %v1091
  %v1100 = vpack.c.b16 %v1096, %v1094
  %v1101 = vpack.c.b16 %v1097, %v1095
  %v1107 = vsel %vm94, %v1081, 0
  %1109 = vmatpush.bf16.msra.mxu0 0
  %1110 = vmatpush.bf16.msra.mxu0 0
  %1111 = vmatpush.bf16.msra.mxu0 0
  %1112 = vmatpush.bf16.msra.mxu0 0
  %1113 = vmatpush.bf16.msra.mxu0 0
  %1114 = vmatpush.bf16.msra.mxu0 0
  %1115 = vmatpush.bf16.msra.mxu0 %v1100
  %1116 = vmatpush.bf16.msra.mxu0 %v1098
  %1117 = vmatmul.bf16.gmra.mxu0 %v1107
  %v1118 = vpop.f32.mrf.mxu0
  %v1119 = vadd.f32 0.0, %v1118
  %v1120 = vpop.f32.mrf.mxu0
  %1121 = vdwg.mxu0
  %1122 = vmatpush.bf16.msra.mxu0 0
  %1123 = vmatpush.bf16.msra.mxu0 0
  %1124 = vmatpush.bf16.msra.mxu0 0
  %1125 = vmatpush.bf16.msra.mxu0 0
  %1126 = vmatpush.bf16.msra.mxu0 0
  %1127 = vmatpush.bf16.msra.mxu0 0
  %1128 = vmatpush.bf16.msra.mxu0 %v1101
  %1129 = vmatpush.bf16.msra.mxu0 %v1099
  %1130 = vmatmul.bf16.gmra.mxu0 %v1107
  %v1131 = vpop.f32.mrf.mxu0
  %v1132 = vadd.f32 0.0, %v1131
  %v1133 = vpop.f32.mrf.mxu0
  %1134 = vdwg.mxu0
  %v1135 = vadd.f32 %v1063, %v1119
  %v1136 = vadd.f32 %v1076, %v1132
  %v1137 = vadd.f32 %v1135, %v233
  %v1138 = vadd.f32 %v1136, %v234
  %vm1139 = vcmp.gt.f32.partialorder %v1137, 0.0
  %vm1140 = vcmp.gt.f32.partialorder %v1138, 0.0
  %v1141 = vmul.f32 %v1137, 0.01
  %v1142 = vmul.f32 %v1138, 0.01
  %v1143 = vsel %vm1139, %v1137, %v1141
  %v1144 = vsel %vm1140, %v1138, %v1142
  %s1145 = scalar_lea.vmem [#allocation2], 80
  %1146 = vst [vmem:[%s1145] sm:$0xff] %v1143
  %1147 = vst.msk [vmem:[%s1145 + $0x8] sm:$0xff] %vm246, %v1144
  %v1148 = vld [vmem:[%s1079] sm:$0xff]
  %v1149 = vpack.c.bf16 %v1148, %v1148
  %v1150 = vld [vmem:[%s2] sm:$0xff]
  %v1151 = vld [vmem:[%s2 + $0x8] sm:$0xff]
  %v1152 = vld [vmem:[%s2 + $0x10] sm:$0xff]
  %v1153 = vld [vmem:[%s2 + $0x18] sm:$0xff]
  %s1154 = scalar_lea.vmem %s0, 104
  %v1155 = vld [vmem:[%s1154] sm:$0xff]
  %v1156 = vpack.c.bf16 %v1155, %v1155
  %v1157 = vld [vmem:[%s69] sm:$0xff]
  %v1158 = vld [vmem:[%s69 + $0x8] sm:$0xff]
  %v1159 = vld [vmem:[%s69 + $0x10] sm:$0xff]
  %v1160 = vld [vmem:[%s69 + $0x18] sm:$0xff]
  %v1165 = vunpack.c.l.b16 %v1157
  %v1166 = vunpack.c.h.b16 %v1157
  %v1167 = vunpack.c.l.b16 %v1158
  %v1168 = vunpack.c.h.b16 %v1158
  %v1169 = vunpack.c.l.b16 %v1159
  %v1170 = vunpack.c.h.b16 %v1159
  %v1171 = vunpack.c.l.b16 %v1160
  %v1172 = vunpack.c.h.b16 %v1160
  %v1173 = vpack.c.b16 %v1167, %v1165
  %v1174 = vpack.c.b16 %v1168, %v1166
  %v1175 = vpack.c.b16 %v1171, %v1169
  %v1176 = vpack.c.b16 %v1172, %v1170
  %v1182 = vsel %vm94, %v1156, 0
  %1184 = vmatpush.bf16.msra.mxu0 0
  %1185 = vmatpush.bf16.msra.mxu0 0
  %1186 = vmatpush.bf16.msra.mxu0 0
  %1187 = vmatpush.bf16.msra.mxu0 0
  %1188 = vmatpush.bf16.msra.mxu0 0
  %1189 = vmatpush.bf16.msra.mxu0 0
  %1190 = vmatpush.bf16.msra.mxu0 %v1175
  %1191 = vmatpush.bf16.msra.mxu0 %v1173
  %1192 = vmatmul.bf16.gmra.mxu0 %v1182
  %v1193 = vpop.f32.mrf.mxu0
  %v1194 = vadd.f32 0.0, %v1193
  %v1195 = vpop.f32.mrf.mxu0
  %1196 = vdwg.mxu0
  %1197 = vmatpush.bf16.msra.mxu0 0
  %1198 = vmatpush.bf16.msra.mxu0 0
  %1199 = vmatpush.bf16.msra.mxu0 0
  %1200 = vmatpush.bf16.msra.mxu0 0
  %1201 = vmatpush.bf16.msra.mxu0 0
  %1202 = vmatpush.bf16.msra.mxu0 0
  %1203 = vmatpush.bf16.msra.mxu0 %v1176
  %1204 = vmatpush.bf16.msra.mxu0 %v1174
  %1205 = vmatmul.bf16.gmra.mxu0 %v1182
  %v1206 = vpop.f32.mrf.mxu0
  %v1207 = vadd.f32 0.0, %v1206
  %v1208 = vpop.f32.mrf.mxu0
  %1209 = vdwg.mxu0
  %v1214 = vunpack.c.l.b16 %v1150
  %v1215 = vunpack.c.h.b16 %v1150
  %v1216 = vunpack.c.l.b16 %v1151
  %v1217 = vunpack.c.h.b16 %v1151
  %v1218 = vunpack.c.l.b16 %v1152
  %v1219 = vunpack.c.h.b16 %v1152
  %v1220 = vunpack.c.l.b16 %v1153
  %v1221 = vunpack.c.h.b16 %v1153
  %v1222 = vpack.c.b16 %v1216, %v1214
  %v1223 = vpack.c.b16 %v1217, %v1215
  %v1224 = vpack.c.b16 %v1220, %v1218
  %v1225 = vpack.c.b16 %v1221, %v1219
  %v1231 = vsel %vm94, %v1149, 0
  %1233 = vmatpush.bf16.msra.mxu0 0
  %1234 = vmatpush.bf16.msra.mxu0 0
  %1235 = vmatpush.bf16.msra.mxu0 0
  %1236 = vmatpush.bf16.msra.mxu0 0
  %1237 = vmatpush.bf16.msra.mxu0 0
  %1238 = vmatpush.bf16.msra.mxu0 0
  %1239 = vmatpush.bf16.msra.mxu0 %v1224
  %1240 = vmatpush.bf16.msra.mxu0 %v1222
  %1241 = vmatmul.bf16.gmra.mxu0 %v1231
  %v1242 = vpop.f32.mrf.mxu0
  %v1243 = vadd.f32 %v1194, %v1242
  %v1244 = vpop.f32.mrf.mxu0
  %1245 = vdwg.mxu0
  %1246 = vmatpush.bf16.msra.mxu0 0
  %1247 = vmatpush.bf16.msra.mxu0 0
  %1248 = vmatpush.bf16.msra.mxu0 0
  %1249 = vmatpush.bf16.msra.mxu0 0
  %1250 = vmatpush.bf16.msra.mxu0 0
  %1251 = vmatpush.bf16.msra.mxu0 0
  %1252 = vmatpush.bf16.msra.mxu0 %v1225
  %1253 = vmatpush.bf16.msra.mxu0 %v1223
  %1254 = vmatmul.bf16.gmra.mxu0 %v1231
  %v1255 = vpop.f32.mrf.mxu0
  %v1256 = vadd.f32 %v1207, %v1255
  %v1257 = vpop.f32.mrf.mxu0
  %1258 = vdwg.mxu0
  %s1259 = scalar_lea.vmem %s0, 112
  %v1260 = vld [vmem:[%s1259] sm:$0xff]
  %v1261 = vpack.c.bf16 %v1260, %v1260
  %v1262 = vld [vmem:[%s176] sm:$0xff]
  %v1263 = vld [vmem:[%s176 + $0x8] sm:$0xff]
  %v1264 = vld [vmem:[%s176 + $0x10] sm:$0xff]
  %v1265 = vld [vmem:[%s176 + $0x18] sm:$0xff]
  %v1270 = vunpack.c.l.b16 %v1262
  %v1271 = vunpack.c.h.b16 %v1262
  %v1272 = vunpack.c.l.b16 %v1263
  %v1273 = vunpack.c.h.b16 %v1263
  %v1274 = vunpack.c.l.b16 %v1264
  %v1275 = vunpack.c.h.b16 %v1264
  %v1276 = vunpack.c.l.b16 %v1265
  %v1277 = vunpack.c.h.b16 %v1265
  %v1278 = vpack.c.b16 %v1272, %v1270
  %v1279 = vpack.c.b16 %v1273, %v1271
  %v1280 = vpack.c.b16 %v1276, %v1274
  %v1281 = vpack.c.b16 %v1277, %v1275
  %v1287 = vsel %vm94, %v1261, 0
  %1289 = vmatpush.bf16.msra.mxu0 0
  %1290 = vmatpush.bf16.msra.mxu0 0
  %1291 = vmatpush.bf16.msra.mxu0 0
  %1292 = vmatpush.bf16.msra.mxu0 0
  %1293 = vmatpush.bf16.msra.mxu0 0
  %1294 = vmatpush.bf16.msra.mxu0 0
  %1295 = vmatpush.bf16.msra.mxu0 %v1280
  %1296 = vmatpush.bf16.msra.mxu0 %v1278
  %1297 = vmatmul.bf16.gmra.mxu0 %v1287
  %v1298 = vpop.f32.mrf.mxu0
  %v1299 = vadd.f32 0.0, %v1298
  %v1300 = vpop.f32.mrf.mxu0
  %1301 = vdwg.mxu0
  %1302 = vmatpush.bf16.msra.mxu0 0
  %1303 = vmatpush.bf16.msra.mxu0 0
  %1304 = vmatpush.bf16.msra.mxu0 0
  %1305 = vmatpush.bf16.msra.mxu0 0
  %1306 = vmatpush.bf16.msra.mxu0 0
  %1307 = vmatpush.bf16.msra.mxu0 0
  %1308 = vmatpush.bf16.msra.mxu0 %v1281
  %1309 = vmatpush.bf16.msra.mxu0 %v1279
  %1310 = vmatmul.bf16.gmra.mxu0 %v1287
  %v1311 = vpop.f32.mrf.mxu0
  %v1312 = vadd.f32 0.0, %v1311
  %v1313 = vpop.f32.mrf.mxu0
  %1314 = vdwg.mxu0
  %v1315 = vadd.f32 %v1243, %v1299
  %v1316 = vadd.f32 %v1256, %v1312
  %v1317 = vadd.f32 %v1315, %v233
  %v1318 = vadd.f32 %v1316, %v234
  %vm1319 = vcmp.gt.f32.partialorder %v1317, 0.0
  %vm1320 = vcmp.gt.f32.partialorder %v1318, 0.0
  %v1321 = vmul.f32 %v1317, 0.01
  %v1322 = vmul.f32 %v1318, 0.01
  %v1323 = vsel %vm1319, %v1317, %v1321
  %v1324 = vsel %vm1320, %v1318, %v1322
  %s1325 = scalar_lea.vmem [#allocation2], 96
  %1326 = vst [vmem:[%s1325] sm:$0xff] %v1323
  %1327 = vst.msk [vmem:[%s1325 + $0x8] sm:$0xff] %vm246, %v1324
  %v1328 = vld [vmem:[%s1259] sm:$0xff]
  %v1329 = vpack.c.bf16 %v1328, %v1328
  %v1330 = vld [vmem:[%s2] sm:$0xff]
  %v1331 = vld [vmem:[%s2 + $0x8] sm:$0xff]
  %v1332 = vld [vmem:[%s2 + $0x10] sm:$0xff]
  %v1333 = vld [vmem:[%s2 + $0x18] sm:$0xff]
  %s1334 = scalar_lea.vmem %s0, 120
  %v1335 = vld [vmem:[%s1334] sm:$0xff]
  %v1336 = vpack.c.bf16 %v1335, %v1335
  %v1337 = vld [vmem:[%s69] sm:$0xff]
  %v1338 = vld [vmem:[%s69 + $0x8] sm:$0xff]
  %v1339 = vld [vmem:[%s69 + $0x10] sm:$0xff]
  %v1340 = vld [vmem:[%s69 + $0x18] sm:$0xff]
  %v1345 = vunpack.c.l.b16 %v1337
  %v1346 = vunpack.c.h.b16 %v1337
  %v1347 = vunpack.c.l.b16 %v1338
  %v1348 = vunpack.c.h.b16 %v1338
  %v1349 = vunpack.c.l.b16 %v1339
  %v1350 = vunpack.c.h.b16 %v1339
  %v1351 = vunpack.c.l.b16 %v1340
  %v1352 = vunpack.c.h.b16 %v1340
  %v1353 = vpack.c.b16 %v1347, %v1345
  %v1354 = vpack.c.b16 %v1348, %v1346
  %v1355 = vpack.c.b16 %v1351, %v1349
  %v1356 = vpack.c.b16 %v1352, %v1350
  %v1362 = vsel %vm94, %v1336, 0
  %1364 = vmatpush.bf16.msra.mxu0 0
  %1365 = vmatpush.bf16.msra.mxu0 0
  %1366 = vmatpush.bf16.msra.mxu0 0
  %1367 = vmatpush.bf16.msra.mxu0 0
  %1368 = vmatpush.bf16.msra.mxu0 0
  %1369 = vmatpush.bf16.msra.mxu0 0
  %1370 = vmatpush.bf16.msra.mxu0 %v1355
  %1371 = vmatpush.bf16.msra.mxu0 %v1353
  %1372 = vmatmul.bf16.gmra.mxu0 %v1362
  %v1373 = vpop.f32.mrf.mxu0
  %v1374 = vadd.f32 0.0, %v1373
  %v1375 = vpop.f32.mrf.mxu0
  %1376 = vdwg.mxu0
  %1377 = vmatpush.bf16.msra.mxu0 0
  %1378 = vmatpush.bf16.msra.mxu0 0
  %1379 = vmatpush.bf16.msra.mxu0 0
  %1380 = vmatpush.bf16.msra.mxu0 0
  %1381 = vmatpush.bf16.msra.mxu0 0
  %1382 = vmatpush.bf16.msra.mxu0 0
  %1383 = vmatpush.bf16.msra.mxu0 %v1356
  %1384 = vmatpush.bf16.msra.mxu0 %v1354
  %1385 = vmatmul.bf16.gmra.mxu0 %v1362
  %v1386 = vpop.f32.mrf.mxu0
  %v1387 = vadd.f32 0.0, %v1386
  %v1388 = vpop.f32.mrf.mxu0
  %1389 = vdwg.mxu0
  %v1394 = vunpack.c.l.b16 %v1330
  %v1395 = vunpack.c.h.b16 %v1330
  %v1396 = vunpack.c.l.b16 %v1331
  %v1397 = vunpack.c.h.b16 %v1331
  %v1398 = vunpack.c.l.b16 %v1332
  %v1399 = vunpack.c.h.b16 %v1332
  %v1400 = vunpack.c.l.b16 %v1333
  %v1401 = vunpack.c.h.b16 %v1333
  %v1402 = vpack.c.b16 %v1396, %v1394
  %v1403 = vpack.c.b16 %v1397, %v1395
  %v1404 = vpack.c.b16 %v1400, %v1398
  %v1405 = vpack.c.b16 %v1401, %v1399
  %v1411 = vsel %vm94, %v1329, 0
  %1413 = vmatpush.bf16.msra.mxu0 0
  %1414 = vmatpush.bf16.msra.mxu0 0
  %1415 = vmatpush.bf16.msra.mxu0 0
  %1416 = vmatpush.bf16.msra.mxu0 0
  %1417 = vmatpush.bf16.msra.mxu0 0
  %1418 = vmatpush.bf16.msra.mxu0 0
  %1419 = vmatpush.bf16.msra.mxu0 %v1404
  %1420 = vmatpush.bf16.msra.mxu0 %v1402
  %1421 = vmatmul.bf16.gmra.mxu0 %v1411
  %v1422 = vpop.f32.mrf.mxu0
  %v1423 = vadd.f32 %v1374, %v1422
  %v1424 = vpop.f32.mrf.mxu0
  %1425 = vdwg.mxu0
  %1426 = vmatpush.bf16.msra.mxu0 0
  %1427 = vmatpush.bf16.msra.mxu0 0
  %1428 = vmatpush.bf16.msra.mxu0 0
  %1429 = vmatpush.bf16.msra.mxu0 0
  %1430 = vmatpush.bf16.msra.mxu0 0
  %1431 = vmatpush.bf16.msra.mxu0 0
  %1432 = vmatpush.bf16.msra.mxu0 %v1405
  %1433 = vmatpush.bf16.msra.mxu0 %v1403
  %1434 = vmatmul.bf16.gmra.mxu0 %v1411
  %v1435 = vpop.f32.mrf.mxu0
  %v1436 = vadd.f32 %v1387, %v1435
  %v1437 = vpop.f32.mrf.mxu0
  %1438 = vdwg.mxu0
  %s1439 = scalar_lea.vmem %s0, 128
  %v1440 = vld [vmem:[%s1439] sm:$0xff]
  %v1441 = vpack.c.bf16 %v1440, %v1440
  %v1442 = vld [vmem:[%s176] sm:$0xff]
  %v1443 = vld [vmem:[%s176 + $0x8] sm:$0xff]
  %v1444 = vld [vmem:[%s176 + $0x10] sm:$0xff]
  %v1445 = vld [vmem:[%s176 + $0x18] sm:$0xff]
  %v1450 = vunpack.c.l.b16 %v1442
  %v1451 = vunpack.c.h.b16 %v1442
  %v1452 = vunpack.c.l.b16 %v1443
  %v1453 = vunpack.c.h.b16 %v1443
  %v1454 = vunpack.c.l.b16 %v1444
  %v1455 = vunpack.c.h.b16 %v1444
  %v1456 = vunpack.c.l.b16 %v1445
  %v1457 = vunpack.c.h.b16 %v1445
  %v1458 = vpack.c.b16 %v1452, %v1450
  %v1459 = vpack.c.b16 %v1453, %v1451
  %v1460 = vpack.c.b16 %v1456, %v1454
  %v1461 = vpack.c.b16 %v1457, %v1455
  %v1467 = vsel %vm94, %v1441, 0
  %1469 = vmatpush.bf16.msra.mxu0 0
  %1470 = vmatpush.bf16.msra.mxu0 0
  %1471 = vmatpush.bf16.msra.mxu0 0
  %1472 = vmatpush.bf16.msra.mxu0 0
  %1473 = vmatpush.bf16.msra.mxu0 0
  %1474 = vmatpush.bf16.msra.mxu0 0
  %1475 = vmatpush.bf16.msra.mxu0 %v1460
  %1476 = vmatpush.bf16.msra.mxu0 %v1458
  %1477 = vmatmul.bf16.gmra.mxu0 %v1467
  %v1478 = vpop.f32.mrf.mxu0
  %v1479 = vadd.f32 0.0, %v1478
  %v1480 = vpop.f32.mrf.mxu0
  %1481 = vdwg.mxu0
  %1482 = vmatpush.bf16.msra.mxu0 0
  %1483 = vmatpush.bf16.msra.mxu0 0
  %1484 = vmatpush.bf16.msra.mxu0 0
  %1485 = vmatpush.bf16.msra.mxu0 0
  %1486 = vmatpush.bf16.msra.mxu0 0
  %1487 = vmatpush.bf16.msra.mxu0 0
  %1488 = vmatpush.bf16.msra.mxu0 %v1461
  %1489 = vmatpush.bf16.msra.mxu0 %v1459
  %1490 = vmatmul.bf16.gmra.mxu0 %v1467
  %v1491 = vpop.f32.mrf.mxu0
  %v1492 = vadd.f32 0.0, %v1491
  %v1493 = vpop.f32.mrf.mxu0
  %1494 = vdwg.mxu0
  %v1495 = vadd.f32 %v1423, %v1479
  %v1496 = vadd.f32 %v1436, %v1492
  %v1497 = vadd.f32 %v1495, %v233
  %v1498 = vadd.f32 %v1496, %v234
  %vm1499 = vcmp.gt.f32.partialorder %v1497, 0.0
  %vm1500 = vcmp.gt.f32.partialorder %v1498, 0.0
  %v1501 = vmul.f32 %v1497, 0.01
  %v1502 = vmul.f32 %v1498, 0.01
  %v1503 = vsel %vm1499, %v1497, %v1501
  %v1504 = vsel %vm1500, %v1498, %v1502
  %s1505 = scalar_lea.vmem [#allocation2], 112
  %1506 = vst [vmem:[%s1505] sm:$0xff] %v1503
  %1507 = vst.msk [vmem:[%s1505 + $0x8] sm:$0xff] %vm246, %v1504
  %v1508 = vld [vmem:[%s1439] sm:$0xff]
  %v1509 = vpack.c.bf16 %v1508, %v1508
  %v1510 = vld [vmem:[%s2] sm:$0xff]
  %v1511 = vld [vmem:[%s2 + $0x8] sm:$0xff]
  %v1512 = vld [vmem:[%s2 + $0x10] sm:$0xff]
  %v1513 = vld [vmem:[%s2 + $0x18] sm:$0xff]
  %s1514 = scalar_lea.vmem %s0, 136
  %v1515 = vld [vmem:[%s1514] sm:$0xff]
  %v1516 = vpack.c.bf16 %v1515, %v1515
  %v1517 = vld [vmem:[%s69] sm:$0xff]
  %v1518 = vld [vmem:[%s69 + $0x8] sm:$0xff]
  %v1519 = vld [vmem:[%s69 + $0x10] sm:$0xff]
  %v1520 = vld [vmem:[%s69 + $0x18] sm:$0xff]
  %v1525 = vunpack.c.l.b16 %v1517
  %v1526 = vunpack.c.h.b16 %v1517
  %v1527 = vunpack.c.l.b16 %v1518
  %v1528 = vunpack.c.h.b16 %v1518
  %v1529 = vunpack.c.l.b16 %v1519
  %v1530 = vunpack.c.h.b16 %v1519
  %v1531 = vunpack.c.l.b16 %v1520
  %v1532 = vunpack.c.h.b16 %v1520
  %v1533 = vpack.c.b16 %v1527, %v1525
  %v1534 = vpack.c.b16 %v1528, %v1526
  %v1535 = vpack.c.b16 %v1531, %v1529
  %v1536 = vpack.c.b16 %v1532, %v1530
  %v1542 = vsel %vm94, %v1516, 0
  %1544 = vmatpush.bf16.msra.mxu0 0
  %1545 = vmatpush.bf16.msra.mxu0 0
  %1546 = vmatpush.bf16.msra.mxu0 0
  %1547 = vmatpush.bf16.msra.mxu0 0
  %1548 = vmatpush.bf16.msra.mxu0 0
  %1549 = vmatpush.bf16.msra.mxu0 0
  %1550 = vmatpush.bf16.msra.mxu0 %v1535
  %1551 = vmatpush.bf16.msra.mxu0 %v1533
  %1552 = vmatmul.bf16.gmra.mxu0 %v1542
  %v1553 = vpop.f32.mrf.mxu0
  %v1554 = vadd.f32 0.0, %v1553
  %v1555 = vpop.f32.mrf.mxu0
  %1556 = vdwg.mxu0
  %1557 = vmatpush.bf16.msra.mxu0 0
  %1558 = vmatpush.bf16.msra.mxu0 0
  %1559 = vmatpush.bf16.msra.mxu0 0
  %1560 = vmatpush.bf16.msra.mxu0 0
  %1561 = vmatpush.bf16.msra.mxu0 0
  %1562 = vmatpush.bf16.msra.mxu0 0
  %1563 = vmatpush.bf16.msra.mxu0 %v1536
  %1564 = vmatpush.bf16.msra.mxu0 %v1534
  %1565 = vmatmul.bf16.gmra.mxu0 %v1542
  %v1566 = vpop.f32.mrf.mxu0
  %v1567 = vadd.f32 0.0, %v1566
  %v1568 = vpop.f32.mrf.mxu0
  %1569 = vdwg.mxu0
  %v1574 = vunpack.c.l.b16 %v1510
  %v1575 = vunpack.c.h.b16 %v1510
  %v1576 = vunpack.c.l.b16 %v1511
  %v1577 = vunpack.c.h.b16 %v1511
  %v1578 = vunpack.c.l.b16 %v1512
  %v1579 = vunpack.c.h.b16 %v1512
  %v1580 = vunpack.c.l.b16 %v1513
  %v1581 = vunpack.c.h.b16 %v1513
  %v1582 = vpack.c.b16 %v1576, %v1574
  %v1583 = vpack.c.b16 %v1577, %v1575
  %v1584 = vpack.c.b16 %v1580, %v1578
  %v1585 = vpack.c.b16 %v1581, %v1579
  %v1591 = vsel %vm94, %v1509, 0
  %1593 = vmatpush.bf16.msra.mxu0 0
  %1594 = vmatpush.bf16.msra.mxu0 0
  %1595 = vmatpush.bf16.msra.mxu0 0
  %1596 = vmatpush.bf16.msra.mxu0 0
  %1597 = vmatpush.bf16.msra.mxu0 0
  %1598 = vmatpush.bf16.msra.mxu0 0
  %1599 = vmatpush.bf16.msra.mxu0 %v1584
  %1600 = vmatpush.bf16.msra.mxu0 %v1582
  %1601 = vmatmul.bf16.gmra.mxu0 %v1591
  %v1602 = vpop.f32.mrf.mxu0
  %v1603 = vadd.f32 %v1554, %v1602
  %v1604 = vpop.f32.mrf.mxu0
  %1605 = vdwg.mxu0
  %1606 = vmatpush.bf16.msra.mxu0 0
  %1607 = vmatpush.bf16.msra.mxu0 0
  %1608 = vmatpush.bf16.msra.mxu0 0
  %1609 = vmatpush.bf16.msra.mxu0 0
  %1610 = vmatpush.bf16.msra.mxu0 0
  %1611 = vmatpush.bf16.msra.mxu0 0
  %1612 = vmatpush.bf16.msra.mxu0 %v1585
  %1613 = vmatpush.bf16.msra.mxu0 %v1583
  %1614 = vmatmul.bf16.gmra.mxu0 %v1591
  %v1615 = vpop.f32.mrf.mxu0
  %v1616 = vadd.f32 %v1567, %v1615
  %v1617 = vpop.f32.mrf.mxu0
  %1618 = vdwg.mxu0
  %s1619 = scalar_lea.vmem %s0, 144
  %v1620 = vld [vmem:[%s1619] sm:$0xff]
  %v1621 = vpack.c.bf16 %v1620, %v1620
  %v1622 = vld [vmem:[%s176] sm:$0xff]
  %v1623 = vld [vmem:[%s176 + $0x8] sm:$0xff]
  %v1624 = vld [vmem:[%s176 + $0x10] sm:$0xff]
  %v1625 = vld [vmem:[%s176 + $0x18] sm:$0xff]
  %v1630 = vunpack.c.l.b16 %v1622
  %v1631 = vunpack.c.h.b16 %v1622
  %v1632 = vunpack.c.l.b16 %v1623
  %v1633 = vunpack.c.h.b16 %v1623
  %v1634 = vunpack.c.l.b16 %v1624
  %v1635 = vunpack.c.h.b16 %v1624
  %v1636 = vunpack.c.l.b16 %v1625
  %v1637 = vunpack.c.h.b16 %v1625
  %v1638 = vpack.c.b16 %v1632, %v1630
  %v1639 = vpack.c.b16 %v1633, %v1631
  %v1640 = vpack.c.b16 %v1636, %v1634
  %v1641 = vpack.c.b16 %v1637, %v1635
  %v1647 = vsel %vm94, %v1621, 0
  %1649 = vmatpush.bf16.msra.mxu0 0
  %1650 = vmatpush.bf16.msra.mxu0 0
  %1651 = vmatpush.bf16.msra.mxu0 0
  %1652 = vmatpush.bf16.msra.mxu0 0
  %1653 = vmatpush.bf16.msra.mxu0 0
  %1654 = vmatpush.bf16.msra.mxu0 0
  %1655 = vmatpush.bf16.msra.mxu0 %v1640
  %1656 = vmatpush.bf16.msra.mxu0 %v1638
  %1657 = vmatmul.bf16.gmra.mxu0 %v1647
  %v1658 = vpop.f32.mrf.mxu0
  %v1659 = vadd.f32 0.0, %v1658
  %v1660 = vpop.f32.mrf.mxu0
  %1661 = vdwg.mxu0
  %1662 = vmatpush.bf16.msra.mxu0 0
  %1663 = vmatpush.bf16.msra.mxu0 0
  %1664 = vmatpush.bf16.msra.mxu0 0
  %1665 = vmatpush.bf16.msra.mxu0 0
  %1666 = vmatpush.bf16.msra.mxu0 0
  %1667 = vmatpush.bf16.msra.mxu0 0
  %1668 = vmatpush.bf16.msra.mxu0 %v1641
  %1669 = vmatpush.bf16.msra.mxu0 %v1639
  %1670 = vmatmul.bf16.gmra.mxu0 %v1647
  %v1671 = vpop.f32.mrf.mxu0
  %v1672 = vadd.f32 0.0, %v1671
  %v1673 = vpop.f32.mrf.mxu0
  %1674 = vdwg.mxu0
  %v1675 = vadd.f32 %v1603, %v1659
  %v1676 = vadd.f32 %v1616, %v1672
  %v1677 = vadd.f32 %v1675, %v233
  %v1678 = vadd.f32 %v1676, %v234
  %vm1679 = vcmp.gt.f32.partialorder %v1677, 0.0
  %vm1680 = vcmp.gt.f32.partialorder %v1678, 0.0
  %v1681 = vmul.f32 %v1677, 0.01
  %v1682 = vmul.f32 %v1678, 0.01
  %v1683 = vsel %vm1679, %v1677, %v1681
  %v1684 = vsel %vm1680, %v1678, %v1682
  %s1685 = scalar_lea.vmem [#allocation2], 128
  %1686 = vst [vmem:[%s1685] sm:$0xff] %v1683
  %1687 = vst.msk [vmem:[%s1685 + $0x8] sm:$0xff] %vm246, %v1684
  %v1688 = vld [vmem:[%s1619] sm:$0xff]
  %v1689 = vpack.c.bf16 %v1688, %v1688
  %v1690 = vld [vmem:[%s2] sm:$0xff]
  %v1691 = vld [vmem:[%s2 + $0x8] sm:$0xff]
  %v1692 = vld [vmem:[%s2 + $0x10] sm:$0xff]
  %v1693 = vld [vmem:[%s2 + $0x18] sm:$0xff]
  %s1694 = scalar_lea.vmem %s0, 152
  %v1695 = vld [vmem:[%s1694] sm:$0xff]
  %v1696 = vpack.c.bf16 %v1695, %v1695
  %v1697 = vld [vmem:[%s69] sm:$0xff]
  %v1698 = vld [vmem:[%s69 + $0x8] sm:$0xff]
  %v1699 = vld [vmem:[%s69 + $0x10] sm:$0xff]
  %v1700 = vld [vmem:[%s69 + $0x18] sm:$0xff]
  %v1705 = vunpack.c.l.b16 %v1697
  %v1706 = vunpack.c.h.b16 %v1697
  %v1707 = vunpack.c.l.b16 %v1698
  %v1708 = vunpack.c.h.b16 %v1698
  %v1709 = vunpack.c.l.b16 %v1699
  %v1710 = vunpack.c.h.b16 %v1699
  %v1711 = vunpack.c.l.b16 %v1700
  %v1712 = vunpack.c.h.b16 %v1700
  %v1713 = vpack.c.b16 %v1707, %v1705
  %v1714 = vpack.c.b16 %v1708, %v1706
  %v1715 = vpack.c.b16 %v1711, %v1709
  %v1716 = vpack.c.b16 %v1712, %v1710
  %v1722 = vsel %vm94, %v1696, 0
  %1724 = vmatpush.bf16.msra.mxu0 0
  %1725 = vmatpush.bf16.msra.mxu0 0
  %1726 = vmatpush.bf16.msra.mxu0 0
  %1727 = vmatpush.bf16.msra.mxu0 0
  %1728 = vmatpush.bf16.msra.mxu0 0
  %1729 = vmatpush.bf16.msra.mxu0 0
  %1730 = vmatpush.bf16.msra.mxu0 %v1715
  %1731 = vmatpush.bf16.msra.mxu0 %v1713
  %1732 = vmatmul.bf16.gmra.mxu0 %v1722
  %v1733 = vpop.f32.mrf.mxu0
  %v1734 = vadd.f32 0.0, %v1733
  %v1735 = vpop.f32.mrf.mxu0
  %1736 = vdwg.mxu0
  %1737 = vmatpush.bf16.msra.mxu0 0
  %1738 = vmatpush.bf16.msra.mxu0 0
  %1739 = vmatpush.bf16.msra.mxu0 0
  %1740 = vmatpush.bf16.msra.mxu0 0
  %1741 = vmatpush.bf16.msra.mxu0 0
  %1742 = vmatpush.bf16.msra.mxu0 0
  %1743 = vmatpush.bf16.msra.mxu0 %v1716
  %1744 = vmatpush.bf16.msra.mxu0 %v1714
  %1745 = vmatmul.bf16.gmra.mxu0 %v1722
  %v1746 = vpop.f32.mrf.mxu0
  %v1747 = vadd.f32 0.0, %v1746
  %v1748 = vpop.f32.mrf.mxu0
  %1749 = vdwg.mxu0
  %v1754 = vunpack.c.l.b16 %v1690
  %v1755 = vunpack.c.h.b16 %v1690
  %v1756 = vunpack.c.l.b16 %v1691
  %v1757 = vunpack.c.h.b16 %v1691
  %v1758 = vunpack.c.l.b16 %v1692
  %v1759 = vunpack.c.h.b16 %v1692
  %v1760 = vunpack.c.l.b16 %v1693
  %v1761 = vunpack.c.h.b16 %v1693
  %v1762 = vpack.c.b16 %v1756, %v1754
  %v1763 = vpack.c.b16 %v1757, %v1755
  %v1764 = vpack.c.b16 %v1760, %v1758
  %v1765 = vpack.c.b16 %v1761, %v1759
  %v1771 = vsel %vm94, %v1689, 0
  %1773 = vmatpush.bf16.msra.mxu0 0
  %1774 = vmatpush.bf16.msra.mxu0 0
  %1775 = vmatpush.bf16.msra.mxu0 0
  %1776 = vmatpush.bf16.msra.mxu0 0
  %1777 = vmatpush.bf16.msra.mxu0 0
  %1778 = vmatpush.bf16.msra.mxu0 0
  %1779 = vmatpush.bf16.msra.mxu0 %v1764
  %1780 = vmatpush.bf16.msra.mxu0 %v1762
  %1781 = vmatmul.bf16.gmra.mxu0 %v1771
  %v1782 = vpop.f32.mrf.mxu0
  %v1783 = vadd.f32 %v1734, %v1782
  %v1784 = vpop.f32.mrf.mxu0
  %1785 = vdwg.mxu0
  %1786 = vmatpush.bf16.msra.mxu0 0
  %1787 = vmatpush.bf16.msra.mxu0 0
  %1788 = vmatpush.bf16.msra.mxu0 0
  %1789 = vmatpush.bf16.msra.mxu0 0
  %1790 = vmatpush.bf16.msra.mxu0 0
  %1791 = vmatpush.bf16.msra.mxu0 0
  %1792 = vmatpush.bf16.msra.mxu0 %v1765
  %1793 = vmatpush.bf16.msra.mxu0 %v1763
  %1794 = vmatmul.bf16.gmra.mxu0 %v1771
  %v1795 = vpop.f32.mrf.mxu0
  %v1796 = vadd.f32 %v1747, %v1795
  %v1797 = vpop.f32.mrf.mxu0
  %1798 = vdwg.mxu0
  %s1799 = scalar_lea.vmem %s0, 160
  %v1800 = vld [vmem:[%s1799] sm:$0xff]
  %v1801 = vpack.c.bf16 %v1800, %v1800
  %v1802 = vld [vmem:[%s176] sm:$0xff]
  %v1803 = vld [vmem:[%s176 + $0x8] sm:$0xff]
  %v1804 = vld [vmem:[%s176 + $0x10] sm:$0xff]
  %v1805 = vld [vmem:[%s176 + $0x18] sm:$0xff]
  %v1810 = vunpack.c.l.b16 %v1802
  %v1811 = vunpack.c.h.b16 %v1802
  %v1812 = vunpack.c.l.b16 %v1803
  %v1813 = vunpack.c.h.b16 %v1803
  %v1814 = vunpack.c.l.b16 %v1804
  %v1815 = vunpack.c.h.b16 %v1804
  %v1816 = vunpack.c.l.b16 %v1805
  %v1817 = vunpack.c.h.b16 %v1805
  %v1818 = vpack.c.b16 %v1812, %v1810
  %v1819 = vpack.c.b16 %v1813, %v1811
  %v1820 = vpack.c.b16 %v1816, %v1814
  %v1821 = vpack.c.b16 %v1817, %v1815
  %v1827 = vsel %vm94, %v1801, 0
  %1829 = vmatpush.bf16.msra.mxu0 0
  %1830 = vmatpush.bf16.msra.mxu0 0
  %1831 = vmatpush.bf16.msra.mxu0 0
  %1832 = vmatpush.bf16.msra.mxu0 0
  %1833 = vmatpush.bf16.msra.mxu0 0
  %1834 = vmatpush.bf16.msra.mxu0 0
  %1835 = vmatpush.bf16.msra.mxu0 %v1820
  %1836 = vmatpush.bf16.msra.mxu0 %v1818
  %1837 = vmatmul.bf16.gmra.mxu0 %v1827
  %v1838 = vpop.f32.mrf.mxu0
  %v1839 = vadd.f32 0.0, %v1838
  %v1840 = vpop.f32.mrf.mxu0
  %1841 = vdwg.mxu0
  %1842 = vmatpush.bf16.msra.mxu0 0
  %1843 = vmatpush.bf16.msra.mxu0 0
  %1844 = vmatpush.bf16.msra.mxu0 0
  %1845 = vmatpush.bf16.msra.mxu0 0
  %1846 = vmatpush.bf16.msra.mxu0 0
  %1847 = vmatpush.bf16.msra.mxu0 0
  %1848 = vmatpush.bf16.msra.mxu0 %v1821
  %1849 = vmatpush.bf16.msra.mxu0 %v1819
  %1850 = vmatmul.bf16.gmra.mxu0 %v1827
  %v1851 = vpop.f32.mrf.mxu0
  %v1852 = vadd.f32 0.0, %v1851
  %v1853 = vpop.f32.mrf.mxu0
  %1854 = vdwg.mxu0
  %v1855 = vadd.f32 %v1783, %v1839
  %v1856 = vadd.f32 %v1796, %v1852
  %v1857 = vadd.f32 %v1855, %v233
  %v1858 = vadd.f32 %v1856, %v234
  %vm1859 = vcmp.gt.f32.partialorder %v1857, 0.0
  %vm1860 = vcmp.gt.f32.partialorder %v1858, 0.0
  %v1861 = vmul.f32 %v1857, 0.01
  %v1862 = vmul.f32 %v1858, 0.01
  %v1863 = vsel %vm1859, %v1857, %v1861
  %v1864 = vsel %vm1860, %v1858, %v1862
  %s1865 = scalar_lea.vmem [#allocation2], 144
  %1866 = vst [vmem:[%s1865] sm:$0xff] %v1863
  %1867 = vst.msk [vmem:[%s1865 + $0x8] sm:$0xff] %vm246, %v1864
  %v1868 = vld [vmem:[%s1799] sm:$0xff]
  %v1869 = vpack.c.bf16 %v1868, %v1868
  %v1870 = vld [vmem:[%s2] sm:$0xff]
  %v1871 = vld [vmem:[%s2 + $0x8] sm:$0xff]
  %v1872 = vld [vmem:[%s2 + $0x10] sm:$0xff]
  %v1873 = vld [vmem:[%s2 + $0x18] sm:$0xff]
  %s1874 = scalar_lea.vmem %s0, 168
  %v1875 = vld [vmem:[%s1874] sm:$0xff]
  %v1876 = vpack.c.bf16 %v1875, %v1875
  %v1877 = vld [vmem:[%s69] sm:$0xff]
  %v1878 = vld [vmem:[%s69 + $0x8] sm:$0xff]
  %v1879 = vld [vmem:[%s69 + $0x10] sm:$0xff]
  %v1880 = vld [vmem:[%s69 + $0x18] sm:$0xff]
  %v1885 = vunpack.c.l.b16 %v1877
  %v1886 = vunpack.c.h.b16 %v1877
  %v1887 = vunpack.c.l.b16 %v1878
  %v1888 = vunpack.c.h.b16 %v1878
  %v1889 = vunpack.c.l.b16 %v1879
  %v1890 = vunpack.c.h.b16 %v1879
  %v1891 = vunpack.c.l.b16 %v1880
  %v1892 = vunpack.c.h.b16 %v1880
  %v1893 = vpack.c.b16 %v1887, %v1885
  %v1894 = vpack.c.b16 %v1888, %v1886
  %v1895 = vpack.c.b16 %v1891, %v1889
  %v1896 = vpack.c.b16 %v1892, %v1890
  %v1902 = vsel %vm94, %v1876, 0
  %1904 = vmatpush.bf16.msra.mxu0 0
  %1905 = vmatpush.bf16.msra.mxu0 0
  %1906 = vmatpush.bf16.msra.mxu0 0
  %1907 = vmatpush.bf16.msra.mxu0 0
  %1908 = vmatpush.bf16.msra.mxu0 0
  %1909 = vmatpush.bf16.msra.mxu0 0
  %1910 = vmatpush.bf16.msra.mxu0 %v1895
  %1911 = vmatpush.bf16.msra.mxu0 %v1893
  %1912 = vmatmul.bf16.gmra.mxu0 %v1902
  %v1913 = vpop.f32.mrf.mxu0
  %v1914 = vadd.f32 0.0, %v1913
  %v1915 = vpop.f32.mrf.mxu0
  %1916 = vdwg.mxu0
  %1917 = vmatpush.bf16.msra.mxu0 0
  %1918 = vmatpush.bf16.msra.mxu0 0
  %1919 = vmatpush.bf16.msra.mxu0 0
  %1920 = vmatpush.bf16.msra.mxu0 0
  %1921 = vmatpush.bf16.msra.mxu0 0
  %1922 = vmatpush.bf16.msra.mxu0 0
  %1923 = vmatpush.bf16.msra.mxu0 %v1896
  %1924 = vmatpush.bf16.msra.mxu0 %v1894
  %1925 = vmatmul.bf16.gmra.mxu0 %v1902
  %v1926 = vpop.f32.mrf.mxu0
  %v1927 = vadd.f32 0.0, %v1926
  %v1928 = vpop.f32.mrf.mxu0
  %1929 = vdwg.mxu0
  %v1934 = vunpack.c.l.b16 %v1870
  %v1935 = vunpack.c.h.b16 %v1870
  %v1936 = vunpack.c.l.b16 %v1871
  %v1937 = vunpack.c.h.b16 %v1871
  %v1938 = vunpack.c.l.b16 %v1872
  %v1939 = vunpack.c.h.b16 %v1872
  %v1940 = vunpack.c.l.b16 %v1873
  %v1941 = vunpack.c.h.b16 %v1873
  %v1942 = vpack.c.b16 %v1936, %v1934
  %v1943 = vpack.c.b16 %v1937, %v1935
  %v1944 = vpack.c.b16 %v1940, %v1938
  %v1945 = vpack.c.b16 %v1941, %v1939
  %v1951 = vsel %vm94, %v1869, 0
  %1953 = vmatpush.bf16.msra.mxu0 0
  %1954 = vmatpush.bf16.msra.mxu0 0
  %1955 = vmatpush.bf16.msra.mxu0 0
  %1956 = vmatpush.bf16.msra.mxu0 0
  %1957 = vmatpush.bf16.msra.mxu0 0
  %1958 = vmatpush.bf16.msra.mxu0 0
  %1959 = vmatpush.bf16.msra.mxu0 %v1944
  %1960 = vmatpush.bf16.msra.mxu0 %v1942
  %1961 = vmatmul.bf16.gmra.mxu0 %v1951
  %v1962 = vpop.f32.mrf.mxu0
  %v1963 = vadd.f32 %v1914, %v1962
  %v1964 = vpop.f32.mrf.mxu0
  %1965 = vdwg.mxu0
  %1966 = vmatpush.bf16.msra.mxu0 0
  %1967 = vmatpush.bf16.msra.mxu0 0
  %1968 = vmatpush.bf16.msra.mxu0 0
  %1969 = vmatpush.bf16.msra.mxu0 0
  %1970 = vmatpush.bf16.msra.mxu0 0
  %1971 = vmatpush.bf16.msra.mxu0 0
  %1972 = vmatpush.bf16.msra.mxu0 %v1945
  %1973 = vmatpush.bf16.msra.mxu0 %v1943
  %1974 = vmatmul.bf16.gmra.mxu0 %v1951
  %v1975 = vpop.f32.mrf.mxu0
  %v1976 = vadd.f32 %v1927, %v1975
  %v1977 = vpop.f32.mrf.mxu0
  %1978 = vdwg.mxu0
  %s1979 = scalar_lea.vmem %s0, 176
  %v1980 = vld [vmem:[%s1979] sm:$0xff]
  %v1981 = vpack.c.bf16 %v1980, %v1980
  %v1982 = vld [vmem:[%s176] sm:$0xff]
  %v1983 = vld [vmem:[%s176 + $0x8] sm:$0xff]
  %v1984 = vld [vmem:[%s176 + $0x10] sm:$0xff]
  %v1985 = vld [vmem:[%s176 + $0x18] sm:$0xff]
  %v1990 = vunpack.c.l.b16 %v1982
  %v1991 = vunpack.c.h.b16 %v1982
  %v1992 = vunpack.c.l.b16 %v1983
  %v1993 = vunpack.c.h.b16 %v1983
  %v1994 = vunpack.c.l.b16 %v1984
  %v1995 = vunpack.c.h.b16 %v1984
  %v1996 = vunpack.c.l.b16 %v1985
  %v1997 = vunpack.c.h.b16 %v1985
  %v1998 = vpack.c.b16 %v1992, %v1990
  %v1999 = vpack.c.b16 %v1993, %v1991
  %v2000 = vpack.c.b16 %v1996, %v1994
  %v2001 = vpack.c.b16 %v1997, %v1995
  %v2007 = vsel %vm94, %v1981, 0
  %2009 = vmatpush.bf16.msra.mxu0 0
  %2010 = vmatpush.bf16.msra.mxu0 0
  %2011 = vmatpush.bf16.msra.mxu0 0
  %2012 = vmatpush.bf16.msra.mxu0 0
  %2013 = vmatpush.bf16.msra.mxu0 0
  %2014 = vmatpush.bf16.msra.mxu0 0
  %2015 = vmatpush.bf16.msra.mxu0 %v2000
  %2016 = vmatpush.bf16.msra.mxu0 %v1998
  %2017 = vmatmul.bf16.gmra.mxu0 %v2007
  %v2018 = vpop.f32.mrf.mxu0
  %v2019 = vadd.f32 0.0, %v2018
  %v2020 = vpop.f32.mrf.mxu0
  %2021 = vdwg.mxu0
  %2022 = vmatpush.bf16.msra.mxu0 0
  %2023 = vmatpush.bf16.msra.mxu0 0
  %2024 = vmatpush.bf16.msra.mxu0 0
  %2025 = vmatpush.bf16.msra.mxu0 0
  %2026 = vmatpush.bf16.msra.mxu0 0
  %2027 = vmatpush.bf16.msra.mxu0 0
  %2028 = vmatpush.bf16.msra.mxu0 %v2001
  %2029 = vmatpush.bf16.msra.mxu0 %v1999
  %2030 = vmatmul.bf16.gmra.mxu0 %v2007
  %v2031 = vpop.f32.mrf.mxu0
  %v2032 = vadd.f32 0.0, %v2031
  %v2033 = vpop.f32.mrf.mxu0
  %2034 = vdwg.mxu0
  %v2035 = vadd.f32 %v1963, %v2019
  %v2036 = vadd.f32 %v1976, %v2032
  %v2037 = vadd.f32 %v2035, %v233
  %v2038 = vadd.f32 %v2036, %v234
  %vm2039 = vcmp.gt.f32.partialorder %v2037, 0.0
  %vm2040 = vcmp.gt.f32.partialorder %v2038, 0.0
  %v2041 = vmul.f32 %v2037, 0.01
  %v2042 = vmul.f32 %v2038, 0.01
  %v2043 = vsel %vm2039, %v2037, %v2041
  %v2044 = vsel %vm2040, %v2038, %v2042
  %s2045 = scalar_lea.vmem [#allocation2], 160
  %2046 = vst [vmem:[%s2045] sm:$0xff] %v2043
  %2047 = vst.msk [vmem:[%s2045 + $0x8] sm:$0xff] %vm246, %v2044
  %v2048 = vld [vmem:[%s1979] sm:$0xff]
  %v2049 = vpack.c.bf16 %v2048, %v2048
  %v2050 = vld [vmem:[%s2] sm:$0xff]
  %v2051 = vld [vmem:[%s2 + $0x8] sm:$0xff]
  %v2052 = vld [vmem:[%s2 + $0x10] sm:$0xff]
  %v2053 = vld [vmem:[%s2 + $0x18] sm:$0xff]
  %s2054 = scalar_lea.vmem %s0, 184
  %v2055 = vld [vmem:[%s2054] sm:$0xff]
  %v2056 = vpack.c.bf16 %v2055, %v2055
  %v2057 = vld [vmem:[%s69] sm:$0xff]
  %v2058 = vld [vmem:[%s69 + $0x8] sm:$0xff]
  %v2059 = vld [vmem:[%s69 + $0x10] sm:$0xff]
  %v2060 = vld [vmem:[%s69 + $0x18] sm:$0xff]
  %v2065 = vunpack.c.l.b16 %v2057
  %v2066 = vunpack.c.h.b16 %v2057
  %v2067 = vunpack.c.l.b16 %v2058
  %v2068 = vunpack.c.h.b16 %v2058
  %v2069 = vunpack.c.l.b16 %v2059
  %v2070 = vunpack.c.h.b16 %v2059
  %v2071 = vunpack.c.l.b16 %v2060
  %v2072 = vunpack.c.h.b16 %v2060
  %v2073 = vpack.c.b16 %v2067, %v2065
  %v2074 = vpack.c.b16 %v2068, %v2066
  %v2075 = vpack.c.b16 %v2071, %v2069
  %v2076 = vpack.c.b16 %v2072, %v2070
  %v2082 = vsel %vm94, %v2056, 0
  %2084 = vmatpush.bf16.msra.mxu0 0
  %2085 = vmatpush.bf16.msra.mxu0 0
  %2086 = vmatpush.bf16.msra.mxu0 0
  %2087 = vmatpush.bf16.msra.mxu0 0
  %2088 = vmatpush.bf16.msra.mxu0 0
  %2089 = vmatpush.bf16.msra.mxu0 0
  %2090 = vmatpush.bf16.msra.mxu0 %v2075
  %2091 = vmatpush.bf16.msra.mxu0 %v2073
  %2092 = vmatmul.bf16.gmra.mxu0 %v2082
  %v2093 = vpop.f32.mrf.mxu0
  %v2094 = vadd.f32 0.0, %v2093
  %v2095 = vpop.f32.mrf.mxu0
  %2096 = vdwg.mxu0
  %2097 = vmatpush.bf16.msra.mxu0 0
  %2098 = vmatpush.bf16.msra.mxu0 0
  %2099 = vmatpush.bf16.msra.mxu0 0
  %2100 = vmatpush.bf16.msra.mxu0 0
  %2101 = vmatpush.bf16.msra.mxu0 0
  %2102 = vmatpush.bf16.msra.mxu0 0
  %2103 = vmatpush.bf16.msra.mxu0 %v2076
  %2104 = vmatpush.bf16.msra.mxu0 %v2074
  %2105 = vmatmul.bf16.gmra.mxu0 %v2082
  %v2106 = vpop.f32.mrf.mxu0
  %v2107 = vadd.f32 0.0, %v2106
  %v2108 = vpop.f32.mrf.mxu0
  %2109 = vdwg.mxu0
  %v2114 = vunpack.c.l.b16 %v2050
  %v2115 = vunpack.c.h.b16 %v2050
  %v2116 = vunpack.c.l.b16 %v2051
  %v2117 = vunpack.c.h.b16 %v2051
  %v2118 = vunpack.c.l.b16 %v2052
  %v2119 = vunpack.c.h.b16 %v2052
  %v2120 = vunpack.c.l.b16 %v2053
  %v2121 = vunpack.c.h.b16 %v2053
  %v2122 = vpack.c.b16 %v2116, %v2114
  %v2123 = vpack.c.b16 %v2117, %v2115
  %v2124 = vpack.c.b16 %v2120, %v2118
  %v2125 = vpack.c.b16 %v2121, %v2119
  %v2131 = vsel %vm94, %v2049, 0
  %2133 = vmatpush.bf16.msra.mxu0 0
  %2134 = vmatpush.bf16.msra.mxu0 0
  %2135 = vmatpush.bf16.msra.mxu0 0
  %2136 = vmatpush.bf16.msra.mxu0 0
  %2137 = vmatpush.bf16.msra.mxu0 0
  %2138 = vmatpush.bf16.msra.mxu0 0
  %2139 = vmatpush.bf16.msra.mxu0 %v2124
  %2140 = vmatpush.bf16.msra.mxu0 %v2122
  %2141 = vmatmul.bf16.gmra.mxu0 %v2131
  %v2142 = vpop.f32.mrf.mxu0
  %v2143 = vadd.f32 %v2094, %v2142
  %v2144 = vpop.f32.mrf.mxu0
  %2145 = vdwg.mxu0
  %2146 = vmatpush.bf16.msra.mxu0 0
  %2147 = vmatpush.bf16.msra.mxu0 0
  %2148 = vmatpush.bf16.msra.mxu0 0
  %2149 = vmatpush.bf16.msra.mxu0 0
  %2150 = vmatpush.bf16.msra.mxu0 0
  %2151 = vmatpush.bf16.msra.mxu0 0
  %2152 = vmatpush.bf16.msra.mxu0 %v2125
  %2153 = vmatpush.bf16.msra.mxu0 %v2123
  %2154 = vmatmul.bf16.gmra.mxu0 %v2131
  %v2155 = vpop.f32.mrf.mxu0
  %v2156 = vadd.f32 %v2107, %v2155
  %v2157 = vpop.f32.mrf.mxu0
  %2158 = vdwg.mxu0
  %s2159 = scalar_lea.vmem %s0, 192
  %v2160 = vld [vmem:[%s2159] sm:$0xff]
  %v2161 = vpack.c.bf16 %v2160, %v2160
  %v2162 = vld [vmem:[%s176] sm:$0xff]
  %v2163 = vld [vmem:[%s176 + $0x8] sm:$0xff]
  %v2164 = vld [vmem:[%s176 + $0x10] sm:$0xff]
  %v2165 = vld [vmem:[%s176 + $0x18] sm:$0xff]
  %v2170 = vunpack.c.l.b16 %v2162
  %v2171 = vunpack.c.h.b16 %v2162
  %v2172 = vunpack.c.l.b16 %v2163
  %v2173 = vunpack.c.h.b16 %v2163
  %v2174 = vunpack.c.l.b16 %v2164
  %v2175 = vunpack.c.h.b16 %v2164
  %v2176 = vunpack.c.l.b16 %v2165
  %v2177 = vunpack.c.h.b16 %v2165
  %v2178 = vpack.c.b16 %v2172, %v2170
  %v2179 = vpack.c.b16 %v2173, %v2171
  %v2180 = vpack.c.b16 %v2176, %v2174
  %v2181 = vpack.c.b16 %v2177, %v2175
  %v2187 = vsel %vm94, %v2161, 0
  %2189 = vmatpush.bf16.msra.mxu0 0
  %2190 = vmatpush.bf16.msra.mxu0 0
  %2191 = vmatpush.bf16.msra.mxu0 0
  %2192 = vmatpush.bf16.msra.mxu0 0
  %2193 = vmatpush.bf16.msra.mxu0 0
  %2194 = vmatpush.bf16.msra.mxu0 0
  %2195 = vmatpush.bf16.msra.mxu0 %v2180
  %2196 = vmatpush.bf16.msra.mxu0 %v2178
  %2197 = vmatmul.bf16.gmra.mxu0 %v2187
  %v2198 = vpop.f32.mrf.mxu0
  %v2199 = vadd.f32 0.0, %v2198
  %v2200 = vpop.f32.mrf.mxu0
  %2201 = vdwg.mxu0
  %2202 = vmatpush.bf16.msra.mxu0 0
  %2203 = vmatpush.bf16.msra.mxu0 0
  %2204 = vmatpush.bf16.msra.mxu0 0
  %2205 = vmatpush.bf16.msra.mxu0 0
  %2206 = vmatpush.bf16.msra.mxu0 0
  %2207 = vmatpush.bf16.msra.mxu0 0
  %2208 = vmatpush.bf16.msra.mxu0 %v2181
  %2209 = vmatpush.bf16.msra.mxu0 %v2179
  %2210 = vmatmul.bf16.gmra.mxu0 %v2187
  %v2211 = vpop.f32.mrf.mxu0
  %v2212 = vadd.f32 0.0, %v2211
  %v2213 = vpop.f32.mrf.mxu0
  %2214 = vdwg.mxu0
  %v2215 = vadd.f32 %v2143, %v2199
  %v2216 = vadd.f32 %v2156, %v2212
  %v2217 = vadd.f32 %v2215, %v233
  %v2218 = vadd.f32 %v2216, %v234
  %vm2219 = vcmp.gt.f32.partialorder %v2217, 0.0
  %vm2220 = vcmp.gt.f32.partialorder %v2218, 0.0
  %v2221 = vmul.f32 %v2217, 0.01
  %v2222 = vmul.f32 %v2218, 0.01
  %v2223 = vsel %vm2219, %v2217, %v2221
  %v2224 = vsel %vm2220, %v2218, %v2222
  %s2225 = scalar_lea.vmem [#allocation2], 176
  %2226 = vst [vmem:[%s2225] sm:$0xff] %v2223
  %2227 = vst.msk [vmem:[%s2225 + $0x8] sm:$0xff] %vm246, %v2224
  %v2228 = vld [vmem:[%s2159] sm:$0xff]
  %v2229 = vpack.c.bf16 %v2228, %v2228
  %v2230 = vld [vmem:[%s2] sm:$0xff]
  %v2231 = vld [vmem:[%s2 + $0x8] sm:$0xff]
  %v2232 = vld [vmem:[%s2 + $0x10] sm:$0xff]
  %v2233 = vld [vmem:[%s2 + $0x18] sm:$0xff]
  %s2234 = scalar_lea.vmem %s0, 200
  %v2235 = vld [vmem:[%s2234] sm:$0xff]
  %v2236 = vpack.c.bf16 %v2235, %v2235
  %v2237 = vld [vmem:[%s69] sm:$0xff]
  %v2238 = vld [vmem:[%s69 + $0x8] sm:$0xff]
  %v2239 = vld [vmem:[%s69 + $0x10] sm:$0xff]
  %v2240 = vld [vmem:[%s69 + $0x18] sm:$0xff]
  %v2245 = vunpack.c.l.b16 %v2237
  %v2246 = vunpack.c.h.b16 %v2237
  %v2247 = vunpack.c.l.b16 %v2238
  %v2248 = vunpack.c.h.b16 %v2238
  %v2249 = vunpack.c.l.b16 %v2239
  %v2250 = vunpack.c.h.b16 %v2239
  %v2251 = vunpack.c.l.b16 %v2240
  %v2252 = vunpack.c.h.b16 %v2240
  %v2253 = vpack.c.b16 %v2247, %v2245
  %v2254 = vpack.c.b16 %v2248, %v2246
  %v2255 = vpack.c.b16 %v2251, %v2249
  %v2256 = vpack.c.b16 %v2252, %v2250
  %v2262 = vsel %vm94, %v2236, 0
  %2264 = vmatpush.bf16.msra.mxu0 0
  %2265 = vmatpush.bf16.msra.mxu0 0
  %2266 = vmatpush.bf16.msra.mxu0 0
  %2267 = vmatpush.bf16.msra.mxu0 0
  %2268 = vmatpush.bf16.msra.mxu0 0
  %2269 = vmatpush.bf16.msra.mxu0 0
  %2270 = vmatpush.bf16.msra.mxu0 %v2255
  %2271 = vmatpush.bf16.msra.mxu0 %v2253
  %2272 = vmatmul.bf16.gmra.mxu0 %v2262
  %v2273 = vpop.f32.mrf.mxu0
  %v2274 = vadd.f32 0.0, %v2273
  %v2275 = vpop.f32.mrf.mxu0
  %2276 = vdwg.mxu0
  %2277 = vmatpush.bf16.msra.mxu0 0
  %2278 = vmatpush.bf16.msra.mxu0 0
  %2279 = vmatpush.bf16.msra.mxu0 0
  %2280 = vmatpush.bf16.msra.mxu0 0
  %2281 = vmatpush.bf16.msra.mxu0 0
  %2282 = vmatpush.bf16.msra.mxu0 0
  %2283 = vmatpush.bf16.msra.mxu0 %v2256
  %2284 = vmatpush.bf16.msra.mxu0 %v2254
  %2285 = vmatmul.bf16.gmra.mxu0 %v2262
  %v2286 = vpop.f32.mrf.mxu0
  %v2287 = vadd.f32 0.0, %v2286
  %v2288 = vpop.f32.mrf.mxu0
  %2289 = vdwg.mxu0
  %v2294 = vunpack.c.l.b16 %v2230
  %v2295 = vunpack.c.h.b16 %v2230
  %v2296 = vunpack.c.l.b16 %v2231
  %v2297 = vunpack.c.h.b16 %v2231
  %v2298 = vunpack.c.l.b16 %v2232
  %v2299 = vunpack.c.h.b16 %v2232
  %v2300 = vunpack.c.l.b16 %v2233
  %v2301 = vunpack.c.h.b16 %v2233
  %v2302 = vpack.c.b16 %v2296, %v2294
  %v2303 = vpack.c.b16 %v2297, %v2295
  %v2304 = vpack.c.b16 %v2300, %v2298
  %v2305 = vpack.c.b16 %v2301, %v2299
  %v2311 = vsel %vm94, %v2229, 0
  %2313 = vmatpush.bf16.msra.mxu0 0
  %2314 = vmatpush.bf16.msra.mxu0 0
  %2315 = vmatpush.bf16.msra.mxu0 0
  %2316 = vmatpush.bf16.msra.mxu0 0
  %2317 = vmatpush.bf16.msra.mxu0 0
  %2318 = vmatpush.bf16.msra.mxu0 0
  %2319 = vmatpush.bf16.msra.mxu0 %v2304
  %2320 = vmatpush.bf16.msra.mxu0 %v2302
  %2321 = vmatmul.bf16.gmra.mxu0 %v2311
  %v2322 = vpop.f32.mrf.mxu0
  %v2323 = vadd.f32 %v2274, %v2322
  %v2324 = vpop.f32.mrf.mxu0
  %2325 = vdwg.mxu0
  %2326 = vmatpush.bf16.msra.mxu0 0
  %2327 = vmatpush.bf16.msra.mxu0 0
  %2328 = vmatpush.bf16.msra.mxu0 0
  %2329 = vmatpush.bf16.msra.mxu0 0
  %2330 = vmatpush.bf16.msra.mxu0 0
  %2331 = vmatpush.bf16.msra.mxu0 0
  %2332 = vmatpush.bf16.msra.mxu0 %v2305
  %2333 = vmatpush.bf16.msra.mxu0 %v2303
  %2334 = vmatmul.bf16.gmra.mxu0 %v2311
  %v2335 = vpop.f32.mrf.mxu0
  %v2336 = vadd.f32 %v2287, %v2335
  %v2337 = vpop.f32.mrf.mxu0
  %2338 = vdwg.mxu0
  %s2339 = scalar_lea.vmem %s0, 208
  %v2340 = vld [vmem:[%s2339] sm:$0xff]
  %v2341 = vpack.c.bf16 %v2340, %v2340
  %v2342 = vld [vmem:[%s176] sm:$0xff]
  %v2343 = vld [vmem:[%s176 + $0x8] sm:$0xff]
  %v2344 = vld [vmem:[%s176 + $0x10] sm:$0xff]
  %v2345 = vld [vmem:[%s176 + $0x18] sm:$0xff]
  %v2350 = vunpack.c.l.b16 %v2342
  %v2351 = vunpack.c.h.b16 %v2342
  %v2352 = vunpack.c.l.b16 %v2343
  %v2353 = vunpack.c.h.b16 %v2343
  %v2354 = vunpack.c.l.b16 %v2344
  %v2355 = vunpack.c.h.b16 %v2344
  %v2356 = vunpack.c.l.b16 %v2345
  %v2357 = vunpack.c.h.b16 %v2345
  %v2358 = vpack.c.b16 %v2352, %v2350
  %v2359 = vpack.c.b16 %v2353, %v2351
  %v2360 = vpack.c.b16 %v2356, %v2354
  %v2361 = vpack.c.b16 %v2357, %v2355
  %v2367 = vsel %vm94, %v2341, 0
  %2369 = vmatpush.bf16.msra.mxu0 0
  %2370 = vmatpush.bf16.msra.mxu0 0
  %2371 = vmatpush.bf16.msra.mxu0 0
  %2372 = vmatpush.bf16.msra.mxu0 0
  %2373 = vmatpush.bf16.msra.mxu0 0
  %2374 = vmatpush.bf16.msra.mxu0 0
  %2375 = vmatpush.bf16.msra.mxu0 %v2360
  %2376 = vmatpush.bf16.msra.mxu0 %v2358
  %2377 = vmatmul.bf16.gmra.mxu0 %v2367
  %v2378 = vpop.f32.mrf.mxu0
  %v2379 = vadd.f32 0.0, %v2378
  %v2380 = vpop.f32.mrf.mxu0
  %2381 = vdwg.mxu0
  %2382 = vmatpush.bf16.msra.mxu0 0
  %2383 = vmatpush.bf16.msra.mxu0 0
  %2384 = vmatpush.bf16.msra.mxu0 0
  %2385 = vmatpush.bf16.msra.mxu0 0
  %2386 = vmatpush.bf16.msra.mxu0 0
  %2387 = vmatpush.bf16.msra.mxu0 0
  %2388 = vmatpush.bf16.msra.mxu0 %v2361
  %2389 = vmatpush.bf16.msra.mxu0 %v2359
  %2390 = vmatmul.bf16.gmra.mxu0 %v2367
  %v2391 = vpop.f32.mrf.mxu0
  %v2392 = vadd.f32 0.0, %v2391
  %v2393 = vpop.f32.mrf.mxu0
  %2394 = vdwg.mxu0
  %v2395 = vadd.f32 %v2323, %v2379
  %v2396 = vadd.f32 %v2336, %v2392
  %v2397 = vadd.f32 %v2395, %v233
  %v2398 = vadd.f32 %v2396, %v234
  %vm2399 = vcmp.gt.f32.partialorder %v2397, 0.0
  %vm2400 = vcmp.gt.f32.partialorder %v2398, 0.0
  %v2401 = vmul.f32 %v2397, 0.01
  %v2402 = vmul.f32 %v2398, 0.01
  %v2403 = vsel %vm2399, %v2397, %v2401
  %v2404 = vsel %vm2400, %v2398, %v2402
  %s2405 = scalar_lea.vmem [#allocation2], 192
  %2406 = vst [vmem:[%s2405] sm:$0xff] %v2403
  %2407 = vst.msk [vmem:[%s2405 + $0x8] sm:$0xff] %vm246, %v2404
  %v2408 = vld [vmem:[%s2339] sm:$0xff]
  %v2409 = vpack.c.bf16 %v2408, %v2408
  %v2410 = vld [vmem:[%s2] sm:$0xff]
  %v2411 = vld [vmem:[%s2 + $0x8] sm:$0xff]
  %v2412 = vld [vmem:[%s2 + $0x10] sm:$0xff]
  %v2413 = vld [vmem:[%s2 + $0x18] sm:$0xff]
  %s2414 = scalar_lea.vmem %s0, 216
  %v2415 = vld [vmem:[%s2414] sm:$0xff]
  %v2416 = vpack.c.bf16 %v2415, %v2415
  %v2417 = vld [vmem:[%s69] sm:$0xff]
  %v2418 = vld [vmem:[%s69 + $0x8] sm:$0xff]
  %v2419 = vld [vmem:[%s69 + $0x10] sm:$0xff]
  %v2420 = vld [vmem:[%s69 + $0x18] sm:$0xff]
  %v2425 = vunpack.c.l.b16 %v2417
  %v2426 = vunpack.c.h.b16 %v2417
  %v2427 = vunpack.c.l.b16 %v2418
  %v2428 = vunpack.c.h.b16 %v2418
  %v2429 = vunpack.c.l.b16 %v2419
  %v2430 = vunpack.c.h.b16 %v2419
  %v2431 = vunpack.c.l.b16 %v2420
  %v2432 = vunpack.c.h.b16 %v2420
  %v2433 = vpack.c.b16 %v2427, %v2425
  %v2434 = vpack.c.b16 %v2428, %v2426
  %v2435 = vpack.c.b16 %v2431, %v2429
  %v2436 = vpack.c.b16 %v2432, %v2430
  %v2442 = vsel %vm94, %v2416, 0
  %2444 = vmatpush.bf16.msra.mxu0 0
  %2445 = vmatpush.bf16.msra.mxu0 0
  %2446 = vmatpush.bf16.msra.mxu0 0
  %2447 = vmatpush.bf16.msra.mxu0 0
  %2448 = vmatpush.bf16.msra.mxu0 0
  %2449 = vmatpush.bf16.msra.mxu0 0
  %2450 = vmatpush.bf16.msra.mxu0 %v2435
  %2451 = vmatpush.bf16.msra.mxu0 %v2433
  %2452 = vmatmul.bf16.gmra.mxu0 %v2442
  %v2453 = vpop.f32.mrf.mxu0
  %v2454 = vadd.f32 0.0, %v2453
  %v2455 = vpop.f32.mrf.mxu0
  %2456 = vdwg.mxu0
  %2457 = vmatpush.bf16.msra.mxu0 0
  %2458 = vmatpush.bf16.msra.mxu0 0
  %2459 = vmatpush.bf16.msra.mxu0 0
  %2460 = vmatpush.bf16.msra.mxu0 0
  %2461 = vmatpush.bf16.msra.mxu0 0
  %2462 = vmatpush.bf16.msra.mxu0 0
  %2463 = vmatpush.bf16.msra.mxu0 %v2436
  %2464 = vmatpush.bf16.msra.mxu0 %v2434
  %2465 = vmatmul.bf16.gmra.mxu0 %v2442
  %v2466 = vpop.f32.mrf.mxu0
  %v2467 = vadd.f32 0.0, %v2466
  %v2468 = vpop.f32.mrf.mxu0
  %2469 = vdwg.mxu0
  %v2474 = vunpack.c.l.b16 %v2410
  %v2475 = vunpack.c.h.b16 %v2410
  %v2476 = vunpack.c.l.b16 %v2411
  %v2477 = vunpack.c.h.b16 %v2411
  %v2478 = vunpack.c.l.b16 %v2412
  %v2479 = vunpack.c.h.b16 %v2412
  %v2480 = vunpack.c.l.b16 %v2413
  %v2481 = vunpack.c.h.b16 %v2413
  %v2482 = vpack.c.b16 %v2476, %v2474
  %v2483 = vpack.c.b16 %v2477, %v2475
  %v2484 = vpack.c.b16 %v2480, %v2478
  %v2485 = vpack.c.b16 %v2481, %v2479
  %v2491 = vsel %vm94, %v2409, 0
  %2493 = vmatpush.bf16.msra.mxu0 0
  %2494 = vmatpush.bf16.msra.mxu0 0
  %2495 = vmatpush.bf16.msra.mxu0 0
  %2496 = vmatpush.bf16.msra.mxu0 0
  %2497 = vmatpush.bf16.msra.mxu0 0
  %2498 = vmatpush.bf16.msra.mxu0 0
  %2499 = vmatpush.bf16.msra.mxu0 %v2484
  %2500 = vmatpush.bf16.msra.mxu0 %v2482
  %2501 = vmatmul.bf16.gmra.mxu0 %v2491
  %v2502 = vpop.f32.mrf.mxu0
  %v2503 = vadd.f32 %v2454, %v2502
  %v2504 = vpop.f32.mrf.mxu0
  %2505 = vdwg.mxu0
  %2506 = vmatpush.bf16.msra.mxu0 0
  %2507 = vmatpush.bf16.msra.mxu0 0
  %2508 = vmatpush.bf16.msra.mxu0 0
  %2509 = vmatpush.bf16.msra.mxu0 0
  %2510 = vmatpush.bf16.msra.mxu0 0
  %2511 = vmatpush.bf16.msra.mxu0 0
  %2512 = vmatpush.bf16.msra.mxu0 %v2485
  %2513 = vmatpush.bf16.msra.mxu0 %v2483
  %2514 = vmatmul.bf16.gmra.mxu0 %v2491
  %v2515 = vpop.f32.mrf.mxu0
  %v2516 = vadd.f32 %v2467, %v2515
  %v2517 = vpop.f32.mrf.mxu0
  %2518 = vdwg.mxu0
  %s2519 = scalar_lea.vmem %s0, 224
  %v2520 = vld [vmem:[%s2519] sm:$0xff]
  %v2521 = vpack.c.bf16 %v2520, %v2520
  %v2522 = vld [vmem:[%s176] sm:$0xff]
  %v2523 = vld [vmem:[%s176 + $0x8] sm:$0xff]
  %v2524 = vld [vmem:[%s176 + $0x10] sm:$0xff]
  %v2525 = vld [vmem:[%s176 + $0x18] sm:$0xff]
  %v2530 = vunpack.c.l.b16 %v2522
  %v2531 = vunpack.c.h.b16 %v2522
  %v2532 = vunpack.c.l.b16 %v2523
  %v2533 = vunpack.c.h.b16 %v2523
  %v2534 = vunpack.c.l.b16 %v2524
  %v2535 = vunpack.c.h.b16 %v2524
  %v2536 = vunpack.c.l.b16 %v2525
  %v2537 = vunpack.c.h.b16 %v2525
  %v2538 = vpack.c.b16 %v2532, %v2530
  %v2539 = vpack.c.b16 %v2533, %v2531
  %v2540 = vpack.c.b16 %v2536, %v2534
  %v2541 = vpack.c.b16 %v2537, %v2535
  %v2547 = vsel %vm94, %v2521, 0
  %2549 = vmatpush.bf16.msra.mxu0 0
  %2550 = vmatpush.bf16.msra.mxu0 0
  %2551 = vmatpush.bf16.msra.mxu0 0
  %2552 = vmatpush.bf16.msra.mxu0 0
  %2553 = vmatpush.bf16.msra.mxu0 0
  %2554 = vmatpush.bf16.msra.mxu0 0
  %2555 = vmatpush.bf16.msra.mxu0 %v2540
  %2556 = vmatpush.bf16.msra.mxu0 %v2538
  %2557 = vmatmul.bf16.gmra.mxu0 %v2547
  %v2558 = vpop.f32.mrf.mxu0
  %v2559 = vadd.f32 0.0, %v2558
  %v2560 = vpop.f32.mrf.mxu0
  %2561 = vdwg.mxu0
  %2562 = vmatpush.bf16.msra.mxu0 0
  %2563 = vmatpush.bf16.msra.mxu0 0
  %2564 = vmatpush.bf16.msra.mxu0 0
  %2565 = vmatpush.bf16.msra.mxu0 0
  %2566 = vmatpush.bf16.msra.mxu0 0
  %2567 = vmatpush.bf16.msra.mxu0 0
  %2568 = vmatpush.bf16.msra.mxu0 %v2541
  %2569 = vmatpush.bf16.msra.mxu0 %v2539
  %2570 = vmatmul.bf16.gmra.mxu0 %v2547
  %v2571 = vpop.f32.mrf.mxu0
  %v2572 = vadd.f32 0.0, %v2571
  %v2573 = vpop.f32.mrf.mxu0
  %2574 = vdwg.mxu0
  %v2575 = vadd.f32 %v2503, %v2559
  %v2576 = vadd.f32 %v2516, %v2572
  %v2577 = vadd.f32 %v2575, %v233
  %v2578 = vadd.f32 %v2576, %v234
  %vm2579 = vcmp.gt.f32.partialorder %v2577, 0.0
  %vm2580 = vcmp.gt.f32.partialorder %v2578, 0.0
  %v2581 = vmul.f32 %v2577, 0.01
  %v2582 = vmul.f32 %v2578, 0.01
  %v2583 = vsel %vm2579, %v2577, %v2581
  %v2584 = vsel %vm2580, %v2578, %v2582
  %s2585 = scalar_lea.vmem [#allocation2], 208
  %2586 = vst [vmem:[%s2585] sm:$0xff] %v2583
  %2587 = vst.msk [vmem:[%s2585 + $0x8] sm:$0xff] %vm246, %v2584
  %v2588 = vld [vmem:[%s2519] sm:$0xff]
  %v2589 = vpack.c.bf16 %v2588, %v2588
  %v2590 = vld [vmem:[%s2] sm:$0xff]
  %v2591 = vld [vmem:[%s2 + $0x8] sm:$0xff]
  %v2592 = vld [vmem:[%s2 + $0x10] sm:$0xff]
  %v2593 = vld [vmem:[%s2 + $0x18] sm:$0xff]
  %s2594 = scalar_lea.vmem %s0, 232
  %v2595 = vld [vmem:[%s2594] sm:$0xff]
  %v2596 = vpack.c.bf16 %v2595, %v2595
  %v2597 = vld [vmem:[%s69] sm:$0xff]
  %v2598 = vld [vmem:[%s69 + $0x8] sm:$0xff]
  %v2599 = vld [vmem:[%s69 + $0x10] sm:$0xff]
  %v2600 = vld [vmem:[%s69 + $0x18] sm:$0xff]
  %v2605 = vunpack.c.l.b16 %v2597
  %v2606 = vunpack.c.h.b16 %v2597
  %v2607 = vunpack.c.l.b16 %v2598
  %v2608 = vunpack.c.h.b16 %v2598
  %v2609 = vunpack.c.l.b16 %v2599
  %v2610 = vunpack.c.h.b16 %v2599
  %v2611 = vunpack.c.l.b16 %v2600
  %v2612 = vunpack.c.h.b16 %v2600
  %v2613 = vpack.c.b16 %v2607, %v2605
  %v2614 = vpack.c.b16 %v2608, %v2606
  %v2615 = vpack.c.b16 %v2611, %v2609
  %v2616 = vpack.c.b16 %v2612, %v2610
  %v2622 = vsel %vm94, %v2596, 0
  %2624 = vmatpush.bf16.msra.mxu0 0
  %2625 = vmatpush.bf16.msra.mxu0 0
  %2626 = vmatpush.bf16.msra.mxu0 0
  %2627 = vmatpush.bf16.msra.mxu0 0
  %2628 = vmatpush.bf16.msra.mxu0 0
  %2629 = vmatpush.bf16.msra.mxu0 0
  %2630 = vmatpush.bf16.msra.mxu0 %v2615
  %2631 = vmatpush.bf16.msra.mxu0 %v2613
  %2632 = vmatmul.bf16.gmra.mxu0 %v2622
  %v2633 = vpop.f32.mrf.mxu0
  %v2634 = vadd.f32 0.0, %v2633
  %v2635 = vpop.f32.mrf.mxu0
  %2636 = vdwg.mxu0
  %2637 = vmatpush.bf16.msra.mxu0 0
  %2638 = vmatpush.bf16.msra.mxu0 0
  %2639 = vmatpush.bf16.msra.mxu0 0
  %2640 = vmatpush.bf16.msra.mxu0 0
  %2641 = vmatpush.bf16.msra.mxu0 0
  %2642 = vmatpush.bf16.msra.mxu0 0
  %2643 = vmatpush.bf16.msra.mxu0 %v2616
  %2644 = vmatpush.bf16.msra.mxu0 %v2614
  %2645 = vmatmul.bf16.gmra.mxu0 %v2622
  %v2646 = vpop.f32.mrf.mxu0
  %v2647 = vadd.f32 0.0, %v2646
  %v2648 = vpop.f32.mrf.mxu0
  %2649 = vdwg.mxu0
  %v2654 = vunpack.c.l.b16 %v2590
  %v2655 = vunpack.c.h.b16 %v2590
  %v2656 = vunpack.c.l.b16 %v2591
  %v2657 = vunpack.c.h.b16 %v2591
  %v2658 = vunpack.c.l.b16 %v2592
  %v2659 = vunpack.c.h.b16 %v2592
  %v2660 = vunpack.c.l.b16 %v2593
  %v2661 = vunpack.c.h.b16 %v2593
  %v2662 = vpack.c.b16 %v2656, %v2654
  %v2663 = vpack.c.b16 %v2657, %v2655
  %v2664 = vpack.c.b16 %v2660, %v2658
  %v2665 = vpack.c.b16 %v2661, %v2659
  %v2671 = vsel %vm94, %v2589, 0
  %2673 = vmatpush.bf16.msra.mxu0 0
  %2674 = vmatpush.bf16.msra.mxu0 0
  %2675 = vmatpush.bf16.msra.mxu0 0
  %2676 = vmatpush.bf16.msra.mxu0 0
  %2677 = vmatpush.bf16.msra.mxu0 0
  %2678 = vmatpush.bf16.msra.mxu0 0
  %2679 = vmatpush.bf16.msra.mxu0 %v2664
  %2680 = vmatpush.bf16.msra.mxu0 %v2662
  %2681 = vmatmul.bf16.gmra.mxu0 %v2671
  %v2682 = vpop.f32.mrf.mxu0
  %v2683 = vadd.f32 %v2634, %v2682
  %v2684 = vpop.f32.mrf.mxu0
  %2685 = vdwg.mxu0
  %2686 = vmatpush.bf16.msra.mxu0 0
  %2687 = vmatpush.bf16.msra.mxu0 0
  %2688 = vmatpush.bf16.msra.mxu0 0
  %2689 = vmatpush.bf16.msra.mxu0 0
  %2690 = vmatpush.bf16.msra.mxu0 0
  %2691 = vmatpush.bf16.msra.mxu0 0
  %2692 = vmatpush.bf16.msra.mxu0 %v2665
  %2693 = vmatpush.bf16.msra.mxu0 %v2663
  %2694 = vmatmul.bf16.gmra.mxu0 %v2671
  %v2695 = vpop.f32.mrf.mxu0
  %v2696 = vadd.f32 %v2647, %v2695
  %v2697 = vpop.f32.mrf.mxu0
  %2698 = vdwg.mxu0
  %s2699 = scalar_lea.vmem %s0, 240
  %v2700 = vld [vmem:[%s2699] sm:$0xff]
  %v2701 = vpack.c.bf16 %v2700, %v2700
  %v2702 = vld [vmem:[%s176] sm:$0xff]
  %v2703 = vld [vmem:[%s176 + $0x8] sm:$0xff]
  %v2704 = vld [vmem:[%s176 + $0x10] sm:$0xff]
  %v2705 = vld [vmem:[%s176 + $0x18] sm:$0xff]
  %v2710 = vunpack.c.l.b16 %v2702
  %v2711 = vunpack.c.h.b16 %v2702
  %v2712 = vunpack.c.l.b16 %v2703
  %v2713 = vunpack.c.h.b16 %v2703
  %v2714 = vunpack.c.l.b16 %v2704
  %v2715 = vunpack.c.h.b16 %v2704
  %v2716 = vunpack.c.l.b16 %v2705
  %v2717 = vunpack.c.h.b16 %v2705
  %v2718 = vpack.c.b16 %v2712, %v2710
  %v2719 = vpack.c.b16 %v2713, %v2711
  %v2720 = vpack.c.b16 %v2716, %v2714
  %v2721 = vpack.c.b16 %v2717, %v2715
  %v2727 = vsel %vm94, %v2701, 0
  %2729 = vmatpush.bf16.msra.mxu0 0
  %2730 = vmatpush.bf16.msra.mxu0 0
  %2731 = vmatpush.bf16.msra.mxu0 0
  %2732 = vmatpush.bf16.msra.mxu0 0
  %2733 = vmatpush.bf16.msra.mxu0 0
  %2734 = vmatpush.bf16.msra.mxu0 0
  %2735 = vmatpush.bf16.msra.mxu0 %v2720
  %2736 = vmatpush.bf16.msra.mxu0 %v2718
  %2737 = vmatmul.bf16.gmra.mxu0 %v2727
  %v2738 = vpop.f32.mrf.mxu0
  %v2739 = vadd.f32 0.0, %v2738
  %v2740 = vpop.f32.mrf.mxu0
  %2741 = vdwg.mxu0
  %2742 = vmatpush.bf16.msra.mxu0 0
  %2743 = vmatpush.bf16.msra.mxu0 0
  %2744 = vmatpush.bf16.msra.mxu0 0
  %2745 = vmatpush.bf16.msra.mxu0 0
  %2746 = vmatpush.bf16.msra.mxu0 0
  %2747 = vmatpush.bf16.msra.mxu0 0
  %2748 = vmatpush.bf16.msra.mxu0 %v2721
  %2749 = vmatpush.bf16.msra.mxu0 %v2719
  %2750 = vmatmul.bf16.gmra.mxu0 %v2727
  %v2751 = vpop.f32.mrf.mxu0
  %v2752 = vadd.f32 0.0, %v2751
  %v2753 = vpop.f32.mrf.mxu0
  %2754 = vdwg.mxu0
  %v2755 = vadd.f32 %v2683, %v2739
  %v2756 = vadd.f32 %v2696, %v2752
  %v2757 = vadd.f32 %v2755, %v233
  %v2758 = vadd.f32 %v2756, %v234
  %vm2759 = vcmp.gt.f32.partialorder %v2757, 0.0
  %vm2760 = vcmp.gt.f32.partialorder %v2758, 0.0
  %v2761 = vmul.f32 %v2757, 0.01
  %v2762 = vmul.f32 %v2758, 0.01
  %v2763 = vsel %vm2759, %v2757, %v2761
  %v2764 = vsel %vm2760, %v2758, %v2762
  %s2765 = scalar_lea.vmem [#allocation2], 224
  %2766 = vst [vmem:[%s2765] sm:$0xff] %v2763
  %2767 = vst.msk [vmem:[%s2765 + $0x8] sm:$0xff] %vm246, %v2764
  %v2768 = vld [vmem:[%s5] sm:$0x3]
  %v2769 = vld [vmem:[#allocation2] sm:$0xff]
  %v2770 = vld [vmem:[#allocation2 + $0x8] sm:$0xff]
  %v2771 = vpack.c.bf16 %v2769, %v2769
  %v2772 = vpack.c.bf16 %v2770, %v2770
  %v2773 = vld [vmem:[%s4] sm:$0xff]
  %v2774 = vld [vmem:[%s4 + $0x8] sm:$0xff]
  %v2775 = vld [vmem:[%s4 + $0x10] sm:$0xff]
  %v2776 = vld [vmem:[%s4 + $0x18] sm:$0xff]
  %v2777 = vld [vmem:[%s4 + $0x20] sm:$0xff]
  %v2778 = vld [vmem:[%s4 + $0x28] sm:$0xff]
  %v2779 = vld [vmem:[%s4 + $0x30] sm:$0xff]
  %v2780 = vld [vmem:[%s4 + $0x38] sm:$0xff]
  %v2781 = vld [vmem:[%s4 + $0x40] sm:$0xff]
  %v2782 = vld [vmem:[%s4 + $0x48] sm:$0xff]
  %v2783 = vld [vmem:[%s4 + $0x50] sm:$0xff]
  %v2784 = vld [vmem:[%s4 + $0x58] sm:$0xff]
  %v2785 = vld [vmem:[%s4 + $0x60] sm:$0xff]
  %v2786 = vld [vmem:[%s4 + $0x68] sm:$0xff]
  %v2787 = vld [vmem:[%s4 + $0x70] sm:$0xff]
  %v2788 = vld [vmem:[%s4 + $0x78] sm:$0xff]
  %v2789 = vld [vmem:[%s4 + $0x80] sm:$0xff]
  %v2790 = vld [vmem:[%s4 + $0x88] sm:$0xff]
  %v2791 = vld [vmem:[%s4 + $0x90] sm:$0xff]
  %v2792 = vld [vmem:[%s4 + $0x98] sm:$0xff]
  %v2793 = vld [vmem:[%s4 + $0xa0] sm:$0xff]
  %v2794 = vld [vmem:[%s4 + $0xa8] sm:$0xff]
  %v2795 = vld [vmem:[%s4 + $0xb0] sm:$0xff]
  %v2796 = vld [vmem:[%s4 + $0xb8] sm:$0xff]
  %v2797 = vld [vmem:[%s4 + $0xc0] sm:$0xff]
  %v2798 = vld [vmem:[%s4 + $0xc8] sm:$0xff]
  %v2799 = vld [vmem:[%s4 + $0xd0] sm:$0xff]
  %v2800 = vld [vmem:[%s4 + $0xd8] sm:$0xff]
  %v2801 = vld [vmem:[%s4 + $0xe0] sm:$0xff]
  %v2802 = vld [vmem:[%s4 + $0xe8] sm:$0xff]
  %v2803 = vld [vmem:[%s425] sm:$0xff]
  %v2804 = vld [vmem:[%s425 + $0x8] sm:$0xff]
  %v2805 = vpack.c.bf16 %v2803, %v2803
  %v2806 = vpack.c.bf16 %v2804, %v2804
  %s2807 = scalar_lea.vmem %s4, 240
  %v2808 = vld [vmem:[%s2807] sm:$0xff]
  %v2809 = vld [vmem:[%s2807 + $0x8] sm:$0xff]
  %v2810 = vld [vmem:[%s2807 + $0x10] sm:$0xff]
  %v2811 = vld [vmem:[%s2807 + $0x18] sm:$0xff]
  %v2812 = vld [vmem:[%s2807 + $0x20] sm:$0xff]
  %v2813 = vld [vmem:[%s2807 + $0x28] sm:$0xff]
  %v2814 = vld [vmem:[%s2807 + $0x30] sm:$0xff]
  %v2815 = vld [vmem:[%s2807 + $0x38] sm:$0xff]
  %v2816 = vld [vmem:[%s2807 + $0x40] sm:$0xff]
  %v2817 = vld [vmem:[%s2807 + $0x48] sm:$0xff]
  %v2818 = vld [vmem:[%s2807 + $0x50] sm:$0xff]
  %v2819 = vld [vmem:[%s2807 + $0x58] sm:$0xff]
  %v2820 = vld [vmem:[%s2807 + $0x60] sm:$0xff]
  %v2821 = vld [vmem:[%s2807 + $0x68] sm:$0xff]
  %v2822 = vld [vmem:[%s2807 + $0x70] sm:$0xff]
  %v2823 = vld [vmem:[%s2807 + $0x78] sm:$0xff]
  %v2824 = vld [vmem:[%s2807 + $0x80] sm:$0xff]
  %v2825 = vld [vmem:[%s2807 + $0x88] sm:$0xff]
  %v2826 = vld [vmem:[%s2807 + $0x90] sm:$0xff]
  %v2827 = vld [vmem:[%s2807 + $0x98] sm:$0xff]
  %v2828 = vld [vmem:[%s2807 + $0xa0] sm:$0xff]
  %v2829 = vld [vmem:[%s2807 + $0xa8] sm:$0xff]
  %v2830 = vld [vmem:[%s2807 + $0xb0] sm:$0xff]
  %v2831 = vld [vmem:[%s2807 + $0xb8] sm:$0xff]
  %v2832 = vld [vmem:[%s2807 + $0xc0] sm:$0xff]
  %v2833 = vld [vmem:[%s2807 + $0xc8] sm:$0xff]
  %v2834 = vld [vmem:[%s2807 + $0xd0] sm:$0xff]
  %v2835 = vld [vmem:[%s2807 + $0xd8] sm:$0xff]
  %v2836 = vld [vmem:[%s2807 + $0xe0] sm:$0xff]
  %v2837 = vld [vmem:[%s2807 + $0xe8] sm:$0xff]
  %v2868 = vunpack.c.l.b16 %v2808
  %v2869 = vunpack.c.h.b16 %v2808
  %v2870 = vunpack.c.l.b16 %v2809
  %v2871 = vunpack.c.h.b16 %v2809
  %v2872 = vunpack.c.l.b16 %v2810
  %v2873 = vunpack.c.h.b16 %v2810
  %v2874 = vunpack.c.l.b16 %v2811
  %v2875 = vunpack.c.h.b16 %v2811
  %v2876 = vunpack.c.l.b16 %v2812
  %v2877 = vunpack.c.h.b16 %v2812
  %v2878 = vunpack.c.l.b16 %v2813
  %v2879 = vunpack.c.h.b16 %v2813
  %v2880 = vunpack.c.l.b16 %v2814
  %v2881 = vunpack.c.h.b16 %v2814
  %v2882 = vunpack.c.l.b16 %v2815
  %v2883 = vunpack.c.h.b16 %v2815
  %v2884 = vunpack.c.l.b16 %v2816
  %v2885 = vunpack.c.h.b16 %v2816
  %v2886 = vunpack.c.l.b16 %v2817
  %v2887 = vunpack.c.h.b16 %v2817
  %v2888 = vunpack.c.l.b16 %v2818
  %v2889 = vunpack.c.h.b16 %v2818
  %v2890 = vunpack.c.l.b16 %v2819
  %v2891 = vunpack.c.h.b16 %v2819
  %v2892 = vunpack.c.l.b16 %v2820
  %v2893 = vunpack.c.h.b16 %v2820
  %v2894 = vunpack.c.l.b16 %v2821
  %v2895 = vunpack.c.h.b16 %v2821
  %v2896 = vunpack.c.l.b16 %v2822
  %v2897 = vunpack.c.h.b16 %v2822
  %v2898 = vunpack.c.l.b16 %v2823
  %v2899 = vunpack.c.h.b16 %v2823
  %v2900 = vunpack.c.l.b16 %v2824
  %v2901 = vunpack.c.h.b16 %v2824
  %v2902 = vunpack.c.l.b16 %v2825
  %v2903 = vunpack.c.h.b16 %v2825
  %v2904 = vunpack.c.l.b16 %v2826
  %v2905 = vunpack.c.h.b16 %v2826
  %v2906 = vunpack.c.l.b16 %v2827
  %v2907 = vunpack.c.h.b16 %v2827
  %v2908 = vunpack.c.l.b16 %v2828
  %v2909 = vunpack.c.h.b16 %v2828
  %v2910 = vunpack.c.l.b16 %v2829
  %v2911 = vunpack.c.h.b16 %v2829
  %v2912 = vunpack.c.l.b16 %v2830
  %v2913 = vunpack.c.h.b16 %v2830
  %v2914 = vunpack.c.l.b16 %v2831
  %v2915 = vunpack.c.h.b16 %v2831
  %v2916 = vunpack.c.l.b16 %v2832
  %v2917 = vunpack.c.h.b16 %v2832
  %v2918 = vunpack.c.l.b16 %v2833
  %v2919 = vunpack.c.h.b16 %v2833
  %v2920 = vunpack.c.l.b16 %v2834
  %v2921 = vunpack.c.h.b16 %v2834
  %v2922 = vunpack.c.l.b16 %v2835
  %v2923 = vunpack.c.h.b16 %v2835
  %v2924 = vunpack.c.l.b16 %v2836
  %v2925 = vunpack.c.h.b16 %v2836
  %v2926 = vunpack.c.l.b16 %v2837
  %v2927 = vunpack.c.h.b16 %v2837
  %v2928 = vpack.c.b16 %v2870, %v2868
  %v2929 = vpack.c.b16 %v2871, %v2869
  %v2930 = vpack.c.b16 %v2874, %v2872
  %v2931 = vpack.c.b16 %v2875, %v2873
  %v2932 = vpack.c.b16 %v2878, %v2876
  %v2933 = vpack.c.b16 %v2879, %v2877
  %v2934 = vpack.c.b16 %v2882, %v2880
  %v2935 = vpack.c.b16 %v2883, %v2881
  %v2936 = vpack.c.b16 %v2886, %v2884
  %v2937 = vpack.c.b16 %v2887, %v2885
  %v2938 = vpack.c.b16 %v2890, %v2888
  %v2939 = vpack.c.b16 %v2891, %v2889
  %v2940 = vpack.c.b16 %v2894, %v2892
  %v2941 = vpack.c.b16 %v2895, %v2893
  %v2942 = vpack.c.b16 %v2898, %v2896
  %v2943 = vpack.c.b16 %v2899, %v2897
  %v2944 = vpack.c.b16 %v2902, %v2900
  %v2945 = vpack.c.b16 %v2903, %v2901
  %v2946 = vpack.c.b16 %v2906, %v2904
  %v2947 = vpack.c.b16 %v2907, %v2905
  %v2948 = vpack.c.b16 %v2910, %v2908
  %v2949 = vpack.c.b16 %v2911, %v2909
  %v2950 = vpack.c.b16 %v2914, %v2912
  %v2951 = vpack.c.b16 %v2915, %v2913
  %v2952 = vpack.c.b16 %v2918, %v2916
  %v2953 = vpack.c.b16 %v2919, %v2917
  %v2954 = vpack.c.b16 %v2922, %v2920
  %v2955 = vpack.c.b16 %v2923, %v2921
  %v2956 = vpack.c.b16 %v2926, %v2924
  %v2957 = vpack.c.b16 %v2927, %v2925
  %v2989 = vsel %vm246, %v2806, 0
  %2991 = vmatpush.bf16.msra.mxu0 %v2942
  %2992 = vmatpush.bf16.msra.mxu0 %v2940
  %2993 = vmatpush.bf16.msra.mxu0 %v2938
  %2994 = vmatpush.bf16.msra.mxu0 %v2936
  %2995 = vmatpush.bf16.msra.mxu0 %v2934
  %2996 = vmatpush.bf16.msra.mxu0 %v2932
  %2997 = vmatpush.bf16.msra.mxu0 %v2930
  %2998 = vmatpush.bf16.msra.mxu0 %v2928
  %2999 = vmatmul.bf16.gmra.mxu0 %v2805
  %v3000 = vpop.f32.mrf.mxu0
  %v3001 = vadd.f32 0.0, %v3000
  %v3002 = vpop.f32.mrf.mxu0
  %3003 = vdwg.mxu0
  %3004 = vmatpush.bf16.msra.mxu0 0
  %3005 = vmatpush.bf16.msra.mxu0 %v2956
  %3006 = vmatpush.bf16.msra.mxu0 %v2954
  %3007 = vmatpush.bf16.msra.mxu0 %v2952
  %3008 = vmatpush.bf16.msra.mxu0 %v2950
  %3009 = vmatpush.bf16.msra.mxu0 %v2948
  %3010 = vmatpush.bf16.msra.mxu0 %v2946
  %3011 = vmatpush.bf16.msra.mxu0 %v2944
  %3012 = vmatmul.bf16.gmra.mxu0 %v2989
  %v3013 = vpop.f32.mrf.mxu0
  %v3014 = vadd.f32 %v3001, %v3013
  %v3015 = vpop.f32.mrf.mxu0
  %3016 = vdwg.mxu0
  %3017 = vmatpush.bf16.msra.mxu0 %v2943
  %3018 = vmatpush.bf16.msra.mxu0 %v2941
  %3019 = vmatpush.bf16.msra.mxu0 %v2939
  %3020 = vmatpush.bf16.msra.mxu0 %v2937
  %3021 = vmatpush.bf16.msra.mxu0 %v2935
  %3022 = vmatpush.bf16.msra.mxu0 %v2933
  %3023 = vmatpush.bf16.msra.mxu0 %v2931
  %3024 = vmatpush.bf16.msra.mxu0 %v2929
  %3025 = vmatmul.bf16.gmra.mxu0 %v2805
  %v3026 = vpop.f32.mrf.mxu0
  %v3027 = vadd.f32 0.0, %v3026
  %v3028 = vpop.f32.mrf.mxu0
  %3029 = vdwg.mxu0
  %3030 = vmatpush.bf16.msra.mxu0 0
  %3031 = vmatpush.bf16.msra.mxu0 %v2957
  %3032 = vmatpush.bf16.msra.mxu0 %v2955
  %3033 = vmatpush.bf16.msra.mxu0 %v2953
  %3034 = vmatpush.bf16.msra.mxu0 %v2951
  %3035 = vmatpush.bf16.msra.mxu0 %v2949
  %3036 = vmatpush.bf16.msra.mxu0 %v2947
  %3037 = vmatpush.bf16.msra.mxu0 %v2945
  %3038 = vmatmul.bf16.gmra.mxu0 %v2989
  %v3039 = vpop.f32.mrf.mxu0
  %v3040 = vadd.f32 %v3027, %v3039
  %v3041 = vpop.f32.mrf.mxu0
  %3042 = vdwg.mxu0
  %v3073 = vunpack.c.l.b16 %v2773
  %v3074 = vunpack.c.h.b16 %v2773
  %v3075 = vunpack.c.l.b16 %v2774
  %v3076 = vunpack.c.h.b16 %v2774
  %v3077 = vunpack.c.l.b16 %v2775
  %v3078 = vunpack.c.h.b16 %v2775
  %v3079 = vunpack.c.l.b16 %v2776
  %v3080 = vunpack.c.h.b16 %v2776
  %v3081 = vunpack.c.l.b16 %v2777
  %v3082 = vunpack.c.h.b16 %v2777
  %v3083 = vunpack.c.l.b16 %v2778
  %v3084 = vunpack.c.h.b16 %v2778
  %v3085 = vunpack.c.l.b16 %v2779
  %v3086 = vunpack.c.h.b16 %v2779
  %v3087 = vunpack.c.l.b16 %v2780
  %v3088 = vunpack.c.h.b16 %v2780
  %v3089 = vunpack.c.l.b16 %v2781
  %v3090 = vunpack.c.h.b16 %v2781
  %v3091 = vunpack.c.l.b16 %v2782
  %v3092 = vunpack.c.h.b16 %v2782
  %v3093 = vunpack.c.l.b16 %v2783
  %v3094 = vunpack.c.h.b16 %v2783
  %v3095 = vunpack.c.l.b16 %v2784
  %v3096 = vunpack.c.h.b16 %v2784
  %v3097 = vunpack.c.l.b16 %v2785
  %v3098 = vunpack.c.h.b16 %v2785
  %v3099 = vunpack.c.l.b16 %v2786
  %v3100 = vunpack.c.h.b16 %v2786
  %v3101 = vunpack.c.l.b16 %v2787
  %v3102 = vunpack.c.h.b16 %v2787
  %v3103 = vunpack.c.l.b16 %v2788
  %v3104 = vunpack.c.h.b16 %v2788
  %v3105 = vunpack.c.l.b16 %v2789
  %v3106 = vunpack.c.h.b16 %v2789
  %v3107 = vunpack.c.l.b16 %v2790
  %v3108 = vunpack.c.h.b16 %v2790
  %v3109 = vunpack.c.l.b16 %v2791
  %v3110 = vunpack.c.h.b16 %v2791
  %v3111 = vunpack.c.l.b16 %v2792
  %v3112 = vunpack.c.h.b16 %v2792
  %v3113 = vunpack.c.l.b16 %v2793
  %v3114 = vunpack.c.h.b16 %v2793
  %v3115 = vunpack.c.l.b16 %v2794
  %v3116 = vunpack.c.h.b16 %v2794
  %v3117 = vunpack.c.l.b16 %v2795
  %v3118 = vunpack.c.h.b16 %v2795
  %v3119 = vunpack.c.l.b16 %v2796
  %v3120 = vunpack.c.h.b16 %v2796
  %v3121 = vunpack.c.l.b16 %v2797
  %v3122 = vunpack.c.h.b16 %v2797
  %v3123 = vunpack.c.l.b16 %v2798
  %v3124 = vunpack.c.h.b16 %v2798
  %v3125 = vunpack.c.l.b16 %v2799
  %v3126 = vunpack.c.h.b16 %v2799
  %v3127 = vunpack.c.l.b16 %v2800
  %v3128 = vunpack.c.h.b16 %v2800
  %v3129 = vunpack.c.l.b16 %v2801
  %v3130 = vunpack.c.h.b16 %v2801
  %v3131 = vunpack.c.l.b16 %v2802
  %v3132 = vunpack.c.h.b16 %v2802
  %v3133 = vpack.c.b16 %v3075, %v3073
  %v3134 = vpack.c.b16 %v3076, %v3074
  %v3135 = vpack.c.b16 %v3079, %v3077
  %v3136 = vpack.c.b16 %v3080, %v3078
  %v3137 = vpack.c.b16 %v3083, %v3081
  %v3138 = vpack.c.b16 %v3084, %v3082
  %v3139 = vpack.c.b16 %v3087, %v3085
  %v3140 = vpack.c.b16 %v3088, %v3086
  %v3141 = vpack.c.b16 %v3091, %v3089
  %v3142 = vpack.c.b16 %v3092, %v3090
  %v3143 = vpack.c.b16 %v3095, %v3093
  %v3144 = vpack.c.b16 %v3096, %v3094
  %v3145 = vpack.c.b16 %v3099, %v3097
  %v3146 = vpack.c.b16 %v3100, %v3098
  %v3147 = vpack.c.b16 %v3103, %v3101
  %v3148 = vpack.c.b16 %v3104, %v3102
  %v3149 = vpack.c.b16 %v3107, %v3105
  %v3150 = vpack.c.b16 %v3108, %v3106
  %v3151 = vpack.c.b16 %v3111, %v3109
  %v3152 = vpack.c.b16 %v3112, %v3110
  %v3153 = vpack.c.b16 %v3115, %v3113
  %v3154 = vpack.c.b16 %v3116, %v3114
  %v3155 = vpack.c.b16 %v3119, %v3117
  %v3156 = vpack.c.b16 %v3120, %v3118
  %v3157 = vpack.c.b16 %v3123, %v3121
  %v3158 = vpack.c.b16 %v3124, %v3122
  %v3159 = vpack.c.b16 %v3127, %v3125
  %v3160 = vpack.c.b16 %v3128, %v3126
  %v3161 = vpack.c.b16 %v3131, %v3129
  %v3162 = vpack.c.b16 %v3132, %v3130
  %v3194 = vsel %vm246, %v2772, 0
  %3196 = vmatpush.bf16.msra.mxu0 %v3147
  %3197 = vmatpush.bf16.msra.mxu0 %v3145
  %3198 = vmatpush.bf16.msra.mxu0 %v3143
  %3199 = vmatpush.bf16.msra.mxu0 %v3141
  %3200 = vmatpush.bf16.msra.mxu0 %v3139
  %3201 = vmatpush.bf16.msra.mxu0 %v3137
  %3202 = vmatpush.bf16.msra.mxu0 %v3135
  %3203 = vmatpush.bf16.msra.mxu0 %v3133
  %3204 = vmatmul.bf16.gmra.mxu0 %v2771
  %v3205 = vpop.f32.mrf.mxu0
  %v3206 = vadd.f32 %v3014, %v3205
  %v3207 = vpop.f32.mrf.mxu0
  %3208 = vdwg.mxu0
  %3209 = vmatpush.bf16.msra.mxu0 0
  %3210 = vmatpush.bf16.msra.mxu0 %v3161
  %3211 = vmatpush.bf16.msra.mxu0 %v3159
  %3212 = vmatpush.bf16.msra.mxu0 %v3157
  %3213 = vmatpush.bf16.msra.mxu0 %v3155
  %3214 = vmatpush.bf16.msra.mxu0 %v3153
  %3215 = vmatpush.bf16.msra.mxu0 %v3151
  %3216 = vmatpush.bf16.msra.mxu0 %v3149
  %3217 = vmatmul.bf16.gmra.mxu0 %v3194
  %v3218 = vpop.f32.mrf.mxu0
  %v3219 = vadd.f32 %v3206, %v3218
  %v3220 = vpop.f32.mrf.mxu0
  %3221 = vdwg.mxu0
  %3222 = vmatpush.bf16.msra.mxu0 %v3148
  %3223 = vmatpush.bf16.msra.mxu0 %v3146
  %3224 = vmatpush.bf16.msra.mxu0 %v3144
  %3225 = vmatpush.bf16.msra.mxu0 %v3142
  %3226 = vmatpush.bf16.msra.mxu0 %v3140
  %3227 = vmatpush.bf16.msra.mxu0 %v3138
  %3228 = vmatpush.bf16.msra.mxu0 %v3136
  %3229 = vmatpush.bf16.msra.mxu0 %v3134
  %3230 = vmatmul.bf16.gmra.mxu0 %v2771
  %v3231 = vpop.f32.mrf.mxu0
  %v3232 = vadd.f32 %v3040, %v3231
  %v3233 = vpop.f32.mrf.mxu0
  %3234 = vdwg.mxu0
  %3235 = vmatpush.bf16.msra.mxu0 0
  %3236 = vmatpush.bf16.msra.mxu0 %v3162
  %3237 = vmatpush.bf16.msra.mxu0 %v3160
  %3238 = vmatpush.bf16.msra.mxu0 %v3158
  %3239 = vmatpush.bf16.msra.mxu0 %v3156
  %3240 = vmatpush.bf16.msra.mxu0 %v3154
  %3241 = vmatpush.bf16.msra.mxu0 %v3152
  %3242 = vmatpush.bf16.msra.mxu0 %v3150
  %3243 = vmatmul.bf16.gmra.mxu0 %v3194
  %v3244 = vpop.f32.mrf.mxu0
  %v3245 = vadd.f32 %v3232, %v3244
  %v3246 = vpop.f32.mrf.mxu0
  %3247 = vdwg.mxu0
  %v3248 = vld [vmem:[%s605] sm:$0xff]
  %v3249 = vld [vmem:[%s605 + $0x8] sm:$0xff]
  %v3250 = vpack.c.bf16 %v3248, %v3248
  %v3251 = vpack.c.bf16 %v3249, %v3249
  %s3252 = scalar_lea.vmem %s4, 480
  %v3253 = vld [vmem:[%s3252] sm:$0xff]
  %v3254 = vld [vmem:[%s3252 + $0x8] sm:$0xff]
  %v3255 = vld [vmem:[%s3252 + $0x10] sm:$0xff]
  %v3256 = vld [vmem:[%s3252 + $0x18] sm:$0xff]
  %v3257 = vld [vmem:[%s3252 + $0x20] sm:$0xff]
  %v3258 = vld [vmem:[%s3252 + $0x28] sm:$0xff]
  %v3259 = vld [vmem:[%s3252 + $0x30] sm:$0xff]
  %v3260 = vld [vmem:[%s3252 + $0x38] sm:$0xff]
  %v3261 = vld [vmem:[%s3252 + $0x40] sm:$0xff]
  %v3262 = vld [vmem:[%s3252 + $0x48] sm:$0xff]
  %v3263 = vld [vmem:[%s3252 + $0x50] sm:$0xff]
  %v3264 = vld [vmem:[%s3252 + $0x58] sm:$0xff]
  %v3265 = vld [vmem:[%s3252 + $0x60] sm:$0xff]
  %v3266 = vld [vmem:[%s3252 + $0x68] sm:$0xff]
  %v3267 = vld [vmem:[%s3252 + $0x70] sm:$0xff]
  %v3268 = vld [vmem:[%s3252 + $0x78] sm:$0xff]
  %v3269 = vld [vmem:[%s3252 + $0x80] sm:$0xff]
  %v3270 = vld [vmem:[%s3252 + $0x88] sm:$0xff]
  %v3271 = vld [vmem:[%s3252 + $0x90] sm:$0xff]
  %v3272 = vld [vmem:[%s3252 + $0x98] sm:$0xff]
  %v3273 = vld [vmem:[%s3252 + $0xa0] sm:$0xff]
  %v3274 = vld [vmem:[%s3252 + $0xa8] sm:$0xff]
  %v3275 = vld [vmem:[%s3252 + $0xb0] sm:$0xff]
  %v3276 = vld [vmem:[%s3252 + $0xb8] sm:$0xff]
  %v3277 = vld [vmem:[%s3252 + $0xc0] sm:$0xff]
  %v3278 = vld [vmem:[%s3252 + $0xc8] sm:$0xff]
  %v3279 = vld [vmem:[%s3252 + $0xd0] sm:$0xff]
  %v3280 = vld [vmem:[%s3252 + $0xd8] sm:$0xff]
  %v3281 = vld [vmem:[%s3252 + $0xe0] sm:$0xff]
  %v3282 = vld [vmem:[%s3252 + $0xe8] sm:$0xff]
  %v3313 = vunpack.c.l.b16 %v3253
  %v3314 = vunpack.c.h.b16 %v3253
  %v3315 = vunpack.c.l.b16 %v3254
  %v3316 = vunpack.c.h.b16 %v3254
  %v3317 = vunpack.c.l.b16 %v3255
  %v3318 = vunpack.c.h.b16 %v3255
  %v3319 = vunpack.c.l.b16 %v3256
  %v3320 = vunpack.c.h.b16 %v3256
  %v3321 = vunpack.c.l.b16 %v3257
  %v3322 = vunpack.c.h.b16 %v3257
  %v3323 = vunpack.c.l.b16 %v3258
  %v3324 = vunpack.c.h.b16 %v3258
  %v3325 = vunpack.c.l.b16 %v3259
  %v3326 = vunpack.c.h.b16 %v3259
  %v3327 = vunpack.c.l.b16 %v3260
  %v3328 = vunpack.c.h.b16 %v3260
  %v3329 = vunpack.c.l.b16 %v3261
  %v3330 = vunpack.c.h.b16 %v3261
  %v3331 = vunpack.c.l.b16 %v3262
  %v3332 = vunpack.c.h.b16 %v3262
  %v3333 = vunpack.c.l.b16 %v3263
  %v3334 = vunpack.c.h.b16 %v3263
  %v3335 = vunpack.c.l.b16 %v3264
  %v3336 = vunpack.c.h.b16 %v3264
  %v3337 = vunpack.c.l.b16 %v3265
  %v3338 = vunpack.c.h.b16 %v3265
  %v3339 = vunpack.c.l.b16 %v3266
  %v3340 = vunpack.c.h.b16 %v3266
  %v3341 = vunpack.c.l.b16 %v3267
  %v3342 = vunpack.c.h.b16 %v3267
  %v3343 = vunpack.c.l.b16 %v3268
  %v3344 = vunpack.c.h.b16 %v3268
  %v3345 = vunpack.c.l.b16 %v3269
  %v3346 = vunpack.c.h.b16 %v3269
  %v3347 = vunpack.c.l.b16 %v3270
  %v3348 = vunpack.c.h.b16 %v3270
  %v3349 = vunpack.c.l.b16 %v3271
  %v3350 = vunpack.c.h.b16 %v3271
  %v3351 = vunpack.c.l.b16 %v3272
  %v3352 = vunpack.c.h.b16 %v3272
  %v3353 = vunpack.c.l.b16 %v3273
  %v3354 = vunpack.c.h.b16 %v3273
  %v3355 = vunpack.c.l.b16 %v3274
  %v3356 = vunpack.c.h.b16 %v3274
  %v3357 = vunpack.c.l.b16 %v3275
  %v3358 = vunpack.c.h.b16 %v3275
  %v3359 = vunpack.c.l.b16 %v3276
  %v3360 = vunpack.c.h.b16 %v3276
  %v3361 = vunpack.c.l.b16 %v3277
  %v3362 = vunpack.c.h.b16 %v3277
  %v3363 = vunpack.c.l.b16 %v3278
  %v3364 = vunpack.c.h.b16 %v3278
  %v3365 = vunpack.c.l.b16 %v3279
  %v3366 = vunpack.c.h.b16 %v3279
  %v3367 = vunpack.c.l.b16 %v3280
  %v3368 = vunpack.c.h.b16 %v3280
  %v3369 = vunpack.c.l.b16 %v3281
  %v3370 = vunpack.c.h.b16 %v3281
  %v3371 = vunpack.c.l.b16 %v3282
  %v3372 = vunpack.c.h.b16 %v3282
  %v3373 = vpack.c.b16 %v3315, %v3313
  %v3374 = vpack.c.b16 %v3316, %v3314
  %v3375 = vpack.c.b16 %v3319, %v3317
  %v3376 = vpack.c.b16 %v3320, %v3318
  %v3377 = vpack.c.b16 %v3323, %v3321
  %v3378 = vpack.c.b16 %v3324, %v3322
  %v3379 = vpack.c.b16 %v3327, %v3325
  %v3380 = vpack.c.b16 %v3328, %v3326
  %v3381 = vpack.c.b16 %v3331, %v3329
  %v3382 = vpack.c.b16 %v3332, %v3330
  %v3383 = vpack.c.b16 %v3335, %v3333
  %v3384 = vpack.c.b16 %v3336, %v3334
  %v3385 = vpack.c.b16 %v3339, %v3337
  %v3386 = vpack.c.b16 %v3340, %v3338
  %v3387 = vpack.c.b16 %v3343, %v3341
  %v3388 = vpack.c.b16 %v3344, %v3342
  %v3389 = vpack.c.b16 %v3347, %v3345
  %v3390 = vpack.c.b16 %v3348, %v3346
  %v3391 = vpack.c.b16 %v3351, %v3349
  %v3392 = vpack.c.b16 %v3352, %v3350
  %v3393 = vpack.c.b16 %v3355, %v3353
  %v3394 = vpack.c.b16 %v3356, %v3354
  %v3395 = vpack.c.b16 %v3359, %v3357
  %v3396 = vpack.c.b16 %v3360, %v3358
  %v3397 = vpack.c.b16 %v3363, %v3361
  %v3398 = vpack.c.b16 %v3364, %v3362
  %v3399 = vpack.c.b16 %v3367, %v3365
  %v3400 = vpack.c.b16 %v3368, %v3366
  %v3401 = vpack.c.b16 %v3371, %v3369
  %v3402 = vpack.c.b16 %v3372, %v3370
  %v3434 = vsel %vm246, %v3251, 0
  %3436 = vmatpush.bf16.msra.mxu0 %v3387
  %3437 = vmatpush.bf16.msra.mxu0 %v3385
  %3438 = vmatpush.bf16.msra.mxu0 %v3383
  %3439 = vmatpush.bf16.msra.mxu0 %v3381
  %3440 = vmatpush.bf16.msra.mxu0 %v3379
  %3441 = vmatpush.bf16.msra.mxu0 %v3377
  %3442 = vmatpush.bf16.msra.mxu0 %v3375
  %3443 = vmatpush.bf16.msra.mxu0 %v3373
  %3444 = vmatmul.bf16.gmra.mxu0 %v3250
  %v3445 = vpop.f32.mrf.mxu0
  %v3446 = vadd.f32 0.0, %v3445
  %v3447 = vpop.f32.mrf.mxu0
  %3448 = vdwg.mxu0
  %3449 = vmatpush.bf16.msra.mxu0 0
  %3450 = vmatpush.bf16.msra.mxu0 %v3401
  %3451 = vmatpush.bf16.msra.mxu0 %v3399
  %3452 = vmatpush.bf16.msra.mxu0 %v3397
  %3453 = vmatpush.bf16.msra.mxu0 %v3395
  %3454 = vmatpush.bf16.msra.mxu0 %v3393
  %3455 = vmatpush.bf16.msra.mxu0 %v3391
  %3456 = vmatpush.bf16.msra.mxu0 %v3389
  %3457 = vmatmul.bf16.gmra.mxu0 %v3434
  %v3458 = vpop.f32.mrf.mxu0
  %v3459 = vadd.f32 %v3446, %v3458
  %v3460 = vpop.f32.mrf.mxu0
  %3461 = vdwg.mxu0
  %3462 = vmatpush.bf16.msra.mxu0 %v3388
  %3463 = vmatpush.bf16.msra.mxu0 %v3386
  %3464 = vmatpush.bf16.msra.mxu0 %v3384
  %3465 = vmatpush.bf16.msra.mxu0 %v3382
  %3466 = vmatpush.bf16.msra.mxu0 %v3380
  %3467 = vmatpush.bf16.msra.mxu0 %v3378
  %3468 = vmatpush.bf16.msra.mxu0 %v3376
  %3469 = vmatpush.bf16.msra.mxu0 %v3374
  %3470 = vmatmul.bf16.gmra.mxu0 %v3250
  %v3471 = vpop.f32.mrf.mxu0
  %v3472 = vadd.f32 0.0, %v3471
  %v3473 = vpop.f32.mrf.mxu0
  %3474 = vdwg.mxu0
  %3475 = vmatpush.bf16.msra.mxu0 0
  %3476 = vmatpush.bf16.msra.mxu0 %v3402
  %3477 = vmatpush.bf16.msra.mxu0 %v3400
  %3478 = vmatpush.bf16.msra.mxu0 %v3398
  %3479 = vmatpush.bf16.msra.mxu0 %v3396
  %3480 = vmatpush.bf16.msra.mxu0 %v3394
  %3481 = vmatpush.bf16.msra.mxu0 %v3392
  %3482 = vmatpush.bf16.msra.mxu0 %v3390
  %3483 = vmatmul.bf16.gmra.mxu0 %v3434
  %v3484 = vpop.f32.mrf.mxu0
  %v3485 = vadd.f32 %v3472, %v3484
  %v3486 = vpop.f32.mrf.mxu0
  %3487 = vdwg.mxu0
  %v3488 = vadd.f32 %v3219, %v3459
  %v3489 = vadd.f32 %v3245, %v3485
  %v3491 = vperm.slane %v2768, 0
  %v3492 = vperm.slane %v2768, 1
  %v3495 = vadd.f32 %v3488, %v3491
  %v3496 = vadd.f32 %v3489, %v3492
  %vm3497 = vcmp.gt.f32.partialorder %v3495, 0.0
  %vm3498 = vcmp.gt.f32.partialorder %v3496, 0.0
  %v3499 = vmul.f32 %v3495, 0.01
  %v3500 = vmul.f32 %v3496, 0.01
  %v3501 = vsel %vm3497, %v3495, %v3499
  %v3502 = vsel %vm3498, %v3496, %v3500
  %3503 = vst [vmem:[#allocation3] sm:$0xff] %v3501
  %vm3504 = vcmask 785408
  %3505 = vst.msk [vmem:[#allocation3 + $0x8] sm:$0xff] %vm3504, %v3502
  %v3506 = vld [vmem:[%s605] sm:$0xff]
  %v3507 = vld [vmem:[%s605 + $0x8] sm:$0xff]
  %v3508 = vpack.c.bf16 %v3506, %v3506
  %v3509 = vpack.c.bf16 %v3507, %v3507
  %v3510 = vld [vmem:[%s4] sm:$0xff]
  %v3511 = vld [vmem:[%s4 + $0x8] sm:$0xff]
  %v3512 = vld [vmem:[%s4 + $0x10] sm:$0xff]
  %v3513 = vld [vmem:[%s4 + $0x18] sm:$0xff]
  %v3514 = vld [vmem:[%s4 + $0x20] sm:$0xff]
  %v3515 = vld [vmem:[%s4 + $0x28] sm:$0xff]
  %v3516 = vld [vmem:[%s4 + $0x30] sm:$0xff]
  %v3517 = vld [vmem:[%s4 + $0x38] sm:$0xff]
  %v3518 = vld [vmem:[%s4 + $0x40] sm:$0xff]
  %v3519 = vld [vmem:[%s4 + $0x48] sm:$0xff]
  %v3520 = vld [vmem:[%s4 + $0x50] sm:$0xff]
  %v3521 = vld [vmem:[%s4 + $0x58] sm:$0xff]
  %v3522 = vld [vmem:[%s4 + $0x60] sm:$0xff]
  %v3523 = vld [vmem:[%s4 + $0x68] sm:$0xff]
  %v3524 = vld [vmem:[%s4 + $0x70] sm:$0xff]
  %v3525 = vld [vmem:[%s4 + $0x78] sm:$0xff]
  %v3526 = vld [vmem:[%s4 + $0x80] sm:$0xff]
  %v3527 = vld [vmem:[%s4 + $0x88] sm:$0xff]
  %v3528 = vld [vmem:[%s4 + $0x90] sm:$0xff]
  %v3529 = vld [vmem:[%s4 + $0x98] sm:$0xff]
  %v3530 = vld [vmem:[%s4 + $0xa0] sm:$0xff]
  %v3531 = vld [vmem:[%s4 + $0xa8] sm:$0xff]
  %v3532 = vld [vmem:[%s4 + $0xb0] sm:$0xff]
  %v3533 = vld [vmem:[%s4 + $0xb8] sm:$0xff]
  %v3534 = vld [vmem:[%s4 + $0xc0] sm:$0xff]
  %v3535 = vld [vmem:[%s4 + $0xc8] sm:$0xff]
  %v3536 = vld [vmem:[%s4 + $0xd0] sm:$0xff]
  %v3537 = vld [vmem:[%s4 + $0xd8] sm:$0xff]
  %v3538 = vld [vmem:[%s4 + $0xe0] sm:$0xff]
  %v3539 = vld [vmem:[%s4 + $0xe8] sm:$0xff]
  %v3540 = vld [vmem:[%s785] sm:$0xff]
  %v3541 = vld [vmem:[%s785 + $0x8] sm:$0xff]
  %v3542 = vpack.c.bf16 %v3540, %v3540
  %v3543 = vpack.c.bf16 %v3541, %v3541
  %v3544 = vld [vmem:[%s2807] sm:$0xff]
  %v3545 = vld [vmem:[%s2807 + $0x8] sm:$0xff]
  %v3546 = vld [vmem:[%s2807 + $0x10] sm:$0xff]
  %v3547 = vld [vmem:[%s2807 + $0x18] sm:$0xff]
  %v3548 = vld [vmem:[%s2807 + $0x20] sm:$0xff]
  %v3549 = vld [vmem:[%s2807 + $0x28] sm:$0xff]
  %v3550 = vld [vmem:[%s2807 + $0x30] sm:$0xff]
  %v3551 = vld [vmem:[%s2807 + $0x38] sm:$0xff]
  %v3552 = vld [vmem:[%s2807 + $0x40] sm:$0xff]
  %v3553 = vld [vmem:[%s2807 + $0x48] sm:$0xff]
  %v3554 = vld [vmem:[%s2807 + $0x50] sm:$0xff]
  %v3555 = vld [vmem:[%s2807 + $0x58] sm:$0xff]
  %v3556 = vld [vmem:[%s2807 + $0x60] sm:$0xff]
  %v3557 = vld [vmem:[%s2807 + $0x68] sm:$0xff]
  %v3558 = vld [vmem:[%s2807 + $0x70] sm:$0xff]
  %v3559 = vld [vmem:[%s2807 + $0x78] sm:$0xff]
  %v3560 = vld [vmem:[%s2807 + $0x80] sm:$0xff]
  %v3561 = vld [vmem:[%s2807 + $0x88] sm:$0xff]
  %v3562 = vld [vmem:[%s2807 + $0x90] sm:$0xff]
  %v3563 = vld [vmem:[%s2807 + $0x98] sm:$0xff]
  %v3564 = vld [vmem:[%s2807 + $0xa0] sm:$0xff]
  %v3565 = vld [vmem:[%s2807 + $0xa8] sm:$0xff]
  %v3566 = vld [vmem:[%s2807 + $0xb0] sm:$0xff]
  %v3567 = vld [vmem:[%s2807 + $0xb8] sm:$0xff]
  %v3568 = vld [vmem:[%s2807 + $0xc0] sm:$0xff]
  %v3569 = vld [vmem:[%s2807 + $0xc8] sm:$0xff]
  %v3570 = vld [vmem:[%s2807 + $0xd0] sm:$0xff]
  %v3571 = vld [vmem:[%s2807 + $0xd8] sm:$0xff]
  %v3572 = vld [vmem:[%s2807 + $0xe0] sm:$0xff]
  %v3573 = vld [vmem:[%s2807 + $0xe8] sm:$0xff]
  %v3604 = vunpack.c.l.b16 %v3544
  %v3605 = vunpack.c.h.b16 %v3544
  %v3606 = vunpack.c.l.b16 %v3545
  %v3607 = vunpack.c.h.b16 %v3545
  %v3608 = vunpack.c.l.b16 %v3546
  %v3609 = vunpack.c.h.b16 %v3546
  %v3610 = vunpack.c.l.b16 %v3547
  %v3611 = vunpack.c.h.b16 %v3547
  %v3612 = vunpack.c.l.b16 %v3548
  %v3613 = vunpack.c.h.b16 %v3548
  %v3614 = vunpack.c.l.b16 %v3549
  %v3615 = vunpack.c.h.b16 %v3549
  %v3616 = vunpack.c.l.b16 %v3550
  %v3617 = vunpack.c.h.b16 %v3550
  %v3618 = vunpack.c.l.b16 %v3551
  %v3619 = vunpack.c.h.b16 %v3551
  %v3620 = vunpack.c.l.b16 %v3552
  %v3621 = vunpack.c.h.b16 %v3552
  %v3622 = vunpack.c.l.b16 %v3553
  %v3623 = vunpack.c.h.b16 %v3553
  %v3624 = vunpack.c.l.b16 %v3554
  %v3625 = vunpack.c.h.b16 %v3554
  %v3626 = vunpack.c.l.b16 %v3555
  %v3627 = vunpack.c.h.b16 %v3555
  %v3628 = vunpack.c.l.b16 %v3556
  %v3629 = vunpack.c.h.b16 %v3556
  %v3630 = vunpack.c.l.b16 %v3557
  %v3631 = vunpack.c.h.b16 %v3557
  %v3632 = vunpack.c.l.b16 %v3558
  %v3633 = vunpack.c.h.b16 %v3558
  %v3634 = vunpack.c.l.b16 %v3559
  %v3635 = vunpack.c.h.b16 %v3559
  %v3636 = vunpack.c.l.b16 %v3560
  %v3637 = vunpack.c.h.b16 %v3560
  %v3638 = vunpack.c.l.b16 %v3561
  %v3639 = vunpack.c.h.b16 %v3561
  %v3640 = vunpack.c.l.b16 %v3562
  %v3641 = vunpack.c.h.b16 %v3562
  %v3642 = vunpack.c.l.b16 %v3563
  %v3643 = vunpack.c.h.b16 %v3563
  %v3644 = vunpack.c.l.b16 %v3564
  %v3645 = vunpack.c.h.b16 %v3564
  %v3646 = vunpack.c.l.b16 %v3565
  %v3647 = vunpack.c.h.b16 %v3565
  %v3648 = vunpack.c.l.b16 %v3566
  %v3649 = vunpack.c.h.b16 %v3566
  %v3650 = vunpack.c.l.b16 %v3567
  %v3651 = vunpack.c.h.b16 %v3567
  %v3652 = vunpack.c.l.b16 %v3568
  %v3653 = vunpack.c.h.b16 %v3568
  %v3654 = vunpack.c.l.b16 %v3569
  %v3655 = vunpack.c.h.b16 %v3569
  %v3656 = vunpack.c.l.b16 %v3570
  %v3657 = vunpack.c.h.b16 %v3570
  %v3658 = vunpack.c.l.b16 %v3571
  %v3659 = vunpack.c.h.b16 %v3571
  %v3660 = vunpack.c.l.b16 %v3572
  %v3661 = vunpack.c.h.b16 %v3572
  %v3662 = vunpack.c.l.b16 %v3573
  %v3663 = vunpack.c.h.b16 %v3573
  %v3664 = vpack.c.b16 %v3606, %v3604
  %v3665 = vpack.c.b16 %v3607, %v3605
  %v3666 = vpack.c.b16 %v3610, %v3608
  %v3667 = vpack.c.b16 %v3611, %v3609
  %v3668 = vpack.c.b16 %v3614, %v3612
  %v3669 = vpack.c.b16 %v3615, %v3613
  %v3670 = vpack.c.b16 %v3618, %v3616
  %v3671 = vpack.c.b16 %v3619, %v3617
  %v3672 = vpack.c.b16 %v3622, %v3620
  %v3673 = vpack.c.b16 %v3623, %v3621
  %v3674 = vpack.c.b16 %v3626, %v3624
  %v3675 = vpack.c.b16 %v3627, %v3625
  %v3676 = vpack.c.b16 %v3630, %v3628
  %v3677 = vpack.c.b16 %v3631, %v3629
  %v3678 = vpack.c.b16 %v3634, %v3632
  %v3679 = vpack.c.b16 %v3635, %v3633
  %v3680 = vpack.c.b16 %v3638, %v3636
  %v3681 = vpack.c.b16 %v3639, %v3637
  %v3682 = vpack.c.b16 %v3642, %v3640
  %v3683 = vpack.c.b16 %v3643, %v3641
  %v3684 = vpack.c.b16 %v3646, %v3644
  %v3685 = vpack.c.b16 %v3647, %v3645
  %v3686 = vpack.c.b16 %v3650, %v3648
  %v3687 = vpack.c.b16 %v3651, %v3649
  %v3688 = vpack.c.b16 %v3654, %v3652
  %v3689 = vpack.c.b16 %v3655, %v3653
  %v3690 = vpack.c.b16 %v3658, %v3656
  %v3691 = vpack.c.b16 %v3659, %v3657
  %v3692 = vpack.c.b16 %v3662, %v3660
  %v3693 = vpack.c.b16 %v3663, %v3661
  %v3725 = vsel %vm246, %v3543, 0
  %3727 = vmatpush.bf16.msra.mxu0 %v3678
  %3728 = vmatpush.bf16.msra.mxu0 %v3676
  %3729 = vmatpush.bf16.msra.mxu0 %v3674
  %3730 = vmatpush.bf16.msra.mxu0 %v3672
  %3731 = vmatpush.bf16.msra.mxu0 %v3670
  %3732 = vmatpush.bf16.msra.mxu0 %v3668
  %3733 = vmatpush.bf16.msra.mxu0 %v3666
  %3734 = vmatpush.bf16.msra.mxu0 %v3664
  %3735 = vmatmul.bf16.gmra.mxu0 %v3542
  %v3736 = vpop.f32.mrf.mxu0
  %v3737 = vadd.f32 0.0, %v3736
  %v3738 = vpop.f32.mrf.mxu0
  %3739 = vdwg.mxu0
  %3740 = vmatpush.bf16.msra.mxu0 0
  %3741 = vmatpush.bf16.msra.mxu0 %v3692
  %3742 = vmatpush.bf16.msra.mxu0 %v3690
  %3743 = vmatpush.bf16.msra.mxu0 %v3688
  %3744 = vmatpush.bf16.msra.mxu0 %v3686
  %3745 = vmatpush.bf16.msra.mxu0 %v3684
  %3746 = vmatpush.bf16.msra.mxu0 %v3682
  %3747 = vmatpush.bf16.msra.mxu0 %v3680
  %3748 = vmatmul.bf16.gmra.mxu0 %v3725
  %v3749 = vpop.f32.mrf.mxu0
  %v3750 = vadd.f32 %v3737, %v3749
  %v3751 = vpop.f32.mrf.mxu0
  %3752 = vdwg.mxu0
  %3753 = vmatpush.bf16.msra.mxu0 %v3679
  %3754 = vmatpush.bf16.msra.mxu0 %v3677
  %3755 = vmatpush.bf16.msra.mxu0 %v3675
  %3756 = vmatpush.bf16.msra.mxu0 %v3673
  %3757 = vmatpush.bf16.msra.mxu0 %v3671
  %3758 = vmatpush.bf16.msra.mxu0 %v3669
  %3759 = vmatpush.bf16.msra.mxu0 %v3667
  %3760 = vmatpush.bf16.msra.mxu0 %v3665
  %3761 = vmatmul.bf16.gmra.mxu0 %v3542
  %v3762 = vpop.f32.mrf.mxu0
  %v3763 = vadd.f32 0.0, %v3762
  %v3764 = vpop.f32.mrf.mxu0
  %3765 = vdwg.mxu0
  %3766 = vmatpush.bf16.msra.mxu0 0
  %3767 = vmatpush.bf16.msra.mxu0 %v3693
  %3768 = vmatpush.bf16.msra.mxu0 %v3691
  %3769 = vmatpush.bf16.msra.mxu0 %v3689
  %3770 = vmatpush.bf16.msra.mxu0 %v3687
  %3771 = vmatpush.bf16.msra.mxu0 %v3685
  %3772 = vmatpush.bf16.msra.mxu0 %v3683
  %3773 = vmatpush.bf16.msra.mxu0 %v3681
  %3774 = vmatmul.bf16.gmra.mxu0 %v3725
  %v3775 = vpop.f32.mrf.mxu0
  %v3776 = vadd.f32 %v3763, %v3775
  %v3777 = vpop.f32.mrf.mxu0
  %3778 = vdwg.mxu0
  %v3809 = vunpack.c.l.b16 %v3510
  %v3810 = vunpack.c.h.b16 %v3510
  %v3811 = vunpack.c.l.b16 %v3511
  %v3812 = vunpack.c.h.b16 %v3511
  %v3813 = vunpack.c.l.b16 %v3512
  %v3814 = vunpack.c.h.b16 %v3512
  %v3815 = vunpack.c.l.b16 %v3513
  %v3816 = vunpack.c.h.b16 %v3513
  %v3817 = vunpack.c.l.b16 %v3514
  %v3818 = vunpack.c.h.b16 %v3514
  %v3819 = vunpack.c.l.b16 %v3515
  %v3820 = vunpack.c.h.b16 %v3515
  %v3821 = vunpack.c.l.b16 %v3516
  %v3822 = vunpack.c.h.b16 %v3516
  %v3823 = vunpack.c.l.b16 %v3517
  %v3824 = vunpack.c.h.b16 %v3517
  %v3825 = vunpack.c.l.b16 %v3518
  %v3826 = vunpack.c.h.b16 %v3518
  %v3827 = vunpack.c.l.b16 %v3519
  %v3828 = vunpack.c.h.b16 %v3519
  %v3829 = vunpack.c.l.b16 %v3520
  %v3830 = vunpack.c.h.b16 %v3520
  %v3831 = vunpack.c.l.b16 %v3521
  %v3832 = vunpack.c.h.b16 %v3521
  %v3833 = vunpack.c.l.b16 %v3522
  %v3834 = vunpack.c.h.b16 %v3522
  %v3835 = vunpack.c.l.b16 %v3523
  %v3836 = vunpack.c.h.b16 %v3523
  %v3837 = vunpack.c.l.b16 %v3524
  %v3838 = vunpack.c.h.b16 %v3524
  %v3839 = vunpack.c.l.b16 %v3525
  %v3840 = vunpack.c.h.b16 %v3525
  %v3841 = vunpack.c.l.b16 %v3526
  %v3842 = vunpack.c.h.b16 %v3526
  %v3843 = vunpack.c.l.b16 %v3527
  %v3844 = vunpack.c.h.b16 %v3527
  %v3845 = vunpack.c.l.b16 %v3528
  %v3846 = vunpack.c.h.b16 %v3528
  %v3847 = vunpack.c.l.b16 %v3529
  %v3848 = vunpack.c.h.b16 %v3529
  %v3849 = vunpack.c.l.b16 %v3530
  %v3850 = vunpack.c.h.b16 %v3530
  %v3851 = vunpack.c.l.b16 %v3531
  %v3852 = vunpack.c.h.b16 %v3531
  %v3853 = vunpack.c.l.b16 %v3532
  %v3854 = vunpack.c.h.b16 %v3532
  %v3855 = vunpack.c.l.b16 %v3533
  %v3856 = vunpack.c.h.b16 %v3533
  %v3857 = vunpack.c.l.b16 %v3534
  %v3858 = vunpack.c.h.b16 %v3534
  %v3859 = vunpack.c.l.b16 %v3535
  %v3860 = vunpack.c.h.b16 %v3535
  %v3861 = vunpack.c.l.b16 %v3536
  %v3862 = vunpack.c.h.b16 %v3536
  %v3863 = vunpack.c.l.b16 %v3537
  %v3864 = vunpack.c.h.b16 %v3537
  %v3865 = vunpack.c.l.b16 %v3538
  %v3866 = vunpack.c.h.b16 %v3538
  %v3867 = vunpack.c.l.b16 %v3539
  %v3868 = vunpack.c.h.b16 %v3539
  %v3869 = vpack.c.b16 %v3811, %v3809
  %v3870 = vpack.c.b16 %v3812, %v3810
  %v3871 = vpack.c.b16 %v3815, %v3813
  %v3872 = vpack.c.b16 %v3816, %v3814
  %v3873 = vpack.c.b16 %v3819, %v3817
  %v3874 = vpack.c.b16 %v3820, %v3818
  %v3875 = vpack.c.b16 %v3823, %v3821
  %v3876 = vpack.c.b16 %v3824, %v3822
  %v3877 = vpack.c.b16 %v3827, %v3825
  %v3878 = vpack.c.b16 %v3828, %v3826
  %v3879 = vpack.c.b16 %v3831, %v3829
  %v3880 = vpack.c.b16 %v3832, %v3830
  %v3881 = vpack.c.b16 %v3835, %v3833
  %v3882 = vpack.c.b16 %v3836, %v3834
  %v3883 = vpack.c.b16 %v3839, %v3837
  %v3884 = vpack.c.b16 %v3840, %v3838
  %v3885 = vpack.c.b16 %v3843, %v3841
  %v3886 = vpack.c.b16 %v3844, %v3842
  %v3887 = vpack.c.b16 %v3847, %v3845
  %v3888 = vpack.c.b16 %v3848, %v3846
  %v3889 = vpack.c.b16 %v3851, %v3849
  %v3890 = vpack.c.b16 %v3852, %v3850
  %v3891 = vpack.c.b16 %v3855, %v3853
  %v3892 = vpack.c.b16 %v3856, %v3854
  %v3893 = vpack.c.b16 %v3859, %v3857
  %v3894 = vpack.c.b16 %v3860, %v3858
  %v3895 = vpack.c.b16 %v3863, %v3861
  %v3896 = vpack.c.b16 %v3864, %v3862
  %v3897 = vpack.c.b16 %v3867, %v3865
  %v3898 = vpack.c.b16 %v3868, %v3866
  %v3930 = vsel %vm246, %v3509, 0
  %3932 = vmatpush.bf16.msra.mxu0 %v3883
  %3933 = vmatpush.bf16.msra.mxu0 %v3881
  %3934 = vmatpush.bf16.msra.mxu0 %v3879
  %3935 = vmatpush.bf16.msra.mxu0 %v3877
  %3936 = vmatpush.bf16.msra.mxu0 %v3875
  %3937 = vmatpush.bf16.msra.mxu0 %v3873
  %3938 = vmatpush.bf16.msra.mxu0 %v3871
  %3939 = vmatpush.bf16.msra.mxu0 %v3869
  %3940 = vmatmul.bf16.gmra.mxu0 %v3508
  %v3941 = vpop.f32.mrf.mxu0
  %v3942 = vadd.f32 %v3750, %v3941
  %v3943 = vpop.f32.mrf.mxu0
  %3944 = vdwg.mxu0
  %3945 = vmatpush.bf16.msra.mxu0 0
  %3946 = vmatpush.bf16.msra.mxu0 %v3897
  %3947 = vmatpush.bf16.msra.mxu0 %v3895
  %3948 = vmatpush.bf16.msra.mxu0 %v3893
  %3949 = vmatpush.bf16.msra.mxu0 %v3891
  %3950 = vmatpush.bf16.msra.mxu0 %v3889
  %3951 = vmatpush.bf16.msra.mxu0 %v3887
  %3952 = vmatpush.bf16.msra.mxu0 %v3885
  %3953 = vmatmul.bf16.gmra.mxu0 %v3930
  %v3954 = vpop.f32.mrf.mxu0
  %v3955 = vadd.f32 %v3942, %v3954
  %v3956 = vpop.f32.mrf.mxu0
  %3957 = vdwg.mxu0
  %3958 = vmatpush.bf16.msra.mxu0 %v3884
  %3959 = vmatpush.bf16.msra.mxu0 %v3882
  %3960 = vmatpush.bf16.msra.mxu0 %v3880
  %3961 = vmatpush.bf16.msra.mxu0 %v3878
  %3962 = vmatpush.bf16.msra.mxu0 %v3876
  %3963 = vmatpush.bf16.msra.mxu0 %v3874
  %3964 = vmatpush.bf16.msra.mxu0 %v3872
  %3965 = vmatpush.bf16.msra.mxu0 %v3870
  %3966 = vmatmul.bf16.gmra.mxu0 %v3508
  %v3967 = vpop.f32.mrf.mxu0
  %v3968 = vadd.f32 %v3776, %v3967
  %v3969 = vpop.f32.mrf.mxu0
  %3970 = vdwg.mxu0
  %3971 = vmatpush.bf16.msra.mxu0 0
  %3972 = vmatpush.bf16.msra.mxu0 %v3898
  %3973 = vmatpush.bf16.msra.mxu0 %v3896
  %3974 = vmatpush.bf16.msra.mxu0 %v3894
  %3975 = vmatpush.bf16.msra.mxu0 %v3892
  %3976 = vmatpush.bf16.msra.mxu0 %v3890
  %3977 = vmatpush.bf16.msra.mxu0 %v3888
  %3978 = vmatpush.bf16.msra.mxu0 %v3886
  %3979 = vmatmul.bf16.gmra.mxu0 %v3930
  %v3980 = vpop.f32.mrf.mxu0
  %v3981 = vadd.f32 %v3968, %v3980
  %v3982 = vpop.f32.mrf.mxu0
  %3983 = vdwg.mxu0
  %v3984 = vld [vmem:[%s965] sm:$0xff]
  %v3985 = vld [vmem:[%s965 + $0x8] sm:$0xff]
  %v3986 = vpack.c.bf16 %v3984, %v3984
  %v3987 = vpack.c.bf16 %v3985, %v3985
  %v3988 = vld [vmem:[%s3252] sm:$0xff]
  %v3989 = vld [vmem:[%s3252 + $0x8] sm:$0xff]
  %v3990 = vld [vmem:[%s3252 + $0x10] sm:$0xff]
  %v3991 = vld [vmem:[%s3252 + $0x18] sm:$0xff]
  %v3992 = vld [vmem:[%s3252 + $0x20] sm:$0xff]
  %v3993 = vld [vmem:[%s3252 + $0x28] sm:$0xff]
  %v3994 = vld [vmem:[%s3252 + $0x30] sm:$0xff]
  %v3995 = vld [vmem:[%s3252 + $0x38] sm:$0xff]
  %v3996 = vld [vmem:[%s3252 + $0x40] sm:$0xff]
  %v3997 = vld [vmem:[%s3252 + $0x48] sm:$0xff]
  %v3998 = vld [vmem:[%s3252 + $0x50] sm:$0xff]
  %v3999 = vld [vmem:[%s3252 + $0x58] sm:$0xff]
  %v4000 = vld [vmem:[%s3252 + $0x60] sm:$0xff]
  %v4001 = vld [vmem:[%s3252 + $0x68] sm:$0xff]
  %v4002 = vld [vmem:[%s3252 + $0x70] sm:$0xff]
  %v4003 = vld [vmem:[%s3252 + $0x78] sm:$0xff]
  %v4004 = vld [vmem:[%s3252 + $0x80] sm:$0xff]
  %v4005 = vld [vmem:[%s3252 + $0x88] sm:$0xff]
  %v4006 = vld [vmem:[%s3252 + $0x90] sm:$0xff]
  %v4007 = vld [vmem:[%s3252 + $0x98] sm:$0xff]
  %v4008 = vld [vmem:[%s3252 + $0xa0] sm:$0xff]
  %v4009 = vld [vmem:[%s3252 + $0xa8] sm:$0xff]
  %v4010 = vld [vmem:[%s3252 + $0xb0] sm:$0xff]
  %v4011 = vld [vmem:[%s3252 + $0xb8] sm:$0xff]
  %v4012 = vld [vmem:[%s3252 + $0xc0] sm:$0xff]
  %v4013 = vld [vmem:[%s3252 + $0xc8] sm:$0xff]
  %v4014 = vld [vmem:[%s3252 + $0xd0] sm:$0xff]
  %v4015 = vld [vmem:[%s3252 + $0xd8] sm:$0xff]
  %v4016 = vld [vmem:[%s3252 + $0xe0] sm:$0xff]
  %v4017 = vld [vmem:[%s3252 + $0xe8] sm:$0xff]
  %v4048 = vunpack.c.l.b16 %v3988
  %v4049 = vunpack.c.h.b16 %v3988
  %v4050 = vunpack.c.l.b16 %v3989
  %v4051 = vunpack.c.h.b16 %v3989
  %v4052 = vunpack.c.l.b16 %v3990
  %v4053 = vunpack.c.h.b16 %v3990
  %v4054 = vunpack.c.l.b16 %v3991
  %v4055 = vunpack.c.h.b16 %v3991
  %v4056 = vunpack.c.l.b16 %v3992
  %v4057 = vunpack.c.h.b16 %v3992
  %v4058 = vunpack.c.l.b16 %v3993
  %v4059 = vunpack.c.h.b16 %v3993
  %v4060 = vunpack.c.l.b16 %v3994
  %v4061 = vunpack.c.h.b16 %v3994
  %v4062 = vunpack.c.l.b16 %v3995
  %v4063 = vunpack.c.h.b16 %v3995
  %v4064 = vunpack.c.l.b16 %v3996
  %v4065 = vunpack.c.h.b16 %v3996
  %v4066 = vunpack.c.l.b16 %v3997
  %v4067 = vunpack.c.h.b16 %v3997
  %v4068 = vunpack.c.l.b16 %v3998
  %v4069 = vunpack.c.h.b16 %v3998
  %v4070 = vunpack.c.l.b16 %v3999
  %v4071 = vunpack.c.h.b16 %v3999
  %v4072 = vunpack.c.l.b16 %v4000
  %v4073 = vunpack.c.h.b16 %v4000
  %v4074 = vunpack.c.l.b16 %v4001
  %v4075 = vunpack.c.h.b16 %v4001
  %v4076 = vunpack.c.l.b16 %v4002
  %v4077 = vunpack.c.h.b16 %v4002
  %v4078 = vunpack.c.l.b16 %v4003
  %v4079 = vunpack.c.h.b16 %v4003
  %v4080 = vunpack.c.l.b16 %v4004
  %v4081 = vunpack.c.h.b16 %v4004
  %v4082 = vunpack.c.l.b16 %v4005
  %v4083 = vunpack.c.h.b16 %v4005
  %v4084 = vunpack.c.l.b16 %v4006
  %v4085 = vunpack.c.h.b16 %v4006
  %v4086 = vunpack.c.l.b16 %v4007
  %v4087 = vunpack.c.h.b16 %v4007
  %v4088 = vunpack.c.l.b16 %v4008
  %v4089 = vunpack.c.h.b16 %v4008
  %v4090 = vunpack.c.l.b16 %v4009
  %v4091 = vunpack.c.h.b16 %v4009
  %v4092 = vunpack.c.l.b16 %v4010
  %v4093 = vunpack.c.h.b16 %v4010
  %v4094 = vunpack.c.l.b16 %v4011
  %v4095 = vunpack.c.h.b16 %v4011
  %v4096 = vunpack.c.l.b16 %v4012
  %v4097 = vunpack.c.h.b16 %v4012
  %v4098 = vunpack.c.l.b16 %v4013
  %v4099 = vunpack.c.h.b16 %v4013
  %v4100 = vunpack.c.l.b16 %v4014
  %v4101 = vunpack.c.h.b16 %v4014
  %v4102 = vunpack.c.l.b16 %v4015
  %v4103 = vunpack.c.h.b16 %v4015
  %v4104 = vunpack.c.l.b16 %v4016
  %v4105 = vunpack.c.h.b16 %v4016
  %v4106 = vunpack.c.l.b16 %v4017
  %v4107 = vunpack.c.h.b16 %v4017
  %v4108 = vpack.c.b16 %v4050, %v4048
  %v4109 = vpack.c.b16 %v4051, %v4049
  %v4110 = vpack.c.b16 %v4054, %v4052
  %v4111 = vpack.c.b16 %v4055, %v4053
  %v4112 = vpack.c.b16 %v4058, %v4056
  %v4113 = vpack.c.b16 %v4059, %v4057
  %v4114 = vpack.c.b16 %v4062, %v4060
  %v4115 = vpack.c.b16 %v4063, %v4061
  %v4116 = vpack.c.b16 %v4066, %v4064
  %v4117 = vpack.c.b16 %v4067, %v4065
  %v4118 = vpack.c.b16 %v4070, %v4068
  %v4119 = vpack.c.b16 %v4071, %v4069
  %v4120 = vpack.c.b16 %v4074, %v4072
  %v4121 = vpack.c.b16 %v4075, %v4073
  %v4122 = vpack.c.b16 %v4078, %v4076
  %v4123 = vpack.c.b16 %v4079, %v4077
  %v4124 = vpack.c.b16 %v4082, %v4080
  %v4125 = vpack.c.b16 %v4083, %v4081
  %v4126 = vpack.c.b16 %v4086, %v4084
  %v4127 = vpack.c.b16 %v4087, %v4085
  %v4128 = vpack.c.b16 %v4090, %v4088
  %v4129 = vpack.c.b16 %v4091, %v4089
  %v4130 = vpack.c.b16 %v4094, %v4092
  %v4131 = vpack.c.b16 %v4095, %v4093
  %v4132 = vpack.c.b16 %v4098, %v4096
  %v4133 = vpack.c.b16 %v4099, %v4097
  %v4134 = vpack.c.b16 %v4102, %v4100
  %v4135 = vpack.c.b16 %v4103, %v4101
  %v4136 = vpack.c.b16 %v4106, %v4104
  %v4137 = vpack.c.b16 %v4107, %v4105
  %v4169 = vsel %vm246, %v3987, 0
  %4171 = vmatpush.bf16.msra.mxu0 %v4122
  %4172 = vmatpush.bf16.msra.mxu0 %v4120
  %4173 = vmatpush.bf16.msra.mxu0 %v4118
  %4174 = vmatpush.bf16.msra.mxu0 %v4116
  %4175 = vmatpush.bf16.msra.mxu0 %v4114
  %4176 = vmatpush.bf16.msra.mxu0 %v4112
  %4177 = vmatpush.bf16.msra.mxu0 %v4110
  %4178 = vmatpush.bf16.msra.mxu0 %v4108
  %4179 = vmatmul.bf16.gmra.mxu0 %v3986
  %v4180 = vpop.f32.mrf.mxu0
  %v4181 = vadd.f32 0.0, %v4180
  %v4182 = vpop.f32.mrf.mxu0
  %4183 = vdwg.mxu0
  %4184 = vmatpush.bf16.msra.mxu0 0
  %4185 = vmatpush.bf16.msra.mxu0 %v4136
  %4186 = vmatpush.bf16.msra.mxu0 %v4134
  %4187 = vmatpush.bf16.msra.mxu0 %v4132
  %4188 = vmatpush.bf16.msra.mxu0 %v4130
  %4189 = vmatpush.bf16.msra.mxu0 %v4128
  %4190 = vmatpush.bf16.msra.mxu0 %v4126
  %4191 = vmatpush.bf16.msra.mxu0 %v4124
  %4192 = vmatmul.bf16.gmra.mxu0 %v4169
  %v4193 = vpop.f32.mrf.mxu0
  %v4194 = vadd.f32 %v4181, %v4193
  %v4195 = vpop.f32.mrf.mxu0
  %4196 = vdwg.mxu0
  %4197 = vmatpush.bf16.msra.mxu0 %v4123
  %4198 = vmatpush.bf16.msra.mxu0 %v4121
  %4199 = vmatpush.bf16.msra.mxu0 %v4119
  %4200 = vmatpush.bf16.msra.mxu0 %v4117
  %4201 = vmatpush.bf16.msra.mxu0 %v4115
  %4202 = vmatpush.bf16.msra.mxu0 %v4113
  %4203 = vmatpush.bf16.msra.mxu0 %v4111
  %4204 = vmatpush.bf16.msra.mxu0 %v4109
  %4205 = vmatmul.bf16.gmra.mxu0 %v3986
  %v4206 = vpop.f32.mrf.mxu0
  %v4207 = vadd.f32 0.0, %v4206
  %v4208 = vpop.f32.mrf.mxu0
  %4209 = vdwg.mxu0
  %4210 = vmatpush.bf16.msra.mxu0 0
  %4211 = vmatpush.bf16.msra.mxu0 %v4137
  %4212 = vmatpush.bf16.msra.mxu0 %v4135
  %4213 = vmatpush.bf16.msra.mxu0 %v4133
  %4214 = vmatpush.bf16.msra.mxu0 %v4131
  %4215 = vmatpush.bf16.msra.mxu0 %v4129
  %4216 = vmatpush.bf16.msra.mxu0 %v4127
  %4217 = vmatpush.bf16.msra.mxu0 %v4125
  %4218 = vmatmul.bf16.gmra.mxu0 %v4169
  %v4219 = vpop.f32.mrf.mxu0
  %v4220 = vadd.f32 %v4207, %v4219
  %v4221 = vpop.f32.mrf.mxu0
  %4222 = vdwg.mxu0
  %v4223 = vadd.f32 %v3955, %v4194
  %v4224 = vadd.f32 %v3981, %v4220
  %v4225 = vadd.f32 %v4223, %v3491
  %v4226 = vadd.f32 %v4224, %v3492
  %vm4227 = vcmp.gt.f32.partialorder %v4225, 0.0
  %vm4228 = vcmp.gt.f32.partialorder %v4226, 0.0
  %v4229 = vmul.f32 %v4225, 0.01
  %v4230 = vmul.f32 %v4226, 0.01
  %v4231 = vsel %vm4227, %v4225, %v4229
  %v4232 = vsel %vm4228, %v4226, %v4230
  %s4233 = scalar_lea.vmem [#allocation3], 16
  %4234 = vst [vmem:[%s4233] sm:$0xff] %v4231
  %4235 = vst.msk [vmem:[%s4233 + $0x8] sm:$0xff] %vm3504, %v4232
  %v4236 = vld [vmem:[%s965] sm:$0xff]
  %v4237 = vld [vmem:[%s965 + $0x8] sm:$0xff]
  %v4238 = vpack.c.bf16 %v4236, %v4236
  %v4239 = vpack.c.bf16 %v4237, %v4237
  %v4240 = vld [vmem:[%s4] sm:$0xff]
  %v4241 = vld [vmem:[%s4 + $0x8] sm:$0xff]
  %v4242 = vld [vmem:[%s4 + $0x10] sm:$0xff]
  %v4243 = vld [vmem:[%s4 + $0x18] sm:$0xff]
  %v4244 = vld [vmem:[%s4 + $0x20] sm:$0xff]
  %v4245 = vld [vmem:[%s4 + $0x28] sm:$0xff]
  %v4246 = vld [vmem:[%s4 + $0x30] sm:$0xff]
  %v4247 = vld [vmem:[%s4 + $0x38] sm:$0xff]
  %v4248 = vld [vmem:[%s4 + $0x40] sm:$0xff]
  %v4249 = vld [vmem:[%s4 + $0x48] sm:$0xff]
  %v4250 = vld [vmem:[%s4 + $0x50] sm:$0xff]
  %v4251 = vld [vmem:[%s4 + $0x58] sm:$0xff]
  %v4252 = vld [vmem:[%s4 + $0x60] sm:$0xff]
  %v4253 = vld [vmem:[%s4 + $0x68] sm:$0xff]
  %v4254 = vld [vmem:[%s4 + $0x70] sm:$0xff]
  %v4255 = vld [vmem:[%s4 + $0x78] sm:$0xff]
  %v4256 = vld [vmem:[%s4 + $0x80] sm:$0xff]
  %v4257 = vld [vmem:[%s4 + $0x88] sm:$0xff]
  %v4258 = vld [vmem:[%s4 + $0x90] sm:$0xff]
  %v4259 = vld [vmem:[%s4 + $0x98] sm:$0xff]
  %v4260 = vld [vmem:[%s4 + $0xa0] sm:$0xff]
  %v4261 = vld [vmem:[%s4 + $0xa8] sm:$0xff]
  %v4262 = vld [vmem:[%s4 + $0xb0] sm:$0xff]
  %v4263 = vld [vmem:[%s4 + $0xb8] sm:$0xff]
  %v4264 = vld [vmem:[%s4 + $0xc0] sm:$0xff]
  %v4265 = vld [vmem:[%s4 + $0xc8] sm:$0xff]
  %v4266 = vld [vmem:[%s4 + $0xd0] sm:$0xff]
  %v4267 = vld [vmem:[%s4 + $0xd8] sm:$0xff]
  %v4268 = vld [vmem:[%s4 + $0xe0] sm:$0xff]
  %v4269 = vld [vmem:[%s4 + $0xe8] sm:$0xff]
  %v4270 = vld [vmem:[%s1145] sm:$0xff]
  %v4271 = vld [vmem:[%s1145 + $0x8] sm:$0xff]
  %v4272 = vpack.c.bf16 %v4270, %v4270
  %v4273 = vpack.c.bf16 %v4271, %v4271
  %v4274 = vld [vmem:[%s2807] sm:$0xff]
  %v4275 = vld [vmem:[%s2807 + $0x8] sm:$0xff]
  %v4276 = vld [vmem:[%s2807 + $0x10] sm:$0xff]
  %v4277 = vld [vmem:[%s2807 + $0x18] sm:$0xff]
  %v4278 = vld [vmem:[%s2807 + $0x20] sm:$0xff]
  %v4279 = vld [vmem:[%s2807 + $0x28] sm:$0xff]
  %v4280 = vld [vmem:[%s2807 + $0x30] sm:$0xff]
  %v4281 = vld [vmem:[%s2807 + $0x38] sm:$0xff]
  %v4282 = vld [vmem:[%s2807 + $0x40] sm:$0xff]
  %v4283 = vld [vmem:[%s2807 + $0x48] sm:$0xff]
  %v4284 = vld [vmem:[%s2807 + $0x50] sm:$0xff]
  %v4285 = vld [vmem:[%s2807 + $0x58] sm:$0xff]
  %v4286 = vld [vmem:[%s2807 + $0x60] sm:$0xff]
  %v4287 = vld [vmem:[%s2807 + $0x68] sm:$0xff]
  %v4288 = vld [vmem:[%s2807 + $0x70] sm:$0xff]
  %v4289 = vld [vmem:[%s2807 + $0x78] sm:$0xff]
  %v4290 = vld [vmem:[%s2807 + $0x80] sm:$0xff]
  %v4291 = vld [vmem:[%s2807 + $0x88] sm:$0xff]
  %v4292 = vld [vmem:[%s2807 + $0x90] sm:$0xff]
  %v4293 = vld [vmem:[%s2807 + $0x98] sm:$0xff]
  %v4294 = vld [vmem:[%s2807 + $0xa0] sm:$0xff]
  %v4295 = vld [vmem:[%s2807 + $0xa8] sm:$0xff]
  %v4296 = vld [vmem:[%s2807 + $0xb0] sm:$0xff]
  %v4297 = vld [vmem:[%s2807 + $0xb8] sm:$0xff]
  %v4298 = vld [vmem:[%s2807 + $0xc0] sm:$0xff]
  %v4299 = vld [vmem:[%s2807 + $0xc8] sm:$0xff]
  %v4300 = vld [vmem:[%s2807 + $0xd0] sm:$0xff]
  %v4301 = vld [vmem:[%s2807 + $0xd8] sm:$0xff]
  %v4302 = vld [vmem:[%s2807 + $0xe0] sm:$0xff]
  %v4303 = vld [vmem:[%s2807 + $0xe8] sm:$0xff]
  %v4334 = vunpack.c.l.b16 %v4274
  %v4335 = vunpack.c.h.b16 %v4274
  %v4336 = vunpack.c.l.b16 %v4275
  %v4337 = vunpack.c.h.b16 %v4275
  %v4338 = vunpack.c.l.b16 %v4276
  %v4339 = vunpack.c.h.b16 %v4276
  %v4340 = vunpack.c.l.b16 %v4277
  %v4341 = vunpack.c.h.b16 %v4277
  %v4342 = vunpack.c.l.b16 %v4278
  %v4343 = vunpack.c.h.b16 %v4278
  %v4344 = vunpack.c.l.b16 %v4279
  %v4345 = vunpack.c.h.b16 %v4279
  %v4346 = vunpack.c.l.b16 %v4280
  %v4347 = vunpack.c.h.b16 %v4280
  %v4348 = vunpack.c.l.b16 %v4281
  %v4349 = vunpack.c.h.b16 %v4281
  %v4350 = vunpack.c.l.b16 %v4282
  %v4351 = vunpack.c.h.b16 %v4282
  %v4352 = vunpack.c.l.b16 %v4283
  %v4353 = vunpack.c.h.b16 %v4283
  %v4354 = vunpack.c.l.b16 %v4284
  %v4355 = vunpack.c.h.b16 %v4284
  %v4356 = vunpack.c.l.b16 %v4285
  %v4357 = vunpack.c.h.b16 %v4285
  %v4358 = vunpack.c.l.b16 %v4286
  %v4359 = vunpack.c.h.b16 %v4286
  %v4360 = vunpack.c.l.b16 %v4287
  %v4361 = vunpack.c.h.b16 %v4287
  %v4362 = vunpack.c.l.b16 %v4288
  %v4363 = vunpack.c.h.b16 %v4288
  %v4364 = vunpack.c.l.b16 %v4289
  %v4365 = vunpack.c.h.b16 %v4289
  %v4366 = vunpack.c.l.b16 %v4290
  %v4367 = vunpack.c.h.b16 %v4290
  %v4368 = vunpack.c.l.b16 %v4291
  %v4369 = vunpack.c.h.b16 %v4291
  %v4370 = vunpack.c.l.b16 %v4292
  %v4371 = vunpack.c.h.b16 %v4292
  %v4372 = vunpack.c.l.b16 %v4293
  %v4373 = vunpack.c.h.b16 %v4293
  %v4374 = vunpack.c.l.b16 %v4294
  %v4375 = vunpack.c.h.b16 %v4294
  %v4376 = vunpack.c.l.b16 %v4295
  %v4377 = vunpack.c.h.b16 %v4295
  %v4378 = vunpack.c.l.b16 %v4296
  %v4379 = vunpack.c.h.b16 %v4296
  %v4380 = vunpack.c.l.b16 %v4297
  %v4381 = vunpack.c.h.b16 %v4297
  %v4382 = vunpack.c.l.b16 %v4298
  %v4383 = vunpack.c.h.b16 %v4298
  %v4384 = vunpack.c.l.b16 %v4299
  %v4385 = vunpack.c.h.b16 %v4299
  %v4386 = vunpack.c.l.b16 %v4300
  %v4387 = vunpack.c.h.b16 %v4300
  %v4388 = vunpack.c.l.b16 %v4301
  %v4389 = vunpack.c.h.b16 %v4301
  %v4390 = vunpack.c.l.b16 %v4302
  %v4391 = vunpack.c.h.b16 %v4302
  %v4392 = vunpack.c.l.b16 %v4303
  %v4393 = vunpack.c.h.b16 %v4303
  %v4394 = vpack.c.b16 %v4336, %v4334
  %v4395 = vpack.c.b16 %v4337, %v4335
  %v4396 = vpack.c.b16 %v4340, %v4338
  %v4397 = vpack.c.b16 %v4341, %v4339
  %v4398 = vpack.c.b16 %v4344, %v4342
  %v4399 = vpack.c.b16 %v4345, %v4343
  %v4400 = vpack.c.b16 %v4348, %v4346
  %v4401 = vpack.c.b16 %v4349, %v4347
  %v4402 = vpack.c.b16 %v4352, %v4350
  %v4403 = vpack.c.b16 %v4353, %v4351
  %v4404 = vpack.c.b16 %v4356, %v4354
  %v4405 = vpack.c.b16 %v4357, %v4355
  %v4406 = vpack.c.b16 %v4360, %v4358
  %v4407 = vpack.c.b16 %v4361, %v4359
  %v4408 = vpack.c.b16 %v4364, %v4362
  %v4409 = vpack.c.b16 %v4365, %v4363
  %v4410 = vpack.c.b16 %v4368, %v4366
  %v4411 = vpack.c.b16 %v4369, %v4367
  %v4412 = vpack.c.b16 %v4372, %v4370
  %v4413 = vpack.c.b16 %v4373, %v4371
  %v4414 = vpack.c.b16 %v4376, %v4374
  %v4415 = vpack.c.b16 %v4377, %v4375
  %v4416 = vpack.c.b16 %v4380, %v4378
  %v4417 = vpack.c.b16 %v4381, %v4379
  %v4418 = vpack.c.b16 %v4384, %v4382
  %v4419 = vpack.c.b16 %v4385, %v4383
  %v4420 = vpack.c.b16 %v4388, %v4386
  %v4421 = vpack.c.b16 %v4389, %v4387
  %v4422 = vpack.c.b16 %v4392, %v4390
  %v4423 = vpack.c.b16 %v4393, %v4391
  %v4455 = vsel %vm246, %v4273, 0
  %4457 = vmatpush.bf16.msra.mxu0 %v4408
  %4458 = vmatpush.bf16.msra.mxu0 %v4406
  %4459 = vmatpush.bf16.msra.mxu0 %v4404
  %4460 = vmatpush.bf16.msra.mxu0 %v4402
  %4461 = vmatpush.bf16.msra.mxu0 %v4400
  %4462 = vmatpush.bf16.msra.mxu0 %v4398
  %4463 = vmatpush.bf16.msra.mxu0 %v4396
  %4464 = vmatpush.bf16.msra.mxu0 %v4394
  %4465 = vmatmul.bf16.gmra.mxu0 %v4272
  %v4466 = vpop.f32.mrf.mxu0
  %v4467 = vadd.f32 0.0, %v4466
  %v4468 = vpop.f32.mrf.mxu0
  %4469 = vdwg.mxu0
  %4470 = vmatpush.bf16.msra.mxu0 0
  %4471 = vmatpush.bf16.msra.mxu0 %v4422
  %4472 = vmatpush.bf16.msra.mxu0 %v4420
  %4473 = vmatpush.bf16.msra.mxu0 %v4418
  %4474 = vmatpush.bf16.msra.mxu0 %v4416
  %4475 = vmatpush.bf16.msra.mxu0 %v4414
  %4476 = vmatpush.bf16.msra.mxu0 %v4412
  %4477 = vmatpush.bf16.msra.mxu0 %v4410
  %4478 = vmatmul.bf16.gmra.mxu0 %v4455
  %v4479 = vpop.f32.mrf.mxu0
  %v4480 = vadd.f32 %v4467, %v4479
  %v4481 = vpop.f32.mrf.mxu0
  %4482 = vdwg.mxu0
  %4483 = vmatpush.bf16.msra.mxu0 %v4409
  %4484 = vmatpush.bf16.msra.mxu0 %v4407
  %4485 = vmatpush.bf16.msra.mxu0 %v4405
  %4486 = vmatpush.bf16.msra.mxu0 %v4403
  %4487 = vmatpush.bf16.msra.mxu0 %v4401
  %4488 = vmatpush.bf16.msra.mxu0 %v4399
  %4489 = vmatpush.bf16.msra.mxu0 %v4397
  %4490 = vmatpush.bf16.msra.mxu0 %v4395
  %4491 = vmatmul.bf16.gmra.mxu0 %v4272
  %v4492 = vpop.f32.mrf.mxu0
  %v4493 = vadd.f32 0.0, %v4492
  %v4494 = vpop.f32.mrf.mxu0
  %4495 = vdwg.mxu0
  %4496 = vmatpush.bf16.msra.mxu0 0
  %4497 = vmatpush.bf16.msra.mxu0 %v4423
  %4498 = vmatpush.bf16.msra.mxu0 %v4421
  %4499 = vmatpush.bf16.msra.mxu0 %v4419
  %4500 = vmatpush.bf16.msra.mxu0 %v4417
  %4501 = vmatpush.bf16.msra.mxu0 %v4415
  %4502 = vmatpush.bf16.msra.mxu0 %v4413
  %4503 = vmatpush.bf16.msra.mxu0 %v4411
  %4504 = vmatmul.bf16.gmra.mxu0 %v4455
  %v4505 = vpop.f32.mrf.mxu0
  %v4506 = vadd.f32 %v4493, %v4505
  %v4507 = vpop.f32.mrf.mxu0
  %4508 = vdwg.mxu0
  %v4539 = vunpack.c.l.b16 %v4240
  %v4540 = vunpack.c.h.b16 %v4240
  %v4541 = vunpack.c.l.b16 %v4241
  %v4542 = vunpack.c.h.b16 %v4241
  %v4543 = vunpack.c.l.b16 %v4242
  %v4544 = vunpack.c.h.b16 %v4242
  %v4545 = vunpack.c.l.b16 %v4243
  %v4546 = vunpack.c.h.b16 %v4243
  %v4547 = vunpack.c.l.b16 %v4244
  %v4548 = vunpack.c.h.b16 %v4244
  %v4549 = vunpack.c.l.b16 %v4245
  %v4550 = vunpack.c.h.b16 %v4245
  %v4551 = vunpack.c.l.b16 %v4246
  %v4552 = vunpack.c.h.b16 %v4246
  %v4553 = vunpack.c.l.b16 %v4247
  %v4554 = vunpack.c.h.b16 %v4247
  %v4555 = vunpack.c.l.b16 %v4248
  %v4556 = vunpack.c.h.b16 %v4248
  %v4557 = vunpack.c.l.b16 %v4249
  %v4558 = vunpack.c.h.b16 %v4249
  %v4559 = vunpack.c.l.b16 %v4250
  %v4560 = vunpack.c.h.b16 %v4250
  %v4561 = vunpack.c.l.b16 %v4251
  %v4562 = vunpack.c.h.b16 %v4251
  %v4563 = vunpack.c.l.b16 %v4252
  %v4564 = vunpack.c.h.b16 %v4252
  %v4565 = vunpack.c.l.b16 %v4253
  %v4566 = vunpack.c.h.b16 %v4253
  %v4567 = vunpack.c.l.b16 %v4254
  %v4568 = vunpack.c.h.b16 %v4254
  %v4569 = vunpack.c.l.b16 %v4255
  %v4570 = vunpack.c.h.b16 %v4255
  %v4571 = vunpack.c.l.b16 %v4256
  %v4572 = vunpack.c.h.b16 %v4256
  %v4573 = vunpack.c.l.b16 %v4257
  %v4574 = vunpack.c.h.b16 %v4257
  %v4575 = vunpack.c.l.b16 %v4258
  %v4576 = vunpack.c.h.b16 %v4258
  %v4577 = vunpack.c.l.b16 %v4259
  %v4578 = vunpack.c.h.b16 %v4259
  %v4579 = vunpack.c.l.b16 %v4260
  %v4580 = vunpack.c.h.b16 %v4260
  %v4581 = vunpack.c.l.b16 %v4261
  %v4582 = vunpack.c.h.b16 %v4261
  %v4583 = vunpack.c.l.b16 %v4262
  %v4584 = vunpack.c.h.b16 %v4262
  %v4585 = vunpack.c.l.b16 %v4263
  %v4586 = vunpack.c.h.b16 %v4263
  %v4587 = vunpack.c.l.b16 %v4264
  %v4588 = vunpack.c.h.b16 %v4264
  %v4589 = vunpack.c.l.b16 %v4265
  %v4590 = vunpack.c.h.b16 %v4265
  %v4591 = vunpack.c.l.b16 %v4266
  %v4592 = vunpack.c.h.b16 %v4266
  %v4593 = vunpack.c.l.b16 %v4267
  %v4594 = vunpack.c.h.b16 %v4267
  %v4595 = vunpack.c.l.b16 %v4268
  %v4596 = vunpack.c.h.b16 %v4268
  %v4597 = vunpack.c.l.b16 %v4269
  %v4598 = vunpack.c.h.b16 %v4269
  %v4599 = vpack.c.b16 %v4541, %v4539
  %v4600 = vpack.c.b16 %v4542, %v4540
  %v4601 = vpack.c.b16 %v4545, %v4543
  %v4602 = vpack.c.b16 %v4546, %v4544
  %v4603 = vpack.c.b16 %v4549, %v4547
  %v4604 = vpack.c.b16 %v4550, %v4548
  %v4605 = vpack.c.b16 %v4553, %v4551
  %v4606 = vpack.c.b16 %v4554, %v4552
  %v4607 = vpack.c.b16 %v4557, %v4555
  %v4608 = vpack.c.b16 %v4558, %v4556
  %v4609 = vpack.c.b16 %v4561, %v4559
  %v4610 = vpack.c.b16 %v4562, %v4560
  %v4611 = vpack.c.b16 %v4565, %v4563
  %v4612 = vpack.c.b16 %v4566, %v4564
  %v4613 = vpack.c.b16 %v4569, %v4567
  %v4614 = vpack.c.b16 %v4570, %v4568
  %v4615 = vpack.c.b16 %v4573, %v4571
  %v4616 = vpack.c.b16 %v4574, %v4572
  %v4617 = vpack.c.b16 %v4577, %v4575
  %v4618 = vpack.c.b16 %v4578, %v4576
  %v4619 = vpack.c.b16 %v4581, %v4579
  %v4620 = vpack.c.b16 %v4582, %v4580
  %v4621 = vpack.c.b16 %v4585, %v4583
  %v4622 = vpack.c.b16 %v4586, %v4584
  %v4623 = vpack.c.b16 %v4589, %v4587
  %v4624 = vpack.c.b16 %v4590, %v4588
  %v4625 = vpack.c.b16 %v4593, %v4591
  %v4626 = vpack.c.b16 %v4594, %v4592
  %v4627 = vpack.c.b16 %v4597, %v4595
  %v4628 = vpack.c.b16 %v4598, %v4596
  %v4660 = vsel %vm246, %v4239, 0
  %4662 = vmatpush.bf16.msra.mxu0 %v4613
  %4663 = vmatpush.bf16.msra.mxu0 %v4611
  %4664 = vmatpush.bf16.msra.mxu0 %v4609
  %4665 = vmatpush.bf16.msra.mxu0 %v4607
  %4666 = vmatpush.bf16.msra.mxu0 %v4605
  %4667 = vmatpush.bf16.msra.mxu0 %v4603
  %4668 = vmatpush.bf16.msra.mxu0 %v4601
  %4669 = vmatpush.bf16.msra.mxu0 %v4599
  %4670 = vmatmul.bf16.gmra.mxu0 %v4238
  %v4671 = vpop.f32.mrf.mxu0
  %v4672 = vadd.f32 %v4480, %v4671
  %v4673 = vpop.f32.mrf.mxu0
  %4674 = vdwg.mxu0
  %4675 = vmatpush.bf16.msra.mxu0 0
  %4676 = vmatpush.bf16.msra.mxu0 %v4627
  %4677 = vmatpush.bf16.msra.mxu0 %v4625
  %4678 = vmatpush.bf16.msra.mxu0 %v4623
  %4679 = vmatpush.bf16.msra.mxu0 %v4621
  %4680 = vmatpush.bf16.msra.mxu0 %v4619
  %4681 = vmatpush.bf16.msra.mxu0 %v4617
  %4682 = vmatpush.bf16.msra.mxu0 %v4615
  %4683 = vmatmul.bf16.gmra.mxu0 %v4660
  %v4684 = vpop.f32.mrf.mxu0
  %v4685 = vadd.f32 %v4672, %v4684
  %v4686 = vpop.f32.mrf.mxu0
  %4687 = vdwg.mxu0
  %4688 = vmatpush.bf16.msra.mxu0 %v4614
  %4689 = vmatpush.bf16.msra.mxu0 %v4612
  %4690 = vmatpush.bf16.msra.mxu0 %v4610
  %4691 = vmatpush.bf16.msra.mxu0 %v4608
  %4692 = vmatpush.bf16.msra.mxu0 %v4606
  %4693 = vmatpush.bf16.msra.mxu0 %v4604
  %4694 = vmatpush.bf16.msra.mxu0 %v4602
  %4695 = vmatpush.bf16.msra.mxu0 %v4600
  %4696 = vmatmul.bf16.gmra.mxu0 %v4238
  %v4697 = vpop.f32.mrf.mxu0
  %v4698 = vadd.f32 %v4506, %v4697
  %v4699 = vpop.f32.mrf.mxu0
  %4700 = vdwg.mxu0
  %4701 = vmatpush.bf16.msra.mxu0 0
  %4702 = vmatpush.bf16.msra.mxu0 %v4628
  %4703 = vmatpush.bf16.msra.mxu0 %v4626
  %4704 = vmatpush.bf16.msra.mxu0 %v4624
  %4705 = vmatpush.bf16.msra.mxu0 %v4622
  %4706 = vmatpush.bf16.msra.mxu0 %v4620
  %4707 = vmatpush.bf16.msra.mxu0 %v4618
  %4708 = vmatpush.bf16.msra.mxu0 %v4616
  %4709 = vmatmul.bf16.gmra.mxu0 %v4660
  %v4710 = vpop.f32.mrf.mxu0
  %v4711 = vadd.f32 %v4698, %v4710
  %v4712 = vpop.f32.mrf.mxu0
  %4713 = vdwg.mxu0
  %v4714 = vld [vmem:[%s1325] sm:$0xff]
  %v4715 = vld [vmem:[%s1325 + $0x8] sm:$0xff]
  %v4716 = vpack.c.bf16 %v4714, %v4714
  %v4717 = vpack.c.bf16 %v4715, %v4715
  %v4718 = vld [vmem:[%s3252] sm:$0xff]
  %v4719 = vld [vmem:[%s3252 + $0x8] sm:$0xff]
  %v4720 = vld [vmem:[%s3252 + $0x10] sm:$0xff]
  %v4721 = vld [vmem:[%s3252 + $0x18] sm:$0xff]
  %v4722 = vld [vmem:[%s3252 + $0x20] sm:$0xff]
  %v4723 = vld [vmem:[%s3252 + $0x28] sm:$0xff]
  %v4724 = vld [vmem:[%s3252 + $0x30] sm:$0xff]
  %v4725 = vld [vmem:[%s3252 + $0x38] sm:$0xff]
  %v4726 = vld [vmem:[%s3252 + $0x40] sm:$0xff]
  %v4727 = vld [vmem:[%s3252 + $0x48] sm:$0xff]
  %v4728 = vld [vmem:[%s3252 + $0x50] sm:$0xff]
  %v4729 = vld [vmem:[%s3252 + $0x58] sm:$0xff]
  %v4730 = vld [vmem:[%s3252 + $0x60] sm:$0xff]
  %v4731 = vld [vmem:[%s3252 + $0x68] sm:$0xff]
  %v4732 = vld [vmem:[%s3252 + $0x70] sm:$0xff]
  %v4733 = vld [vmem:[%s3252 + $0x78] sm:$0xff]
  %v4734 = vld [vmem:[%s3252 + $0x80] sm:$0xff]
  %v4735 = vld [vmem:[%s3252 + $0x88] sm:$0xff]
  %v4736 = vld [vmem:[%s3252 + $0x90] sm:$0xff]
  %v4737 = vld [vmem:[%s3252 + $0x98] sm:$0xff]
  %v4738 = vld [vmem:[%s3252 + $0xa0] sm:$0xff]
  %v4739 = vld [vmem:[%s3252 + $0xa8] sm:$0xff]
  %v4740 = vld [vmem:[%s3252 + $0xb0] sm:$0xff]
  %v4741 = vld [vmem:[%s3252 + $0xb8] sm:$0xff]
  %v4742 = vld [vmem:[%s3252 + $0xc0] sm:$0xff]
  %v4743 = vld [vmem:[%s3252 + $0xc8] sm:$0xff]
  %v4744 = vld [vmem:[%s3252 + $0xd0] sm:$0xff]
  %v4745 = vld [vmem:[%s3252 + $0xd8] sm:$0xff]
  %v4746 = vld [vmem:[%s3252 + $0xe0] sm:$0xff]
  %v4747 = vld [vmem:[%s3252 + $0xe8] sm:$0xff]
  %v4778 = vunpack.c.l.b16 %v4718
  %v4779 = vunpack.c.h.b16 %v4718
  %v4780 = vunpack.c.l.b16 %v4719
  %v4781 = vunpack.c.h.b16 %v4719
  %v4782 = vunpack.c.l.b16 %v4720
  %v4783 = vunpack.c.h.b16 %v4720
  %v4784 = vunpack.c.l.b16 %v4721
  %v4785 = vunpack.c.h.b16 %v4721
  %v4786 = vunpack.c.l.b16 %v4722
  %v4787 = vunpack.c.h.b16 %v4722
  %v4788 = vunpack.c.l.b16 %v4723
  %v4789 = vunpack.c.h.b16 %v4723
  %v4790 = vunpack.c.l.b16 %v4724
  %v4791 = vunpack.c.h.b16 %v4724
  %v4792 = vunpack.c.l.b16 %v4725
  %v4793 = vunpack.c.h.b16 %v4725
  %v4794 = vunpack.c.l.b16 %v4726
  %v4795 = vunpack.c.h.b16 %v4726
  %v4796 = vunpack.c.l.b16 %v4727
  %v4797 = vunpack.c.h.b16 %v4727
  %v4798 = vunpack.c.l.b16 %v4728
  %v4799 = vunpack.c.h.b16 %v4728
  %v4800 = vunpack.c.l.b16 %v4729
  %v4801 = vunpack.c.h.b16 %v4729
  %v4802 = vunpack.c.l.b16 %v4730
  %v4803 = vunpack.c.h.b16 %v4730
  %v4804 = vunpack.c.l.b16 %v4731
  %v4805 = vunpack.c.h.b16 %v4731
  %v4806 = vunpack.c.l.b16 %v4732
  %v4807 = vunpack.c.h.b16 %v4732
  %v4808 = vunpack.c.l.b16 %v4733
  %v4809 = vunpack.c.h.b16 %v4733
  %v4810 = vunpack.c.l.b16 %v4734
  %v4811 = vunpack.c.h.b16 %v4734
  %v4812 = vunpack.c.l.b16 %v4735
  %v4813 = vunpack.c.h.b16 %v4735
  %v4814 = vunpack.c.l.b16 %v4736
  %v4815 = vunpack.c.h.b16 %v4736
  %v4816 = vunpack.c.l.b16 %v4737
  %v4817 = vunpack.c.h.b16 %v4737
  %v4818 = vunpack.c.l.b16 %v4738
  %v4819 = vunpack.c.h.b16 %v4738
  %v4820 = vunpack.c.l.b16 %v4739
  %v4821 = vunpack.c.h.b16 %v4739
  %v4822 = vunpack.c.l.b16 %v4740
  %v4823 = vunpack.c.h.b16 %v4740
  %v4824 = vunpack.c.l.b16 %v4741
  %v4825 = vunpack.c.h.b16 %v4741
  %v4826 = vunpack.c.l.b16 %v4742
  %v4827 = vunpack.c.h.b16 %v4742
  %v4828 = vunpack.c.l.b16 %v4743
  %v4829 = vunpack.c.h.b16 %v4743
  %v4830 = vunpack.c.l.b16 %v4744
  %v4831 = vunpack.c.h.b16 %v4744
  %v4832 = vunpack.c.l.b16 %v4745
  %v4833 = vunpack.c.h.b16 %v4745
  %v4834 = vunpack.c.l.b16 %v4746
  %v4835 = vunpack.c.h.b16 %v4746
  %v4836 = vunpack.c.l.b16 %v4747
  %v4837 = vunpack.c.h.b16 %v4747
  %v4838 = vpack.c.b16 %v4780, %v4778
  %v4839 = vpack.c.b16 %v4781, %v4779
  %v4840 = vpack.c.b16 %v4784, %v4782
  %v4841 = vpack.c.b16 %v4785, %v4783
  %v4842 = vpack.c.b16 %v4788, %v4786
  %v4843 = vpack.c.b16 %v4789, %v4787
  %v4844 = vpack.c.b16 %v4792, %v4790
  %v4845 = vpack.c.b16 %v4793, %v4791
  %v4846 = vpack.c.b16 %v4796, %v4794
  %v4847 = vpack.c.b16 %v4797, %v4795
  %v4848 = vpack.c.b16 %v4800, %v4798
  %v4849 = vpack.c.b16 %v4801, %v4799
  %v4850 = vpack.c.b16 %v4804, %v4802
  %v4851 = vpack.c.b16 %v4805, %v4803
  %v4852 = vpack.c.b16 %v4808, %v4806
  %v4853 = vpack.c.b16 %v4809, %v4807
  %v4854 = vpack.c.b16 %v4812, %v4810
  %v4855 = vpack.c.b16 %v4813, %v4811
  %v4856 = vpack.c.b16 %v4816, %v4814
  %v4857 = vpack.c.b16 %v4817, %v4815
  %v4858 = vpack.c.b16 %v4820, %v4818
  %v4859 = vpack.c.b16 %v4821, %v4819
  %v4860 = vpack.c.b16 %v4824, %v4822
  %v4861 = vpack.c.b16 %v4825, %v4823
  %v4862 = vpack.c.b16 %v4828, %v4826
  %v4863 = vpack.c.b16 %v4829, %v4827
  %v4864 = vpack.c.b16 %v4832, %v4830
  %v4865 = vpack.c.b16 %v4833, %v4831
  %v4866 = vpack.c.b16 %v4836, %v4834
  %v4867 = vpack.c.b16 %v4837, %v4835
  %v4899 = vsel %vm246, %v4717, 0
  %4901 = vmatpush.bf16.msra.mxu0 %v4852
  %4902 = vmatpush.bf16.msra.mxu0 %v4850
  %4903 = vmatpush.bf16.msra.mxu0 %v4848
  %4904 = vmatpush.bf16.msra.mxu0 %v4846
  %4905 = vmatpush.bf16.msra.mxu0 %v4844
  %4906 = vmatpush.bf16.msra.mxu0 %v4842
  %4907 = vmatpush.bf16.msra.mxu0 %v4840
  %4908 = vmatpush.bf16.msra.mxu0 %v4838
  %4909 = vmatmul.bf16.gmra.mxu0 %v4716
  %v4910 = vpop.f32.mrf.mxu0
  %v4911 = vadd.f32 0.0, %v4910
  %v4912 = vpop.f32.mrf.mxu0
  %4913 = vdwg.mxu0
  %4914 = vmatpush.bf16.msra.mxu0 0
  %4915 = vmatpush.bf16.msra.mxu0 %v4866
  %4916 = vmatpush.bf16.msra.mxu0 %v4864
  %4917 = vmatpush.bf16.msra.mxu0 %v4862
  %4918 = vmatpush.bf16.msra.mxu0 %v4860
  %4919 = vmatpush.bf16.msra.mxu0 %v4858
  %4920 = vmatpush.bf16.msra.mxu0 %v4856
  %4921 = vmatpush.bf16.msra.mxu0 %v4854
  %4922 = vmatmul.bf16.gmra.mxu0 %v4899
  %v4923 = vpop.f32.mrf.mxu0
  %v4924 = vadd.f32 %v4911, %v4923
  %v4925 = vpop.f32.mrf.mxu0
  %4926 = vdwg.mxu0
  %4927 = vmatpush.bf16.msra.mxu0 %v4853
  %4928 = vmatpush.bf16.msra.mxu0 %v4851
  %4929 = vmatpush.bf16.msra.mxu0 %v4849
  %4930 = vmatpush.bf16.msra.mxu0 %v4847
  %4931 = vmatpush.bf16.msra.mxu0 %v4845
  %4932 = vmatpush.bf16.msra.mxu0 %v4843
  %4933 = vmatpush.bf16.msra.mxu0 %v4841
  %4934 = vmatpush.bf16.msra.mxu0 %v4839
  %4935 = vmatmul.bf16.gmra.mxu0 %v4716
  %v4936 = vpop.f32.mrf.mxu0
  %v4937 = vadd.f32 0.0, %v4936
  %v4938 = vpop.f32.mrf.mxu0
  %4939 = vdwg.mxu0
  %4940 = vmatpush.bf16.msra.mxu0 0
  %4941 = vmatpush.bf16.msra.mxu0 %v4867
  %4942 = vmatpush.bf16.msra.mxu0 %v4865
  %4943 = vmatpush.bf16.msra.mxu0 %v4863
  %4944 = vmatpush.bf16.msra.mxu0 %v4861
  %4945 = vmatpush.bf16.msra.mxu0 %v4859
  %4946 = vmatpush.bf16.msra.mxu0 %v4857
  %4947 = vmatpush.bf16.msra.mxu0 %v4855
  %4948 = vmatmul.bf16.gmra.mxu0 %v4899
  %v4949 = vpop.f32.mrf.mxu0
  %v4950 = vadd.f32 %v4937, %v4949
  %v4951 = vpop.f32.mrf.mxu0
  %4952 = vdwg.mxu0
  %v4953 = vadd.f32 %v4685, %v4924
  %v4954 = vadd.f32 %v4711, %v4950
  %v4955 = vadd.f32 %v4953, %v3491
  %v4956 = vadd.f32 %v4954, %v3492
  %vm4957 = vcmp.gt.f32.partialorder %v4955, 0.0
  %vm4958 = vcmp.gt.f32.partialorder %v4956, 0.0
  %v4959 = vmul.f32 %v4955, 0.01
  %v4960 = vmul.f32 %v4956, 0.01
  %v4961 = vsel %vm4957, %v4955, %v4959
  %v4962 = vsel %vm4958, %v4956, %v4960
  %s4963 = scalar_lea.vmem [#allocation3], 32
  %4964 = vst [vmem:[%s4963] sm:$0xff] %v4961
  %4965 = vst.msk [vmem:[%s4963 + $0x8] sm:$0xff] %vm3504, %v4962
  %v4966 = vld [vmem:[%s1325] sm:$0xff]
  %v4967 = vld [vmem:[%s1325 + $0x8] sm:$0xff]
  %v4968 = vpack.c.bf16 %v4966, %v4966
  %v4969 = vpack.c.bf16 %v4967, %v4967
  %v4970 = vld [vmem:[%s4] sm:$0xff]
  %v4971 = vld [vmem:[%s4 + $0x8] sm:$0xff]
  %v4972 = vld [vmem:[%s4 + $0x10] sm:$0xff]
  %v4973 = vld [vmem:[%s4 + $0x18] sm:$0xff]
  %v4974 = vld [vmem:[%s4 + $0x20] sm:$0xff]
  %v4975 = vld [vmem:[%s4 + $0x28] sm:$0xff]
  %v4976 = vld [vmem:[%s4 + $0x30] sm:$0xff]
  %v4977 = vld [vmem:[%s4 + $0x38] sm:$0xff]
  %v4978 = vld [vmem:[%s4 + $0x40] sm:$0xff]
  %v4979 = vld [vmem:[%s4 + $0x48] sm:$0xff]
  %v4980 = vld [vmem:[%s4 + $0x50] sm:$0xff]
  %v4981 = vld [vmem:[%s4 + $0x58] sm:$0xff]
  %v4982 = vld [vmem:[%s4 + $0x60] sm:$0xff]
  %v4983 = vld [vmem:[%s4 + $0x68] sm:$0xff]
  %v4984 = vld [vmem:[%s4 + $0x70] sm:$0xff]
  %v4985 = vld [vmem:[%s4 + $0x78] sm:$0xff]
  %v4986 = vld [vmem:[%s4 + $0x80] sm:$0xff]
  %v4987 = vld [vmem:[%s4 + $0x88] sm:$0xff]
  %v4988 = vld [vmem:[%s4 + $0x90] sm:$0xff]
  %v4989 = vld [vmem:[%s4 + $0x98] sm:$0xff]
  %v4990 = vld [vmem:[%s4 + $0xa0] sm:$0xff]
  %v4991 = vld [vmem:[%s4 + $0xa8] sm:$0xff]
  %v4992 = vld [vmem:[%s4 + $0xb0] sm:$0xff]
  %v4993 = vld [vmem:[%s4 + $0xb8] sm:$0xff]
  %v4994 = vld [vmem:[%s4 + $0xc0] sm:$0xff]
  %v4995 = vld [vmem:[%s4 + $0xc8] sm:$0xff]
  %v4996 = vld [vmem:[%s4 + $0xd0] sm:$0xff]
  %v4997 = vld [vmem:[%s4 + $0xd8] sm:$0xff]
  %v4998 = vld [vmem:[%s4 + $0xe0] sm:$0xff]
  %v4999 = vld [vmem:[%s4 + $0xe8] sm:$0xff]
  %v5000 = vld [vmem:[%s1505] sm:$0xff]
  %v5001 = vld [vmem:[%s1505 + $0x8] sm:$0xff]
  %v5002 = vpack.c.bf16 %v5000, %v5000
  %v5003 = vpack.c.bf16 %v5001, %v5001
  %v5004 = vld [vmem:[%s2807] sm:$0xff]
  %v5005 = vld [vmem:[%s2807 + $0x8] sm:$0xff]
  %v5006 = vld [vmem:[%s2807 + $0x10] sm:$0xff]
  %v5007 = vld [vmem:[%s2807 + $0x18] sm:$0xff]
  %v5008 = vld [vmem:[%s2807 + $0x20] sm:$0xff]
  %v5009 = vld [vmem:[%s2807 + $0x28] sm:$0xff]
  %v5010 = vld [vmem:[%s2807 + $0x30] sm:$0xff]
  %v5011 = vld [vmem:[%s2807 + $0x38] sm:$0xff]
  %v5012 = vld [vmem:[%s2807 + $0x40] sm:$0xff]
  %v5013 = vld [vmem:[%s2807 + $0x48] sm:$0xff]
  %v5014 = vld [vmem:[%s2807 + $0x50] sm:$0xff]
  %v5015 = vld [vmem:[%s2807 + $0x58] sm:$0xff]
  %v5016 = vld [vmem:[%s2807 + $0x60] sm:$0xff]
  %v5017 = vld [vmem:[%s2807 + $0x68] sm:$0xff]
  %v5018 = vld [vmem:[%s2807 + $0x70] sm:$0xff]
  %v5019 = vld [vmem:[%s2807 + $0x78] sm:$0xff]
  %v5020 = vld [vmem:[%s2807 + $0x80] sm:$0xff]
  %v5021 = vld [vmem:[%s2807 + $0x88] sm:$0xff]
  %v5022 = vld [vmem:[%s2807 + $0x90] sm:$0xff]
  %v5023 = vld [vmem:[%s2807 + $0x98] sm:$0xff]
  %v5024 = vld [vmem:[%s2807 + $0xa0] sm:$0xff]
  %v5025 = vld [vmem:[%s2807 + $0xa8] sm:$0xff]
  %v5026 = vld [vmem:[%s2807 + $0xb0] sm:$0xff]
  %v5027 = vld [vmem:[%s2807 + $0xb8] sm:$0xff]
  %v5028 = vld [vmem:[%s2807 + $0xc0] sm:$0xff]
  %v5029 = vld [vmem:[%s2807 + $0xc8] sm:$0xff]
  %v5030 = vld [vmem:[%s2807 + $0xd0] sm:$0xff]
  %v5031 = vld [vmem:[%s2807 + $0xd8] sm:$0xff]
  %v5032 = vld [vmem:[%s2807 + $0xe0] sm:$0xff]
  %v5033 = vld [vmem:[%s2807 + $0xe8] sm:$0xff]
  %v5064 = vunpack.c.l.b16 %v5004
  %v5065 = vunpack.c.h.b16 %v5004
  %v5066 = vunpack.c.l.b16 %v5005
  %v5067 = vunpack.c.h.b16 %v5005
  %v5068 = vunpack.c.l.b16 %v5006
  %v5069 = vunpack.c.h.b16 %v5006
  %v5070 = vunpack.c.l.b16 %v5007
  %v5071 = vunpack.c.h.b16 %v5007
  %v5072 = vunpack.c.l.b16 %v5008
  %v5073 = vunpack.c.h.b16 %v5008
  %v5074 = vunpack.c.l.b16 %v5009
  %v5075 = vunpack.c.h.b16 %v5009
  %v5076 = vunpack.c.l.b16 %v5010
  %v5077 = vunpack.c.h.b16 %v5010
  %v5078 = vunpack.c.l.b16 %v5011
  %v5079 = vunpack.c.h.b16 %v5011
  %v5080 = vunpack.c.l.b16 %v5012
  %v5081 = vunpack.c.h.b16 %v5012
  %v5082 = vunpack.c.l.b16 %v5013
  %v5083 = vunpack.c.h.b16 %v5013
  %v5084 = vunpack.c.l.b16 %v5014
  %v5085 = vunpack.c.h.b16 %v5014
  %v5086 = vunpack.c.l.b16 %v5015
  %v5087 = vunpack.c.h.b16 %v5015
  %v5088 = vunpack.c.l.b16 %v5016
  %v5089 = vunpack.c.h.b16 %v5016
  %v5090 = vunpack.c.l.b16 %v5017
  %v5091 = vunpack.c.h.b16 %v5017
  %v5092 = vunpack.c.l.b16 %v5018
  %v5093 = vunpack.c.h.b16 %v5018
  %v5094 = vunpack.c.l.b16 %v5019
  %v5095 = vunpack.c.h.b16 %v5019
  %v5096 = vunpack.c.l.b16 %v5020
  %v5097 = vunpack.c.h.b16 %v5020
  %v5098 = vunpack.c.l.b16 %v5021
  %v5099 = vunpack.c.h.b16 %v5021
  %v5100 = vunpack.c.l.b16 %v5022
  %v5101 = vunpack.c.h.b16 %v5022
  %v5102 = vunpack.c.l.b16 %v5023
  %v5103 = vunpack.c.h.b16 %v5023
  %v5104 = vunpack.c.l.b16 %v5024
  %v5105 = vunpack.c.h.b16 %v5024
  %v5106 = vunpack.c.l.b16 %v5025
  %v5107 = vunpack.c.h.b16 %v5025
  %v5108 = vunpack.c.l.b16 %v5026
  %v5109 = vunpack.c.h.b16 %v5026
  %v5110 = vunpack.c.l.b16 %v5027
  %v5111 = vunpack.c.h.b16 %v5027
  %v5112 = vunpack.c.l.b16 %v5028
  %v5113 = vunpack.c.h.b16 %v5028
  %v5114 = vunpack.c.l.b16 %v5029
  %v5115 = vunpack.c.h.b16 %v5029
  %v5116 = vunpack.c.l.b16 %v5030
  %v5117 = vunpack.c.h.b16 %v5030
  %v5118 = vunpack.c.l.b16 %v5031
  %v5119 = vunpack.c.h.b16 %v5031
  %v5120 = vunpack.c.l.b16 %v5032
  %v5121 = vunpack.c.h.b16 %v5032
  %v5122 = vunpack.c.l.b16 %v5033
  %v5123 = vunpack.c.h.b16 %v5033
  %v5124 = vpack.c.b16 %v5066, %v5064
  %v5125 = vpack.c.b16 %v5067, %v5065
  %v5126 = vpack.c.b16 %v5070, %v5068
  %v5127 = vpack.c.b16 %v5071, %v5069
  %v5128 = vpack.c.b16 %v5074, %v5072
  %v5129 = vpack.c.b16 %v5075, %v5073
  %v5130 = vpack.c.b16 %v5078, %v5076
  %v5131 = vpack.c.b16 %v5079, %v5077
  %v5132 = vpack.c.b16 %v5082, %v5080
  %v5133 = vpack.c.b16 %v5083, %v5081
  %v5134 = vpack.c.b16 %v5086, %v5084
  %v5135 = vpack.c.b16 %v5087, %v5085
  %v5136 = vpack.c.b16 %v5090, %v5088
  %v5137 = vpack.c.b16 %v5091, %v5089
  %v5138 = vpack.c.b16 %v5094, %v5092
  %v5139 = vpack.c.b16 %v5095, %v5093
  %v5140 = vpack.c.b16 %v5098, %v5096
  %v5141 = vpack.c.b16 %v5099, %v5097
  %v5142 = vpack.c.b16 %v5102, %v5100
  %v5143 = vpack.c.b16 %v5103, %v5101
  %v5144 = vpack.c.b16 %v5106, %v5104
  %v5145 = vpack.c.b16 %v5107, %v5105
  %v5146 = vpack.c.b16 %v5110, %v5108
  %v5147 = vpack.c.b16 %v5111, %v5109
  %v5148 = vpack.c.b16 %v5114, %v5112
  %v5149 = vpack.c.b16 %v5115, %v5113
  %v5150 = vpack.c.b16 %v5118, %v5116
  %v5151 = vpack.c.b16 %v5119, %v5117
  %v5152 = vpack.c.b16 %v5122, %v5120
  %v5153 = vpack.c.b16 %v5123, %v5121
  %v5185 = vsel %vm246, %v5003, 0
  %5187 = vmatpush.bf16.msra.mxu0 %v5138
  %5188 = vmatpush.bf16.msra.mxu0 %v5136
  %5189 = vmatpush.bf16.msra.mxu0 %v5134
  %5190 = vmatpush.bf16.msra.mxu0 %v5132
  %5191 = vmatpush.bf16.msra.mxu0 %v5130
  %5192 = vmatpush.bf16.msra.mxu0 %v5128
  %5193 = vmatpush.bf16.msra.mxu0 %v5126
  %5194 = vmatpush.bf16.msra.mxu0 %v5124
  %5195 = vmatmul.bf16.gmra.mxu0 %v5002
  %v5196 = vpop.f32.mrf.mxu0
  %v5197 = vadd.f32 0.0, %v5196
  %v5198 = vpop.f32.mrf.mxu0
  %5199 = vdwg.mxu0
  %5200 = vmatpush.bf16.msra.mxu0 0
  %5201 = vmatpush.bf16.msra.mxu0 %v5152
  %5202 = vmatpush.bf16.msra.mxu0 %v5150
  %5203 = vmatpush.bf16.msra.mxu0 %v5148
  %5204 = vmatpush.bf16.msra.mxu0 %v5146
  %5205 = vmatpush.bf16.msra.mxu0 %v5144
  %5206 = vmatpush.bf16.msra.mxu0 %v5142
  %5207 = vmatpush.bf16.msra.mxu0 %v5140
  %5208 = vmatmul.bf16.gmra.mxu0 %v5185
  %v5209 = vpop.f32.mrf.mxu0
  %v5210 = vadd.f32 %v5197, %v5209
  %v5211 = vpop.f32.mrf.mxu0
  %5212 = vdwg.mxu0
  %5213 = vmatpush.bf16.msra.mxu0 %v5139
  %5214 = vmatpush.bf16.msra.mxu0 %v5137
  %5215 = vmatpush.bf16.msra.mxu0 %v5135
  %5216 = vmatpush.bf16.msra.mxu0 %v5133
  %5217 = vmatpush.bf16.msra.mxu0 %v5131
  %5218 = vmatpush.bf16.msra.mxu0 %v5129
  %5219 = vmatpush.bf16.msra.mxu0 %v5127
  %5220 = vmatpush.bf16.msra.mxu0 %v5125
  %5221 = vmatmul.bf16.gmra.mxu0 %v5002
  %v5222 = vpop.f32.mrf.mxu0
  %v5223 = vadd.f32 0.0, %v5222
  %v5224 = vpop.f32.mrf.mxu0
  %5225 = vdwg.mxu0
  %5226 = vmatpush.bf16.msra.mxu0 0
  %5227 = vmatpush.bf16.msra.mxu0 %v5153
  %5228 = vmatpush.bf16.msra.mxu0 %v5151
  %5229 = vmatpush.bf16.msra.mxu0 %v5149
  %5230 = vmatpush.bf16.msra.mxu0 %v5147
  %5231 = vmatpush.bf16.msra.mxu0 %v5145
  %5232 = vmatpush.bf16.msra.mxu0 %v5143
  %5233 = vmatpush.bf16.msra.mxu0 %v5141
  %5234 = vmatmul.bf16.gmra.mxu0 %v5185
  %v5235 = vpop.f32.mrf.mxu0
  %v5236 = vadd.f32 %v5223, %v5235
  %v5237 = vpop.f32.mrf.mxu0
  %5238 = vdwg.mxu0
  %v5269 = vunpack.c.l.b16 %v4970
  %v5270 = vunpack.c.h.b16 %v4970
  %v5271 = vunpack.c.l.b16 %v4971
  %v5272 = vunpack.c.h.b16 %v4971
  %v5273 = vunpack.c.l.b16 %v4972
  %v5274 = vunpack.c.h.b16 %v4972
  %v5275 = vunpack.c.l.b16 %v4973
  %v5276 = vunpack.c.h.b16 %v4973
  %v5277 = vunpack.c.l.b16 %v4974
  %v5278 = vunpack.c.h.b16 %v4974
  %v5279 = vunpack.c.l.b16 %v4975
  %v5280 = vunpack.c.h.b16 %v4975
  %v5281 = vunpack.c.l.b16 %v4976
  %v5282 = vunpack.c.h.b16 %v4976
  %v5283 = vunpack.c.l.b16 %v4977
  %v5284 = vunpack.c.h.b16 %v4977
  %v5285 = vunpack.c.l.b16 %v4978
  %v5286 = vunpack.c.h.b16 %v4978
  %v5287 = vunpack.c.l.b16 %v4979
  %v5288 = vunpack.c.h.b16 %v4979
  %v5289 = vunpack.c.l.b16 %v4980
  %v5290 = vunpack.c.h.b16 %v4980
  %v5291 = vunpack.c.l.b16 %v4981
  %v5292 = vunpack.c.h.b16 %v4981
  %v5293 = vunpack.c.l.b16 %v4982
  %v5294 = vunpack.c.h.b16 %v4982
  %v5295 = vunpack.c.l.b16 %v4983
  %v5296 = vunpack.c.h.b16 %v4983
  %v5297 = vunpack.c.l.b16 %v4984
  %v5298 = vunpack.c.h.b16 %v4984
  %v5299 = vunpack.c.l.b16 %v4985
  %v5300 = vunpack.c.h.b16 %v4985
  %v5301 = vunpack.c.l.b16 %v4986
  %v5302 = vunpack.c.h.b16 %v4986
  %v5303 = vunpack.c.l.b16 %v4987
  %v5304 = vunpack.c.h.b16 %v4987
  %v5305 = vunpack.c.l.b16 %v4988
  %v5306 = vunpack.c.h.b16 %v4988
  %v5307 = vunpack.c.l.b16 %v4989
  %v5308 = vunpack.c.h.b16 %v4989
  %v5309 = vunpack.c.l.b16 %v4990
  %v5310 = vunpack.c.h.b16 %v4990
  %v5311 = vunpack.c.l.b16 %v4991
  %v5312 = vunpack.c.h.b16 %v4991
  %v5313 = vunpack.c.l.b16 %v4992
  %v5314 = vunpack.c.h.b16 %v4992
  %v5315 = vunpack.c.l.b16 %v4993
  %v5316 = vunpack.c.h.b16 %v4993
  %v5317 = vunpack.c.l.b16 %v4994
  %v5318 = vunpack.c.h.b16 %v4994
  %v5319 = vunpack.c.l.b16 %v4995
  %v5320 = vunpack.c.h.b16 %v4995
  %v5321 = vunpack.c.l.b16 %v4996
  %v5322 = vunpack.c.h.b16 %v4996
  %v5323 = vunpack.c.l.b16 %v4997
  %v5324 = vunpack.c.h.b16 %v4997
  %v5325 = vunpack.c.l.b16 %v4998
  %v5326 = vunpack.c.h.b16 %v4998
  %v5327 = vunpack.c.l.b16 %v4999
  %v5328 = vunpack.c.h.b16 %v4999
  %v5329 = vpack.c.b16 %v5271, %v5269
  %v5330 = vpack.c.b16 %v5272, %v5270
  %v5331 = vpack.c.b16 %v5275, %v5273
  %v5332 = vpack.c.b16 %v5276, %v5274
  %v5333 = vpack.c.b16 %v5279, %v5277
  %v5334 = vpack.c.b16 %v5280, %v5278
  %v5335 = vpack.c.b16 %v5283, %v5281
  %v5336 = vpack.c.b16 %v5284, %v5282
  %v5337 = vpack.c.b16 %v5287, %v5285
  %v5338 = vpack.c.b16 %v5288, %v5286
  %v5339 = vpack.c.b16 %v5291, %v5289
  %v5340 = vpack.c.b16 %v5292, %v5290
  %v5341 = vpack.c.b16 %v5295, %v5293
  %v5342 = vpack.c.b16 %v5296, %v5294
  %v5343 = vpack.c.b16 %v5299, %v5297
  %v5344 = vpack.c.b16 %v5300, %v5298
  %v5345 = vpack.c.b16 %v5303, %v5301
  %v5346 = vpack.c.b16 %v5304, %v5302
  %v5347 = vpack.c.b16 %v5307, %v5305
  %v5348 = vpack.c.b16 %v5308, %v5306
  %v5349 = vpack.c.b16 %v5311, %v5309
  %v5350 = vpack.c.b16 %v5312, %v5310
  %v5351 = vpack.c.b16 %v5315, %v5313
  %v5352 = vpack.c.b16 %v5316, %v5314
  %v5353 = vpack.c.b16 %v5319, %v5317
  %v5354 = vpack.c.b16 %v5320, %v5318
  %v5355 = vpack.c.b16 %v5323, %v5321
  %v5356 = vpack.c.b16 %v5324, %v5322
  %v5357 = vpack.c.b16 %v5327, %v5325
  %v5358 = vpack.c.b16 %v5328, %v5326
  %v5390 = vsel %vm246, %v4969, 0
  %5392 = vmatpush.bf16.msra.mxu0 %v5343
  %5393 = vmatpush.bf16.msra.mxu0 %v5341
  %5394 = vmatpush.bf16.msra.mxu0 %v5339
  %5395 = vmatpush.bf16.msra.mxu0 %v5337
  %5396 = vmatpush.bf16.msra.mxu0 %v5335
  %5397 = vmatpush.bf16.msra.mxu0 %v5333
  %5398 = vmatpush.bf16.msra.mxu0 %v5331
  %5399 = vmatpush.bf16.msra.mxu0 %v5329
  %5400 = vmatmul.bf16.gmra.mxu0 %v4968
  %v5401 = vpop.f32.mrf.mxu0
  %v5402 = vadd.f32 %v5210, %v5401
  %v5403 = vpop.f32.mrf.mxu0
  %5404 = vdwg.mxu0
  %5405 = vmatpush.bf16.msra.mxu0 0
  %5406 = vmatpush.bf16.msra.mxu0 %v5357
  %5407 = vmatpush.bf16.msra.mxu0 %v5355
  %5408 = vmatpush.bf16.msra.mxu0 %v5353
  %5409 = vmatpush.bf16.msra.mxu0 %v5351
  %5410 = vmatpush.bf16.msra.mxu0 %v5349
  %5411 = vmatpush.bf16.msra.mxu0 %v5347
  %5412 = vmatpush.bf16.msra.mxu0 %v5345
  %5413 = vmatmul.bf16.gmra.mxu0 %v5390
  %v5414 = vpop.f32.mrf.mxu0
  %v5415 = vadd.f32 %v5402, %v5414
  %v5416 = vpop.f32.mrf.mxu0
  %5417 = vdwg.mxu0
  %5418 = vmatpush.bf16.msra.mxu0 %v5344
  %5419 = vmatpush.bf16.msra.mxu0 %v5342
  %5420 = vmatpush.bf16.msra.mxu0 %v5340
  %5421 = vmatpush.bf16.msra.mxu0 %v5338
  %5422 = vmatpush.bf16.msra.mxu0 %v5336
  %5423 = vmatpush.bf16.msra.mxu0 %v5334
  %5424 = vmatpush.bf16.msra.mxu0 %v5332
  %5425 = vmatpush.bf16.msra.mxu0 %v5330
  %5426 = vmatmul.bf16.gmra.mxu0 %v4968
  %v5427 = vpop.f32.mrf.mxu0
  %v5428 = vadd.f32 %v5236, %v5427
  %v5429 = vpop.f32.mrf.mxu0
  %5430 = vdwg.mxu0
  %5431 = vmatpush.bf16.msra.mxu0 0
  %5432 = vmatpush.bf16.msra.mxu0 %v5358
  %5433 = vmatpush.bf16.msra.mxu0 %v5356
  %5434 = vmatpush.bf16.msra.mxu0 %v5354
  %5435 = vmatpush.bf16.msra.mxu0 %v5352
  %5436 = vmatpush.bf16.msra.mxu0 %v5350
  %5437 = vmatpush.bf16.msra.mxu0 %v5348
  %5438 = vmatpush.bf16.msra.mxu0 %v5346
  %5439 = vmatmul.bf16.gmra.mxu0 %v5390
  %v5440 = vpop.f32.mrf.mxu0
  %v5441 = vadd.f32 %v5428, %v5440
  %v5442 = vpop.f32.mrf.mxu0
  %5443 = vdwg.mxu0
  %v5444 = vld [vmem:[%s1685] sm:$0xff]
  %v5445 = vld [vmem:[%s1685 + $0x8] sm:$0xff]
  %v5446 = vpack.c.bf16 %v5444, %v5444
  %v5447 = vpack.c.bf16 %v5445, %v5445
  %v5448 = vld [vmem:[%s3252] sm:$0xff]
  %v5449 = vld [vmem:[%s3252 + $0x8] sm:$0xff]
  %v5450 = vld [vmem:[%s3252 + $0x10] sm:$0xff]
  %v5451 = vld [vmem:[%s3252 + $0x18] sm:$0xff]
  %v5452 = vld [vmem:[%s3252 + $0x20] sm:$0xff]
  %v5453 = vld [vmem:[%s3252 + $0x28] sm:$0xff]
  %v5454 = vld [vmem:[%s3252 + $0x30] sm:$0xff]
  %v5455 = vld [vmem:[%s3252 + $0x38] sm:$0xff]
  %v5456 = vld [vmem:[%s3252 + $0x40] sm:$0xff]
  %v5457 = vld [vmem:[%s3252 + $0x48] sm:$0xff]
  %v5458 = vld [vmem:[%s3252 + $0x50] sm:$0xff]
  %v5459 = vld [vmem:[%s3252 + $0x58] sm:$0xff]
  %v5460 = vld [vmem:[%s3252 + $0x60] sm:$0xff]
  %v5461 = vld [vmem:[%s3252 + $0x68] sm:$0xff]
  %v5462 = vld [vmem:[%s3252 + $0x70] sm:$0xff]
  %v5463 = vld [vmem:[%s3252 + $0x78] sm:$0xff]
  %v5464 = vld [vmem:[%s3252 + $0x80] sm:$0xff]
  %v5465 = vld [vmem:[%s3252 + $0x88] sm:$0xff]
  %v5466 = vld [vmem:[%s3252 + $0x90] sm:$0xff]
  %v5467 = vld [vmem:[%s3252 + $0x98] sm:$0xff]
  %v5468 = vld [vmem:[%s3252 + $0xa0] sm:$0xff]
  %v5469 = vld [vmem:[%s3252 + $0xa8] sm:$0xff]
  %v5470 = vld [vmem:[%s3252 + $0xb0] sm:$0xff]
  %v5471 = vld [vmem:[%s3252 + $0xb8] sm:$0xff]
  %v5472 = vld [vmem:[%s3252 + $0xc0] sm:$0xff]
  %v5473 = vld [vmem:[%s3252 + $0xc8] sm:$0xff]
  %v5474 = vld [vmem:[%s3252 + $0xd0] sm:$0xff]
  %v5475 = vld [vmem:[%s3252 + $0xd8] sm:$0xff]
  %v5476 = vld [vmem:[%s3252 + $0xe0] sm:$0xff]
  %v5477 = vld [vmem:[%s3252 + $0xe8] sm:$0xff]
  %v5508 = vunpack.c.l.b16 %v5448
  %v5509 = vunpack.c.h.b16 %v5448
  %v5510 = vunpack.c.l.b16 %v5449
  %v5511 = vunpack.c.h.b16 %v5449
  %v5512 = vunpack.c.l.b16 %v5450
  %v5513 = vunpack.c.h.b16 %v5450
  %v5514 = vunpack.c.l.b16 %v5451
  %v5515 = vunpack.c.h.b16 %v5451
  %v5516 = vunpack.c.l.b16 %v5452
  %v5517 = vunpack.c.h.b16 %v5452
  %v5518 = vunpack.c.l.b16 %v5453
  %v5519 = vunpack.c.h.b16 %v5453
  %v5520 = vunpack.c.l.b16 %v5454
  %v5521 = vunpack.c.h.b16 %v5454
  %v5522 = vunpack.c.l.b16 %v5455
  %v5523 = vunpack.c.h.b16 %v5455
  %v5524 = vunpack.c.l.b16 %v5456
  %v5525 = vunpack.c.h.b16 %v5456
  %v5526 = vunpack.c.l.b16 %v5457
  %v5527 = vunpack.c.h.b16 %v5457
  %v5528 = vunpack.c.l.b16 %v5458
  %v5529 = vunpack.c.h.b16 %v5458
  %v5530 = vunpack.c.l.b16 %v5459
  %v5531 = vunpack.c.h.b16 %v5459
  %v5532 = vunpack.c.l.b16 %v5460
  %v5533 = vunpack.c.h.b16 %v5460
  %v5534 = vunpack.c.l.b16 %v5461
  %v5535 = vunpack.c.h.b16 %v5461
  %v5536 = vunpack.c.l.b16 %v5462
  %v5537 = vunpack.c.h.b16 %v5462
  %v5538 = vunpack.c.l.b16 %v5463
  %v5539 = vunpack.c.h.b16 %v5463
  %v5540 = vunpack.c.l.b16 %v5464
  %v5541 = vunpack.c.h.b16 %v5464
  %v5542 = vunpack.c.l.b16 %v5465
  %v5543 = vunpack.c.h.b16 %v5465
  %v5544 = vunpack.c.l.b16 %v5466
  %v5545 = vunpack.c.h.b16 %v5466
  %v5546 = vunpack.c.l.b16 %v5467
  %v5547 = vunpack.c.h.b16 %v5467
  %v5548 = vunpack.c.l.b16 %v5468
  %v5549 = vunpack.c.h.b16 %v5468
  %v5550 = vunpack.c.l.b16 %v5469
  %v5551 = vunpack.c.h.b16 %v5469
  %v5552 = vunpack.c.l.b16 %v5470
  %v5553 = vunpack.c.h.b16 %v5470
  %v5554 = vunpack.c.l.b16 %v5471
  %v5555 = vunpack.c.h.b16 %v5471
  %v5556 = vunpack.c.l.b16 %v5472
  %v5557 = vunpack.c.h.b16 %v5472
  %v5558 = vunpack.c.l.b16 %v5473
  %v5559 = vunpack.c.h.b16 %v5473
  %v5560 = vunpack.c.l.b16 %v5474
  %v5561 = vunpack.c.h.b16 %v5474
  %v5562 = vunpack.c.l.b16 %v5475
  %v5563 = vunpack.c.h.b16 %v5475
  %v5564 = vunpack.c.l.b16 %v5476
  %v5565 = vunpack.c.h.b16 %v5476
  %v5566 = vunpack.c.l.b16 %v5477
  %v5567 = vunpack.c.h.b16 %v5477
  %v5568 = vpack.c.b16 %v5510, %v5508
  %v5569 = vpack.c.b16 %v5511, %v5509
  %v5570 = vpack.c.b16 %v5514, %v5512
  %v5571 = vpack.c.b16 %v5515, %v5513
  %v5572 = vpack.c.b16 %v5518, %v5516
  %v5573 = vpack.c.b16 %v5519, %v5517
  %v5574 = vpack.c.b16 %v5522, %v5520
  %v5575 = vpack.c.b16 %v5523, %v5521
  %v5576 = vpack.c.b16 %v5526, %v5524
  %v5577 = vpack.c.b16 %v5527, %v5525
  %v5578 = vpack.c.b16 %v5530, %v5528
  %v5579 = vpack.c.b16 %v5531, %v5529
  %v5580 = vpack.c.b16 %v5534, %v5532
  %v5581 = vpack.c.b16 %v5535, %v5533
  %v5582 = vpack.c.b16 %v5538, %v5536
  %v5583 = vpack.c.b16 %v5539, %v5537
  %v5584 = vpack.c.b16 %v5542, %v5540
  %v5585 = vpack.c.b16 %v5543, %v5541
  %v5586 = vpack.c.b16 %v5546, %v5544
  %v5587 = vpack.c.b16 %v5547, %v5545
  %v5588 = vpack.c.b16 %v5550, %v5548
  %v5589 = vpack.c.b16 %v5551, %v5549
  %v5590 = vpack.c.b16 %v5554, %v5552
  %v5591 = vpack.c.b16 %v5555, %v5553
  %v5592 = vpack.c.b16 %v5558, %v5556
  %v5593 = vpack.c.b16 %v5559, %v5557
  %v5594 = vpack.c.b16 %v5562, %v5560
  %v5595 = vpack.c.b16 %v5563, %v5561
  %v5596 = vpack.c.b16 %v5566, %v5564
  %v5597 = vpack.c.b16 %v5567, %v5565
  %v5629 = vsel %vm246, %v5447, 0
  %5631 = vmatpush.bf16.msra.mxu0 %v5582
  %5632 = vmatpush.bf16.msra.mxu0 %v5580
  %5633 = vmatpush.bf16.msra.mxu0 %v5578
  %5634 = vmatpush.bf16.msra.mxu0 %v5576
  %5635 = vmatpush.bf16.msra.mxu0 %v5574
  %5636 = vmatpush.bf16.msra.mxu0 %v5572
  %5637 = vmatpush.bf16.msra.mxu0 %v5570
  %5638 = vmatpush.bf16.msra.mxu0 %v5568
  %5639 = vmatmul.bf16.gmra.mxu0 %v5446
  %v5640 = vpop.f32.mrf.mxu0
  %v5641 = vadd.f32 0.0, %v5640
  %v5642 = vpop.f32.mrf.mxu0
  %5643 = vdwg.mxu0
  %5644 = vmatpush.bf16.msra.mxu0 0
  %5645 = vmatpush.bf16.msra.mxu0 %v5596
  %5646 = vmatpush.bf16.msra.mxu0 %v5594
  %5647 = vmatpush.bf16.msra.mxu0 %v5592
  %5648 = vmatpush.bf16.msra.mxu0 %v5590
  %5649 = vmatpush.bf16.msra.mxu0 %v5588
  %5650 = vmatpush.bf16.msra.mxu0 %v5586
  %5651 = vmatpush.bf16.msra.mxu0 %v5584
  %5652 = vmatmul.bf16.gmra.mxu0 %v5629
  %v5653 = vpop.f32.mrf.mxu0
  %v5654 = vadd.f32 %v5641, %v5653
  %v5655 = vpop.f32.mrf.mxu0
  %5656 = vdwg.mxu0
  %5657 = vmatpush.bf16.msra.mxu0 %v5583
  %5658 = vmatpush.bf16.msra.mxu0 %v5581
  %5659 = vmatpush.bf16.msra.mxu0 %v5579
  %5660 = vmatpush.bf16.msra.mxu0 %v5577
  %5661 = vmatpush.bf16.msra.mxu0 %v5575
  %5662 = vmatpush.bf16.msra.mxu0 %v5573
  %5663 = vmatpush.bf16.msra.mxu0 %v5571
  %5664 = vmatpush.bf16.msra.mxu0 %v5569
  %5665 = vmatmul.bf16.gmra.mxu0 %v5446
  %v5666 = vpop.f32.mrf.mxu0
  %v5667 = vadd.f32 0.0, %v5666
  %v5668 = vpop.f32.mrf.mxu0
  %5669 = vdwg.mxu0
  %5670 = vmatpush.bf16.msra.mxu0 0
  %5671 = vmatpush.bf16.msra.mxu0 %v5597
  %5672 = vmatpush.bf16.msra.mxu0 %v5595
  %5673 = vmatpush.bf16.msra.mxu0 %v5593
  %5674 = vmatpush.bf16.msra.mxu0 %v5591
  %5675 = vmatpush.bf16.msra.mxu0 %v5589
  %5676 = vmatpush.bf16.msra.mxu0 %v5587
  %5677 = vmatpush.bf16.msra.mxu0 %v5585
  %5678 = vmatmul.bf16.gmra.mxu0 %v5629
  %v5679 = vpop.f32.mrf.mxu0
  %v5680 = vadd.f32 %v5667, %v5679
  %v5681 = vpop.f32.mrf.mxu0
  %5682 = vdwg.mxu0
  %v5683 = vadd.f32 %v5415, %v5654
  %v5684 = vadd.f32 %v5441, %v5680
  %v5685 = vadd.f32 %v5683, %v3491
  %v5686 = vadd.f32 %v5684, %v3492
  %vm5687 = vcmp.gt.f32.partialorder %v5685, 0.0
  %vm5688 = vcmp.gt.f32.partialorder %v5686, 0.0
  %v5689 = vmul.f32 %v5685, 0.01
  %v5690 = vmul.f32 %v5686, 0.01
  %v5691 = vsel %vm5687, %v5685, %v5689
  %v5692 = vsel %vm5688, %v5686, %v5690
  %s5693 = scalar_lea.vmem [#allocation3], 48
  %5694 = vst [vmem:[%s5693] sm:$0xff] %v5691
  %5695 = vst.msk [vmem:[%s5693 + $0x8] sm:$0xff] %vm3504, %v5692
  %v5696 = vld [vmem:[%s1685] sm:$0xff]
  %v5697 = vld [vmem:[%s1685 + $0x8] sm:$0xff]
  %v5698 = vpack.c.bf16 %v5696, %v5696
  %v5699 = vpack.c.bf16 %v5697, %v5697
  %v5700 = vld [vmem:[%s4] sm:$0xff]
  %v5701 = vld [vmem:[%s4 + $0x8] sm:$0xff]
  %v5702 = vld [vmem:[%s4 + $0x10] sm:$0xff]
  %v5703 = vld [vmem:[%s4 + $0x18] sm:$0xff]
  %v5704 = vld [vmem:[%s4 + $0x20] sm:$0xff]
  %v5705 = vld [vmem:[%s4 + $0x28] sm:$0xff]
  %v5706 = vld [vmem:[%s4 + $0x30] sm:$0xff]
  %v5707 = vld [vmem:[%s4 + $0x38] sm:$0xff]
  %v5708 = vld [vmem:[%s4 + $0x40] sm:$0xff]
  %v5709 = vld [vmem:[%s4 + $0x48] sm:$0xff]
  %v5710 = vld [vmem:[%s4 + $0x50] sm:$0xff]
  %v5711 = vld [vmem:[%s4 + $0x58] sm:$0xff]
  %v5712 = vld [vmem:[%s4 + $0x60] sm:$0xff]
  %v5713 = vld [vmem:[%s4 + $0x68] sm:$0xff]
  %v5714 = vld [vmem:[%s4 + $0x70] sm:$0xff]
  %v5715 = vld [vmem:[%s4 + $0x78] sm:$0xff]
  %v5716 = vld [vmem:[%s4 + $0x80] sm:$0xff]
  %v5717 = vld [vmem:[%s4 + $0x88] sm:$0xff]
  %v5718 = vld [vmem:[%s4 + $0x90] sm:$0xff]
  %v5719 = vld [vmem:[%s4 + $0x98] sm:$0xff]
  %v5720 = vld [vmem:[%s4 + $0xa0] sm:$0xff]
  %v5721 = vld [vmem:[%s4 + $0xa8] sm:$0xff]
  %v5722 = vld [vmem:[%s4 + $0xb0] sm:$0xff]
  %v5723 = vld [vmem:[%s4 + $0xb8] sm:$0xff]
  %v5724 = vld [vmem:[%s4 + $0xc0] sm:$0xff]
  %v5725 = vld [vmem:[%s4 + $0xc8] sm:$0xff]
  %v5726 = vld [vmem:[%s4 + $0xd0] sm:$0xff]
  %v5727 = vld [vmem:[%s4 + $0xd8] sm:$0xff]
  %v5728 = vld [vmem:[%s4 + $0xe0] sm:$0xff]
  %v5729 = vld [vmem:[%s4 + $0xe8] sm:$0xff]
  %v5730 = vld [vmem:[%s1865] sm:$0xff]
  %v5731 = vld [vmem:[%s1865 + $0x8] sm:$0xff]
  %v5732 = vpack.c.bf16 %v5730, %v5730
  %v5733 = vpack.c.bf16 %v5731, %v5731
  %v5734 = vld [vmem:[%s2807] sm:$0xff]
  %v5735 = vld [vmem:[%s2807 + $0x8] sm:$0xff]
  %v5736 = vld [vmem:[%s2807 + $0x10] sm:$0xff]
  %v5737 = vld [vmem:[%s2807 + $0x18] sm:$0xff]
  %v5738 = vld [vmem:[%s2807 + $0x20] sm:$0xff]
  %v5739 = vld [vmem:[%s2807 + $0x28] sm:$0xff]
  %v5740 = vld [vmem:[%s2807 + $0x30] sm:$0xff]
  %v5741 = vld [vmem:[%s2807 + $0x38] sm:$0xff]
  %v5742 = vld [vmem:[%s2807 + $0x40] sm:$0xff]
  %v5743 = vld [vmem:[%s2807 + $0x48] sm:$0xff]
  %v5744 = vld [vmem:[%s2807 + $0x50] sm:$0xff]
  %v5745 = vld [vmem:[%s2807 + $0x58] sm:$0xff]
  %v5746 = vld [vmem:[%s2807 + $0x60] sm:$0xff]
  %v5747 = vld [vmem:[%s2807 + $0x68] sm:$0xff]
  %v5748 = vld [vmem:[%s2807 + $0x70] sm:$0xff]
  %v5749 = vld [vmem:[%s2807 + $0x78] sm:$0xff]
  %v5750 = vld [vmem:[%s2807 + $0x80] sm:$0xff]
  %v5751 = vld [vmem:[%s2807 + $0x88] sm:$0xff]
  %v5752 = vld [vmem:[%s2807 + $0x90] sm:$0xff]
  %v5753 = vld [vmem:[%s2807 + $0x98] sm:$0xff]
  %v5754 = vld [vmem:[%s2807 + $0xa0] sm:$0xff]
  %v5755 = vld [vmem:[%s2807 + $0xa8] sm:$0xff]
  %v5756 = vld [vmem:[%s2807 + $0xb0] sm:$0xff]
  %v5757 = vld [vmem:[%s2807 + $0xb8] sm:$0xff]
  %v5758 = vld [vmem:[%s2807 + $0xc0] sm:$0xff]
  %v5759 = vld [vmem:[%s2807 + $0xc8] sm:$0xff]
  %v5760 = vld [vmem:[%s2807 + $0xd0] sm:$0xff]
  %v5761 = vld [vmem:[%s2807 + $0xd8] sm:$0xff]
  %v5762 = vld [vmem:[%s2807 + $0xe0] sm:$0xff]
  %v5763 = vld [vmem:[%s2807 + $0xe8] sm:$0xff]
  %v5794 = vunpack.c.l.b16 %v5734
  %v5795 = vunpack.c.h.b16 %v5734
  %v5796 = vunpack.c.l.b16 %v5735
  %v5797 = vunpack.c.h.b16 %v5735
  %v5798 = vunpack.c.l.b16 %v5736
  %v5799 = vunpack.c.h.b16 %v5736
  %v5800 = vunpack.c.l.b16 %v5737
  %v5801 = vunpack.c.h.b16 %v5737
  %v5802 = vunpack.c.l.b16 %v5738
  %v5803 = vunpack.c.h.b16 %v5738
  %v5804 = vunpack.c.l.b16 %v5739
  %v5805 = vunpack.c.h.b16 %v5739
  %v5806 = vunpack.c.l.b16 %v5740
  %v5807 = vunpack.c.h.b16 %v5740
  %v5808 = vunpack.c.l.b16 %v5741
  %v5809 = vunpack.c.h.b16 %v5741
  %v5810 = vunpack.c.l.b16 %v5742
  %v5811 = vunpack.c.h.b16 %v5742
  %v5812 = vunpack.c.l.b16 %v5743
  %v5813 = vunpack.c.h.b16 %v5743
  %v5814 = vunpack.c.l.b16 %v5744
  %v5815 = vunpack.c.h.b16 %v5744
  %v5816 = vunpack.c.l.b16 %v5745
  %v5817 = vunpack.c.h.b16 %v5745
  %v5818 = vunpack.c.l.b16 %v5746
  %v5819 = vunpack.c.h.b16 %v5746
  %v5820 = vunpack.c.l.b16 %v5747
  %v5821 = vunpack.c.h.b16 %v5747
  %v5822 = vunpack.c.l.b16 %v5748
  %v5823 = vunpack.c.h.b16 %v5748
  %v5824 = vunpack.c.l.b16 %v5749
  %v5825 = vunpack.c.h.b16 %v5749
  %v5826 = vunpack.c.l.b16 %v5750
  %v5827 = vunpack.c.h.b16 %v5750
  %v5828 = vunpack.c.l.b16 %v5751
  %v5829 = vunpack.c.h.b16 %v5751
  %v5830 = vunpack.c.l.b16 %v5752
  %v5831 = vunpack.c.h.b16 %v5752
  %v5832 = vunpack.c.l.b16 %v5753
  %v5833 = vunpack.c.h.b16 %v5753
  %v5834 = vunpack.c.l.b16 %v5754
  %v5835 = vunpack.c.h.b16 %v5754
  %v5836 = vunpack.c.l.b16 %v5755
  %v5837 = vunpack.c.h.b16 %v5755
  %v5838 = vunpack.c.l.b16 %v5756
  %v5839 = vunpack.c.h.b16 %v5756
  %v5840 = vunpack.c.l.b16 %v5757
  %v5841 = vunpack.c.h.b16 %v5757
  %v5842 = vunpack.c.l.b16 %v5758
  %v5843 = vunpack.c.h.b16 %v5758
  %v5844 = vunpack.c.l.b16 %v5759
  %v5845 = vunpack.c.h.b16 %v5759
  %v5846 = vunpack.c.l.b16 %v5760
  %v5847 = vunpack.c.h.b16 %v5760
  %v5848 = vunpack.c.l.b16 %v5761
  %v5849 = vunpack.c.h.b16 %v5761
  %v5850 = vunpack.c.l.b16 %v5762
  %v5851 = vunpack.c.h.b16 %v5762
  %v5852 = vunpack.c.l.b16 %v5763
  %v5853 = vunpack.c.h.b16 %v5763
  %v5854 = vpack.c.b16 %v5796, %v5794
  %v5855 = vpack.c.b16 %v5797, %v5795
  %v5856 = vpack.c.b16 %v5800, %v5798
  %v5857 = vpack.c.b16 %v5801, %v5799
  %v5858 = vpack.c.b16 %v5804, %v5802
  %v5859 = vpack.c.b16 %v5805, %v5803
  %v5860 = vpack.c.b16 %v5808, %v5806
  %v5861 = vpack.c.b16 %v5809, %v5807
  %v5862 = vpack.c.b16 %v5812, %v5810
  %v5863 = vpack.c.b16 %v5813, %v5811
  %v5864 = vpack.c.b16 %v5816, %v5814
  %v5865 = vpack.c.b16 %v5817, %v5815
  %v5866 = vpack.c.b16 %v5820, %v5818
  %v5867 = vpack.c.b16 %v5821, %v5819
  %v5868 = vpack.c.b16 %v5824, %v5822
  %v5869 = vpack.c.b16 %v5825, %v5823
  %v5870 = vpack.c.b16 %v5828, %v5826
  %v5871 = vpack.c.b16 %v5829, %v5827
  %v5872 = vpack.c.b16 %v5832, %v5830
  %v5873 = vpack.c.b16 %v5833, %v5831
  %v5874 = vpack.c.b16 %v5836, %v5834
  %v5875 = vpack.c.b16 %v5837, %v5835
  %v5876 = vpack.c.b16 %v5840, %v5838
  %v5877 = vpack.c.b16 %v5841, %v5839
  %v5878 = vpack.c.b16 %v5844, %v5842
  %v5879 = vpack.c.b16 %v5845, %v5843
  %v5880 = vpack.c.b16 %v5848, %v5846
  %v5881 = vpack.c.b16 %v5849, %v5847
  %v5882 = vpack.c.b16 %v5852, %v5850
  %v5883 = vpack.c.b16 %v5853, %v5851
  %v5915 = vsel %vm246, %v5733, 0
  %5917 = vmatpush.bf16.msra.mxu0 %v5868
  %5918 = vmatpush.bf16.msra.mxu0 %v5866
  %5919 = vmatpush.bf16.msra.mxu0 %v5864
  %5920 = vmatpush.bf16.msra.mxu0 %v5862
  %5921 = vmatpush.bf16.msra.mxu0 %v5860
  %5922 = vmatpush.bf16.msra.mxu0 %v5858
  %5923 = vmatpush.bf16.msra.mxu0 %v5856
  %5924 = vmatpush.bf16.msra.mxu0 %v5854
  %5925 = vmatmul.bf16.gmra.mxu0 %v5732
  %v5926 = vpop.f32.mrf.mxu0
  %v5927 = vadd.f32 0.0, %v5926
  %v5928 = vpop.f32.mrf.mxu0
  %5929 = vdwg.mxu0
  %5930 = vmatpush.bf16.msra.mxu0 0
  %5931 = vmatpush.bf16.msra.mxu0 %v5882
  %5932 = vmatpush.bf16.msra.mxu0 %v5880
  %5933 = vmatpush.bf16.msra.mxu0 %v5878
  %5934 = vmatpush.bf16.msra.mxu0 %v5876
  %5935 = vmatpush.bf16.msra.mxu0 %v5874
  %5936 = vmatpush.bf16.msra.mxu0 %v5872
  %5937 = vmatpush.bf16.msra.mxu0 %v5870
  %5938 = vmatmul.bf16.gmra.mxu0 %v5915
  %v5939 = vpop.f32.mrf.mxu0
  %v5940 = vadd.f32 %v5927, %v5939
  %v5941 = vpop.f32.mrf.mxu0
  %5942 = vdwg.mxu0
  %5943 = vmatpush.bf16.msra.mxu0 %v5869
  %5944 = vmatpush.bf16.msra.mxu0 %v5867
  %5945 = vmatpush.bf16.msra.mxu0 %v5865
  %5946 = vmatpush.bf16.msra.mxu0 %v5863
  %5947 = vmatpush.bf16.msra.mxu0 %v5861
  %5948 = vmatpush.bf16.msra.mxu0 %v5859
  %5949 = vmatpush.bf16.msra.mxu0 %v5857
  %5950 = vmatpush.bf16.msra.mxu0 %v5855
  %5951 = vmatmul.bf16.gmra.mxu0 %v5732
  %v5952 = vpop.f32.mrf.mxu0
  %v5953 = vadd.f32 0.0, %v5952
  %v5954 = vpop.f32.mrf.mxu0
  %5955 = vdwg.mxu0
  %5956 = vmatpush.bf16.msra.mxu0 0
  %5957 = vmatpush.bf16.msra.mxu0 %v5883
  %5958 = vmatpush.bf16.msra.mxu0 %v5881
  %5959 = vmatpush.bf16.msra.mxu0 %v5879
  %5960 = vmatpush.bf16.msra.mxu0 %v5877
  %5961 = vmatpush.bf16.msra.mxu0 %v5875
  %5962 = vmatpush.bf16.msra.mxu0 %v5873
  %5963 = vmatpush.bf16.msra.mxu0 %v5871
  %5964 = vmatmul.bf16.gmra.mxu0 %v5915
  %v5965 = vpop.f32.mrf.mxu0
  %v5966 = vadd.f32 %v5953, %v5965
  %v5967 = vpop.f32.mrf.mxu0
  %5968 = vdwg.mxu0
  %v5999 = vunpack.c.l.b16 %v5700
  %v6000 = vunpack.c.h.b16 %v5700
  %v6001 = vunpack.c.l.b16 %v5701
  %v6002 = vunpack.c.h.b16 %v5701
  %v6003 = vunpack.c.l.b16 %v5702
  %v6004 = vunpack.c.h.b16 %v5702
  %v6005 = vunpack.c.l.b16 %v5703
  %v6006 = vunpack.c.h.b16 %v5703
  %v6007 = vunpack.c.l.b16 %v5704
  %v6008 = vunpack.c.h.b16 %v5704
  %v6009 = vunpack.c.l.b16 %v5705
  %v6010 = vunpack.c.h.b16 %v5705
  %v6011 = vunpack.c.l.b16 %v5706
  %v6012 = vunpack.c.h.b16 %v5706
  %v6013 = vunpack.c.l.b16 %v5707
  %v6014 = vunpack.c.h.b16 %v5707
  %v6015 = vunpack.c.l.b16 %v5708
  %v6016 = vunpack.c.h.b16 %v5708
  %v6017 = vunpack.c.l.b16 %v5709
  %v6018 = vunpack.c.h.b16 %v5709
  %v6019 = vunpack.c.l.b16 %v5710
  %v6020 = vunpack.c.h.b16 %v5710
  %v6021 = vunpack.c.l.b16 %v5711
  %v6022 = vunpack.c.h.b16 %v5711
  %v6023 = vunpack.c.l.b16 %v5712
  %v6024 = vunpack.c.h.b16 %v5712
  %v6025 = vunpack.c.l.b16 %v5713
  %v6026 = vunpack.c.h.b16 %v5713
  %v6027 = vunpack.c.l.b16 %v5714
  %v6028 = vunpack.c.h.b16 %v5714
  %v6029 = vunpack.c.l.b16 %v5715
  %v6030 = vunpack.c.h.b16 %v5715
  %v6031 = vunpack.c.l.b16 %v5716
  %v6032 = vunpack.c.h.b16 %v5716
  %v6033 = vunpack.c.l.b16 %v5717
  %v6034 = vunpack.c.h.b16 %v5717
  %v6035 = vunpack.c.l.b16 %v5718
  %v6036 = vunpack.c.h.b16 %v5718
  %v6037 = vunpack.c.l.b16 %v5719
  %v6038 = vunpack.c.h.b16 %v5719
  %v6039 = vunpack.c.l.b16 %v5720
  %v6040 = vunpack.c.h.b16 %v5720
  %v6041 = vunpack.c.l.b16 %v5721
  %v6042 = vunpack.c.h.b16 %v5721
  %v6043 = vunpack.c.l.b16 %v5722
  %v6044 = vunpack.c.h.b16 %v5722
  %v6045 = vunpack.c.l.b16 %v5723
  %v6046 = vunpack.c.h.b16 %v5723
  %v6047 = vunpack.c.l.b16 %v5724
  %v6048 = vunpack.c.h.b16 %v5724
  %v6049 = vunpack.c.l.b16 %v5725
  %v6050 = vunpack.c.h.b16 %v5725
  %v6051 = vunpack.c.l.b16 %v5726
  %v6052 = vunpack.c.h.b16 %v5726
  %v6053 = vunpack.c.l.b16 %v5727
  %v6054 = vunpack.c.h.b16 %v5727
  %v6055 = vunpack.c.l.b16 %v5728
  %v6056 = vunpack.c.h.b16 %v5728
  %v6057 = vunpack.c.l.b16 %v5729
  %v6058 = vunpack.c.h.b16 %v5729
  %v6059 = vpack.c.b16 %v6001, %v5999
  %v6060 = vpack.c.b16 %v6002, %v6000
  %v6061 = vpack.c.b16 %v6005, %v6003
  %v6062 = vpack.c.b16 %v6006, %v6004
  %v6063 = vpack.c.b16 %v6009, %v6007
  %v6064 = vpack.c.b16 %v6010, %v6008
  %v6065 = vpack.c.b16 %v6013, %v6011
  %v6066 = vpack.c.b16 %v6014, %v6012
  %v6067 = vpack.c.b16 %v6017, %v6015
  %v6068 = vpack.c.b16 %v6018, %v6016
  %v6069 = vpack.c.b16 %v6021, %v6019
  %v6070 = vpack.c.b16 %v6022, %v6020
  %v6071 = vpack.c.b16 %v6025, %v6023
  %v6072 = vpack.c.b16 %v6026, %v6024
  %v6073 = vpack.c.b16 %v6029, %v6027
  %v6074 = vpack.c.b16 %v6030, %v6028
  %v6075 = vpack.c.b16 %v6033, %v6031
  %v6076 = vpack.c.b16 %v6034, %v6032
  %v6077 = vpack.c.b16 %v6037, %v6035
  %v6078 = vpack.c.b16 %v6038, %v6036
  %v6079 = vpack.c.b16 %v6041, %v6039
  %v6080 = vpack.c.b16 %v6042, %v6040
  %v6081 = vpack.c.b16 %v6045, %v6043
  %v6082 = vpack.c.b16 %v6046, %v6044
  %v6083 = vpack.c.b16 %v6049, %v6047
  %v6084 = vpack.c.b16 %v6050, %v6048
  %v6085 = vpack.c.b16 %v6053, %v6051
  %v6086 = vpack.c.b16 %v6054, %v6052
  %v6087 = vpack.c.b16 %v6057, %v6055
  %v6088 = vpack.c.b16 %v6058, %v6056
  %v6120 = vsel %vm246, %v5699, 0
  %6122 = vmatpush.bf16.msra.mxu0 %v6073
  %6123 = vmatpush.bf16.msra.mxu0 %v6071
  %6124 = vmatpush.bf16.msra.mxu0 %v6069
  %6125 = vmatpush.bf16.msra.mxu0 %v6067
  %6126 = vmatpush.bf16.msra.mxu0 %v6065
  %6127 = vmatpush.bf16.msra.mxu0 %v6063
  %6128 = vmatpush.bf16.msra.mxu0 %v6061
  %6129 = vmatpush.bf16.msra.mxu0 %v6059
  %6130 = vmatmul.bf16.gmra.mxu0 %v5698
  %v6131 = vpop.f32.mrf.mxu0
  %v6132 = vadd.f32 %v5940, %v6131
  %v6133 = vpop.f32.mrf.mxu0
  %6134 = vdwg.mxu0
  %6135 = vmatpush.bf16.msra.mxu0 0
  %6136 = vmatpush.bf16.msra.mxu0 %v6087
  %6137 = vmatpush.bf16.msra.mxu0 %v6085
  %6138 = vmatpush.bf16.msra.mxu0 %v6083
  %6139 = vmatpush.bf16.msra.mxu0 %v6081
  %6140 = vmatpush.bf16.msra.mxu0 %v6079
  %6141 = vmatpush.bf16.msra.mxu0 %v6077
  %6142 = vmatpush.bf16.msra.mxu0 %v6075
  %6143 = vmatmul.bf16.gmra.mxu0 %v6120
  %v6144 = vpop.f32.mrf.mxu0
  %v6145 = vadd.f32 %v6132, %v6144
  %v6146 = vpop.f32.mrf.mxu0
  %6147 = vdwg.mxu0
  %6148 = vmatpush.bf16.msra.mxu0 %v6074
  %6149 = vmatpush.bf16.msra.mxu0 %v6072
  %6150 = vmatpush.bf16.msra.mxu0 %v6070
  %6151 = vmatpush.bf16.msra.mxu0 %v6068
  %6152 = vmatpush.bf16.msra.mxu0 %v6066
  %6153 = vmatpush.bf16.msra.mxu0 %v6064
  %6154 = vmatpush.bf16.msra.mxu0 %v6062
  %6155 = vmatpush.bf16.msra.mxu0 %v6060
  %6156 = vmatmul.bf16.gmra.mxu0 %v5698
  %v6157 = vpop.f32.mrf.mxu0
  %v6158 = vadd.f32 %v5966, %v6157
  %v6159 = vpop.f32.mrf.mxu0
  %6160 = vdwg.mxu0
  %6161 = vmatpush.bf16.msra.mxu0 0
  %6162 = vmatpush.bf16.msra.mxu0 %v6088
  %6163 = vmatpush.bf16.msra.mxu0 %v6086
  %6164 = vmatpush.bf16.msra.mxu0 %v6084
  %6165 = vmatpush.bf16.msra.mxu0 %v6082
  %6166 = vmatpush.bf16.msra.mxu0 %v6080
  %6167 = vmatpush.bf16.msra.mxu0 %v6078
  %6168 = vmatpush.bf16.msra.mxu0 %v6076
  %6169 = vmatmul.bf16.gmra.mxu0 %v6120
  %v6170 = vpop.f32.mrf.mxu0
  %v6171 = vadd.f32 %v6158, %v6170
  %v6172 = vpop.f32.mrf.mxu0
  %6173 = vdwg.mxu0
  %v6174 = vld [vmem:[%s2045] sm:$0xff]
  %v6175 = vld [vmem:[%s2045 + $0x8] sm:$0xff]
  %v6176 = vpack.c.bf16 %v6174, %v6174
  %v6177 = vpack.c.bf16 %v6175, %v6175
  %v6178 = vld [vmem:[%s3252] sm:$0xff]
  %v6179 = vld [vmem:[%s3252 + $0x8] sm:$0xff]
  %v6180 = vld [vmem:[%s3252 + $0x10] sm:$0xff]
  %v6181 = vld [vmem:[%s3252 + $0x18] sm:$0xff]
  %v6182 = vld [vmem:[%s3252 + $0x20] sm:$0xff]
  %v6183 = vld [vmem:[%s3252 + $0x28] sm:$0xff]
  %v6184 = vld [vmem:[%s3252 + $0x30] sm:$0xff]
  %v6185 = vld [vmem:[%s3252 + $0x38] sm:$0xff]
  %v6186 = vld [vmem:[%s3252 + $0x40] sm:$0xff]
  %v6187 = vld [vmem:[%s3252 + $0x48] sm:$0xff]
  %v6188 = vld [vmem:[%s3252 + $0x50] sm:$0xff]
  %v6189 = vld [vmem:[%s3252 + $0x58] sm:$0xff]
  %v6190 = vld [vmem:[%s3252 + $0x60] sm:$0xff]
  %v6191 = vld [vmem:[%s3252 + $0x68] sm:$0xff]
  %v6192 = vld [vmem:[%s3252 + $0x70] sm:$0xff]
  %v6193 = vld [vmem:[%s3252 + $0x78] sm:$0xff]
  %v6194 = vld [vmem:[%s3252 + $0x80] sm:$0xff]
  %v6195 = vld [vmem:[%s3252 + $0x88] sm:$0xff]
  %v6196 = vld [vmem:[%s3252 + $0x90] sm:$0xff]
  %v6197 = vld [vmem:[%s3252 + $0x98] sm:$0xff]
  %v6198 = vld [vmem:[%s3252 + $0xa0] sm:$0xff]
  %v6199 = vld [vmem:[%s3252 + $0xa8] sm:$0xff]
  %v6200 = vld [vmem:[%s3252 + $0xb0] sm:$0xff]
  %v6201 = vld [vmem:[%s3252 + $0xb8] sm:$0xff]
  %v6202 = vld [vmem:[%s3252 + $0xc0] sm:$0xff]
  %v6203 = vld [vmem:[%s3252 + $0xc8] sm:$0xff]
  %v6204 = vld [vmem:[%s3252 + $0xd0] sm:$0xff]
  %v6205 = vld [vmem:[%s3252 + $0xd8] sm:$0xff]
  %v6206 = vld [vmem:[%s3252 + $0xe0] sm:$0xff]
  %v6207 = vld [vmem:[%s3252 + $0xe8] sm:$0xff]
  %v6238 = vunpack.c.l.b16 %v6178
  %v6239 = vunpack.c.h.b16 %v6178
  %v6240 = vunpack.c.l.b16 %v6179
  %v6241 = vunpack.c.h.b16 %v6179
  %v6242 = vunpack.c.l.b16 %v6180
  %v6243 = vunpack.c.h.b16 %v6180
  %v6244 = vunpack.c.l.b16 %v6181
  %v6245 = vunpack.c.h.b16 %v6181
  %v6246 = vunpack.c.l.b16 %v6182
  %v6247 = vunpack.c.h.b16 %v6182
  %v6248 = vunpack.c.l.b16 %v6183
  %v6249 = vunpack.c.h.b16 %v6183
  %v6250 = vunpack.c.l.b16 %v6184
  %v6251 = vunpack.c.h.b16 %v6184
  %v6252 = vunpack.c.l.b16 %v6185
  %v6253 = vunpack.c.h.b16 %v6185
  %v6254 = vunpack.c.l.b16 %v6186
  %v6255 = vunpack.c.h.b16 %v6186
  %v6256 = vunpack.c.l.b16 %v6187
  %v6257 = vunpack.c.h.b16 %v6187
  %v6258 = vunpack.c.l.b16 %v6188
  %v6259 = vunpack.c.h.b16 %v6188
  %v6260 = vunpack.c.l.b16 %v6189
  %v6261 = vunpack.c.h.b16 %v6189
  %v6262 = vunpack.c.l.b16 %v6190
  %v6263 = vunpack.c.h.b16 %v6190
  %v6264 = vunpack.c.l.b16 %v6191
  %v6265 = vunpack.c.h.b16 %v6191
  %v6266 = vunpack.c.l.b16 %v6192
  %v6267 = vunpack.c.h.b16 %v6192
  %v6268 = vunpack.c.l.b16 %v6193
  %v6269 = vunpack.c.h.b16 %v6193
  %v6270 = vunpack.c.l.b16 %v6194
  %v6271 = vunpack.c.h.b16 %v6194
  %v6272 = vunpack.c.l.b16 %v6195
  %v6273 = vunpack.c.h.b16 %v6195
  %v6274 = vunpack.c.l.b16 %v6196
  %v6275 = vunpack.c.h.b16 %v6196
  %v6276 = vunpack.c.l.b16 %v6197
  %v6277 = vunpack.c.h.b16 %v6197
  %v6278 = vunpack.c.l.b16 %v6198
  %v6279 = vunpack.c.h.b16 %v6198
  %v6280 = vunpack.c.l.b16 %v6199
  %v6281 = vunpack.c.h.b16 %v6199
  %v6282 = vunpack.c.l.b16 %v6200
  %v6283 = vunpack.c.h.b16 %v6200
  %v6284 = vunpack.c.l.b16 %v6201
  %v6285 = vunpack.c.h.b16 %v6201
  %v6286 = vunpack.c.l.b16 %v6202
  %v6287 = vunpack.c.h.b16 %v6202
  %v6288 = vunpack.c.l.b16 %v6203
  %v6289 = vunpack.c.h.b16 %v6203
  %v6290 = vunpack.c.l.b16 %v6204
  %v6291 = vunpack.c.h.b16 %v6204
  %v6292 = vunpack.c.l.b16 %v6205
  %v6293 = vunpack.c.h.b16 %v6205
  %v6294 = vunpack.c.l.b16 %v6206
  %v6295 = vunpack.c.h.b16 %v6206
  %v6296 = vunpack.c.l.b16 %v6207
  %v6297 = vunpack.c.h.b16 %v6207
  %v6298 = vpack.c.b16 %v6240, %v6238
  %v6299 = vpack.c.b16 %v6241, %v6239
  %v6300 = vpack.c.b16 %v6244, %v6242
  %v6301 = vpack.c.b16 %v6245, %v6243
  %v6302 = vpack.c.b16 %v6248, %v6246
  %v6303 = vpack.c.b16 %v6249, %v6247
  %v6304 = vpack.c.b16 %v6252, %v6250
  %v6305 = vpack.c.b16 %v6253, %v6251
  %v6306 = vpack.c.b16 %v6256, %v6254
  %v6307 = vpack.c.b16 %v6257, %v6255
  %v6308 = vpack.c.b16 %v6260, %v6258
  %v6309 = vpack.c.b16 %v6261, %v6259
  %v6310 = vpack.c.b16 %v6264, %v6262
  %v6311 = vpack.c.b16 %v6265, %v6263
  %v6312 = vpack.c.b16 %v6268, %v6266
  %v6313 = vpack.c.b16 %v6269, %v6267
  %v6314 = vpack.c.b16 %v6272, %v6270
  %v6315 = vpack.c.b16 %v6273, %v6271
  %v6316 = vpack.c.b16 %v6276, %v6274
  %v6317 = vpack.c.b16 %v6277, %v6275
  %v6318 = vpack.c.b16 %v6280, %v6278
  %v6319 = vpack.c.b16 %v6281, %v6279
  %v6320 = vpack.c.b16 %v6284, %v6282
  %v6321 = vpack.c.b16 %v6285, %v6283
  %v6322 = vpack.c.b16 %v6288, %v6286
  %v6323 = vpack.c.b16 %v6289, %v6287
  %v6324 = vpack.c.b16 %v6292, %v6290
  %v6325 = vpack.c.b16 %v6293, %v6291
  %v6326 = vpack.c.b16 %v6296, %v6294
  %v6327 = vpack.c.b16 %v6297, %v6295
  %v6359 = vsel %vm246, %v6177, 0
  %6361 = vmatpush.bf16.msra.mxu0 %v6312
  %6362 = vmatpush.bf16.msra.mxu0 %v6310
  %6363 = vmatpush.bf16.msra.mxu0 %v6308
  %6364 = vmatpush.bf16.msra.mxu0 %v6306
  %6365 = vmatpush.bf16.msra.mxu0 %v6304
  %6366 = vmatpush.bf16.msra.mxu0 %v6302
  %6367 = vmatpush.bf16.msra.mxu0 %v6300
  %6368 = vmatpush.bf16.msra.mxu0 %v6298
  %6369 = vmatmul.bf16.gmra.mxu0 %v6176
  %v6370 = vpop.f32.mrf.mxu0
  %v6371 = vadd.f32 0.0, %v6370
  %v6372 = vpop.f32.mrf.mxu0
  %6373 = vdwg.mxu0
  %6374 = vmatpush.bf16.msra.mxu0 0
  %6375 = vmatpush.bf16.msra.mxu0 %v6326
  %6376 = vmatpush.bf16.msra.mxu0 %v6324
  %6377 = vmatpush.bf16.msra.mxu0 %v6322
  %6378 = vmatpush.bf16.msra.mxu0 %v6320
  %6379 = vmatpush.bf16.msra.mxu0 %v6318
  %6380 = vmatpush.bf16.msra.mxu0 %v6316
  %6381 = vmatpush.bf16.msra.mxu0 %v6314
  %6382 = vmatmul.bf16.gmra.mxu0 %v6359
  %v6383 = vpop.f32.mrf.mxu0
  %v6384 = vadd.f32 %v6371, %v6383
  %v6385 = vpop.f32.mrf.mxu0
  %6386 = vdwg.mxu0
  %6387 = vmatpush.bf16.msra.mxu0 %v6313
  %6388 = vmatpush.bf16.msra.mxu0 %v6311
  %6389 = vmatpush.bf16.msra.mxu0 %v6309
  %6390 = vmatpush.bf16.msra.mxu0 %v6307
  %6391 = vmatpush.bf16.msra.mxu0 %v6305
  %6392 = vmatpush.bf16.msra.mxu0 %v6303
  %6393 = vmatpush.bf16.msra.mxu0 %v6301
  %6394 = vmatpush.bf16.msra.mxu0 %v6299
  %6395 = vmatmul.bf16.gmra.mxu0 %v6176
  %v6396 = vpop.f32.mrf.mxu0
  %v6397 = vadd.f32 0.0, %v6396
  %v6398 = vpop.f32.mrf.mxu0
  %6399 = vdwg.mxu0
  %6400 = vmatpush.bf16.msra.mxu0 0
  %6401 = vmatpush.bf16.msra.mxu0 %v6327
  %6402 = vmatpush.bf16.msra.mxu0 %v6325
  %6403 = vmatpush.bf16.msra.mxu0 %v6323
  %6404 = vmatpush.bf16.msra.mxu0 %v6321
  %6405 = vmatpush.bf16.msra.mxu0 %v6319
  %6406 = vmatpush.bf16.msra.mxu0 %v6317
  %6407 = vmatpush.bf16.msra.mxu0 %v6315
  %6408 = vmatmul.bf16.gmra.mxu0 %v6359
  %v6409 = vpop.f32.mrf.mxu0
  %v6410 = vadd.f32 %v6397, %v6409
  %v6411 = vpop.f32.mrf.mxu0
  %6412 = vdwg.mxu0
  %v6413 = vadd.f32 %v6145, %v6384
  %v6414 = vadd.f32 %v6171, %v6410
  %v6415 = vadd.f32 %v6413, %v3491
  %v6416 = vadd.f32 %v6414, %v3492
  %vm6417 = vcmp.gt.f32.partialorder %v6415, 0.0
  %vm6418 = vcmp.gt.f32.partialorder %v6416, 0.0
  %v6419 = vmul.f32 %v6415, 0.01
  %v6420 = vmul.f32 %v6416, 0.01
  %v6421 = vsel %vm6417, %v6415, %v6419
  %v6422 = vsel %vm6418, %v6416, %v6420
  %s6423 = scalar_lea.vmem [#allocation3], 64
  %6424 = vst [vmem:[%s6423] sm:$0xff] %v6421
  %6425 = vst.msk [vmem:[%s6423 + $0x8] sm:$0xff] %vm3504, %v6422
  %v6426 = vld [vmem:[%s2045] sm:$0xff]
  %v6427 = vld [vmem:[%s2045 + $0x8] sm:$0xff]
  %v6428 = vpack.c.bf16 %v6426, %v6426
  %v6429 = vpack.c.bf16 %v6427, %v6427
  %v6430 = vld [vmem:[%s4] sm:$0xff]
  %v6431 = vld [vmem:[%s4 + $0x8] sm:$0xff]
  %v6432 = vld [vmem:[%s4 + $0x10] sm:$0xff]
  %v6433 = vld [vmem:[%s4 + $0x18] sm:$0xff]
  %v6434 = vld [vmem:[%s4 + $0x20] sm:$0xff]
  %v6435 = vld [vmem:[%s4 + $0x28] sm:$0xff]
  %v6436 = vld [vmem:[%s4 + $0x30] sm:$0xff]
  %v6437 = vld [vmem:[%s4 + $0x38] sm:$0xff]
  %v6438 = vld [vmem:[%s4 + $0x40] sm:$0xff]
  %v6439 = vld [vmem:[%s4 + $0x48] sm:$0xff]
  %v6440 = vld [vmem:[%s4 + $0x50] sm:$0xff]
  %v6441 = vld [vmem:[%s4 + $0x58] sm:$0xff]
  %v6442 = vld [vmem:[%s4 + $0x60] sm:$0xff]
  %v6443 = vld [vmem:[%s4 + $0x68] sm:$0xff]
  %v6444 = vld [vmem:[%s4 + $0x70] sm:$0xff]
  %v6445 = vld [vmem:[%s4 + $0x78] sm:$0xff]
  %v6446 = vld [vmem:[%s4 + $0x80] sm:$0xff]
  %v6447 = vld [vmem:[%s4 + $0x88] sm:$0xff]
  %v6448 = vld [vmem:[%s4 + $0x90] sm:$0xff]
  %v6449 = vld [vmem:[%s4 + $0x98] sm:$0xff]
  %v6450 = vld [vmem:[%s4 + $0xa0] sm:$0xff]
  %v6451 = vld [vmem:[%s4 + $0xa8] sm:$0xff]
  %v6452 = vld [vmem:[%s4 + $0xb0] sm:$0xff]
  %v6453 = vld [vmem:[%s4 + $0xb8] sm:$0xff]
  %v6454 = vld [vmem:[%s4 + $0xc0] sm:$0xff]
  %v6455 = vld [vmem:[%s4 + $0xc8] sm:$0xff]
  %v6456 = vld [vmem:[%s4 + $0xd0] sm:$0xff]
  %v6457 = vld [vmem:[%s4 + $0xd8] sm:$0xff]
  %v6458 = vld [vmem:[%s4 + $0xe0] sm:$0xff]
  %v6459 = vld [vmem:[%s4 + $0xe8] sm:$0xff]
  %v6460 = vld [vmem:[%s2225] sm:$0xff]
  %v6461 = vld [vmem:[%s2225 + $0x8] sm:$0xff]
  %v6462 = vpack.c.bf16 %v6460, %v6460
  %v6463 = vpack.c.bf16 %v6461, %v6461
  %v6464 = vld [vmem:[%s2807] sm:$0xff]
  %v6465 = vld [vmem:[%s2807 + $0x8] sm:$0xff]
  %v6466 = vld [vmem:[%s2807 + $0x10] sm:$0xff]
  %v6467 = vld [vmem:[%s2807 + $0x18] sm:$0xff]
  %v6468 = vld [vmem:[%s2807 + $0x20] sm:$0xff]
  %v6469 = vld [vmem:[%s2807 + $0x28] sm:$0xff]
  %v6470 = vld [vmem:[%s2807 + $0x30] sm:$0xff]
  %v6471 = vld [vmem:[%s2807 + $0x38] sm:$0xff]
  %v6472 = vld [vmem:[%s2807 + $0x40] sm:$0xff]
  %v6473 = vld [vmem:[%s2807 + $0x48] sm:$0xff]
  %v6474 = vld [vmem:[%s2807 + $0x50] sm:$0xff]
  %v6475 = vld [vmem:[%s2807 + $0x58] sm:$0xff]
  %v6476 = vld [vmem:[%s2807 + $0x60] sm:$0xff]
  %v6477 = vld [vmem:[%s2807 + $0x68] sm:$0xff]
  %v6478 = vld [vmem:[%s2807 + $0x70] sm:$0xff]
  %v6479 = vld [vmem:[%s2807 + $0x78] sm:$0xff]
  %v6480 = vld [vmem:[%s2807 + $0x80] sm:$0xff]
  %v6481 = vld [vmem:[%s2807 + $0x88] sm:$0xff]
  %v6482 = vld [vmem:[%s2807 + $0x90] sm:$0xff]
  %v6483 = vld [vmem:[%s2807 + $0x98] sm:$0xff]
  %v6484 = vld [vmem:[%s2807 + $0xa0] sm:$0xff]
  %v6485 = vld [vmem:[%s2807 + $0xa8] sm:$0xff]
  %v6486 = vld [vmem:[%s2807 + $0xb0] sm:$0xff]
  %v6487 = vld [vmem:[%s2807 + $0xb8] sm:$0xff]
  %v6488 = vld [vmem:[%s2807 + $0xc0] sm:$0xff]
  %v6489 = vld [vmem:[%s2807 + $0xc8] sm:$0xff]
  %v6490 = vld [vmem:[%s2807 + $0xd0] sm:$0xff]
  %v6491 = vld [vmem:[%s2807 + $0xd8] sm:$0xff]
  %v6492 = vld [vmem:[%s2807 + $0xe0] sm:$0xff]
  %v6493 = vld [vmem:[%s2807 + $0xe8] sm:$0xff]
  %v6524 = vunpack.c.l.b16 %v6464
  %v6525 = vunpack.c.h.b16 %v6464
  %v6526 = vunpack.c.l.b16 %v6465
  %v6527 = vunpack.c.h.b16 %v6465
  %v6528 = vunpack.c.l.b16 %v6466
  %v6529 = vunpack.c.h.b16 %v6466
  %v6530 = vunpack.c.l.b16 %v6467
  %v6531 = vunpack.c.h.b16 %v6467
  %v6532 = vunpack.c.l.b16 %v6468
  %v6533 = vunpack.c.h.b16 %v6468
  %v6534 = vunpack.c.l.b16 %v6469
  %v6535 = vunpack.c.h.b16 %v6469
  %v6536 = vunpack.c.l.b16 %v6470
  %v6537 = vunpack.c.h.b16 %v6470
  %v6538 = vunpack.c.l.b16 %v6471
  %v6539 = vunpack.c.h.b16 %v6471
  %v6540 = vunpack.c.l.b16 %v6472
  %v6541 = vunpack.c.h.b16 %v6472
  %v6542 = vunpack.c.l.b16 %v6473
  %v6543 = vunpack.c.h.b16 %v6473
  %v6544 = vunpack.c.l.b16 %v6474
  %v6545 = vunpack.c.h.b16 %v6474
  %v6546 = vunpack.c.l.b16 %v6475
  %v6547 = vunpack.c.h.b16 %v6475
  %v6548 = vunpack.c.l.b16 %v6476
  %v6549 = vunpack.c.h.b16 %v6476
  %v6550 = vunpack.c.l.b16 %v6477
  %v6551 = vunpack.c.h.b16 %v6477
  %v6552 = vunpack.c.l.b16 %v6478
  %v6553 = vunpack.c.h.b16 %v6478
  %v6554 = vunpack.c.l.b16 %v6479
  %v6555 = vunpack.c.h.b16 %v6479
  %v6556 = vunpack.c.l.b16 %v6480
  %v6557 = vunpack.c.h.b16 %v6480
  %v6558 = vunpack.c.l.b16 %v6481
  %v6559 = vunpack.c.h.b16 %v6481
  %v6560 = vunpack.c.l.b16 %v6482
  %v6561 = vunpack.c.h.b16 %v6482
  %v6562 = vunpack.c.l.b16 %v6483
  %v6563 = vunpack.c.h.b16 %v6483
  %v6564 = vunpack.c.l.b16 %v6484
  %v6565 = vunpack.c.h.b16 %v6484
  %v6566 = vunpack.c.l.b16 %v6485
  %v6567 = vunpack.c.h.b16 %v6485
  %v6568 = vunpack.c.l.b16 %v6486
  %v6569 = vunpack.c.h.b16 %v6486
  %v6570 = vunpack.c.l.b16 %v6487
  %v6571 = vunpack.c.h.b16 %v6487
  %v6572 = vunpack.c.l.b16 %v6488
  %v6573 = vunpack.c.h.b16 %v6488
  %v6574 = vunpack.c.l.b16 %v6489
  %v6575 = vunpack.c.h.b16 %v6489
  %v6576 = vunpack.c.l.b16 %v6490
  %v6577 = vunpack.c.h.b16 %v6490
  %v6578 = vunpack.c.l.b16 %v6491
  %v6579 = vunpack.c.h.b16 %v6491
  %v6580 = vunpack.c.l.b16 %v6492
  %v6581 = vunpack.c.h.b16 %v6492
  %v6582 = vunpack.c.l.b16 %v6493
  %v6583 = vunpack.c.h.b16 %v6493
  %v6584 = vpack.c.b16 %v6526, %v6524
  %v6585 = vpack.c.b16 %v6527, %v6525
  %v6586 = vpack.c.b16 %v6530, %v6528
  %v6587 = vpack.c.b16 %v6531, %v6529
  %v6588 = vpack.c.b16 %v6534, %v6532
  %v6589 = vpack.c.b16 %v6535, %v6533
  %v6590 = vpack.c.b16 %v6538, %v6536
  %v6591 = vpack.c.b16 %v6539, %v6537
  %v6592 = vpack.c.b16 %v6542, %v6540
  %v6593 = vpack.c.b16 %v6543, %v6541
  %v6594 = vpack.c.b16 %v6546, %v6544
  %v6595 = vpack.c.b16 %v6547, %v6545
  %v6596 = vpack.c.b16 %v6550, %v6548
  %v6597 = vpack.c.b16 %v6551, %v6549
  %v6598 = vpack.c.b16 %v6554, %v6552
  %v6599 = vpack.c.b16 %v6555, %v6553
  %v6600 = vpack.c.b16 %v6558, %v6556
  %v6601 = vpack.c.b16 %v6559, %v6557
  %v6602 = vpack.c.b16 %v6562, %v6560
  %v6603 = vpack.c.b16 %v6563, %v6561
  %v6604 = vpack.c.b16 %v6566, %v6564
  %v6605 = vpack.c.b16 %v6567, %v6565
  %v6606 = vpack.c.b16 %v6570, %v6568
  %v6607 = vpack.c.b16 %v6571, %v6569
  %v6608 = vpack.c.b16 %v6574, %v6572
  %v6609 = vpack.c.b16 %v6575, %v6573
  %v6610 = vpack.c.b16 %v6578, %v6576
  %v6611 = vpack.c.b16 %v6579, %v6577
  %v6612 = vpack.c.b16 %v6582, %v6580
  %v6613 = vpack.c.b16 %v6583, %v6581
  %v6645 = vsel %vm246, %v6463, 0
  %6647 = vmatpush.bf16.msra.mxu0 %v6598
  %6648 = vmatpush.bf16.msra.mxu0 %v6596
  %6649 = vmatpush.bf16.msra.mxu0 %v6594
  %6650 = vmatpush.bf16.msra.mxu0 %v6592
  %6651 = vmatpush.bf16.msra.mxu0 %v6590
  %6652 = vmatpush.bf16.msra.mxu0 %v6588
  %6653 = vmatpush.bf16.msra.mxu0 %v6586
  %6654 = vmatpush.bf16.msra.mxu0 %v6584
  %6655 = vmatmul.bf16.gmra.mxu0 %v6462
  %v6656 = vpop.f32.mrf.mxu0
  %v6657 = vadd.f32 0.0, %v6656
  %v6658 = vpop.f32.mrf.mxu0
  %6659 = vdwg.mxu0
  %6660 = vmatpush.bf16.msra.mxu0 0
  %6661 = vmatpush.bf16.msra.mxu0 %v6612
  %6662 = vmatpush.bf16.msra.mxu0 %v6610
  %6663 = vmatpush.bf16.msra.mxu0 %v6608
  %6664 = vmatpush.bf16.msra.mxu0 %v6606
  %6665 = vmatpush.bf16.msra.mxu0 %v6604
  %6666 = vmatpush.bf16.msra.mxu0 %v6602
  %6667 = vmatpush.bf16.msra.mxu0 %v6600
  %6668 = vmatmul.bf16.gmra.mxu0 %v6645
  %v6669 = vpop.f32.mrf.mxu0
  %v6670 = vadd.f32 %v6657, %v6669
  %v6671 = vpop.f32.mrf.mxu0
  %6672 = vdwg.mxu0
  %6673 = vmatpush.bf16.msra.mxu0 %v6599
  %6674 = vmatpush.bf16.msra.mxu0 %v6597
  %6675 = vmatpush.bf16.msra.mxu0 %v6595
  %6676 = vmatpush.bf16.msra.mxu0 %v6593
  %6677 = vmatpush.bf16.msra.mxu0 %v6591
  %6678 = vmatpush.bf16.msra.mxu0 %v6589
  %6679 = vmatpush.bf16.msra.mxu0 %v6587
  %6680 = vmatpush.bf16.msra.mxu0 %v6585
  %6681 = vmatmul.bf16.gmra.mxu0 %v6462
  %v6682 = vpop.f32.mrf.mxu0
  %v6683 = vadd.f32 0.0, %v6682
  %v6684 = vpop.f32.mrf.mxu0
  %6685 = vdwg.mxu0
  %6686 = vmatpush.bf16.msra.mxu0 0
  %6687 = vmatpush.bf16.msra.mxu0 %v6613
  %6688 = vmatpush.bf16.msra.mxu0 %v6611
  %6689 = vmatpush.bf16.msra.mxu0 %v6609
  %6690 = vmatpush.bf16.msra.mxu0 %v6607
  %6691 = vmatpush.bf16.msra.mxu0 %v6605
  %6692 = vmatpush.bf16.msra.mxu0 %v6603
  %6693 = vmatpush.bf16.msra.mxu0 %v6601
  %6694 = vmatmul.bf16.gmra.mxu0 %v6645
  %v6695 = vpop.f32.mrf.mxu0
  %v6696 = vadd.f32 %v6683, %v6695
  %v6697 = vpop.f32.mrf.mxu0
  %6698 = vdwg.mxu0
  %v6729 = vunpack.c.l.b16 %v6430
  %v6730 = vunpack.c.h.b16 %v6430
  %v6731 = vunpack.c.l.b16 %v6431
  %v6732 = vunpack.c.h.b16 %v6431
  %v6733 = vunpack.c.l.b16 %v6432
  %v6734 = vunpack.c.h.b16 %v6432
  %v6735 = vunpack.c.l.b16 %v6433
  %v6736 = vunpack.c.h.b16 %v6433
  %v6737 = vunpack.c.l.b16 %v6434
  %v6738 = vunpack.c.h.b16 %v6434
  %v6739 = vunpack.c.l.b16 %v6435
  %v6740 = vunpack.c.h.b16 %v6435
  %v6741 = vunpack.c.l.b16 %v6436
  %v6742 = vunpack.c.h.b16 %v6436
  %v6743 = vunpack.c.l.b16 %v6437
  %v6744 = vunpack.c.h.b16 %v6437
  %v6745 = vunpack.c.l.b16 %v6438
  %v6746 = vunpack.c.h.b16 %v6438
  %v6747 = vunpack.c.l.b16 %v6439
  %v6748 = vunpack.c.h.b16 %v6439
  %v6749 = vunpack.c.l.b16 %v6440
  %v6750 = vunpack.c.h.b16 %v6440
  %v6751 = vunpack.c.l.b16 %v6441
  %v6752 = vunpack.c.h.b16 %v6441
  %v6753 = vunpack.c.l.b16 %v6442
  %v6754 = vunpack.c.h.b16 %v6442
  %v6755 = vunpack.c.l.b16 %v6443
  %v6756 = vunpack.c.h.b16 %v6443
  %v6757 = vunpack.c.l.b16 %v6444
  %v6758 = vunpack.c.h.b16 %v6444
  %v6759 = vunpack.c.l.b16 %v6445
  %v6760 = vunpack.c.h.b16 %v6445
  %v6761 = vunpack.c.l.b16 %v6446
  %v6762 = vunpack.c.h.b16 %v6446
  %v6763 = vunpack.c.l.b16 %v6447
  %v6764 = vunpack.c.h.b16 %v6447
  %v6765 = vunpack.c.l.b16 %v6448
  %v6766 = vunpack.c.h.b16 %v6448
  %v6767 = vunpack.c.l.b16 %v6449
  %v6768 = vunpack.c.h.b16 %v6449
  %v6769 = vunpack.c.l.b16 %v6450
  %v6770 = vunpack.c.h.b16 %v6450
  %v6771 = vunpack.c.l.b16 %v6451
  %v6772 = vunpack.c.h.b16 %v6451
  %v6773 = vunpack.c.l.b16 %v6452
  %v6774 = vunpack.c.h.b16 %v6452
  %v6775 = vunpack.c.l.b16 %v6453
  %v6776 = vunpack.c.h.b16 %v6453
  %v6777 = vunpack.c.l.b16 %v6454
  %v6778 = vunpack.c.h.b16 %v6454
  %v6779 = vunpack.c.l.b16 %v6455
  %v6780 = vunpack.c.h.b16 %v6455
  %v6781 = vunpack.c.l.b16 %v6456
  %v6782 = vunpack.c.h.b16 %v6456
  %v6783 = vunpack.c.l.b16 %v6457
  %v6784 = vunpack.c.h.b16 %v6457
  %v6785 = vunpack.c.l.b16 %v6458
  %v6786 = vunpack.c.h.b16 %v6458
  %v6787 = vunpack.c.l.b16 %v6459
  %v6788 = vunpack.c.h.b16 %v6459
  %v6789 = vpack.c.b16 %v6731, %v6729
  %v6790 = vpack.c.b16 %v6732, %v6730
  %v6791 = vpack.c.b16 %v6735, %v6733
  %v6792 = vpack.c.b16 %v6736, %v6734
  %v6793 = vpack.c.b16 %v6739, %v6737
  %v6794 = vpack.c.b16 %v6740, %v6738
  %v6795 = vpack.c.b16 %v6743, %v6741
  %v6796 = vpack.c.b16 %v6744, %v6742
  %v6797 = vpack.c.b16 %v6747, %v6745
  %v6798 = vpack.c.b16 %v6748, %v6746
  %v6799 = vpack.c.b16 %v6751, %v6749
  %v6800 = vpack.c.b16 %v6752, %v6750
  %v6801 = vpack.c.b16 %v6755, %v6753
  %v6802 = vpack.c.b16 %v6756, %v6754
  %v6803 = vpack.c.b16 %v6759, %v6757
  %v6804 = vpack.c.b16 %v6760, %v6758
  %v6805 = vpack.c.b16 %v6763, %v6761
  %v6806 = vpack.c.b16 %v6764, %v6762
  %v6807 = vpack.c.b16 %v6767, %v6765
  %v6808 = vpack.c.b16 %v6768, %v6766
  %v6809 = vpack.c.b16 %v6771, %v6769
  %v6810 = vpack.c.b16 %v6772, %v6770
  %v6811 = vpack.c.b16 %v6775, %v6773
  %v6812 = vpack.c.b16 %v6776, %v6774
  %v6813 = vpack.c.b16 %v6779, %v6777
  %v6814 = vpack.c.b16 %v6780, %v6778
  %v6815 = vpack.c.b16 %v6783, %v6781
  %v6816 = vpack.c.b16 %v6784, %v6782
  %v6817 = vpack.c.b16 %v6787, %v6785
  %v6818 = vpack.c.b16 %v6788, %v6786
  %v6850 = vsel %vm246, %v6429, 0
  %6852 = vmatpush.bf16.msra.mxu0 %v6803
  %6853 = vmatpush.bf16.msra.mxu0 %v6801
  %6854 = vmatpush.bf16.msra.mxu0 %v6799
  %6855 = vmatpush.bf16.msra.mxu0 %v6797
  %6856 = vmatpush.bf16.msra.mxu0 %v6795
  %6857 = vmatpush.bf16.msra.mxu0 %v6793
  %6858 = vmatpush.bf16.msra.mxu0 %v6791
  %6859 = vmatpush.bf16.msra.mxu0 %v6789
  %6860 = vmatmul.bf16.gmra.mxu0 %v6428
  %v6861 = vpop.f32.mrf.mxu0
  %v6862 = vadd.f32 %v6670, %v6861
  %v6863 = vpop.f32.mrf.mxu0
  %6864 = vdwg.mxu0
  %6865 = vmatpush.bf16.msra.mxu0 0
  %6866 = vmatpush.bf16.msra.mxu0 %v6817
  %6867 = vmatpush.bf16.msra.mxu0 %v6815
  %6868 = vmatpush.bf16.msra.mxu0 %v6813
  %6869 = vmatpush.bf16.msra.mxu0 %v6811
  %6870 = vmatpush.bf16.msra.mxu0 %v6809
  %6871 = vmatpush.bf16.msra.mxu0 %v6807
  %6872 = vmatpush.bf16.msra.mxu0 %v6805
  %6873 = vmatmul.bf16.gmra.mxu0 %v6850
  %v6874 = vpop.f32.mrf.mxu0
  %v6875 = vadd.f32 %v6862, %v6874
  %v6876 = vpop.f32.mrf.mxu0
  %6877 = vdwg.mxu0
  %6878 = vmatpush.bf16.msra.mxu0 %v6804
  %6879 = vmatpush.bf16.msra.mxu0 %v6802
  %6880 = vmatpush.bf16.msra.mxu0 %v6800
  %6881 = vmatpush.bf16.msra.mxu0 %v6798
  %6882 = vmatpush.bf16.msra.mxu0 %v6796
  %6883 = vmatpush.bf16.msra.mxu0 %v6794
  %6884 = vmatpush.bf16.msra.mxu0 %v6792
  %6885 = vmatpush.bf16.msra.mxu0 %v6790
  %6886 = vmatmul.bf16.gmra.mxu0 %v6428
  %v6887 = vpop.f32.mrf.mxu0
  %v6888 = vadd.f32 %v6696, %v6887
  %v6889 = vpop.f32.mrf.mxu0
  %6890 = vdwg.mxu0
  %6891 = vmatpush.bf16.msra.mxu0 0
  %6892 = vmatpush.bf16.msra.mxu0 %v6818
  %6893 = vmatpush.bf16.msra.mxu0 %v6816
  %6894 = vmatpush.bf16.msra.mxu0 %v6814
  %6895 = vmatpush.bf16.msra.mxu0 %v6812
  %6896 = vmatpush.bf16.msra.mxu0 %v6810
  %6897 = vmatpush.bf16.msra.mxu0 %v6808
  %6898 = vmatpush.bf16.msra.mxu0 %v6806
  %6899 = vmatmul.bf16.gmra.mxu0 %v6850
  %v6900 = vpop.f32.mrf.mxu0
  %v6901 = vadd.f32 %v6888, %v6900
  %v6902 = vpop.f32.mrf.mxu0
  %6903 = vdwg.mxu0
  %v6904 = vld [vmem:[%s2405] sm:$0xff]
  %v6905 = vld [vmem:[%s2405 + $0x8] sm:$0xff]
  %v6906 = vpack.c.bf16 %v6904, %v6904
  %v6907 = vpack.c.bf16 %v6905, %v6905
  %v6908 = vld [vmem:[%s3252] sm:$0xff]
  %v6909 = vld [vmem:[%s3252 + $0x8] sm:$0xff]
  %v6910 = vld [vmem:[%s3252 + $0x10] sm:$0xff]
  %v6911 = vld [vmem:[%s3252 + $0x18] sm:$0xff]
  %v6912 = vld [vmem:[%s3252 + $0x20] sm:$0xff]
  %v6913 = vld [vmem:[%s3252 + $0x28] sm:$0xff]
  %v6914 = vld [vmem:[%s3252 + $0x30] sm:$0xff]
  %v6915 = vld [vmem:[%s3252 + $0x38] sm:$0xff]
  %v6916 = vld [vmem:[%s3252 + $0x40] sm:$0xff]
  %v6917 = vld [vmem:[%s3252 + $0x48] sm:$0xff]
  %v6918 = vld [vmem:[%s3252 + $0x50] sm:$0xff]
  %v6919 = vld [vmem:[%s3252 + $0x58] sm:$0xff]
  %v6920 = vld [vmem:[%s3252 + $0x60] sm:$0xff]
  %v6921 = vld [vmem:[%s3252 + $0x68] sm:$0xff]
  %v6922 = vld [vmem:[%s3252 + $0x70] sm:$0xff]
  %v6923 = vld [vmem:[%s3252 + $0x78] sm:$0xff]
  %v6924 = vld [vmem:[%s3252 + $0x80] sm:$0xff]
  %v6925 = vld [vmem:[%s3252 + $0x88] sm:$0xff]
  %v6926 = vld [vmem:[%s3252 + $0x90] sm:$0xff]
  %v6927 = vld [vmem:[%s3252 + $0x98] sm:$0xff]
  %v6928 = vld [vmem:[%s3252 + $0xa0] sm:$0xff]
  %v6929 = vld [vmem:[%s3252 + $0xa8] sm:$0xff]
  %v6930 = vld [vmem:[%s3252 + $0xb0] sm:$0xff]
  %v6931 = vld [vmem:[%s3252 + $0xb8] sm:$0xff]
  %v6932 = vld [vmem:[%s3252 + $0xc0] sm:$0xff]
  %v6933 = vld [vmem:[%s3252 + $0xc8] sm:$0xff]
  %v6934 = vld [vmem:[%s3252 + $0xd0] sm:$0xff]
  %v6935 = vld [vmem:[%s3252 + $0xd8] sm:$0xff]
  %v6936 = vld [vmem:[%s3252 + $0xe0] sm:$0xff]
  %v6937 = vld [vmem:[%s3252 + $0xe8] sm:$0xff]
  %v6968 = vunpack.c.l.b16 %v6908
  %v6969 = vunpack.c.h.b16 %v6908
  %v6970 = vunpack.c.l.b16 %v6909
  %v6971 = vunpack.c.h.b16 %v6909
  %v6972 = vunpack.c.l.b16 %v6910
  %v6973 = vunpack.c.h.b16 %v6910
  %v6974 = vunpack.c.l.b16 %v6911
  %v6975 = vunpack.c.h.b16 %v6911
  %v6976 = vunpack.c.l.b16 %v6912
  %v6977 = vunpack.c.h.b16 %v6912
  %v6978 = vunpack.c.l.b16 %v6913
  %v6979 = vunpack.c.h.b16 %v6913
  %v6980 = vunpack.c.l.b16 %v6914
  %v6981 = vunpack.c.h.b16 %v6914
  %v6982 = vunpack.c.l.b16 %v6915
  %v6983 = vunpack.c.h.b16 %v6915
  %v6984 = vunpack.c.l.b16 %v6916
  %v6985 = vunpack.c.h.b16 %v6916
  %v6986 = vunpack.c.l.b16 %v6917
  %v6987 = vunpack.c.h.b16 %v6917
  %v6988 = vunpack.c.l.b16 %v6918
  %v6989 = vunpack.c.h.b16 %v6918
  %v6990 = vunpack.c.l.b16 %v6919
  %v6991 = vunpack.c.h.b16 %v6919
  %v6992 = vunpack.c.l.b16 %v6920
  %v6993 = vunpack.c.h.b16 %v6920
  %v6994 = vunpack.c.l.b16 %v6921
  %v6995 = vunpack.c.h.b16 %v6921
  %v6996 = vunpack.c.l.b16 %v6922
  %v6997 = vunpack.c.h.b16 %v6922
  %v6998 = vunpack.c.l.b16 %v6923
  %v6999 = vunpack.c.h.b16 %v6923
  %v7000 = vunpack.c.l.b16 %v6924
  %v7001 = vunpack.c.h.b16 %v6924
  %v7002 = vunpack.c.l.b16 %v6925
  %v7003 = vunpack.c.h.b16 %v6925
  %v7004 = vunpack.c.l.b16 %v6926
  %v7005 = vunpack.c.h.b16 %v6926
  %v7006 = vunpack.c.l.b16 %v6927
  %v7007 = vunpack.c.h.b16 %v6927
  %v7008 = vunpack.c.l.b16 %v6928
  %v7009 = vunpack.c.h.b16 %v6928
  %v7010 = vunpack.c.l.b16 %v6929
  %v7011 = vunpack.c.h.b16 %v6929
  %v7012 = vunpack.c.l.b16 %v6930
  %v7013 = vunpack.c.h.b16 %v6930
  %v7014 = vunpack.c.l.b16 %v6931
  %v7015 = vunpack.c.h.b16 %v6931
  %v7016 = vunpack.c.l.b16 %v6932
  %v7017 = vunpack.c.h.b16 %v6932
  %v7018 = vunpack.c.l.b16 %v6933
  %v7019 = vunpack.c.h.b16 %v6933
  %v7020 = vunpack.c.l.b16 %v6934
  %v7021 = vunpack.c.h.b16 %v6934
  %v7022 = vunpack.c.l.b16 %v6935
  %v7023 = vunpack.c.h.b16 %v6935
  %v7024 = vunpack.c.l.b16 %v6936
  %v7025 = vunpack.c.h.b16 %v6936
  %v7026 = vunpack.c.l.b16 %v6937
  %v7027 = vunpack.c.h.b16 %v6937
  %v7028 = vpack.c.b16 %v6970, %v6968
  %v7029 = vpack.c.b16 %v6971, %v6969
  %v7030 = vpack.c.b16 %v6974, %v6972
  %v7031 = vpack.c.b16 %v6975, %v6973
  %v7032 = vpack.c.b16 %v6978, %v6976
  %v7033 = vpack.c.b16 %v6979, %v6977
  %v7034 = vpack.c.b16 %v6982, %v6980
  %v7035 = vpack.c.b16 %v6983, %v6981
  %v7036 = vpack.c.b16 %v6986, %v6984
  %v7037 = vpack.c.b16 %v6987, %v6985
  %v7038 = vpack.c.b16 %v6990, %v6988
  %v7039 = vpack.c.b16 %v6991, %v6989
  %v7040 = vpack.c.b16 %v6994, %v6992
  %v7041 = vpack.c.b16 %v6995, %v6993
  %v7042 = vpack.c.b16 %v6998, %v6996
  %v7043 = vpack.c.b16 %v6999, %v6997
  %v7044 = vpack.c.b16 %v7002, %v7000
  %v7045 = vpack.c.b16 %v7003, %v7001
  %v7046 = vpack.c.b16 %v7006, %v7004
  %v7047 = vpack.c.b16 %v7007, %v7005
  %v7048 = vpack.c.b16 %v7010, %v7008
  %v7049 = vpack.c.b16 %v7011, %v7009
  %v7050 = vpack.c.b16 %v7014, %v7012
  %v7051 = vpack.c.b16 %v7015, %v7013
  %v7052 = vpack.c.b16 %v7018, %v7016
  %v7053 = vpack.c.b16 %v7019, %v7017
  %v7054 = vpack.c.b16 %v7022, %v7020
  %v7055 = vpack.c.b16 %v7023, %v7021
  %v7056 = vpack.c.b16 %v7026, %v7024
  %v7057 = vpack.c.b16 %v7027, %v7025
  %v7089 = vsel %vm246, %v6907, 0
  %7091 = vmatpush.bf16.msra.mxu0 %v7042
  %7092 = vmatpush.bf16.msra.mxu0 %v7040
  %7093 = vmatpush.bf16.msra.mxu0 %v7038
  %7094 = vmatpush.bf16.msra.mxu0 %v7036
  %7095 = vmatpush.bf16.msra.mxu0 %v7034
  %7096 = vmatpush.bf16.msra.mxu0 %v7032
  %7097 = vmatpush.bf16.msra.mxu0 %v7030
  %7098 = vmatpush.bf16.msra.mxu0 %v7028
  %7099 = vmatmul.bf16.gmra.mxu0 %v6906
  %v7100 = vpop.f32.mrf.mxu0
  %v7101 = vadd.f32 0.0, %v7100
  %v7102 = vpop.f32.mrf.mxu0
  %7103 = vdwg.mxu0
  %7104 = vmatpush.bf16.msra.mxu0 0
  %7105 = vmatpush.bf16.msra.mxu0 %v7056
  %7106 = vmatpush.bf16.msra.mxu0 %v7054
  %7107 = vmatpush.bf16.msra.mxu0 %v7052
  %7108 = vmatpush.bf16.msra.mxu0 %v7050
  %7109 = vmatpush.bf16.msra.mxu0 %v7048
  %7110 = vmatpush.bf16.msra.mxu0 %v7046
  %7111 = vmatpush.bf16.msra.mxu0 %v7044
  %7112 = vmatmul.bf16.gmra.mxu0 %v7089
  %v7113 = vpop.f32.mrf.mxu0
  %v7114 = vadd.f32 %v7101, %v7113
  %v7115 = vpop.f32.mrf.mxu0
  %7116 = vdwg.mxu0
  %7117 = vmatpush.bf16.msra.mxu0 %v7043
  %7118 = vmatpush.bf16.msra.mxu0 %v7041
  %7119 = vmatpush.bf16.msra.mxu0 %v7039
  %7120 = vmatpush.bf16.msra.mxu0 %v7037
  %7121 = vmatpush.bf16.msra.mxu0 %v7035
  %7122 = vmatpush.bf16.msra.mxu0 %v7033
  %7123 = vmatpush.bf16.msra.mxu0 %v7031
  %7124 = vmatpush.bf16.msra.mxu0 %v7029
  %7125 = vmatmul.bf16.gmra.mxu0 %v6906
  %v7126 = vpop.f32.mrf.mxu0
  %v7127 = vadd.f32 0.0, %v7126
  %v7128 = vpop.f32.mrf.mxu0
  %7129 = vdwg.mxu0
  %7130 = vmatpush.bf16.msra.mxu0 0
  %7131 = vmatpush.bf16.msra.mxu0 %v7057
  %7132 = vmatpush.bf16.msra.mxu0 %v7055
  %7133 = vmatpush.bf16.msra.mxu0 %v7053
  %7134 = vmatpush.bf16.msra.mxu0 %v7051
  %7135 = vmatpush.bf16.msra.mxu0 %v7049
  %7136 = vmatpush.bf16.msra.mxu0 %v7047
  %7137 = vmatpush.bf16.msra.mxu0 %v7045
  %7138 = vmatmul.bf16.gmra.mxu0 %v7089
  %v7139 = vpop.f32.mrf.mxu0
  %v7140 = vadd.f32 %v7127, %v7139
  %v7141 = vpop.f32.mrf.mxu0
  %7142 = vdwg.mxu0
  %v7143 = vadd.f32 %v6875, %v7114
  %v7144 = vadd.f32 %v6901, %v7140
  %v7145 = vadd.f32 %v7143, %v3491
  %v7146 = vadd.f32 %v7144, %v3492
  %vm7147 = vcmp.gt.f32.partialorder %v7145, 0.0
  %vm7148 = vcmp.gt.f32.partialorder %v7146, 0.0
  %v7149 = vmul.f32 %v7145, 0.01
  %v7150 = vmul.f32 %v7146, 0.01
  %v7151 = vsel %vm7147, %v7145, %v7149
  %v7152 = vsel %vm7148, %v7146, %v7150
  %s7153 = scalar_lea.vmem [#allocation3], 80
  %7154 = vst [vmem:[%s7153] sm:$0xff] %v7151
  %7155 = vst.msk [vmem:[%s7153 + $0x8] sm:$0xff] %vm3504, %v7152
  %v7156 = vld [vmem:[%s2405] sm:$0xff]
  %v7157 = vld [vmem:[%s2405 + $0x8] sm:$0xff]
  %v7158 = vpack.c.bf16 %v7156, %v7156
  %v7159 = vpack.c.bf16 %v7157, %v7157
  %v7160 = vld [vmem:[%s4] sm:$0xff]
  %v7161 = vld [vmem:[%s4 + $0x8] sm:$0xff]
  %v7162 = vld [vmem:[%s4 + $0x10] sm:$0xff]
  %v7163 = vld [vmem:[%s4 + $0x18] sm:$0xff]
  %v7164 = vld [vmem:[%s4 + $0x20] sm:$0xff]
  %v7165 = vld [vmem:[%s4 + $0x28] sm:$0xff]
  %v7166 = vld [vmem:[%s4 + $0x30] sm:$0xff]
  %v7167 = vld [vmem:[%s4 + $0x38] sm:$0xff]
  %v7168 = vld [vmem:[%s4 + $0x40] sm:$0xff]
  %v7169 = vld [vmem:[%s4 + $0x48] sm:$0xff]
  %v7170 = vld [vmem:[%s4 + $0x50] sm:$0xff]
  %v7171 = vld [vmem:[%s4 + $0x58] sm:$0xff]
  %v7172 = vld [vmem:[%s4 + $0x60] sm:$0xff]
  %v7173 = vld [vmem:[%s4 + $0x68] sm:$0xff]
  %v7174 = vld [vmem:[%s4 + $0x70] sm:$0xff]
  %v7175 = vld [vmem:[%s4 + $0x78] sm:$0xff]
  %v7176 = vld [vmem:[%s4 + $0x80] sm:$0xff]
  %v7177 = vld [vmem:[%s4 + $0x88] sm:$0xff]
  %v7178 = vld [vmem:[%s4 + $0x90] sm:$0xff]
  %v7179 = vld [vmem:[%s4 + $0x98] sm:$0xff]
  %v7180 = vld [vmem:[%s4 + $0xa0] sm:$0xff]
  %v7181 = vld [vmem:[%s4 + $0xa8] sm:$0xff]
  %v7182 = vld [vmem:[%s4 + $0xb0] sm:$0xff]
  %v7183 = vld [vmem:[%s4 + $0xb8] sm:$0xff]
  %v7184 = vld [vmem:[%s4 + $0xc0] sm:$0xff]
  %v7185 = vld [vmem:[%s4 + $0xc8] sm:$0xff]
  %v7186 = vld [vmem:[%s4 + $0xd0] sm:$0xff]
  %v7187 = vld [vmem:[%s4 + $0xd8] sm:$0xff]
  %v7188 = vld [vmem:[%s4 + $0xe0] sm:$0xff]
  %v7189 = vld [vmem:[%s4 + $0xe8] sm:$0xff]
  %v7190 = vld [vmem:[%s2585] sm:$0xff]
  %v7191 = vld [vmem:[%s2585 + $0x8] sm:$0xff]
  %v7192 = vpack.c.bf16 %v7190, %v7190
  %v7193 = vpack.c.bf16 %v7191, %v7191
  %v7194 = vld [vmem:[%s2807] sm:$0xff]
  %v7195 = vld [vmem:[%s2807 + $0x8] sm:$0xff]
  %v7196 = vld [vmem:[%s2807 + $0x10] sm:$0xff]
  %v7197 = vld [vmem:[%s2807 + $0x18] sm:$0xff]
  %v7198 = vld [vmem:[%s2807 + $0x20] sm:$0xff]
  %v7199 = vld [vmem:[%s2807 + $0x28] sm:$0xff]
  %v7200 = vld [vmem:[%s2807 + $0x30] sm:$0xff]
  %v7201 = vld [vmem:[%s2807 + $0x38] sm:$0xff]
  %v7202 = vld [vmem:[%s2807 + $0x40] sm:$0xff]
  %v7203 = vld [vmem:[%s2807 + $0x48] sm:$0xff]
  %v7204 = vld [vmem:[%s2807 + $0x50] sm:$0xff]
  %v7205 = vld [vmem:[%s2807 + $0x58] sm:$0xff]
  %v7206 = vld [vmem:[%s2807 + $0x60] sm:$0xff]
  %v7207 = vld [vmem:[%s2807 + $0x68] sm:$0xff]
  %v7208 = vld [vmem:[%s2807 + $0x70] sm:$0xff]
  %v7209 = vld [vmem:[%s2807 + $0x78] sm:$0xff]
  %v7210 = vld [vmem:[%s2807 + $0x80] sm:$0xff]
  %v7211 = vld [vmem:[%s2807 + $0x88] sm:$0xff]
  %v7212 = vld [vmem:[%s2807 + $0x90] sm:$0xff]
  %v7213 = vld [vmem:[%s2807 + $0x98] sm:$0xff]
  %v7214 = vld [vmem:[%s2807 + $0xa0] sm:$0xff]
  %v7215 = vld [vmem:[%s2807 + $0xa8] sm:$0xff]
  %v7216 = vld [vmem:[%s2807 + $0xb0] sm:$0xff]
  %v7217 = vld [vmem:[%s2807 + $0xb8] sm:$0xff]
  %v7218 = vld [vmem:[%s2807 + $0xc0] sm:$0xff]
  %v7219 = vld [vmem:[%s2807 + $0xc8] sm:$0xff]
  %v7220 = vld [vmem:[%s2807 + $0xd0] sm:$0xff]
  %v7221 = vld [vmem:[%s2807 + $0xd8] sm:$0xff]
  %v7222 = vld [vmem:[%s2807 + $0xe0] sm:$0xff]
  %v7223 = vld [vmem:[%s2807 + $0xe8] sm:$0xff]
  %v7254 = vunpack.c.l.b16 %v7194
  %v7255 = vunpack.c.h.b16 %v7194
  %v7256 = vunpack.c.l.b16 %v7195
  %v7257 = vunpack.c.h.b16 %v7195
  %v7258 = vunpack.c.l.b16 %v7196
  %v7259 = vunpack.c.h.b16 %v7196
  %v7260 = vunpack.c.l.b16 %v7197
  %v7261 = vunpack.c.h.b16 %v7197
  %v7262 = vunpack.c.l.b16 %v7198
  %v7263 = vunpack.c.h.b16 %v7198
  %v7264 = vunpack.c.l.b16 %v7199
  %v7265 = vunpack.c.h.b16 %v7199
  %v7266 = vunpack.c.l.b16 %v7200
  %v7267 = vunpack.c.h.b16 %v7200
  %v7268 = vunpack.c.l.b16 %v7201
  %v7269 = vunpack.c.h.b16 %v7201
  %v7270 = vunpack.c.l.b16 %v7202
  %v7271 = vunpack.c.h.b16 %v7202
  %v7272 = vunpack.c.l.b16 %v7203
  %v7273 = vunpack.c.h.b16 %v7203
  %v7274 = vunpack.c.l.b16 %v7204
  %v7275 = vunpack.c.h.b16 %v7204
  %v7276 = vunpack.c.l.b16 %v7205
  %v7277 = vunpack.c.h.b16 %v7205
  %v7278 = vunpack.c.l.b16 %v7206
  %v7279 = vunpack.c.h.b16 %v7206
  %v7280 = vunpack.c.l.b16 %v7207
  %v7281 = vunpack.c.h.b16 %v7207
  %v7282 = vunpack.c.l.b16 %v7208
  %v7283 = vunpack.c.h.b16 %v7208
  %v7284 = vunpack.c.l.b16 %v7209
  %v7285 = vunpack.c.h.b16 %v7209
  %v7286 = vunpack.c.l.b16 %v7210
  %v7287 = vunpack.c.h.b16 %v7210
  %v7288 = vunpack.c.l.b16 %v7211
  %v7289 = vunpack.c.h.b16 %v7211
  %v7290 = vunpack.c.l.b16 %v7212
  %v7291 = vunpack.c.h.b16 %v7212
  %v7292 = vunpack.c.l.b16 %v7213
  %v7293 = vunpack.c.h.b16 %v7213
  %v7294 = vunpack.c.l.b16 %v7214
  %v7295 = vunpack.c.h.b16 %v7214
  %v7296 = vunpack.c.l.b16 %v7215
  %v7297 = vunpack.c.h.b16 %v7215
  %v7298 = vunpack.c.l.b16 %v7216
  %v7299 = vunpack.c.h.b16 %v7216
  %v7300 = vunpack.c.l.b16 %v7217
  %v7301 = vunpack.c.h.b16 %v7217
  %v7302 = vunpack.c.l.b16 %v7218
  %v7303 = vunpack.c.h.b16 %v7218
  %v7304 = vunpack.c.l.b16 %v7219
  %v7305 = vunpack.c.h.b16 %v7219
  %v7306 = vunpack.c.l.b16 %v7220
  %v7307 = vunpack.c.h.b16 %v7220
  %v7308 = vunpack.c.l.b16 %v7221
  %v7309 = vunpack.c.h.b16 %v7221
  %v7310 = vunpack.c.l.b16 %v7222
  %v7311 = vunpack.c.h.b16 %v7222
  %v7312 = vunpack.c.l.b16 %v7223
  %v7313 = vunpack.c.h.b16 %v7223
  %v7314 = vpack.c.b16 %v7256, %v7254
  %v7315 = vpack.c.b16 %v7257, %v7255
  %v7316 = vpack.c.b16 %v7260, %v7258
  %v7317 = vpack.c.b16 %v7261, %v7259
  %v7318 = vpack.c.b16 %v7264, %v7262
  %v7319 = vpack.c.b16 %v7265, %v7263
  %v7320 = vpack.c.b16 %v7268, %v7266
  %v7321 = vpack.c.b16 %v7269, %v7267
  %v7322 = vpack.c.b16 %v7272, %v7270
  %v7323 = vpack.c.b16 %v7273, %v7271
  %v7324 = vpack.c.b16 %v7276, %v7274
  %v7325 = vpack.c.b16 %v7277, %v7275
  %v7326 = vpack.c.b16 %v7280, %v7278
  %v7327 = vpack.c.b16 %v7281, %v7279
  %v7328 = vpack.c.b16 %v7284, %v7282
  %v7329 = vpack.c.b16 %v7285, %v7283
  %v7330 = vpack.c.b16 %v7288, %v7286
  %v7331 = vpack.c.b16 %v7289, %v7287
  %v7332 = vpack.c.b16 %v7292, %v7290
  %v7333 = vpack.c.b16 %v7293, %v7291
  %v7334 = vpack.c.b16 %v7296, %v7294
  %v7335 = vpack.c.b16 %v7297, %v7295
  %v7336 = vpack.c.b16 %v7300, %v7298
  %v7337 = vpack.c.b16 %v7301, %v7299
  %v7338 = vpack.c.b16 %v7304, %v7302
  %v7339 = vpack.c.b16 %v7305, %v7303
  %v7340 = vpack.c.b16 %v7308, %v7306
  %v7341 = vpack.c.b16 %v7309, %v7307
  %v7342 = vpack.c.b16 %v7312, %v7310
  %v7343 = vpack.c.b16 %v7313, %v7311
  %v7375 = vsel %vm246, %v7193, 0
  %7377 = vmatpush.bf16.msra.mxu0 %v7328
  %7378 = vmatpush.bf16.msra.mxu0 %v7326
  %7379 = vmatpush.bf16.msra.mxu0 %v7324
  %7380 = vmatpush.bf16.msra.mxu0 %v7322
  %7381 = vmatpush.bf16.msra.mxu0 %v7320
  %7382 = vmatpush.bf16.msra.mxu0 %v7318
  %7383 = vmatpush.bf16.msra.mxu0 %v7316
  %7384 = vmatpush.bf16.msra.mxu0 %v7314
  %7385 = vmatmul.bf16.gmra.mxu0 %v7192
  %v7386 = vpop.f32.mrf.mxu0
  %v7387 = vadd.f32 0.0, %v7386
  %v7388 = vpop.f32.mrf.mxu0
  %7389 = vdwg.mxu0
  %7390 = vmatpush.bf16.msra.mxu0 0
  %7391 = vmatpush.bf16.msra.mxu0 %v7342
  %7392 = vmatpush.bf16.msra.mxu0 %v7340
  %7393 = vmatpush.bf16.msra.mxu0 %v7338
  %7394 = vmatpush.bf16.msra.mxu0 %v7336
  %7395 = vmatpush.bf16.msra.mxu0 %v7334
  %7396 = vmatpush.bf16.msra.mxu0 %v7332
  %7397 = vmatpush.bf16.msra.mxu0 %v7330
  %7398 = vmatmul.bf16.gmra.mxu0 %v7375
  %v7399 = vpop.f32.mrf.mxu0
  %v7400 = vadd.f32 %v7387, %v7399
  %v7401 = vpop.f32.mrf.mxu0
  %7402 = vdwg.mxu0
  %7403 = vmatpush.bf16.msra.mxu0 %v7329
  %7404 = vmatpush.bf16.msra.mxu0 %v7327
  %7405 = vmatpush.bf16.msra.mxu0 %v7325
  %7406 = vmatpush.bf16.msra.mxu0 %v7323
  %7407 = vmatpush.bf16.msra.mxu0 %v7321
  %7408 = vmatpush.bf16.msra.mxu0 %v7319
  %7409 = vmatpush.bf16.msra.mxu0 %v7317
  %7410 = vmatpush.bf16.msra.mxu0 %v7315
  %7411 = vmatmul.bf16.gmra.mxu0 %v7192
  %v7412 = vpop.f32.mrf.mxu0
  %v7413 = vadd.f32 0.0, %v7412
  %v7414 = vpop.f32.mrf.mxu0
  %7415 = vdwg.mxu0
  %7416 = vmatpush.bf16.msra.mxu0 0
  %7417 = vmatpush.bf16.msra.mxu0 %v7343
  %7418 = vmatpush.bf16.msra.mxu0 %v7341
  %7419 = vmatpush.bf16.msra.mxu0 %v7339
  %7420 = vmatpush.bf16.msra.mxu0 %v7337
  %7421 = vmatpush.bf16.msra.mxu0 %v7335
  %7422 = vmatpush.bf16.msra.mxu0 %v7333
  %7423 = vmatpush.bf16.msra.mxu0 %v7331
  %7424 = vmatmul.bf16.gmra.mxu0 %v7375
  %v7425 = vpop.f32.mrf.mxu0
  %v7426 = vadd.f32 %v7413, %v7425
  %v7427 = vpop.f32.mrf.mxu0
  %7428 = vdwg.mxu0
  %v7459 = vunpack.c.l.b16 %v7160
  %v7460 = vunpack.c.h.b16 %v7160
  %v7461 = vunpack.c.l.b16 %v7161
  %v7462 = vunpack.c.h.b16 %v7161
  %v7463 = vunpack.c.l.b16 %v7162
  %v7464 = vunpack.c.h.b16 %v7162
  %v7465 = vunpack.c.l.b16 %v7163
  %v7466 = vunpack.c.h.b16 %v7163
  %v7467 = vunpack.c.l.b16 %v7164
  %v7468 = vunpack.c.h.b16 %v7164
  %v7469 = vunpack.c.l.b16 %v7165
  %v7470 = vunpack.c.h.b16 %v7165
  %v7471 = vunpack.c.l.b16 %v7166
  %v7472 = vunpack.c.h.b16 %v7166
  %v7473 = vunpack.c.l.b16 %v7167
  %v7474 = vunpack.c.h.b16 %v7167
  %v7475 = vunpack.c.l.b16 %v7168
  %v7476 = vunpack.c.h.b16 %v7168
  %v7477 = vunpack.c.l.b16 %v7169
  %v7478 = vunpack.c.h.b16 %v7169
  %v7479 = vunpack.c.l.b16 %v7170
  %v7480 = vunpack.c.h.b16 %v7170
  %v7481 = vunpack.c.l.b16 %v7171
  %v7482 = vunpack.c.h.b16 %v7171
  %v7483 = vunpack.c.l.b16 %v7172
  %v7484 = vunpack.c.h.b16 %v7172
  %v7485 = vunpack.c.l.b16 %v7173
  %v7486 = vunpack.c.h.b16 %v7173
  %v7487 = vunpack.c.l.b16 %v7174
  %v7488 = vunpack.c.h.b16 %v7174
  %v7489 = vunpack.c.l.b16 %v7175
  %v7490 = vunpack.c.h.b16 %v7175
  %v7491 = vunpack.c.l.b16 %v7176
  %v7492 = vunpack.c.h.b16 %v7176
  %v7493 = vunpack.c.l.b16 %v7177
  %v7494 = vunpack.c.h.b16 %v7177
  %v7495 = vunpack.c.l.b16 %v7178
  %v7496 = vunpack.c.h.b16 %v7178
  %v7497 = vunpack.c.l.b16 %v7179
  %v7498 = vunpack.c.h.b16 %v7179
  %v7499 = vunpack.c.l.b16 %v7180
  %v7500 = vunpack.c.h.b16 %v7180
  %v7501 = vunpack.c.l.b16 %v7181
  %v7502 = vunpack.c.h.b16 %v7181
  %v7503 = vunpack.c.l.b16 %v7182
  %v7504 = vunpack.c.h.b16 %v7182
  %v7505 = vunpack.c.l.b16 %v7183
  %v7506 = vunpack.c.h.b16 %v7183
  %v7507 = vunpack.c.l.b16 %v7184
  %v7508 = vunpack.c.h.b16 %v7184
  %v7509 = vunpack.c.l.b16 %v7185
  %v7510 = vunpack.c.h.b16 %v7185
  %v7511 = vunpack.c.l.b16 %v7186
  %v7512 = vunpack.c.h.b16 %v7186
  %v7513 = vunpack.c.l.b16 %v7187
  %v7514 = vunpack.c.h.b16 %v7187
  %v7515 = vunpack.c.l.b16 %v7188
  %v7516 = vunpack.c.h.b16 %v7188
  %v7517 = vunpack.c.l.b16 %v7189
  %v7518 = vunpack.c.h.b16 %v7189
  %v7519 = vpack.c.b16 %v7461, %v7459
  %v7520 = vpack.c.b16 %v7462, %v7460
  %v7521 = vpack.c.b16 %v7465, %v7463
  %v7522 = vpack.c.b16 %v7466, %v7464
  %v7523 = vpack.c.b16 %v7469, %v7467
  %v7524 = vpack.c.b16 %v7470, %v7468
  %v7525 = vpack.c.b16 %v7473, %v7471
  %v7526 = vpack.c.b16 %v7474, %v7472
  %v7527 = vpack.c.b16 %v7477, %v7475
  %v7528 = vpack.c.b16 %v7478, %v7476
  %v7529 = vpack.c.b16 %v7481, %v7479
  %v7530 = vpack.c.b16 %v7482, %v7480
  %v7531 = vpack.c.b16 %v7485, %v7483
  %v7532 = vpack.c.b16 %v7486, %v7484
  %v7533 = vpack.c.b16 %v7489, %v7487
  %v7534 = vpack.c.b16 %v7490, %v7488
  %v7535 = vpack.c.b16 %v7493, %v7491
  %v7536 = vpack.c.b16 %v7494, %v7492
  %v7537 = vpack.c.b16 %v7497, %v7495
  %v7538 = vpack.c.b16 %v7498, %v7496
  %v7539 = vpack.c.b16 %v7501, %v7499
  %v7540 = vpack.c.b16 %v7502, %v7500
  %v7541 = vpack.c.b16 %v7505, %v7503
  %v7542 = vpack.c.b16 %v7506, %v7504
  %v7543 = vpack.c.b16 %v7509, %v7507
  %v7544 = vpack.c.b16 %v7510, %v7508
  %v7545 = vpack.c.b16 %v7513, %v7511
  %v7546 = vpack.c.b16 %v7514, %v7512
  %v7547 = vpack.c.b16 %v7517, %v7515
  %v7548 = vpack.c.b16 %v7518, %v7516
  %v7580 = vsel %vm246, %v7159, 0
  %7582 = vmatpush.bf16.msra.mxu0 %v7533
  %7583 = vmatpush.bf16.msra.mxu0 %v7531
  %7584 = vmatpush.bf16.msra.mxu0 %v7529
  %7585 = vmatpush.bf16.msra.mxu0 %v7527
  %7586 = vmatpush.bf16.msra.mxu0 %v7525
  %7587 = vmatpush.bf16.msra.mxu0 %v7523
  %7588 = vmatpush.bf16.msra.mxu0 %v7521
  %7589 = vmatpush.bf16.msra.mxu0 %v7519
  %7590 = vmatmul.bf16.gmra.mxu0 %v7158
  %v7591 = vpop.f32.mrf.mxu0
  %v7592 = vadd.f32 %v7400, %v7591
  %v7593 = vpop.f32.mrf.mxu0
  %7594 = vdwg.mxu0
  %7595 = vmatpush.bf16.msra.mxu0 0
  %7596 = vmatpush.bf16.msra.mxu0 %v7547
  %7597 = vmatpush.bf16.msra.mxu0 %v7545
  %7598 = vmatpush.bf16.msra.mxu0 %v7543
  %7599 = vmatpush.bf16.msra.mxu0 %v7541
  %7600 = vmatpush.bf16.msra.mxu0 %v7539
  %7601 = vmatpush.bf16.msra.mxu0 %v7537
  %7602 = vmatpush.bf16.msra.mxu0 %v7535
  %7603 = vmatmul.bf16.gmra.mxu0 %v7580
  %v7604 = vpop.f32.mrf.mxu0
  %v7605 = vadd.f32 %v7592, %v7604
  %v7606 = vpop.f32.mrf.mxu0
  %7607 = vdwg.mxu0
  %7608 = vmatpush.bf16.msra.mxu0 %v7534
  %7609 = vmatpush.bf16.msra.mxu0 %v7532
  %7610 = vmatpush.bf16.msra.mxu0 %v7530
  %7611 = vmatpush.bf16.msra.mxu0 %v7528
  %7612 = vmatpush.bf16.msra.mxu0 %v7526
  %7613 = vmatpush.bf16.msra.mxu0 %v7524
  %7614 = vmatpush.bf16.msra.mxu0 %v7522
  %7615 = vmatpush.bf16.msra.mxu0 %v7520
  %7616 = vmatmul.bf16.gmra.mxu0 %v7158
  %v7617 = vpop.f32.mrf.mxu0
  %v7618 = vadd.f32 %v7426, %v7617
  %v7619 = vpop.f32.mrf.mxu0
  %7620 = vdwg.mxu0
  %7621 = vmatpush.bf16.msra.mxu0 0
  %7622 = vmatpush.bf16.msra.mxu0 %v7548
  %7623 = vmatpush.bf16.msra.mxu0 %v7546
  %7624 = vmatpush.bf16.msra.mxu0 %v7544
  %7625 = vmatpush.bf16.msra.mxu0 %v7542
  %7626 = vmatpush.bf16.msra.mxu0 %v7540
  %7627 = vmatpush.bf16.msra.mxu0 %v7538
  %7628 = vmatpush.bf16.msra.mxu0 %v7536
  %7629 = vmatmul.bf16.gmra.mxu0 %v7580
  %v7630 = vpop.f32.mrf.mxu0
  %v7631 = vadd.f32 %v7618, %v7630
  %v7632 = vpop.f32.mrf.mxu0
  %7633 = vdwg.mxu0
  %v7634 = vld [vmem:[%s2765] sm:$0xff]
  %v7635 = vld [vmem:[%s2765 + $0x8] sm:$0xff]
  %v7636 = vpack.c.bf16 %v7634, %v7634
  %v7637 = vpack.c.bf16 %v7635, %v7635
  %v7638 = vld [vmem:[%s3252] sm:$0xff]
  %v7639 = vld [vmem:[%s3252 + $0x8] sm:$0xff]
  %v7640 = vld [vmem:[%s3252 + $0x10] sm:$0xff]
  %v7641 = vld [vmem:[%s3252 + $0x18] sm:$0xff]
  %v7642 = vld [vmem:[%s3252 + $0x20] sm:$0xff]
  %v7643 = vld [vmem:[%s3252 + $0x28] sm:$0xff]
  %v7644 = vld [vmem:[%s3252 + $0x30] sm:$0xff]
  %v7645 = vld [vmem:[%s3252 + $0x38] sm:$0xff]
  %v7646 = vld [vmem:[%s3252 + $0x40] sm:$0xff]
  %v7647 = vld [vmem:[%s3252 + $0x48] sm:$0xff]
  %v7648 = vld [vmem:[%s3252 + $0x50] sm:$0xff]
  %v7649 = vld [vmem:[%s3252 + $0x58] sm:$0xff]
  %v7650 = vld [vmem:[%s3252 + $0x60] sm:$0xff]
  %v7651 = vld [vmem:[%s3252 + $0x68] sm:$0xff]
  %v7652 = vld [vmem:[%s3252 + $0x70] sm:$0xff]
  %v7653 = vld [vmem:[%s3252 + $0x78] sm:$0xff]
  %v7654 = vld [vmem:[%s3252 + $0x80] sm:$0xff]
  %v7655 = vld [vmem:[%s3252 + $0x88] sm:$0xff]
  %v7656 = vld [vmem:[%s3252 + $0x90] sm:$0xff]
  %v7657 = vld [vmem:[%s3252 + $0x98] sm:$0xff]
  %v7658 = vld [vmem:[%s3252 + $0xa0] sm:$0xff]
  %v7659 = vld [vmem:[%s3252 + $0xa8] sm:$0xff]
  %v7660 = vld [vmem:[%s3252 + $0xb0] sm:$0xff]
  %v7661 = vld [vmem:[%s3252 + $0xb8] sm:$0xff]
  %v7662 = vld [vmem:[%s3252 + $0xc0] sm:$0xff]
  %v7663 = vld [vmem:[%s3252 + $0xc8] sm:$0xff]
  %v7664 = vld [vmem:[%s3252 + $0xd0] sm:$0xff]
  %v7665 = vld [vmem:[%s3252 + $0xd8] sm:$0xff]
  %v7666 = vld [vmem:[%s3252 + $0xe0] sm:$0xff]
  %v7667 = vld [vmem:[%s3252 + $0xe8] sm:$0xff]
  %v7698 = vunpack.c.l.b16 %v7638
  %v7699 = vunpack.c.h.b16 %v7638
  %v7700 = vunpack.c.l.b16 %v7639
  %v7701 = vunpack.c.h.b16 %v7639
  %v7702 = vunpack.c.l.b16 %v7640
  %v7703 = vunpack.c.h.b16 %v7640
  %v7704 = vunpack.c.l.b16 %v7641
  %v7705 = vunpack.c.h.b16 %v7641
  %v7706 = vunpack.c.l.b16 %v7642
  %v7707 = vunpack.c.h.b16 %v7642
  %v7708 = vunpack.c.l.b16 %v7643
  %v7709 = vunpack.c.h.b16 %v7643
  %v7710 = vunpack.c.l.b16 %v7644
  %v7711 = vunpack.c.h.b16 %v7644
  %v7712 = vunpack.c.l.b16 %v7645
  %v7713 = vunpack.c.h.b16 %v7645
  %v7714 = vunpack.c.l.b16 %v7646
  %v7715 = vunpack.c.h.b16 %v7646
  %v7716 = vunpack.c.l.b16 %v7647
  %v7717 = vunpack.c.h.b16 %v7647
  %v7718 = vunpack.c.l.b16 %v7648
  %v7719 = vunpack.c.h.b16 %v7648
  %v7720 = vunpack.c.l.b16 %v7649
  %v7721 = vunpack.c.h.b16 %v7649
  %v7722 = vunpack.c.l.b16 %v7650
  %v7723 = vunpack.c.h.b16 %v7650
  %v7724 = vunpack.c.l.b16 %v7651
  %v7725 = vunpack.c.h.b16 %v7651
  %v7726 = vunpack.c.l.b16 %v7652
  %v7727 = vunpack.c.h.b16 %v7652
  %v7728 = vunpack.c.l.b16 %v7653
  %v7729 = vunpack.c.h.b16 %v7653
  %v7730 = vunpack.c.l.b16 %v7654
  %v7731 = vunpack.c.h.b16 %v7654
  %v7732 = vunpack.c.l.b16 %v7655
  %v7733 = vunpack.c.h.b16 %v7655
  %v7734 = vunpack.c.l.b16 %v7656
  %v7735 = vunpack.c.h.b16 %v7656
  %v7736 = vunpack.c.l.b16 %v7657
  %v7737 = vunpack.c.h.b16 %v7657
  %v7738 = vunpack.c.l.b16 %v7658
  %v7739 = vunpack.c.h.b16 %v7658
  %v7740 = vunpack.c.l.b16 %v7659
  %v7741 = vunpack.c.h.b16 %v7659
  %v7742 = vunpack.c.l.b16 %v7660
  %v7743 = vunpack.c.h.b16 %v7660
  %v7744 = vunpack.c.l.b16 %v7661
  %v7745 = vunpack.c.h.b16 %v7661
  %v7746 = vunpack.c.l.b16 %v7662
  %v7747 = vunpack.c.h.b16 %v7662
  %v7748 = vunpack.c.l.b16 %v7663
  %v7749 = vunpack.c.h.b16 %v7663
  %v7750 = vunpack.c.l.b16 %v7664
  %v7751 = vunpack.c.h.b16 %v7664
  %v7752 = vunpack.c.l.b16 %v7665
  %v7753 = vunpack.c.h.b16 %v7665
  %v7754 = vunpack.c.l.b16 %v7666
  %v7755 = vunpack.c.h.b16 %v7666
  %v7756 = vunpack.c.l.b16 %v7667
  %v7757 = vunpack.c.h.b16 %v7667
  %v7758 = vpack.c.b16 %v7700, %v7698
  %v7759 = vpack.c.b16 %v7701, %v7699
  %v7760 = vpack.c.b16 %v7704, %v7702
  %v7761 = vpack.c.b16 %v7705, %v7703
  %v7762 = vpack.c.b16 %v7708, %v7706
  %v7763 = vpack.c.b16 %v7709, %v7707
  %v7764 = vpack.c.b16 %v7712, %v7710
  %v7765 = vpack.c.b16 %v7713, %v7711
  %v7766 = vpack.c.b16 %v7716, %v7714
  %v7767 = vpack.c.b16 %v7717, %v7715
  %v7768 = vpack.c.b16 %v7720, %v7718
  %v7769 = vpack.c.b16 %v7721, %v7719
  %v7770 = vpack.c.b16 %v7724, %v7722
  %v7771 = vpack.c.b16 %v7725, %v7723
  %v7772 = vpack.c.b16 %v7728, %v7726
  %v7773 = vpack.c.b16 %v7729, %v7727
  %v7774 = vpack.c.b16 %v7732, %v7730
  %v7775 = vpack.c.b16 %v7733, %v7731
  %v7776 = vpack.c.b16 %v7736, %v7734
  %v7777 = vpack.c.b16 %v7737, %v7735
  %v7778 = vpack.c.b16 %v7740, %v7738
  %v7779 = vpack.c.b16 %v7741, %v7739
  %v7780 = vpack.c.b16 %v7744, %v7742
  %v7781 = vpack.c.b16 %v7745, %v7743
  %v7782 = vpack.c.b16 %v7748, %v7746
  %v7783 = vpack.c.b16 %v7749, %v7747
  %v7784 = vpack.c.b16 %v7752, %v7750
  %v7785 = vpack.c.b16 %v7753, %v7751
  %v7786 = vpack.c.b16 %v7756, %v7754
  %v7787 = vpack.c.b16 %v7757, %v7755
  %v7819 = vsel %vm246, %v7637, 0
  %7821 = vmatpush.bf16.msra.mxu0 %v7772
  %7822 = vmatpush.bf16.msra.mxu0 %v7770
  %7823 = vmatpush.bf16.msra.mxu0 %v7768
  %7824 = vmatpush.bf16.msra.mxu0 %v7766
  %7825 = vmatpush.bf16.msra.mxu0 %v7764
  %7826 = vmatpush.bf16.msra.mxu0 %v7762
  %7827 = vmatpush.bf16.msra.mxu0 %v7760
  %7828 = vmatpush.bf16.msra.mxu0 %v7758
  %7829 = vmatmul.bf16.gmra.mxu0 %v7636
  %v7830 = vpop.f32.mrf.mxu0
  %v7831 = vadd.f32 0.0, %v7830
  %v7832 = vpop.f32.mrf.mxu0
  %7833 = vdwg.mxu0
  %7834 = vmatpush.bf16.msra.mxu0 0
  %7835 = vmatpush.bf16.msra.mxu0 %v7786
  %7836 = vmatpush.bf16.msra.mxu0 %v7784
  %7837 = vmatpush.bf16.msra.mxu0 %v7782
  %7838 = vmatpush.bf16.msra.mxu0 %v7780
  %7839 = vmatpush.bf16.msra.mxu0 %v7778
  %7840 = vmatpush.bf16.msra.mxu0 %v7776
  %7841 = vmatpush.bf16.msra.mxu0 %v7774
  %7842 = vmatmul.bf16.gmra.mxu0 %v7819
  %v7843 = vpop.f32.mrf.mxu0
  %v7844 = vadd.f32 %v7831, %v7843
  %v7845 = vpop.f32.mrf.mxu0
  %7846 = vdwg.mxu0
  %7847 = vmatpush.bf16.msra.mxu0 %v7773
  %7848 = vmatpush.bf16.msra.mxu0 %v7771
  %7849 = vmatpush.bf16.msra.mxu0 %v7769
  %7850 = vmatpush.bf16.msra.mxu0 %v7767
  %7851 = vmatpush.bf16.msra.mxu0 %v7765
  %7852 = vmatpush.bf16.msra.mxu0 %v7763
  %7853 = vmatpush.bf16.msra.mxu0 %v7761
  %7854 = vmatpush.bf16.msra.mxu0 %v7759
  %7855 = vmatmul.bf16.gmra.mxu0 %v7636
  %v7856 = vpop.f32.mrf.mxu0
  %v7857 = vadd.f32 0.0, %v7856
  %v7858 = vpop.f32.mrf.mxu0
  %7859 = vdwg.mxu0
  %7860 = vmatpush.bf16.msra.mxu0 0
  %7861 = vmatpush.bf16.msra.mxu0 %v7787
  %7862 = vmatpush.bf16.msra.mxu0 %v7785
  %7863 = vmatpush.bf16.msra.mxu0 %v7783
  %7864 = vmatpush.bf16.msra.mxu0 %v7781
  %7865 = vmatpush.bf16.msra.mxu0 %v7779
  %7866 = vmatpush.bf16.msra.mxu0 %v7777
  %7867 = vmatpush.bf16.msra.mxu0 %v7775
  %7868 = vmatmul.bf16.gmra.mxu0 %v7819
  %v7869 = vpop.f32.mrf.mxu0
  %v7870 = vadd.f32 %v7857, %v7869
  %v7871 = vpop.f32.mrf.mxu0
  %7872 = vdwg.mxu0
  %v7873 = vadd.f32 %v7605, %v7844
  %v7874 = vadd.f32 %v7631, %v7870
  %v7875 = vadd.f32 %v7873, %v3491
  %v7876 = vadd.f32 %v7874, %v3492
  %vm7877 = vcmp.gt.f32.partialorder %v7875, 0.0
  %vm7878 = vcmp.gt.f32.partialorder %v7876, 0.0
  %v7879 = vmul.f32 %v7875, 0.01
  %v7880 = vmul.f32 %v7876, 0.01
  %v7881 = vsel %vm7877, %v7875, %v7879
  %v7882 = vsel %vm7878, %v7876, %v7880
  %s7883 = scalar_lea.vmem [#allocation3], 96
  %7884 = vst [vmem:[%s7883] sm:$0xff] %v7881
  %7885 = vst.msk [vmem:[%s7883 + $0x8] sm:$0xff] %vm3504, %v7882
  %v7886 = vld [vmem:[%s7] sm:$0x3]
  %v7887 = vld [vmem:[#allocation3] sm:$0xff]
  %v7888 = vld [vmem:[#allocation3 + $0x8] sm:$0xff]
  %v7889 = vpack.c.bf16 %v7887, %v7887
  %v7890 = vpack.c.bf16 %v7888, %v7888
  %v7891 = vld [vmem:[%s6] sm:$0xff]
  %v7892 = vld [vmem:[%s6 + $0x8] sm:$0xff]
  %v7893 = vld [vmem:[%s6 + $0x10] sm:$0xff]
  %v7894 = vld [vmem:[%s6 + $0x18] sm:$0xff]
  %v7895 = vld [vmem:[%s6 + $0x20] sm:$0xff]
  %v7896 = vld [vmem:[%s6 + $0x28] sm:$0xff]
  %v7897 = vld [vmem:[%s6 + $0x30] sm:$0xff]
  %v7898 = vld [vmem:[%s6 + $0x38] sm:$0xff]
  %v7899 = vld [vmem:[%s6 + $0x40] sm:$0xff]
  %v7900 = vld [vmem:[%s6 + $0x48] sm:$0xff]
  %v7901 = vld [vmem:[%s6 + $0x50] sm:$0xff]
  %v7902 = vld [vmem:[%s6 + $0x58] sm:$0xff]
  %v7903 = vld [vmem:[%s6 + $0x60] sm:$0xff]
  %v7904 = vld [vmem:[%s6 + $0x68] sm:$0xff]
  %v7905 = vld [vmem:[%s6 + $0x70] sm:$0xff]
  %v7906 = vld [vmem:[%s6 + $0x78] sm:$0xff]
  %v7907 = vld [vmem:[%s6 + $0x80] sm:$0xff]
  %v7908 = vld [vmem:[%s6 + $0x88] sm:$0xff]
  %v7909 = vld [vmem:[%s6 + $0x90] sm:$0xff]
  %v7910 = vld [vmem:[%s6 + $0x98] sm:$0xff]
  %v7911 = vld [vmem:[%s6 + $0xa0] sm:$0xff]
  %v7912 = vld [vmem:[%s6 + $0xa8] sm:$0xff]
  %v7913 = vld [vmem:[%s6 + $0xb0] sm:$0xff]
  %v7914 = vld [vmem:[%s6 + $0xb8] sm:$0xff]
  %v7915 = vld [vmem:[%s6 + $0xc0] sm:$0xff]
  %v7916 = vld [vmem:[%s6 + $0xc8] sm:$0xff]
  %v7917 = vld [vmem:[%s6 + $0xd0] sm:$0xff]
  %v7918 = vld [vmem:[%s6 + $0xd8] sm:$0xff]
  %v7919 = vld [vmem:[%s4233] sm:$0xff]
  %v7920 = vld [vmem:[%s4233 + $0x8] sm:$0xff]
  %v7921 = vpack.c.bf16 %v7919, %v7919
  %v7922 = vpack.c.bf16 %v7920, %v7920
  %s7923 = scalar_lea.vmem %s6, 224
  %v7924 = vld [vmem:[%s7923] sm:$0xff]
  %v7925 = vld [vmem:[%s7923 + $0x8] sm:$0xff]
  %v7926 = vld [vmem:[%s7923 + $0x10] sm:$0xff]
  %v7927 = vld [vmem:[%s7923 + $0x18] sm:$0xff]
  %v7928 = vld [vmem:[%s7923 + $0x20] sm:$0xff]
  %v7929 = vld [vmem:[%s7923 + $0x28] sm:$0xff]
  %v7930 = vld [vmem:[%s7923 + $0x30] sm:$0xff]
  %v7931 = vld [vmem:[%s7923 + $0x38] sm:$0xff]
  %v7932 = vld [vmem:[%s7923 + $0x40] sm:$0xff]
  %v7933 = vld [vmem:[%s7923 + $0x48] sm:$0xff]
  %v7934 = vld [vmem:[%s7923 + $0x50] sm:$0xff]
  %v7935 = vld [vmem:[%s7923 + $0x58] sm:$0xff]
  %v7936 = vld [vmem:[%s7923 + $0x60] sm:$0xff]
  %v7937 = vld [vmem:[%s7923 + $0x68] sm:$0xff]
  %v7938 = vld [vmem:[%s7923 + $0x70] sm:$0xff]
  %v7939 = vld [vmem:[%s7923 + $0x78] sm:$0xff]
  %v7940 = vld [vmem:[%s7923 + $0x80] sm:$0xff]
  %v7941 = vld [vmem:[%s7923 + $0x88] sm:$0xff]
  %v7942 = vld [vmem:[%s7923 + $0x90] sm:$0xff]
  %v7943 = vld [vmem:[%s7923 + $0x98] sm:$0xff]
  %v7944 = vld [vmem:[%s7923 + $0xa0] sm:$0xff]
  %v7945 = vld [vmem:[%s7923 + $0xa8] sm:$0xff]
  %v7946 = vld [vmem:[%s7923 + $0xb0] sm:$0xff]
  %v7947 = vld [vmem:[%s7923 + $0xb8] sm:$0xff]
  %v7948 = vld [vmem:[%s7923 + $0xc0] sm:$0xff]
  %v7949 = vld [vmem:[%s7923 + $0xc8] sm:$0xff]
  %v7950 = vld [vmem:[%s7923 + $0xd0] sm:$0xff]
  %v7951 = vld [vmem:[%s7923 + $0xd8] sm:$0xff]
  %v7980 = vunpack.c.l.b16 %v7924
  %v7981 = vunpack.c.h.b16 %v7924
  %v7982 = vunpack.c.l.b16 %v7925
  %v7983 = vunpack.c.h.b16 %v7925
  %v7984 = vunpack.c.l.b16 %v7926
  %v7985 = vunpack.c.h.b16 %v7926
  %v7986 = vunpack.c.l.b16 %v7927
  %v7987 = vunpack.c.h.b16 %v7927
  %v7988 = vunpack.c.l.b16 %v7928
  %v7989 = vunpack.c.h.b16 %v7928
  %v7990 = vunpack.c.l.b16 %v7929
  %v7991 = vunpack.c.h.b16 %v7929
  %v7992 = vunpack.c.l.b16 %v7930
  %v7993 = vunpack.c.h.b16 %v7930
  %v7994 = vunpack.c.l.b16 %v7931
  %v7995 = vunpack.c.h.b16 %v7931
  %v7996 = vunpack.c.l.b16 %v7932
  %v7997 = vunpack.c.h.b16 %v7932
  %v7998 = vunpack.c.l.b16 %v7933
  %v7999 = vunpack.c.h.b16 %v7933
  %v8000 = vunpack.c.l.b16 %v7934
  %v8001 = vunpack.c.h.b16 %v7934
  %v8002 = vunpack.c.l.b16 %v7935
  %v8003 = vunpack.c.h.b16 %v7935
  %v8004 = vunpack.c.l.b16 %v7936
  %v8005 = vunpack.c.h.b16 %v7936
  %v8006 = vunpack.c.l.b16 %v7937
  %v8007 = vunpack.c.h.b16 %v7937
  %v8008 = vunpack.c.l.b16 %v7938
  %v8009 = vunpack.c.h.b16 %v7938
  %v8010 = vunpack.c.l.b16 %v7939
  %v8011 = vunpack.c.h.b16 %v7939
  %v8012 = vunpack.c.l.b16 %v7940
  %v8013 = vunpack.c.h.b16 %v7940
  %v8014 = vunpack.c.l.b16 %v7941
  %v8015 = vunpack.c.h.b16 %v7941
  %v8016 = vunpack.c.l.b16 %v7942
  %v8017 = vunpack.c.h.b16 %v7942
  %v8018 = vunpack.c.l.b16 %v7943
  %v8019 = vunpack.c.h.b16 %v7943
  %v8020 = vunpack.c.l.b16 %v7944
  %v8021 = vunpack.c.h.b16 %v7944
  %v8022 = vunpack.c.l.b16 %v7945
  %v8023 = vunpack.c.h.b16 %v7945
  %v8024 = vunpack.c.l.b16 %v7946
  %v8025 = vunpack.c.h.b16 %v7946
  %v8026 = vunpack.c.l.b16 %v7947
  %v8027 = vunpack.c.h.b16 %v7947
  %v8028 = vunpack.c.l.b16 %v7948
  %v8029 = vunpack.c.h.b16 %v7948
  %v8030 = vunpack.c.l.b16 %v7949
  %v8031 = vunpack.c.h.b16 %v7949
  %v8032 = vunpack.c.l.b16 %v7950
  %v8033 = vunpack.c.h.b16 %v7950
  %v8034 = vunpack.c.l.b16 %v7951
  %v8035 = vunpack.c.h.b16 %v7951
  %v8036 = vpack.c.b16 %v7982, %v7980
  %v8037 = vpack.c.b16 %v7983, %v7981
  %v8038 = vpack.c.b16 %v7986, %v7984
  %v8039 = vpack.c.b16 %v7987, %v7985
  %v8040 = vpack.c.b16 %v7990, %v7988
  %v8041 = vpack.c.b16 %v7991, %v7989
  %v8042 = vpack.c.b16 %v7994, %v7992
  %v8043 = vpack.c.b16 %v7995, %v7993
  %v8044 = vpack.c.b16 %v7998, %v7996
  %v8045 = vpack.c.b16 %v7999, %v7997
  %v8046 = vpack.c.b16 %v8002, %v8000
  %v8047 = vpack.c.b16 %v8003, %v8001
  %v8048 = vpack.c.b16 %v8006, %v8004
  %v8049 = vpack.c.b16 %v8007, %v8005
  %v8050 = vpack.c.b16 %v8010, %v8008
  %v8051 = vpack.c.b16 %v8011, %v8009
  %v8052 = vpack.c.b16 %v8014, %v8012
  %v8053 = vpack.c.b16 %v8015, %v8013
  %v8054 = vpack.c.b16 %v8018, %v8016
  %v8055 = vpack.c.b16 %v8019, %v8017
  %v8056 = vpack.c.b16 %v8022, %v8020
  %v8057 = vpack.c.b16 %v8023, %v8021
  %v8058 = vpack.c.b16 %v8026, %v8024
  %v8059 = vpack.c.b16 %v8027, %v8025
  %v8060 = vpack.c.b16 %v8030, %v8028
  %v8061 = vpack.c.b16 %v8031, %v8029
  %v8062 = vpack.c.b16 %v8034, %v8032
  %v8063 = vpack.c.b16 %v8035, %v8033
  %v8093 = vsel %vm3504, %v7922, 0
  %8095 = vmatpush.bf16.msra.mxu0 %v8050
  %8096 = vmatpush.bf16.msra.mxu0 %v8048
  %8097 = vmatpush.bf16.msra.mxu0 %v8046
  %8098 = vmatpush.bf16.msra.mxu0 %v8044
  %8099 = vmatpush.bf16.msra.mxu0 %v8042
  %8100 = vmatpush.bf16.msra.mxu0 %v8040
  %8101 = vmatpush.bf16.msra.mxu0 %v8038
  %8102 = vmatpush.bf16.msra.mxu0 %v8036
  %8103 = vmatmul.bf16.gmra.mxu0 %v7921
  %v8104 = vpop.f32.mrf.mxu0
  %v8105 = vadd.f32 0.0, %v8104
  %v8106 = vpop.f32.mrf.mxu0
  %8107 = vdwg.mxu0
  %8108 = vmatpush.bf16.msra.mxu0 0
  %8109 = vmatpush.bf16.msra.mxu0 0
  %8110 = vmatpush.bf16.msra.mxu0 %v8062
  %8111 = vmatpush.bf16.msra.mxu0 %v8060
  %8112 = vmatpush.bf16.msra.mxu0 %v8058
  %8113 = vmatpush.bf16.msra.mxu0 %v8056
  %8114 = vmatpush.bf16.msra.mxu0 %v8054
  %8115 = vmatpush.bf16.msra.mxu0 %v8052
  %8116 = vmatmul.bf16.gmra.mxu0 %v8093
  %v8117 = vpop.f32.mrf.mxu0
  %v8118 = vadd.f32 %v8105, %v8117
  %v8119 = vpop.f32.mrf.mxu0
  %8120 = vdwg.mxu0
  %8121 = vmatpush.bf16.msra.mxu0 %v8051
  %8122 = vmatpush.bf16.msra.mxu0 %v8049
  %8123 = vmatpush.bf16.msra.mxu0 %v8047
  %8124 = vmatpush.bf16.msra.mxu0 %v8045
  %8125 = vmatpush.bf16.msra.mxu0 %v8043
  %8126 = vmatpush.bf16.msra.mxu0 %v8041
  %8127 = vmatpush.bf16.msra.mxu0 %v8039
  %8128 = vmatpush.bf16.msra.mxu0 %v8037
  %8129 = vmatmul.bf16.gmra.mxu0 %v7921
  %v8130 = vpop.f32.mrf.mxu0
  %v8131 = vadd.f32 0.0, %v8130
  %v8132 = vpop.f32.mrf.mxu0
  %8133 = vdwg.mxu0
  %8134 = vmatpush.bf16.msra.mxu0 0
  %8135 = vmatpush.bf16.msra.mxu0 0
  %8136 = vmatpush.bf16.msra.mxu0 %v8063
  %8137 = vmatpush.bf16.msra.mxu0 %v8061
  %8138 = vmatpush.bf16.msra.mxu0 %v8059
  %8139 = vmatpush.bf16.msra.mxu0 %v8057
  %8140 = vmatpush.bf16.msra.mxu0 %v8055
  %8141 = vmatpush.bf16.msra.mxu0 %v8053
  %8142 = vmatmul.bf16.gmra.mxu0 %v8093
  %v8143 = vpop.f32.mrf.mxu0
  %v8144 = vadd.f32 %v8131, %v8143
  %v8145 = vpop.f32.mrf.mxu0
  %8146 = vdwg.mxu0
  %v8175 = vunpack.c.l.b16 %v7891
  %v8176 = vunpack.c.h.b16 %v7891
  %v8177 = vunpack.c.l.b16 %v7892
  %v8178 = vunpack.c.h.b16 %v7892
  %v8179 = vunpack.c.l.b16 %v7893
  %v8180 = vunpack.c.h.b16 %v7893
  %v8181 = vunpack.c.l.b16 %v7894
  %v8182 = vunpack.c.h.b16 %v7894
  %v8183 = vunpack.c.l.b16 %v7895
  %v8184 = vunpack.c.h.b16 %v7895
  %v8185 = vunpack.c.l.b16 %v7896
  %v8186 = vunpack.c.h.b16 %v7896
  %v8187 = vunpack.c.l.b16 %v7897
  %v8188 = vunpack.c.h.b16 %v7897
  %v8189 = vunpack.c.l.b16 %v7898
  %v8190 = vunpack.c.h.b16 %v7898
  %v8191 = vunpack.c.l.b16 %v7899
  %v8192 = vunpack.c.h.b16 %v7899
  %v8193 = vunpack.c.l.b16 %v7900
  %v8194 = vunpack.c.h.b16 %v7900
  %v8195 = vunpack.c.l.b16 %v7901
  %v8196 = vunpack.c.h.b16 %v7901
  %v8197 = vunpack.c.l.b16 %v7902
  %v8198 = vunpack.c.h.b16 %v7902
  %v8199 = vunpack.c.l.b16 %v7903
  %v8200 = vunpack.c.h.b16 %v7903
  %v8201 = vunpack.c.l.b16 %v7904
  %v8202 = vunpack.c.h.b16 %v7904
  %v8203 = vunpack.c.l.b16 %v7905
  %v8204 = vunpack.c.h.b16 %v7905
  %v8205 = vunpack.c.l.b16 %v7906
  %v8206 = vunpack.c.h.b16 %v7906
  %v8207 = vunpack.c.l.b16 %v7907
  %v8208 = vunpack.c.h.b16 %v7907
  %v8209 = vunpack.c.l.b16 %v7908
  %v8210 = vunpack.c.h.b16 %v7908
  %v8211 = vunpack.c.l.b16 %v7909
  %v8212 = vunpack.c.h.b16 %v7909
  %v8213 = vunpack.c.l.b16 %v7910
  %v8214 = vunpack.c.h.b16 %v7910
  %v8215 = vunpack.c.l.b16 %v7911
  %v8216 = vunpack.c.h.b16 %v7911
  %v8217 = vunpack.c.l.b16 %v7912
  %v8218 = vunpack.c.h.b16 %v7912
  %v8219 = vunpack.c.l.b16 %v7913
  %v8220 = vunpack.c.h.b16 %v7913
  %v8221 = vunpack.c.l.b16 %v7914
  %v8222 = vunpack.c.h.b16 %v7914
  %v8223 = vunpack.c.l.b16 %v7915
  %v8224 = vunpack.c.h.b16 %v7915
  %v8225 = vunpack.c.l.b16 %v7916
  %v8226 = vunpack.c.h.b16 %v7916
  %v8227 = vunpack.c.l.b16 %v7917
  %v8228 = vunpack.c.h.b16 %v7917
  %v8229 = vunpack.c.l.b16 %v7918
  %v8230 = vunpack.c.h.b16 %v7918
  %v8231 = vpack.c.b16 %v8177, %v8175
  %v8232 = vpack.c.b16 %v8178, %v8176
  %v8233 = vpack.c.b16 %v8181, %v8179
  %v8234 = vpack.c.b16 %v8182, %v8180
  %v8235 = vpack.c.b16 %v8185, %v8183
  %v8236 = vpack.c.b16 %v8186, %v8184
  %v8237 = vpack.c.b16 %v8189, %v8187
  %v8238 = vpack.c.b16 %v8190, %v8188
  %v8239 = vpack.c.b16 %v8193, %v8191
  %v8240 = vpack.c.b16 %v8194, %v8192
  %v8241 = vpack.c.b16 %v8197, %v8195
  %v8242 = vpack.c.b16 %v8198, %v8196
  %v8243 = vpack.c.b16 %v8201, %v8199
  %v8244 = vpack.c.b16 %v8202, %v8200
  %v8245 = vpack.c.b16 %v8205, %v8203
  %v8246 = vpack.c.b16 %v8206, %v8204
  %v8247 = vpack.c.b16 %v8209, %v8207
  %v8248 = vpack.c.b16 %v8210, %v8208
  %v8249 = vpack.c.b16 %v8213, %v8211
  %v8250 = vpack.c.b16 %v8214, %v8212
  %v8251 = vpack.c.b16 %v8217, %v8215
  %v8252 = vpack.c.b16 %v8218, %v8216
  %v8253 = vpack.c.b16 %v8221, %v8219
  %v8254 = vpack.c.b16 %v8222, %v8220
  %v8255 = vpack.c.b16 %v8225, %v8223
  %v8256 = vpack.c.b16 %v8226, %v8224
  %v8257 = vpack.c.b16 %v8229, %v8227
  %v8258 = vpack.c.b16 %v8230, %v8228
  %v8288 = vsel %vm3504, %v7890, 0
  %8290 = vmatpush.bf16.msra.mxu0 %v8245
  %8291 = vmatpush.bf16.msra.mxu0 %v8243
  %8292 = vmatpush.bf16.msra.mxu0 %v8241
  %8293 = vmatpush.bf16.msra.mxu0 %v8239
  %8294 = vmatpush.bf16.msra.mxu0 %v8237
  %8295 = vmatpush.bf16.msra.mxu0 %v8235
  %8296 = vmatpush.bf16.msra.mxu0 %v8233
  %8297 = vmatpush.bf16.msra.mxu0 %v8231
  %8298 = vmatmul.bf16.gmra.mxu0 %v7889
  %v8299 = vpop.f32.mrf.mxu0
  %v8300 = vadd.f32 %v8118, %v8299
  %v8301 = vpop.f32.mrf.mxu0
  %8302 = vdwg.mxu0
  %8303 = vmatpush.bf16.msra.mxu0 0
  %8304 = vmatpush.bf16.msra.mxu0 0
  %8305 = vmatpush.bf16.msra.mxu0 %v8257
  %8306 = vmatpush.bf16.msra.mxu0 %v8255
  %8307 = vmatpush.bf16.msra.mxu0 %v8253
  %8308 = vmatpush.bf16.msra.mxu0 %v8251
  %8309 = vmatpush.bf16.msra.mxu0 %v8249
  %8310 = vmatpush.bf16.msra.mxu0 %v8247
  %8311 = vmatmul.bf16.gmra.mxu0 %v8288
  %v8312 = vpop.f32.mrf.mxu0
  %v8313 = vadd.f32 %v8300, %v8312
  %v8314 = vpop.f32.mrf.mxu0
  %8315 = vdwg.mxu0
  %8316 = vmatpush.bf16.msra.mxu0 %v8246
  %8317 = vmatpush.bf16.msra.mxu0 %v8244
  %8318 = vmatpush.bf16.msra.mxu0 %v8242
  %8319 = vmatpush.bf16.msra.mxu0 %v8240
  %8320 = vmatpush.bf16.msra.mxu0 %v8238
  %8321 = vmatpush.bf16.msra.mxu0 %v8236
  %8322 = vmatpush.bf16.msra.mxu0 %v8234
  %8323 = vmatpush.bf16.msra.mxu0 %v8232
  %8324 = vmatmul.bf16.gmra.mxu0 %v7889
  %v8325 = vpop.f32.mrf.mxu0
  %v8326 = vadd.f32 %v8144, %v8325
  %v8327 = vpop.f32.mrf.mxu0
  %8328 = vdwg.mxu0
  %8329 = vmatpush.bf16.msra.mxu0 0
  %8330 = vmatpush.bf16.msra.mxu0 0
  %8331 = vmatpush.bf16.msra.mxu0 %v8258
  %8332 = vmatpush.bf16.msra.mxu0 %v8256
  %8333 = vmatpush.bf16.msra.mxu0 %v8254
  %8334 = vmatpush.bf16.msra.mxu0 %v8252
  %8335 = vmatpush.bf16.msra.mxu0 %v8250
  %8336 = vmatpush.bf16.msra.mxu0 %v8248
  %8337 = vmatmul.bf16.gmra.mxu0 %v8288
  %v8338 = vpop.f32.mrf.mxu0
  %v8339 = vadd.f32 %v8326, %v8338
  %v8340 = vpop.f32.mrf.mxu0
  %8341 = vdwg.mxu0
  %v8342 = vld [vmem:[%s4963] sm:$0xff]
  %v8343 = vld [vmem:[%s4963 + $0x8] sm:$0xff]
  %v8344 = vpack.c.bf16 %v8342, %v8342
  %v8345 = vpack.c.bf16 %v8343, %v8343
  %s8346 = scalar_lea.vmem %s6, 448
  %v8347 = vld [vmem:[%s8346] sm:$0xff]
  %v8348 = vld [vmem:[%s8346 + $0x8] sm:$0xff]
  %v8349 = vld [vmem:[%s8346 + $0x10] sm:$0xff]
  %v8350 = vld [vmem:[%s8346 + $0x18] sm:$0xff]
  %v8351 = vld [vmem:[%s8346 + $0x20] sm:$0xff]
  %v8352 = vld [vmem:[%s8346 + $0x28] sm:$0xff]
  %v8353 = vld [vmem:[%s8346 + $0x30] sm:$0xff]
  %v8354 = vld [vmem:[%s8346 + $0x38] sm:$0xff]
  %v8355 = vld [vmem:[%s8346 + $0x40] sm:$0xff]
  %v8356 = vld [vmem:[%s8346 + $0x48] sm:$0xff]
  %v8357 = vld [vmem:[%s8346 + $0x50] sm:$0xff]
  %v8358 = vld [vmem:[%s8346 + $0x58] sm:$0xff]
  %v8359 = vld [vmem:[%s8346 + $0x60] sm:$0xff]
  %v8360 = vld [vmem:[%s8346 + $0x68] sm:$0xff]
  %v8361 = vld [vmem:[%s8346 + $0x70] sm:$0xff]
  %v8362 = vld [vmem:[%s8346 + $0x78] sm:$0xff]
  %v8363 = vld [vmem:[%s8346 + $0x80] sm:$0xff]
  %v8364 = vld [vmem:[%s8346 + $0x88] sm:$0xff]
  %v8365 = vld [vmem:[%s8346 + $0x90] sm:$0xff]
  %v8366 = vld [vmem:[%s8346 + $0x98] sm:$0xff]
  %v8367 = vld [vmem:[%s8346 + $0xa0] sm:$0xff]
  %v8368 = vld [vmem:[%s8346 + $0xa8] sm:$0xff]
  %v8369 = vld [vmem:[%s8346 + $0xb0] sm:$0xff]
  %v8370 = vld [vmem:[%s8346 + $0xb8] sm:$0xff]
  %v8371 = vld [vmem:[%s8346 + $0xc0] sm:$0xff]
  %v8372 = vld [vmem:[%s8346 + $0xc8] sm:$0xff]
  %v8373 = vld [vmem:[%s8346 + $0xd0] sm:$0xff]
  %v8374 = vld [vmem:[%s8346 + $0xd8] sm:$0xff]
  %v8403 = vunpack.c.l.b16 %v8347
  %v8404 = vunpack.c.h.b16 %v8347
  %v8405 = vunpack.c.l.b16 %v8348
  %v8406 = vunpack.c.h.b16 %v8348
  %v8407 = vunpack.c.l.b16 %v8349
  %v8408 = vunpack.c.h.b16 %v8349
  %v8409 = vunpack.c.l.b16 %v8350
  %v8410 = vunpack.c.h.b16 %v8350
  %v8411 = vunpack.c.l.b16 %v8351
  %v8412 = vunpack.c.h.b16 %v8351
  %v8413 = vunpack.c.l.b16 %v8352
  %v8414 = vunpack.c.h.b16 %v8352
  %v8415 = vunpack.c.l.b16 %v8353
  %v8416 = vunpack.c.h.b16 %v8353
  %v8417 = vunpack.c.l.b16 %v8354
  %v8418 = vunpack.c.h.b16 %v8354
  %v8419 = vunpack.c.l.b16 %v8355
  %v8420 = vunpack.c.h.b16 %v8355
  %v8421 = vunpack.c.l.b16 %v8356
  %v8422 = vunpack.c.h.b16 %v8356
  %v8423 = vunpack.c.l.b16 %v8357
  %v8424 = vunpack.c.h.b16 %v8357
  %v8425 = vunpack.c.l.b16 %v8358
  %v8426 = vunpack.c.h.b16 %v8358
  %v8427 = vunpack.c.l.b16 %v8359
  %v8428 = vunpack.c.h.b16 %v8359
  %v8429 = vunpack.c.l.b16 %v8360
  %v8430 = vunpack.c.h.b16 %v8360
  %v8431 = vunpack.c.l.b16 %v8361
  %v8432 = vunpack.c.h.b16 %v8361
  %v8433 = vunpack.c.l.b16 %v8362
  %v8434 = vunpack.c.h.b16 %v8362
  %v8435 = vunpack.c.l.b16 %v8363
  %v8436 = vunpack.c.h.b16 %v8363
  %v8437 = vunpack.c.l.b16 %v8364
  %v8438 = vunpack.c.h.b16 %v8364
  %v8439 = vunpack.c.l.b16 %v8365
  %v8440 = vunpack.c.h.b16 %v8365
  %v8441 = vunpack.c.l.b16 %v8366
  %v8442 = vunpack.c.h.b16 %v8366
  %v8443 = vunpack.c.l.b16 %v8367
  %v8444 = vunpack.c.h.b16 %v8367
  %v8445 = vunpack.c.l.b16 %v8368
  %v8446 = vunpack.c.h.b16 %v8368
  %v8447 = vunpack.c.l.b16 %v8369
  %v8448 = vunpack.c.h.b16 %v8369
  %v8449 = vunpack.c.l.b16 %v8370
  %v8450 = vunpack.c.h.b16 %v8370
  %v8451 = vunpack.c.l.b16 %v8371
  %v8452 = vunpack.c.h.b16 %v8371
  %v8453 = vunpack.c.l.b16 %v8372
  %v8454 = vunpack.c.h.b16 %v8372
  %v8455 = vunpack.c.l.b16 %v8373
  %v8456 = vunpack.c.h.b16 %v8373
  %v8457 = vunpack.c.l.b16 %v8374
  %v8458 = vunpack.c.h.b16 %v8374
  %v8459 = vpack.c.b16 %v8405, %v8403
  %v8460 = vpack.c.b16 %v8406, %v8404
  %v8461 = vpack.c.b16 %v8409, %v8407
  %v8462 = vpack.c.b16 %v8410, %v8408
  %v8463 = vpack.c.b16 %v8413, %v8411
  %v8464 = vpack.c.b16 %v8414, %v8412
  %v8465 = vpack.c.b16 %v8417, %v8415
  %v8466 = vpack.c.b16 %v8418, %v8416
  %v8467 = vpack.c.b16 %v8421, %v8419
  %v8468 = vpack.c.b16 %v8422, %v8420
  %v8469 = vpack.c.b16 %v8425, %v8423
  %v8470 = vpack.c.b16 %v8426, %v8424
  %v8471 = vpack.c.b16 %v8429, %v8427
  %v8472 = vpack.c.b16 %v8430, %v8428
  %v8473 = vpack.c.b16 %v8433, %v8431
  %v8474 = vpack.c.b16 %v8434, %v8432
  %v8475 = vpack.c.b16 %v8437, %v8435
  %v8476 = vpack.c.b16 %v8438, %v8436
  %v8477 = vpack.c.b16 %v8441, %v8439
  %v8478 = vpack.c.b16 %v8442, %v8440
  %v8479 = vpack.c.b16 %v8445, %v8443
  %v8480 = vpack.c.b16 %v8446, %v8444
  %v8481 = vpack.c.b16 %v8449, %v8447
  %v8482 = vpack.c.b16 %v8450, %v8448
  %v8483 = vpack.c.b16 %v8453, %v8451
  %v8484 = vpack.c.b16 %v8454, %v8452
  %v8485 = vpack.c.b16 %v8457, %v8455
  %v8486 = vpack.c.b16 %v8458, %v8456
  %v8516 = vsel %vm3504, %v8345, 0
  %8518 = vmatpush.bf16.msra.mxu0 %v8473
  %8519 = vmatpush.bf16.msra.mxu0 %v8471
  %8520 = vmatpush.bf16.msra.mxu0 %v8469
  %8521 = vmatpush.bf16.msra.mxu0 %v8467
  %8522 = vmatpush.bf16.msra.mxu0 %v8465
  %8523 = vmatpush.bf16.msra.mxu0 %v8463
  %8524 = vmatpush.bf16.msra.mxu0 %v8461
  %8525 = vmatpush.bf16.msra.mxu0 %v8459
  %8526 = vmatmul.bf16.gmra.mxu0 %v8344
  %v8527 = vpop.f32.mrf.mxu0
  %v8528 = vadd.f32 0.0, %v8527
  %v8529 = vpop.f32.mrf.mxu0
  %8530 = vdwg.mxu0
  %8531 = vmatpush.bf16.msra.mxu0 0
  %8532 = vmatpush.bf16.msra.mxu0 0
  %8533 = vmatpush.bf16.msra.mxu0 %v8485
  %8534 = vmatpush.bf16.msra.mxu0 %v8483
  %8535 = vmatpush.bf16.msra.mxu0 %v8481
  %8536 = vmatpush.bf16.msra.mxu0 %v8479
  %8537 = vmatpush.bf16.msra.mxu0 %v8477
  %8538 = vmatpush.bf16.msra.mxu0 %v8475
  %8539 = vmatmul.bf16.gmra.mxu0 %v8516
  %v8540 = vpop.f32.mrf.mxu0
  %v8541 = vadd.f32 %v8528, %v8540
  %v8542 = vpop.f32.mrf.mxu0
  %8543 = vdwg.mxu0
  %8544 = vmatpush.bf16.msra.mxu0 %v8474
  %8545 = vmatpush.bf16.msra.mxu0 %v8472
  %8546 = vmatpush.bf16.msra.mxu0 %v8470
  %8547 = vmatpush.bf16.msra.mxu0 %v8468
  %8548 = vmatpush.bf16.msra.mxu0 %v8466
  %8549 = vmatpush.bf16.msra.mxu0 %v8464
  %8550 = vmatpush.bf16.msra.mxu0 %v8462
  %8551 = vmatpush.bf16.msra.mxu0 %v8460
  %8552 = vmatmul.bf16.gmra.mxu0 %v8344
  %v8553 = vpop.f32.mrf.mxu0
  %v8554 = vadd.f32 0.0, %v8553
  %v8555 = vpop.f32.mrf.mxu0
  %8556 = vdwg.mxu0
  %8557 = vmatpush.bf16.msra.mxu0 0
  %8558 = vmatpush.bf16.msra.mxu0 0
  %8559 = vmatpush.bf16.msra.mxu0 %v8486
  %8560 = vmatpush.bf16.msra.mxu0 %v8484
  %8561 = vmatpush.bf16.msra.mxu0 %v8482
  %8562 = vmatpush.bf16.msra.mxu0 %v8480
  %8563 = vmatpush.bf16.msra.mxu0 %v8478
  %8564 = vmatpush.bf16.msra.mxu0 %v8476
  %8565 = vmatmul.bf16.gmra.mxu0 %v8516
  %v8566 = vpop.f32.mrf.mxu0
  %v8567 = vadd.f32 %v8554, %v8566
  %v8568 = vpop.f32.mrf.mxu0
  %8569 = vdwg.mxu0
  %v8570 = vadd.f32 %v8313, %v8541
  %v8571 = vadd.f32 %v8339, %v8567
  %v8573 = vperm.slane %v7886, 0
  %v8574 = vperm.slane %v7886, 1
  %v8577 = vadd.f32 %v8570, %v8573
  %v8578 = vadd.f32 %v8571, %v8574
  %vm8579 = vcmp.gt.f32.partialorder %v8577, 0.0
  %vm8580 = vcmp.gt.f32.partialorder %v8578, 0.0
  %v8581 = vmul.f32 %v8577, 0.01
  %v8582 = vmul.f32 %v8578, 0.01
  %v8583 = vsel %vm8579, %v8577, %v8581
  %v8584 = vsel %vm8580, %v8578, %v8582
  %8585 = vst [vmem:[#allocation4] sm:$0xff] %v8583
  %vm8586 = vcmask 523264
  %8587 = vst.msk [vmem:[#allocation4 + $0x8] sm:$0xff] %vm8586, %v8584
  %v8588 = vld [vmem:[%s4963] sm:$0xff]
  %v8589 = vld [vmem:[%s4963 + $0x8] sm:$0xff]
  %v8590 = vpack.c.bf16 %v8588, %v8588
  %v8591 = vpack.c.bf16 %v8589, %v8589
  %v8592 = vld [vmem:[%s6] sm:$0xff]
  %v8593 = vld [vmem:[%s6 + $0x8] sm:$0xff]
  %v8594 = vld [vmem:[%s6 + $0x10] sm:$0xff]
  %v8595 = vld [vmem:[%s6 + $0x18] sm:$0xff]
  %v8596 = vld [vmem:[%s6 + $0x20] sm:$0xff]
  %v8597 = vld [vmem:[%s6 + $0x28] sm:$0xff]
  %v8598 = vld [vmem:[%s6 + $0x30] sm:$0xff]
  %v8599 = vld [vmem:[%s6 + $0x38] sm:$0xff]
  %v8600 = vld [vmem:[%s6 + $0x40] sm:$0xff]
  %v8601 = vld [vmem:[%s6 + $0x48] sm:$0xff]
  %v8602 = vld [vmem:[%s6 + $0x50] sm:$0xff]
  %v8603 = vld [vmem:[%s6 + $0x58] sm:$0xff]
  %v8604 = vld [vmem:[%s6 + $0x60] sm:$0xff]
  %v8605 = vld [vmem:[%s6 + $0x68] sm:$0xff]
  %v8606 = vld [vmem:[%s6 + $0x70] sm:$0xff]
  %v8607 = vld [vmem:[%s6 + $0x78] sm:$0xff]
  %v8608 = vld [vmem:[%s6 + $0x80] sm:$0xff]
  %v8609 = vld [vmem:[%s6 + $0x88] sm:$0xff]
  %v8610 = vld [vmem:[%s6 + $0x90] sm:$0xff]
  %v8611 = vld [vmem:[%s6 + $0x98] sm:$0xff]
  %v8612 = vld [vmem:[%s6 + $0xa0] sm:$0xff]
  %v8613 = vld [vmem:[%s6 + $0xa8] sm:$0xff]
  %v8614 = vld [vmem:[%s6 + $0xb0] sm:$0xff]
  %v8615 = vld [vmem:[%s6 + $0xb8] sm:$0xff]
  %v8616 = vld [vmem:[%s6 + $0xc0] sm:$0xff]
  %v8617 = vld [vmem:[%s6 + $0xc8] sm:$0xff]
  %v8618 = vld [vmem:[%s6 + $0xd0] sm:$0xff]
  %v8619 = vld [vmem:[%s6 + $0xd8] sm:$0xff]
  %v8620 = vld [vmem:[%s5693] sm:$0xff]
  %v8621 = vld [vmem:[%s5693 + $0x8] sm:$0xff]
  %v8622 = vpack.c.bf16 %v8620, %v8620
  %v8623 = vpack.c.bf16 %v8621, %v8621
  %v8624 = vld [vmem:[%s7923] sm:$0xff]
  %v8625 = vld [vmem:[%s7923 + $0x8] sm:$0xff]
  %v8626 = vld [vmem:[%s7923 + $0x10] sm:$0xff]
  %v8627 = vld [vmem:[%s7923 + $0x18] sm:$0xff]
  %v8628 = vld [vmem:[%s7923 + $0x20] sm:$0xff]
  %v8629 = vld [vmem:[%s7923 + $0x28] sm:$0xff]
  %v8630 = vld [vmem:[%s7923 + $0x30] sm:$0xff]
  %v8631 = vld [vmem:[%s7923 + $0x38] sm:$0xff]
  %v8632 = vld [vmem:[%s7923 + $0x40] sm:$0xff]
  %v8633 = vld [vmem:[%s7923 + $0x48] sm:$0xff]
  %v8634 = vld [vmem:[%s7923 + $0x50] sm:$0xff]
  %v8635 = vld [vmem:[%s7923 + $0x58] sm:$0xff]
  %v8636 = vld [vmem:[%s7923 + $0x60] sm:$0xff]
  %v8637 = vld [vmem:[%s7923 + $0x68] sm:$0xff]
  %v8638 = vld [vmem:[%s7923 + $0x70] sm:$0xff]
  %v8639 = vld [vmem:[%s7923 + $0x78] sm:$0xff]
  %v8640 = vld [vmem:[%s7923 + $0x80] sm:$0xff]
  %v8641 = vld [vmem:[%s7923 + $0x88] sm:$0xff]
  %v8642 = vld [vmem:[%s7923 + $0x90] sm:$0xff]
  %v8643 = vld [vmem:[%s7923 + $0x98] sm:$0xff]
  %v8644 = vld [vmem:[%s7923 + $0xa0] sm:$0xff]
  %v8645 = vld [vmem:[%s7923 + $0xa8] sm:$0xff]
  %v8646 = vld [vmem:[%s7923 + $0xb0] sm:$0xff]
  %v8647 = vld [vmem:[%s7923 + $0xb8] sm:$0xff]
  %v8648 = vld [vmem:[%s7923 + $0xc0] sm:$0xff]
  %v8649 = vld [vmem:[%s7923 + $0xc8] sm:$0xff]
  %v8650 = vld [vmem:[%s7923 + $0xd0] sm:$0xff]
  %v8651 = vld [vmem:[%s7923 + $0xd8] sm:$0xff]
  %v8680 = vunpack.c.l.b16 %v8624
  %v8681 = vunpack.c.h.b16 %v8624
  %v8682 = vunpack.c.l.b16 %v8625
  %v8683 = vunpack.c.h.b16 %v8625
  %v8684 = vunpack.c.l.b16 %v8626
  %v8685 = vunpack.c.h.b16 %v8626
  %v8686 = vunpack.c.l.b16 %v8627
  %v8687 = vunpack.c.h.b16 %v8627
  %v8688 = vunpack.c.l.b16 %v8628
  %v8689 = vunpack.c.h.b16 %v8628
  %v8690 = vunpack.c.l.b16 %v8629
  %v8691 = vunpack.c.h.b16 %v8629
  %v8692 = vunpack.c.l.b16 %v8630
  %v8693 = vunpack.c.h.b16 %v8630
  %v8694 = vunpack.c.l.b16 %v8631
  %v8695 = vunpack.c.h.b16 %v8631
  %v8696 = vunpack.c.l.b16 %v8632
  %v8697 = vunpack.c.h.b16 %v8632
  %v8698 = vunpack.c.l.b16 %v8633
  %v8699 = vunpack.c.h.b16 %v8633
  %v8700 = vunpack.c.l.b16 %v8634
  %v8701 = vunpack.c.h.b16 %v8634
  %v8702 = vunpack.c.l.b16 %v8635
  %v8703 = vunpack.c.h.b16 %v8635
  %v8704 = vunpack.c.l.b16 %v8636
  %v8705 = vunpack.c.h.b16 %v8636
  %v8706 = vunpack.c.l.b16 %v8637
  %v8707 = vunpack.c.h.b16 %v8637
  %v8708 = vunpack.c.l.b16 %v8638
  %v8709 = vunpack.c.h.b16 %v8638
  %v8710 = vunpack.c.l.b16 %v8639
  %v8711 = vunpack.c.h.b16 %v8639
  %v8712 = vunpack.c.l.b16 %v8640
  %v8713 = vunpack.c.h.b16 %v8640
  %v8714 = vunpack.c.l.b16 %v8641
  %v8715 = vunpack.c.h.b16 %v8641
  %v8716 = vunpack.c.l.b16 %v8642
  %v8717 = vunpack.c.h.b16 %v8642
  %v8718 = vunpack.c.l.b16 %v8643
  %v8719 = vunpack.c.h.b16 %v8643
  %v8720 = vunpack.c.l.b16 %v8644
  %v8721 = vunpack.c.h.b16 %v8644
  %v8722 = vunpack.c.l.b16 %v8645
  %v8723 = vunpack.c.h.b16 %v8645
  %v8724 = vunpack.c.l.b16 %v8646
  %v8725 = vunpack.c.h.b16 %v8646
  %v8726 = vunpack.c.l.b16 %v8647
  %v8727 = vunpack.c.h.b16 %v8647
  %v8728 = vunpack.c.l.b16 %v8648
  %v8729 = vunpack.c.h.b16 %v8648
  %v8730 = vunpack.c.l.b16 %v8649
  %v8731 = vunpack.c.h.b16 %v8649
  %v8732 = vunpack.c.l.b16 %v8650
  %v8733 = vunpack.c.h.b16 %v8650
  %v8734 = vunpack.c.l.b16 %v8651
  %v8735 = vunpack.c.h.b16 %v8651
  %v8736 = vpack.c.b16 %v8682, %v8680
  %v8737 = vpack.c.b16 %v8683, %v8681
  %v8738 = vpack.c.b16 %v8686, %v8684
  %v8739 = vpack.c.b16 %v8687, %v8685
  %v8740 = vpack.c.b16 %v8690, %v8688
  %v8741 = vpack.c.b16 %v8691, %v8689
  %v8742 = vpack.c.b16 %v8694, %v8692
  %v8743 = vpack.c.b16 %v8695, %v8693
  %v8744 = vpack.c.b16 %v8698, %v8696
  %v8745 = vpack.c.b16 %v8699, %v8697
  %v8746 = vpack.c.b16 %v8702, %v8700
  %v8747 = vpack.c.b16 %v8703, %v8701
  %v8748 = vpack.c.b16 %v8706, %v8704
  %v8749 = vpack.c.b16 %v8707, %v8705
  %v8750 = vpack.c.b16 %v8710, %v8708
  %v8751 = vpack.c.b16 %v8711, %v8709
  %v8752 = vpack.c.b16 %v8714, %v8712
  %v8753 = vpack.c.b16 %v8715, %v8713
  %v8754 = vpack.c.b16 %v8718, %v8716
  %v8755 = vpack.c.b16 %v8719, %v8717
  %v8756 = vpack.c.b16 %v8722, %v8720
  %v8757 = vpack.c.b16 %v8723, %v8721
  %v8758 = vpack.c.b16 %v8726, %v8724
  %v8759 = vpack.c.b16 %v8727, %v8725
  %v8760 = vpack.c.b16 %v8730, %v8728
  %v8761 = vpack.c.b16 %v8731, %v8729
  %v8762 = vpack.c.b16 %v8734, %v8732
  %v8763 = vpack.c.b16 %v8735, %v8733
  %v8793 = vsel %vm3504, %v8623, 0
  %8795 = vmatpush.bf16.msra.mxu0 %v8750
  %8796 = vmatpush.bf16.msra.mxu0 %v8748
  %8797 = vmatpush.bf16.msra.mxu0 %v8746
  %8798 = vmatpush.bf16.msra.mxu0 %v8744
  %8799 = vmatpush.bf16.msra.mxu0 %v8742
  %8800 = vmatpush.bf16.msra.mxu0 %v8740
  %8801 = vmatpush.bf16.msra.mxu0 %v8738
  %8802 = vmatpush.bf16.msra.mxu0 %v8736
  %8803 = vmatmul.bf16.gmra.mxu0 %v8622
  %v8804 = vpop.f32.mrf.mxu0
  %v8805 = vadd.f32 0.0, %v8804
  %v8806 = vpop.f32.mrf.mxu0
  %8807 = vdwg.mxu0
  %8808 = vmatpush.bf16.msra.mxu0 0
  %8809 = vmatpush.bf16.msra.mxu0 0
  %8810 = vmatpush.bf16.msra.mxu0 %v8762
  %8811 = vmatpush.bf16.msra.mxu0 %v8760
  %8812 = vmatpush.bf16.msra.mxu0 %v8758
  %8813 = vmatpush.bf16.msra.mxu0 %v8756
  %8814 = vmatpush.bf16.msra.mxu0 %v8754
  %8815 = vmatpush.bf16.msra.mxu0 %v8752
  %8816 = vmatmul.bf16.gmra.mxu0 %v8793
  %v8817 = vpop.f32.mrf.mxu0
  %v8818 = vadd.f32 %v8805, %v8817
  %v8819 = vpop.f32.mrf.mxu0
  %8820 = vdwg.mxu0
  %8821 = vmatpush.bf16.msra.mxu0 %v8751
  %8822 = vmatpush.bf16.msra.mxu0 %v8749
  %8823 = vmatpush.bf16.msra.mxu0 %v8747
  %8824 = vmatpush.bf16.msra.mxu0 %v8745
  %8825 = vmatpush.bf16.msra.mxu0 %v8743
  %8826 = vmatpush.bf16.msra.mxu0 %v8741
  %8827 = vmatpush.bf16.msra.mxu0 %v8739
  %8828 = vmatpush.bf16.msra.mxu0 %v8737
  %8829 = vmatmul.bf16.gmra.mxu0 %v8622
  %v8830 = vpop.f32.mrf.mxu0
  %v8831 = vadd.f32 0.0, %v8830
  %v8832 = vpop.f32.mrf.mxu0
  %8833 = vdwg.mxu0
  %8834 = vmatpush.bf16.msra.mxu0 0
  %8835 = vmatpush.bf16.msra.mxu0 0
  %8836 = vmatpush.bf16.msra.mxu0 %v8763
  %8837 = vmatpush.bf16.msra.mxu0 %v8761
  %8838 = vmatpush.bf16.msra.mxu0 %v8759
  %8839 = vmatpush.bf16.msra.mxu0 %v8757
  %8840 = vmatpush.bf16.msra.mxu0 %v8755
  %8841 = vmatpush.bf16.msra.mxu0 %v8753
  %8842 = vmatmul.bf16.gmra.mxu0 %v8793
  %v8843 = vpop.f32.mrf.mxu0
  %v8844 = vadd.f32 %v8831, %v8843
  %v8845 = vpop.f32.mrf.mxu0
  %8846 = vdwg.mxu0
  %v8875 = vunpack.c.l.b16 %v8592
  %v8876 = vunpack.c.h.b16 %v8592
  %v8877 = vunpack.c.l.b16 %v8593
  %v8878 = vunpack.c.h.b16 %v8593
  %v8879 = vunpack.c.l.b16 %v8594
  %v8880 = vunpack.c.h.b16 %v8594
  %v8881 = vunpack.c.l.b16 %v8595
  %v8882 = vunpack.c.h.b16 %v8595
  %v8883 = vunpack.c.l.b16 %v8596
  %v8884 = vunpack.c.h.b16 %v8596
  %v8885 = vunpack.c.l.b16 %v8597
  %v8886 = vunpack.c.h.b16 %v8597
  %v8887 = vunpack.c.l.b16 %v8598
  %v8888 = vunpack.c.h.b16 %v8598
  %v8889 = vunpack.c.l.b16 %v8599
  %v8890 = vunpack.c.h.b16 %v8599
  %v8891 = vunpack.c.l.b16 %v8600
  %v8892 = vunpack.c.h.b16 %v8600
  %v8893 = vunpack.c.l.b16 %v8601
  %v8894 = vunpack.c.h.b16 %v8601
  %v8895 = vunpack.c.l.b16 %v8602
  %v8896 = vunpack.c.h.b16 %v8602
  %v8897 = vunpack.c.l.b16 %v8603
  %v8898 = vunpack.c.h.b16 %v8603
  %v8899 = vunpack.c.l.b16 %v8604
  %v8900 = vunpack.c.h.b16 %v8604
  %v8901 = vunpack.c.l.b16 %v8605
  %v8902 = vunpack.c.h.b16 %v8605
  %v8903 = vunpack.c.l.b16 %v8606
  %v8904 = vunpack.c.h.b16 %v8606
  %v8905 = vunpack.c.l.b16 %v8607
  %v8906 = vunpack.c.h.b16 %v8607
  %v8907 = vunpack.c.l.b16 %v8608
  %v8908 = vunpack.c.h.b16 %v8608
  %v8909 = vunpack.c.l.b16 %v8609
  %v8910 = vunpack.c.h.b16 %v8609
  %v8911 = vunpack.c.l.b16 %v8610
  %v8912 = vunpack.c.h.b16 %v8610
  %v8913 = vunpack.c.l.b16 %v8611
  %v8914 = vunpack.c.h.b16 %v8611
  %v8915 = vunpack.c.l.b16 %v8612
  %v8916 = vunpack.c.h.b16 %v8612
  %v8917 = vunpack.c.l.b16 %v8613
  %v8918 = vunpack.c.h.b16 %v8613
  %v8919 = vunpack.c.l.b16 %v8614
  %v8920 = vunpack.c.h.b16 %v8614
  %v8921 = vunpack.c.l.b16 %v8615
  %v8922 = vunpack.c.h.b16 %v8615
  %v8923 = vunpack.c.l.b16 %v8616
  %v8924 = vunpack.c.h.b16 %v8616
  %v8925 = vunpack.c.l.b16 %v8617
  %v8926 = vunpack.c.h.b16 %v8617
  %v8927 = vunpack.c.l.b16 %v8618
  %v8928 = vunpack.c.h.b16 %v8618
  %v8929 = vunpack.c.l.b16 %v8619
  %v8930 = vunpack.c.h.b16 %v8619
  %v8931 = vpack.c.b16 %v8877, %v8875
  %v8932 = vpack.c.b16 %v8878, %v8876
  %v8933 = vpack.c.b16 %v8881, %v8879
  %v8934 = vpack.c.b16 %v8882, %v8880
  %v8935 = vpack.c.b16 %v8885, %v8883
  %v8936 = vpack.c.b16 %v8886, %v8884
  %v8937 = vpack.c.b16 %v8889, %v8887
  %v8938 = vpack.c.b16 %v8890, %v8888
  %v8939 = vpack.c.b16 %v8893, %v8891
  %v8940 = vpack.c.b16 %v8894, %v8892
  %v8941 = vpack.c.b16 %v8897, %v8895
  %v8942 = vpack.c.b16 %v8898, %v8896
  %v8943 = vpack.c.b16 %v8901, %v8899
  %v8944 = vpack.c.b16 %v8902, %v8900
  %v8945 = vpack.c.b16 %v8905, %v8903
  %v8946 = vpack.c.b16 %v8906, %v8904
  %v8947 = vpack.c.b16 %v8909, %v8907
  %v8948 = vpack.c.b16 %v8910, %v8908
  %v8949 = vpack.c.b16 %v8913, %v8911
  %v8950 = vpack.c.b16 %v8914, %v8912
  %v8951 = vpack.c.b16 %v8917, %v8915
  %v8952 = vpack.c.b16 %v8918, %v8916
  %v8953 = vpack.c.b16 %v8921, %v8919
  %v8954 = vpack.c.b16 %v8922, %v8920
  %v8955 = vpack.c.b16 %v8925, %v8923
  %v8956 = vpack.c.b16 %v8926, %v8924
  %v8957 = vpack.c.b16 %v8929, %v8927
  %v8958 = vpack.c.b16 %v8930, %v8928
  %v8988 = vsel %vm3504, %v8591, 0
  %8990 = vmatpush.bf16.msra.mxu0 %v8945
  %8991 = vmatpush.bf16.msra.mxu0 %v8943
  %8992 = vmatpush.bf16.msra.mxu0 %v8941
  %8993 = vmatpush.bf16.msra.mxu0 %v8939
  %8994 = vmatpush.bf16.msra.mxu0 %v8937
  %8995 = vmatpush.bf16.msra.mxu0 %v8935
  %8996 = vmatpush.bf16.msra.mxu0 %v8933
  %8997 = vmatpush.bf16.msra.mxu0 %v8931
  %8998 = vmatmul.bf16.gmra.mxu0 %v8590
  %v8999 = vpop.f32.mrf.mxu0
  %v9000 = vadd.f32 %v8818, %v8999
  %v9001 = vpop.f32.mrf.mxu0
  %9002 = vdwg.mxu0
  %9003 = vmatpush.bf16.msra.mxu0 0
  %9004 = vmatpush.bf16.msra.mxu0 0
  %9005 = vmatpush.bf16.msra.mxu0 %v8957
  %9006 = vmatpush.bf16.msra.mxu0 %v8955
  %9007 = vmatpush.bf16.msra.mxu0 %v8953
  %9008 = vmatpush.bf16.msra.mxu0 %v8951
  %9009 = vmatpush.bf16.msra.mxu0 %v8949
  %9010 = vmatpush.bf16.msra.mxu0 %v8947
  %9011 = vmatmul.bf16.gmra.mxu0 %v8988
  %v9012 = vpop.f32.mrf.mxu0
  %v9013 = vadd.f32 %v9000, %v9012
  %v9014 = vpop.f32.mrf.mxu0
  %9015 = vdwg.mxu0
  %9016 = vmatpush.bf16.msra.mxu0 %v8946
  %9017 = vmatpush.bf16.msra.mxu0 %v8944
  %9018 = vmatpush.bf16.msra.mxu0 %v8942
  %9019 = vmatpush.bf16.msra.mxu0 %v8940
  %9020 = vmatpush.bf16.msra.mxu0 %v8938
  %9021 = vmatpush.bf16.msra.mxu0 %v8936
  %9022 = vmatpush.bf16.msra.mxu0 %v8934
  %9023 = vmatpush.bf16.msra.mxu0 %v8932
  %9024 = vmatmul.bf16.gmra.mxu0 %v8590
  %v9025 = vpop.f32.mrf.mxu0
  %v9026 = vadd.f32 %v8844, %v9025
  %v9027 = vpop.f32.mrf.mxu0
  %9028 = vdwg.mxu0
  %9029 = vmatpush.bf16.msra.mxu0 0
  %9030 = vmatpush.bf16.msra.mxu0 0
  %9031 = vmatpush.bf16.msra.mxu0 %v8958
  %9032 = vmatpush.bf16.msra.mxu0 %v8956
  %9033 = vmatpush.bf16.msra.mxu0 %v8954
  %9034 = vmatpush.bf16.msra.mxu0 %v8952
  %9035 = vmatpush.bf16.msra.mxu0 %v8950
  %9036 = vmatpush.bf16.msra.mxu0 %v8948
  %9037 = vmatmul.bf16.gmra.mxu0 %v8988
  %v9038 = vpop.f32.mrf.mxu0
  %v9039 = vadd.f32 %v9026, %v9038
  %v9040 = vpop.f32.mrf.mxu0
  %9041 = vdwg.mxu0
  %v9042 = vld [vmem:[%s6423] sm:$0xff]
  %v9043 = vld [vmem:[%s6423 + $0x8] sm:$0xff]
  %v9044 = vpack.c.bf16 %v9042, %v9042
  %v9045 = vpack.c.bf16 %v9043, %v9043
  %v9046 = vld [vmem:[%s8346] sm:$0xff]
  %v9047 = vld [vmem:[%s8346 + $0x8] sm:$0xff]
  %v9048 = vld [vmem:[%s8346 + $0x10] sm:$0xff]
  %v9049 = vld [vmem:[%s8346 + $0x18] sm:$0xff]
  %v9050 = vld [vmem:[%s8346 + $0x20] sm:$0xff]
  %v9051 = vld [vmem:[%s8346 + $0x28] sm:$0xff]
  %v9052 = vld [vmem:[%s8346 + $0x30] sm:$0xff]
  %v9053 = vld [vmem:[%s8346 + $0x38] sm:$0xff]
  %v9054 = vld [vmem:[%s8346 + $0x40] sm:$0xff]
  %v9055 = vld [vmem:[%s8346 + $0x48] sm:$0xff]
  %v9056 = vld [vmem:[%s8346 + $0x50] sm:$0xff]
  %v9057 = vld [vmem:[%s8346 + $0x58] sm:$0xff]
  %v9058 = vld [vmem:[%s8346 + $0x60] sm:$0xff]
  %v9059 = vld [vmem:[%s8346 + $0x68] sm:$0xff]
  %v9060 = vld [vmem:[%s8346 + $0x70] sm:$0xff]
  %v9061 = vld [vmem:[%s8346 + $0x78] sm:$0xff]
  %v9062 = vld [vmem:[%s8346 + $0x80] sm:$0xff]
  %v9063 = vld [vmem:[%s8346 + $0x88] sm:$0xff]
  %v9064 = vld [vmem:[%s8346 + $0x90] sm:$0xff]
  %v9065 = vld [vmem:[%s8346 + $0x98] sm:$0xff]
  %v9066 = vld [vmem:[%s8346 + $0xa0] sm:$0xff]
  %v9067 = vld [vmem:[%s8346 + $0xa8] sm:$0xff]
  %v9068 = vld [vmem:[%s8346 + $0xb0] sm:$0xff]
  %v9069 = vld [vmem:[%s8346 + $0xb8] sm:$0xff]
  %v9070 = vld [vmem:[%s8346 + $0xc0] sm:$0xff]
  %v9071 = vld [vmem:[%s8346 + $0xc8] sm:$0xff]
  %v9072 = vld [vmem:[%s8346 + $0xd0] sm:$0xff]
  %v9073 = vld [vmem:[%s8346 + $0xd8] sm:$0xff]
  %v9102 = vunpack.c.l.b16 %v9046
  %v9103 = vunpack.c.h.b16 %v9046
  %v9104 = vunpack.c.l.b16 %v9047
  %v9105 = vunpack.c.h.b16 %v9047
  %v9106 = vunpack.c.l.b16 %v9048
  %v9107 = vunpack.c.h.b16 %v9048
  %v9108 = vunpack.c.l.b16 %v9049
  %v9109 = vunpack.c.h.b16 %v9049
  %v9110 = vunpack.c.l.b16 %v9050
  %v9111 = vunpack.c.h.b16 %v9050
  %v9112 = vunpack.c.l.b16 %v9051
  %v9113 = vunpack.c.h.b16 %v9051
  %v9114 = vunpack.c.l.b16 %v9052
  %v9115 = vunpack.c.h.b16 %v9052
  %v9116 = vunpack.c.l.b16 %v9053
  %v9117 = vunpack.c.h.b16 %v9053
  %v9118 = vunpack.c.l.b16 %v9054
  %v9119 = vunpack.c.h.b16 %v9054
  %v9120 = vunpack.c.l.b16 %v9055
  %v9121 = vunpack.c.h.b16 %v9055
  %v9122 = vunpack.c.l.b16 %v9056
  %v9123 = vunpack.c.h.b16 %v9056
  %v9124 = vunpack.c.l.b16 %v9057
  %v9125 = vunpack.c.h.b16 %v9057
  %v9126 = vunpack.c.l.b16 %v9058
  %v9127 = vunpack.c.h.b16 %v9058
  %v9128 = vunpack.c.l.b16 %v9059
  %v9129 = vunpack.c.h.b16 %v9059
  %v9130 = vunpack.c.l.b16 %v9060
  %v9131 = vunpack.c.h.b16 %v9060
  %v9132 = vunpack.c.l.b16 %v9061
  %v9133 = vunpack.c.h.b16 %v9061
  %v9134 = vunpack.c.l.b16 %v9062
  %v9135 = vunpack.c.h.b16 %v9062
  %v9136 = vunpack.c.l.b16 %v9063
  %v9137 = vunpack.c.h.b16 %v9063
  %v9138 = vunpack.c.l.b16 %v9064
  %v9139 = vunpack.c.h.b16 %v9064
  %v9140 = vunpack.c.l.b16 %v9065
  %v9141 = vunpack.c.h.b16 %v9065
  %v9142 = vunpack.c.l.b16 %v9066
  %v9143 = vunpack.c.h.b16 %v9066
  %v9144 = vunpack.c.l.b16 %v9067
  %v9145 = vunpack.c.h.b16 %v9067
  %v9146 = vunpack.c.l.b16 %v9068
  %v9147 = vunpack.c.h.b16 %v9068
  %v9148 = vunpack.c.l.b16 %v9069
  %v9149 = vunpack.c.h.b16 %v9069
  %v9150 = vunpack.c.l.b16 %v9070
  %v9151 = vunpack.c.h.b16 %v9070
  %v9152 = vunpack.c.l.b16 %v9071
  %v9153 = vunpack.c.h.b16 %v9071
  %v9154 = vunpack.c.l.b16 %v9072
  %v9155 = vunpack.c.h.b16 %v9072
  %v9156 = vunpack.c.l.b16 %v9073
  %v9157 = vunpack.c.h.b16 %v9073
  %v9158 = vpack.c.b16 %v9104, %v9102
  %v9159 = vpack.c.b16 %v9105, %v9103
  %v9160 = vpack.c.b16 %v9108, %v9106
  %v9161 = vpack.c.b16 %v9109, %v9107
  %v9162 = vpack.c.b16 %v9112, %v9110
  %v9163 = vpack.c.b16 %v9113, %v9111
  %v9164 = vpack.c.b16 %v9116, %v9114
  %v9165 = vpack.c.b16 %v9117, %v9115
  %v9166 = vpack.c.b16 %v9120, %v9118
  %v9167 = vpack.c.b16 %v9121, %v9119
  %v9168 = vpack.c.b16 %v9124, %v9122
  %v9169 = vpack.c.b16 %v9125, %v9123
  %v9170 = vpack.c.b16 %v9128, %v9126
  %v9171 = vpack.c.b16 %v9129, %v9127
  %v9172 = vpack.c.b16 %v9132, %v9130
  %v9173 = vpack.c.b16 %v9133, %v9131
  %v9174 = vpack.c.b16 %v9136, %v9134
  %v9175 = vpack.c.b16 %v9137, %v9135
  %v9176 = vpack.c.b16 %v9140, %v9138
  %v9177 = vpack.c.b16 %v9141, %v9139
  %v9178 = vpack.c.b16 %v9144, %v9142
  %v9179 = vpack.c.b16 %v9145, %v9143
  %v9180 = vpack.c.b16 %v9148, %v9146
  %v9181 = vpack.c.b16 %v9149, %v9147
  %v9182 = vpack.c.b16 %v9152, %v9150
  %v9183 = vpack.c.b16 %v9153, %v9151
  %v9184 = vpack.c.b16 %v9156, %v9154
  %v9185 = vpack.c.b16 %v9157, %v9155
  %v9215 = vsel %vm3504, %v9045, 0
  %9217 = vmatpush.bf16.msra.mxu0 %v9172
  %9218 = vmatpush.bf16.msra.mxu0 %v9170
  %9219 = vmatpush.bf16.msra.mxu0 %v9168
  %9220 = vmatpush.bf16.msra.mxu0 %v9166
  %9221 = vmatpush.bf16.msra.mxu0 %v9164
  %9222 = vmatpush.bf16.msra.mxu0 %v9162
  %9223 = vmatpush.bf16.msra.mxu0 %v9160
  %9224 = vmatpush.bf16.msra.mxu0 %v9158
  %9225 = vmatmul.bf16.gmra.mxu0 %v9044
  %v9226 = vpop.f32.mrf.mxu0
  %v9227 = vadd.f32 0.0, %v9226
  %v9228 = vpop.f32.mrf.mxu0
  %9229 = vdwg.mxu0
  %9230 = vmatpush.bf16.msra.mxu0 0
  %9231 = vmatpush.bf16.msra.mxu0 0
  %9232 = vmatpush.bf16.msra.mxu0 %v9184
  %9233 = vmatpush.bf16.msra.mxu0 %v9182
  %9234 = vmatpush.bf16.msra.mxu0 %v9180
  %9235 = vmatpush.bf16.msra.mxu0 %v9178
  %9236 = vmatpush.bf16.msra.mxu0 %v9176
  %9237 = vmatpush.bf16.msra.mxu0 %v9174
  %9238 = vmatmul.bf16.gmra.mxu0 %v9215
  %v9239 = vpop.f32.mrf.mxu0
  %v9240 = vadd.f32 %v9227, %v9239
  %v9241 = vpop.f32.mrf.mxu0
  %9242 = vdwg.mxu0
  %9243 = vmatpush.bf16.msra.mxu0 %v9173
  %9244 = vmatpush.bf16.msra.mxu0 %v9171
  %9245 = vmatpush.bf16.msra.mxu0 %v9169
  %9246 = vmatpush.bf16.msra.mxu0 %v9167
  %9247 = vmatpush.bf16.msra.mxu0 %v9165
  %9248 = vmatpush.bf16.msra.mxu0 %v9163
  %9249 = vmatpush.bf16.msra.mxu0 %v9161
  %9250 = vmatpush.bf16.msra.mxu0 %v9159
  %9251 = vmatmul.bf16.gmra.mxu0 %v9044
  %v9252 = vpop.f32.mrf.mxu0
  %v9253 = vadd.f32 0.0, %v9252
  %v9254 = vpop.f32.mrf.mxu0
  %9255 = vdwg.mxu0
  %9256 = vmatpush.bf16.msra.mxu0 0
  %9257 = vmatpush.bf16.msra.mxu0 0
  %9258 = vmatpush.bf16.msra.mxu0 %v9185
  %9259 = vmatpush.bf16.msra.mxu0 %v9183
  %9260 = vmatpush.bf16.msra.mxu0 %v9181
  %9261 = vmatpush.bf16.msra.mxu0 %v9179
  %9262 = vmatpush.bf16.msra.mxu0 %v9177
  %9263 = vmatpush.bf16.msra.mxu0 %v9175
  %9264 = vmatmul.bf16.gmra.mxu0 %v9215
  %v9265 = vpop.f32.mrf.mxu0
  %v9266 = vadd.f32 %v9253, %v9265
  %v9267 = vpop.f32.mrf.mxu0
  %9268 = vdwg.mxu0
  %v9269 = vadd.f32 %v9013, %v9240
  %v9270 = vadd.f32 %v9039, %v9266
  %v9271 = vadd.f32 %v9269, %v8573
  %v9272 = vadd.f32 %v9270, %v8574
  %vm9273 = vcmp.gt.f32.partialorder %v9271, 0.0
  %vm9274 = vcmp.gt.f32.partialorder %v9272, 0.0
  %v9275 = vmul.f32 %v9271, 0.01
  %v9276 = vmul.f32 %v9272, 0.01
  %v9277 = vsel %vm9273, %v9271, %v9275
  %v9278 = vsel %vm9274, %v9272, %v9276
  %s9279 = scalar_lea.vmem [#allocation4], 16
  %9280 = vst [vmem:[%s9279] sm:$0xff] %v9277
  %9281 = vst.msk [vmem:[%s9279 + $0x8] sm:$0xff] %vm8586, %v9278
  %v9282 = vld [vmem:[%s6423] sm:$0xff]
  %v9283 = vld [vmem:[%s6423 + $0x8] sm:$0xff]
  %v9284 = vpack.c.bf16 %v9282, %v9282
  %v9285 = vpack.c.bf16 %v9283, %v9283
  %v9286 = vld [vmem:[%s6] sm:$0xff]
  %v9287 = vld [vmem:[%s6 + $0x8] sm:$0xff]
  %v9288 = vld [vmem:[%s6 + $0x10] sm:$0xff]
  %v9289 = vld [vmem:[%s6 + $0x18] sm:$0xff]
  %v9290 = vld [vmem:[%s6 + $0x20] sm:$0xff]
  %v9291 = vld [vmem:[%s6 + $0x28] sm:$0xff]
  %v9292 = vld [vmem:[%s6 + $0x30] sm:$0xff]
  %v9293 = vld [vmem:[%s6 + $0x38] sm:$0xff]
  %v9294 = vld [vmem:[%s6 + $0x40] sm:$0xff]
  %v9295 = vld [vmem:[%s6 + $0x48] sm:$0xff]
  %v9296 = vld [vmem:[%s6 + $0x50] sm:$0xff]
  %v9297 = vld [vmem:[%s6 + $0x58] sm:$0xff]
  %v9298 = vld [vmem:[%s6 + $0x60] sm:$0xff]
  %v9299 = vld [vmem:[%s6 + $0x68] sm:$0xff]
  %v9300 = vld [vmem:[%s6 + $0x70] sm:$0xff]
  %v9301 = vld [vmem:[%s6 + $0x78] sm:$0xff]
  %v9302 = vld [vmem:[%s6 + $0x80] sm:$0xff]
  %v9303 = vld [vmem:[%s6 + $0x88] sm:$0xff]
  %v9304 = vld [vmem:[%s6 + $0x90] sm:$0xff]
  %v9305 = vld [vmem:[%s6 + $0x98] sm:$0xff]
  %v9306 = vld [vmem:[%s6 + $0xa0] sm:$0xff]
  %v9307 = vld [vmem:[%s6 + $0xa8] sm:$0xff]
  %v9308 = vld [vmem:[%s6 + $0xb0] sm:$0xff]
  %v9309 = vld [vmem:[%s6 + $0xb8] sm:$0xff]
  %v9310 = vld [vmem:[%s6 + $0xc0] sm:$0xff]
  %v9311 = vld [vmem:[%s6 + $0xc8] sm:$0xff]
  %v9312 = vld [vmem:[%s6 + $0xd0] sm:$0xff]
  %v9313 = vld [vmem:[%s6 + $0xd8] sm:$0xff]
  %v9314 = vld [vmem:[%s7153] sm:$0xff]
  %v9315 = vld [vmem:[%s7153 + $0x8] sm:$0xff]
  %v9316 = vpack.c.bf16 %v9314, %v9314
  %v9317 = vpack.c.bf16 %v9315, %v9315
  %v9318 = vld [vmem:[%s7923] sm:$0xff]
  %v9319 = vld [vmem:[%s7923 + $0x8] sm:$0xff]
  %v9320 = vld [vmem:[%s7923 + $0x10] sm:$0xff]
  %v9321 = vld [vmem:[%s7923 + $0x18] sm:$0xff]
  %v9322 = vld [vmem:[%s7923 + $0x20] sm:$0xff]
  %v9323 = vld [vmem:[%s7923 + $0x28] sm:$0xff]
  %v9324 = vld [vmem:[%s7923 + $0x30] sm:$0xff]
  %v9325 = vld [vmem:[%s7923 + $0x38] sm:$0xff]
  %v9326 = vld [vmem:[%s7923 + $0x40] sm:$0xff]
  %v9327 = vld [vmem:[%s7923 + $0x48] sm:$0xff]
  %v9328 = vld [vmem:[%s7923 + $0x50] sm:$0xff]
  %v9329 = vld [vmem:[%s7923 + $0x58] sm:$0xff]
  %v9330 = vld [vmem:[%s7923 + $0x60] sm:$0xff]
  %v9331 = vld [vmem:[%s7923 + $0x68] sm:$0xff]
  %v9332 = vld [vmem:[%s7923 + $0x70] sm:$0xff]
  %v9333 = vld [vmem:[%s7923 + $0x78] sm:$0xff]
  %v9334 = vld [vmem:[%s7923 + $0x80] sm:$0xff]
  %v9335 = vld [vmem:[%s7923 + $0x88] sm:$0xff]
  %v9336 = vld [vmem:[%s7923 + $0x90] sm:$0xff]
  %v9337 = vld [vmem:[%s7923 + $0x98] sm:$0xff]
  %v9338 = vld [vmem:[%s7923 + $0xa0] sm:$0xff]
  %v9339 = vld [vmem:[%s7923 + $0xa8] sm:$0xff]
  %v9340 = vld [vmem:[%s7923 + $0xb0] sm:$0xff]
  %v9341 = vld [vmem:[%s7923 + $0xb8] sm:$0xff]
  %v9342 = vld [vmem:[%s7923 + $0xc0] sm:$0xff]
  %v9343 = vld [vmem:[%s7923 + $0xc8] sm:$0xff]
  %v9344 = vld [vmem:[%s7923 + $0xd0] sm:$0xff]
  %v9345 = vld [vmem:[%s7923 + $0xd8] sm:$0xff]
  %v9374 = vunpack.c.l.b16 %v9318
  %v9375 = vunpack.c.h.b16 %v9318
  %v9376 = vunpack.c.l.b16 %v9319
  %v9377 = vunpack.c.h.b16 %v9319
  %v9378 = vunpack.c.l.b16 %v9320
  %v9379 = vunpack.c.h.b16 %v9320
  %v9380 = vunpack.c.l.b16 %v9321
  %v9381 = vunpack.c.h.b16 %v9321
  %v9382 = vunpack.c.l.b16 %v9322
  %v9383 = vunpack.c.h.b16 %v9322
  %v9384 = vunpack.c.l.b16 %v9323
  %v9385 = vunpack.c.h.b16 %v9323
  %v9386 = vunpack.c.l.b16 %v9324
  %v9387 = vunpack.c.h.b16 %v9324
  %v9388 = vunpack.c.l.b16 %v9325
  %v9389 = vunpack.c.h.b16 %v9325
  %v9390 = vunpack.c.l.b16 %v9326
  %v9391 = vunpack.c.h.b16 %v9326
  %v9392 = vunpack.c.l.b16 %v9327
  %v9393 = vunpack.c.h.b16 %v9327
  %v9394 = vunpack.c.l.b16 %v9328
  %v9395 = vunpack.c.h.b16 %v9328
  %v9396 = vunpack.c.l.b16 %v9329
  %v9397 = vunpack.c.h.b16 %v9329
  %v9398 = vunpack.c.l.b16 %v9330
  %v9399 = vunpack.c.h.b16 %v9330
  %v9400 = vunpack.c.l.b16 %v9331
  %v9401 = vunpack.c.h.b16 %v9331
  %v9402 = vunpack.c.l.b16 %v9332
  %v9403 = vunpack.c.h.b16 %v9332
  %v9404 = vunpack.c.l.b16 %v9333
  %v9405 = vunpack.c.h.b16 %v9333
  %v9406 = vunpack.c.l.b16 %v9334
  %v9407 = vunpack.c.h.b16 %v9334
  %v9408 = vunpack.c.l.b16 %v9335
  %v9409 = vunpack.c.h.b16 %v9335
  %v9410 = vunpack.c.l.b16 %v9336
  %v9411 = vunpack.c.h.b16 %v9336
  %v9412 = vunpack.c.l.b16 %v9337
  %v9413 = vunpack.c.h.b16 %v9337
  %v9414 = vunpack.c.l.b16 %v9338
  %v9415 = vunpack.c.h.b16 %v9338
  %v9416 = vunpack.c.l.b16 %v9339
  %v9417 = vunpack.c.h.b16 %v9339
  %v9418 = vunpack.c.l.b16 %v9340
  %v9419 = vunpack.c.h.b16 %v9340
  %v9420 = vunpack.c.l.b16 %v9341
  %v9421 = vunpack.c.h.b16 %v9341
  %v9422 = vunpack.c.l.b16 %v9342
  %v9423 = vunpack.c.h.b16 %v9342
  %v9424 = vunpack.c.l.b16 %v9343
  %v9425 = vunpack.c.h.b16 %v9343
  %v9426 = vunpack.c.l.b16 %v9344
  %v9427 = vunpack.c.h.b16 %v9344
  %v9428 = vunpack.c.l.b16 %v9345
  %v9429 = vunpack.c.h.b16 %v9345
  %v9430 = vpack.c.b16 %v9376, %v9374
  %v9431 = vpack.c.b16 %v9377, %v9375
  %v9432 = vpack.c.b16 %v9380, %v9378
  %v9433 = vpack.c.b16 %v9381, %v9379
  %v9434 = vpack.c.b16 %v9384, %v9382
  %v9435 = vpack.c.b16 %v9385, %v9383
  %v9436 = vpack.c.b16 %v9388, %v9386
  %v9437 = vpack.c.b16 %v9389, %v9387
  %v9438 = vpack.c.b16 %v9392, %v9390
  %v9439 = vpack.c.b16 %v9393, %v9391
  %v9440 = vpack.c.b16 %v9396, %v9394
  %v9441 = vpack.c.b16 %v9397, %v9395
  %v9442 = vpack.c.b16 %v9400, %v9398
  %v9443 = vpack.c.b16 %v9401, %v9399
  %v9444 = vpack.c.b16 %v9404, %v9402
  %v9445 = vpack.c.b16 %v9405, %v9403
  %v9446 = vpack.c.b16 %v9408, %v9406
  %v9447 = vpack.c.b16 %v9409, %v9407
  %v9448 = vpack.c.b16 %v9412, %v9410
  %v9449 = vpack.c.b16 %v9413, %v9411
  %v9450 = vpack.c.b16 %v9416, %v9414
  %v9451 = vpack.c.b16 %v9417, %v9415
  %v9452 = vpack.c.b16 %v9420, %v9418
  %v9453 = vpack.c.b16 %v9421, %v9419
  %v9454 = vpack.c.b16 %v9424, %v9422
  %v9455 = vpack.c.b16 %v9425, %v9423
  %v9456 = vpack.c.b16 %v9428, %v9426
  %v9457 = vpack.c.b16 %v9429, %v9427
  %v9487 = vsel %vm3504, %v9317, 0
  %9489 = vmatpush.bf16.msra.mxu0 %v9444
  %9490 = vmatpush.bf16.msra.mxu0 %v9442
  %9491 = vmatpush.bf16.msra.mxu0 %v9440
  %9492 = vmatpush.bf16.msra.mxu0 %v9438
  %9493 = vmatpush.bf16.msra.mxu0 %v9436
  %9494 = vmatpush.bf16.msra.mxu0 %v9434
  %9495 = vmatpush.bf16.msra.mxu0 %v9432
  %9496 = vmatpush.bf16.msra.mxu0 %v9430
  %9497 = vmatmul.bf16.gmra.mxu0 %v9316
  %v9498 = vpop.f32.mrf.mxu0
  %v9499 = vadd.f32 0.0, %v9498
  %v9500 = vpop.f32.mrf.mxu0
  %9501 = vdwg.mxu0
  %9502 = vmatpush.bf16.msra.mxu0 0
  %9503 = vmatpush.bf16.msra.mxu0 0
  %9504 = vmatpush.bf16.msra.mxu0 %v9456
  %9505 = vmatpush.bf16.msra.mxu0 %v9454
  %9506 = vmatpush.bf16.msra.mxu0 %v9452
  %9507 = vmatpush.bf16.msra.mxu0 %v9450
  %9508 = vmatpush.bf16.msra.mxu0 %v9448
  %9509 = vmatpush.bf16.msra.mxu0 %v9446
  %9510 = vmatmul.bf16.gmra.mxu0 %v9487
  %v9511 = vpop.f32.mrf.mxu0
  %v9512 = vadd.f32 %v9499, %v9511
  %v9513 = vpop.f32.mrf.mxu0
  %9514 = vdwg.mxu0
  %9515 = vmatpush.bf16.msra.mxu0 %v9445
  %9516 = vmatpush.bf16.msra.mxu0 %v9443
  %9517 = vmatpush.bf16.msra.mxu0 %v9441
  %9518 = vmatpush.bf16.msra.mxu0 %v9439
  %9519 = vmatpush.bf16.msra.mxu0 %v9437
  %9520 = vmatpush.bf16.msra.mxu0 %v9435
  %9521 = vmatpush.bf16.msra.mxu0 %v9433
  %9522 = vmatpush.bf16.msra.mxu0 %v9431
  %9523 = vmatmul.bf16.gmra.mxu0 %v9316
  %v9524 = vpop.f32.mrf.mxu0
  %v9525 = vadd.f32 0.0, %v9524
  %v9526 = vpop.f32.mrf.mxu0
  %9527 = vdwg.mxu0
  %9528 = vmatpush.bf16.msra.mxu0 0
  %9529 = vmatpush.bf16.msra.mxu0 0
  %9530 = vmatpush.bf16.msra.mxu0 %v9457
  %9531 = vmatpush.bf16.msra.mxu0 %v9455
  %9532 = vmatpush.bf16.msra.mxu0 %v9453
  %9533 = vmatpush.bf16.msra.mxu0 %v9451
  %9534 = vmatpush.bf16.msra.mxu0 %v9449
  %9535 = vmatpush.bf16.msra.mxu0 %v9447
  %9536 = vmatmul.bf16.gmra.mxu0 %v9487
  %v9537 = vpop.f32.mrf.mxu0
  %v9538 = vadd.f32 %v9525, %v9537
  %v9539 = vpop.f32.mrf.mxu0
  %9540 = vdwg.mxu0
  %v9569 = vunpack.c.l.b16 %v9286
  %v9570 = vunpack.c.h.b16 %v9286
  %v9571 = vunpack.c.l.b16 %v9287
  %v9572 = vunpack.c.h.b16 %v9287
  %v9573 = vunpack.c.l.b16 %v9288
  %v9574 = vunpack.c.h.b16 %v9288
  %v9575 = vunpack.c.l.b16 %v9289
  %v9576 = vunpack.c.h.b16 %v9289
  %v9577 = vunpack.c.l.b16 %v9290
  %v9578 = vunpack.c.h.b16 %v9290
  %v9579 = vunpack.c.l.b16 %v9291
  %v9580 = vunpack.c.h.b16 %v9291
  %v9581 = vunpack.c.l.b16 %v9292
  %v9582 = vunpack.c.h.b16 %v9292
  %v9583 = vunpack.c.l.b16 %v9293
  %v9584 = vunpack.c.h.b16 %v9293
  %v9585 = vunpack.c.l.b16 %v9294
  %v9586 = vunpack.c.h.b16 %v9294
  %v9587 = vunpack.c.l.b16 %v9295
  %v9588 = vunpack.c.h.b16 %v9295
  %v9589 = vunpack.c.l.b16 %v9296
  %v9590 = vunpack.c.h.b16 %v9296
  %v9591 = vunpack.c.l.b16 %v9297
  %v9592 = vunpack.c.h.b16 %v9297
  %v9593 = vunpack.c.l.b16 %v9298
  %v9594 = vunpack.c.h.b16 %v9298
  %v9595 = vunpack.c.l.b16 %v9299
  %v9596 = vunpack.c.h.b16 %v9299
  %v9597 = vunpack.c.l.b16 %v9300
  %v9598 = vunpack.c.h.b16 %v9300
  %v9599 = vunpack.c.l.b16 %v9301
  %v9600 = vunpack.c.h.b16 %v9301
  %v9601 = vunpack.c.l.b16 %v9302
  %v9602 = vunpack.c.h.b16 %v9302
  %v9603 = vunpack.c.l.b16 %v9303
  %v9604 = vunpack.c.h.b16 %v9303
  %v9605 = vunpack.c.l.b16 %v9304
  %v9606 = vunpack.c.h.b16 %v9304
  %v9607 = vunpack.c.l.b16 %v9305
  %v9608 = vunpack.c.h.b16 %v9305
  %v9609 = vunpack.c.l.b16 %v9306
  %v9610 = vunpack.c.h.b16 %v9306
  %v9611 = vunpack.c.l.b16 %v9307
  %v9612 = vunpack.c.h.b16 %v9307
  %v9613 = vunpack.c.l.b16 %v9308
  %v9614 = vunpack.c.h.b16 %v9308
  %v9615 = vunpack.c.l.b16 %v9309
  %v9616 = vunpack.c.h.b16 %v9309
  %v9617 = vunpack.c.l.b16 %v9310
  %v9618 = vunpack.c.h.b16 %v9310
  %v9619 = vunpack.c.l.b16 %v9311
  %v9620 = vunpack.c.h.b16 %v9311
  %v9621 = vunpack.c.l.b16 %v9312
  %v9622 = vunpack.c.h.b16 %v9312
  %v9623 = vunpack.c.l.b16 %v9313
  %v9624 = vunpack.c.h.b16 %v9313
  %v9625 = vpack.c.b16 %v9571, %v9569
  %v9626 = vpack.c.b16 %v9572, %v9570
  %v9627 = vpack.c.b16 %v9575, %v9573
  %v9628 = vpack.c.b16 %v9576, %v9574
  %v9629 = vpack.c.b16 %v9579, %v9577
  %v9630 = vpack.c.b16 %v9580, %v9578
  %v9631 = vpack.c.b16 %v9583, %v9581
  %v9632 = vpack.c.b16 %v9584, %v9582
  %v9633 = vpack.c.b16 %v9587, %v9585
  %v9634 = vpack.c.b16 %v9588, %v9586
  %v9635 = vpack.c.b16 %v9591, %v9589
  %v9636 = vpack.c.b16 %v9592, %v9590
  %v9637 = vpack.c.b16 %v9595, %v9593
  %v9638 = vpack.c.b16 %v9596, %v9594
  %v9639 = vpack.c.b16 %v9599, %v9597
  %v9640 = vpack.c.b16 %v9600, %v9598
  %v9641 = vpack.c.b16 %v9603, %v9601
  %v9642 = vpack.c.b16 %v9604, %v9602
  %v9643 = vpack.c.b16 %v9607, %v9605
  %v9644 = vpack.c.b16 %v9608, %v9606
  %v9645 = vpack.c.b16 %v9611, %v9609
  %v9646 = vpack.c.b16 %v9612, %v9610
  %v9647 = vpack.c.b16 %v9615, %v9613
  %v9648 = vpack.c.b16 %v9616, %v9614
  %v9649 = vpack.c.b16 %v9619, %v9617
  %v9650 = vpack.c.b16 %v9620, %v9618
  %v9651 = vpack.c.b16 %v9623, %v9621
  %v9652 = vpack.c.b16 %v9624, %v9622
  %v9682 = vsel %vm3504, %v9285, 0
  %9684 = vmatpush.bf16.msra.mxu0 %v9639
  %9685 = vmatpush.bf16.msra.mxu0 %v9637
  %9686 = vmatpush.bf16.msra.mxu0 %v9635
  %9687 = vmatpush.bf16.msra.mxu0 %v9633
  %9688 = vmatpush.bf16.msra.mxu0 %v9631
  %9689 = vmatpush.bf16.msra.mxu0 %v9629
  %9690 = vmatpush.bf16.msra.mxu0 %v9627
  %9691 = vmatpush.bf16.msra.mxu0 %v9625
  %9692 = vmatmul.bf16.gmra.mxu0 %v9284
  %v9693 = vpop.f32.mrf.mxu0
  %v9694 = vadd.f32 %v9512, %v9693
  %v9695 = vpop.f32.mrf.mxu0
  %9696 = vdwg.mxu0
  %9697 = vmatpush.bf16.msra.mxu0 0
  %9698 = vmatpush.bf16.msra.mxu0 0
  %9699 = vmatpush.bf16.msra.mxu0 %v9651
  %9700 = vmatpush.bf16.msra.mxu0 %v9649
  %9701 = vmatpush.bf16.msra.mxu0 %v9647
  %9702 = vmatpush.bf16.msra.mxu0 %v9645
  %9703 = vmatpush.bf16.msra.mxu0 %v9643
  %9704 = vmatpush.bf16.msra.mxu0 %v9641
  %9705 = vmatmul.bf16.gmra.mxu0 %v9682
  %v9706 = vpop.f32.mrf.mxu0
  %v9707 = vadd.f32 %v9694, %v9706
  %v9708 = vpop.f32.mrf.mxu0
  %9709 = vdwg.mxu0
  %9710 = vmatpush.bf16.msra.mxu0 %v9640
  %9711 = vmatpush.bf16.msra.mxu0 %v9638
  %9712 = vmatpush.bf16.msra.mxu0 %v9636
  %9713 = vmatpush.bf16.msra.mxu0 %v9634
  %9714 = vmatpush.bf16.msra.mxu0 %v9632
  %9715 = vmatpush.bf16.msra.mxu0 %v9630
  %9716 = vmatpush.bf16.msra.mxu0 %v9628
  %9717 = vmatpush.bf16.msra.mxu0 %v9626
  %9718 = vmatmul.bf16.gmra.mxu0 %v9284
  %v9719 = vpop.f32.mrf.mxu0
  %v9720 = vadd.f32 %v9538, %v9719
  %v9721 = vpop.f32.mrf.mxu0
  %9722 = vdwg.mxu0
  %9723 = vmatpush.bf16.msra.mxu0 0
  %9724 = vmatpush.bf16.msra.mxu0 0
  %9725 = vmatpush.bf16.msra.mxu0 %v9652
  %9726 = vmatpush.bf16.msra.mxu0 %v9650
  %9727 = vmatpush.bf16.msra.mxu0 %v9648
  %9728 = vmatpush.bf16.msra.mxu0 %v9646
  %9729 = vmatpush.bf16.msra.mxu0 %v9644
  %9730 = vmatpush.bf16.msra.mxu0 %v9642
  %9731 = vmatmul.bf16.gmra.mxu0 %v9682
  %v9732 = vpop.f32.mrf.mxu0
  %v9733 = vadd.f32 %v9720, %v9732
  %v9734 = vpop.f32.mrf.mxu0
  %9735 = vdwg.mxu0
  %v9736 = vld [vmem:[%s7883] sm:$0xff]
  %v9737 = vld [vmem:[%s7883 + $0x8] sm:$0xff]
  %v9738 = vpack.c.bf16 %v9736, %v9736
  %v9739 = vpack.c.bf16 %v9737, %v9737
  %v9740 = vld [vmem:[%s8346] sm:$0xff]
  %v9741 = vld [vmem:[%s8346 + $0x8] sm:$0xff]
  %v9742 = vld [vmem:[%s8346 + $0x10] sm:$0xff]
  %v9743 = vld [vmem:[%s8346 + $0x18] sm:$0xff]
  %v9744 = vld [vmem:[%s8346 + $0x20] sm:$0xff]
  %v9745 = vld [vmem:[%s8346 + $0x28] sm:$0xff]
  %v9746 = vld [vmem:[%s8346 + $0x30] sm:$0xff]
  %v9747 = vld [vmem:[%s8346 + $0x38] sm:$0xff]
  %v9748 = vld [vmem:[%s8346 + $0x40] sm:$0xff]
  %v9749 = vld [vmem:[%s8346 + $0x48] sm:$0xff]
  %v9750 = vld [vmem:[%s8346 + $0x50] sm:$0xff]
  %v9751 = vld [vmem:[%s8346 + $0x58] sm:$0xff]
  %v9752 = vld [vmem:[%s8346 + $0x60] sm:$0xff]
  %v9753 = vld [vmem:[%s8346 + $0x68] sm:$0xff]
  %v9754 = vld [vmem:[%s8346 + $0x70] sm:$0xff]
  %v9755 = vld [vmem:[%s8346 + $0x78] sm:$0xff]
  %v9756 = vld [vmem:[%s8346 + $0x80] sm:$0xff]
  %v9757 = vld [vmem:[%s8346 + $0x88] sm:$0xff]
  %v9758 = vld [vmem:[%s8346 + $0x90] sm:$0xff]
  %v9759 = vld [vmem:[%s8346 + $0x98] sm:$0xff]
  %v9760 = vld [vmem:[%s8346 + $0xa0] sm:$0xff]
  %v9761 = vld [vmem:[%s8346 + $0xa8] sm:$0xff]
  %v9762 = vld [vmem:[%s8346 + $0xb0] sm:$0xff]
  %v9763 = vld [vmem:[%s8346 + $0xb8] sm:$0xff]
  %v9764 = vld [vmem:[%s8346 + $0xc0] sm:$0xff]
  %v9765 = vld [vmem:[%s8346 + $0xc8] sm:$0xff]
  %v9766 = vld [vmem:[%s8346 + $0xd0] sm:$0xff]
  %v9767 = vld [vmem:[%s8346 + $0xd8] sm:$0xff]
  %v9796 = vunpack.c.l.b16 %v9740
  %v9797 = vunpack.c.h.b16 %v9740
  %v9798 = vunpack.c.l.b16 %v9741
  %v9799 = vunpack.c.h.b16 %v9741
  %v9800 = vunpack.c.l.b16 %v9742
  %v9801 = vunpack.c.h.b16 %v9742
  %v9802 = vunpack.c.l.b16 %v9743
  %v9803 = vunpack.c.h.b16 %v9743
  %v9804 = vunpack.c.l.b16 %v9744
  %v9805 = vunpack.c.h.b16 %v9744
  %v9806 = vunpack.c.l.b16 %v9745
  %v9807 = vunpack.c.h.b16 %v9745
  %v9808 = vunpack.c.l.b16 %v9746
  %v9809 = vunpack.c.h.b16 %v9746
  %v9810 = vunpack.c.l.b16 %v9747
  %v9811 = vunpack.c.h.b16 %v9747
  %v9812 = vunpack.c.l.b16 %v9748
  %v9813 = vunpack.c.h.b16 %v9748
  %v9814 = vunpack.c.l.b16 %v9749
  %v9815 = vunpack.c.h.b16 %v9749
  %v9816 = vunpack.c.l.b16 %v9750
  %v9817 = vunpack.c.h.b16 %v9750
  %v9818 = vunpack.c.l.b16 %v9751
  %v9819 = vunpack.c.h.b16 %v9751
  %v9820 = vunpack.c.l.b16 %v9752
  %v9821 = vunpack.c.h.b16 %v9752
  %v9822 = vunpack.c.l.b16 %v9753
  %v9823 = vunpack.c.h.b16 %v9753
  %v9824 = vunpack.c.l.b16 %v9754
  %v9825 = vunpack.c.h.b16 %v9754
  %v9826 = vunpack.c.l.b16 %v9755
  %v9827 = vunpack.c.h.b16 %v9755
  %v9828 = vunpack.c.l.b16 %v9756
  %v9829 = vunpack.c.h.b16 %v9756
  %v9830 = vunpack.c.l.b16 %v9757
  %v9831 = vunpack.c.h.b16 %v9757
  %v9832 = vunpack.c.l.b16 %v9758
  %v9833 = vunpack.c.h.b16 %v9758
  %v9834 = vunpack.c.l.b16 %v9759
  %v9835 = vunpack.c.h.b16 %v9759
  %v9836 = vunpack.c.l.b16 %v9760
  %v9837 = vunpack.c.h.b16 %v9760
  %v9838 = vunpack.c.l.b16 %v9761
  %v9839 = vunpack.c.h.b16 %v9761
  %v9840 = vunpack.c.l.b16 %v9762
  %v9841 = vunpack.c.h.b16 %v9762
  %v9842 = vunpack.c.l.b16 %v9763
  %v9843 = vunpack.c.h.b16 %v9763
  %v9844 = vunpack.c.l.b16 %v9764
  %v9845 = vunpack.c.h.b16 %v9764
  %v9846 = vunpack.c.l.b16 %v9765
  %v9847 = vunpack.c.h.b16 %v9765
  %v9848 = vunpack.c.l.b16 %v9766
  %v9849 = vunpack.c.h.b16 %v9766
  %v9850 = vunpack.c.l.b16 %v9767
  %v9851 = vunpack.c.h.b16 %v9767
  %v9852 = vpack.c.b16 %v9798, %v9796
  %v9853 = vpack.c.b16 %v9799, %v9797
  %v9854 = vpack.c.b16 %v9802, %v9800
  %v9855 = vpack.c.b16 %v9803, %v9801
  %v9856 = vpack.c.b16 %v9806, %v9804
  %v9857 = vpack.c.b16 %v9807, %v9805
  %v9858 = vpack.c.b16 %v9810, %v9808
  %v9859 = vpack.c.b16 %v9811, %v9809
  %v9860 = vpack.c.b16 %v9814, %v9812
  %v9861 = vpack.c.b16 %v9815, %v9813
  %v9862 = vpack.c.b16 %v9818, %v9816
  %v9863 = vpack.c.b16 %v9819, %v9817
  %v9864 = vpack.c.b16 %v9822, %v9820
  %v9865 = vpack.c.b16 %v9823, %v9821
  %v9866 = vpack.c.b16 %v9826, %v9824
  %v9867 = vpack.c.b16 %v9827, %v9825
  %v9868 = vpack.c.b16 %v9830, %v9828
  %v9869 = vpack.c.b16 %v9831, %v9829
  %v9870 = vpack.c.b16 %v9834, %v9832
  %v9871 = vpack.c.b16 %v9835, %v9833
  %v9872 = vpack.c.b16 %v9838, %v9836
  %v9873 = vpack.c.b16 %v9839, %v9837
  %v9874 = vpack.c.b16 %v9842, %v9840
  %v9875 = vpack.c.b16 %v9843, %v9841
  %v9876 = vpack.c.b16 %v9846, %v9844
  %v9877 = vpack.c.b16 %v9847, %v9845
  %v9878 = vpack.c.b16 %v9850, %v9848
  %v9879 = vpack.c.b16 %v9851, %v9849
  %v9909 = vsel %vm3504, %v9739, 0
  %9911 = vmatpush.bf16.msra.mxu0 %v9866
  %9912 = vmatpush.bf16.msra.mxu0 %v9864
  %9913 = vmatpush.bf16.msra.mxu0 %v9862
  %9914 = vmatpush.bf16.msra.mxu0 %v9860
  %9915 = vmatpush.bf16.msra.mxu0 %v9858
  %9916 = vmatpush.bf16.msra.mxu0 %v9856
  %9917 = vmatpush.bf16.msra.mxu0 %v9854
  %9918 = vmatpush.bf16.msra.mxu0 %v9852
  %9919 = vmatmul.bf16.gmra.mxu0 %v9738
  %v9920 = vpop.f32.mrf.mxu0
  %v9921 = vadd.f32 0.0, %v9920
  %v9922 = vpop.f32.mrf.mxu0
  %9923 = vdwg.mxu0
  %9924 = vmatpush.bf16.msra.mxu0 0
  %9925 = vmatpush.bf16.msra.mxu0 0
  %9926 = vmatpush.bf16.msra.mxu0 %v9878
  %9927 = vmatpush.bf16.msra.mxu0 %v9876
  %9928 = vmatpush.bf16.msra.mxu0 %v9874
  %9929 = vmatpush.bf16.msra.mxu0 %v9872
  %9930 = vmatpush.bf16.msra.mxu0 %v9870
  %9931 = vmatpush.bf16.msra.mxu0 %v9868
  %9932 = vmatmul.bf16.gmra.mxu0 %v9909
  %v9933 = vpop.f32.mrf.mxu0
  %v9934 = vadd.f32 %v9921, %v9933
  %v9935 = vpop.f32.mrf.mxu0
  %9936 = vdwg.mxu0
  %9937 = vmatpush.bf16.msra.mxu0 %v9867
  %9938 = vmatpush.bf16.msra.mxu0 %v9865
  %9939 = vmatpush.bf16.msra.mxu0 %v9863
  %9940 = vmatpush.bf16.msra.mxu0 %v9861
  %9941 = vmatpush.bf16.msra.mxu0 %v9859
  %9942 = vmatpush.bf16.msra.mxu0 %v9857
  %9943 = vmatpush.bf16.msra.mxu0 %v9855
  %9944 = vmatpush.bf16.msra.mxu0 %v9853
  %9945 = vmatmul.bf16.gmra.mxu0 %v9738
  %v9946 = vpop.f32.mrf.mxu0
  %v9947 = vadd.f32 0.0, %v9946
  %v9948 = vpop.f32.mrf.mxu0
  %9949 = vdwg.mxu0
  %9950 = vmatpush.bf16.msra.mxu0 0
  %9951 = vmatpush.bf16.msra.mxu0 0
  %9952 = vmatpush.bf16.msra.mxu0 %v9879
  %9953 = vmatpush.bf16.msra.mxu0 %v9877
  %9954 = vmatpush.bf16.msra.mxu0 %v9875
  %9955 = vmatpush.bf16.msra.mxu0 %v9873
  %9956 = vmatpush.bf16.msra.mxu0 %v9871
  %9957 = vmatpush.bf16.msra.mxu0 %v9869
  %9958 = vmatmul.bf16.gmra.mxu0 %v9909
  %v9959 = vpop.f32.mrf.mxu0
  %v9960 = vadd.f32 %v9947, %v9959
  %v9961 = vpop.f32.mrf.mxu0
  %9962 = vdwg.mxu0
  %v9963 = vadd.f32 %v9707, %v9934
  %v9964 = vadd.f32 %v9733, %v9960
  %v9965 = vadd.f32 %v9963, %v8573
  %v9966 = vadd.f32 %v9964, %v8574
  %vm9967 = vcmp.gt.f32.partialorder %v9965, 0.0
  %vm9968 = vcmp.gt.f32.partialorder %v9966, 0.0
  %v9969 = vmul.f32 %v9965, 0.01
  %v9970 = vmul.f32 %v9966, 0.01
  %v9971 = vsel %vm9967, %v9965, %v9969
  %v9972 = vsel %vm9968, %v9966, %v9970
  %s9973 = scalar_lea.vmem [#allocation4], 32
  %9974 = vst [vmem:[%s9973] sm:$0xff] %v9971
  %9975 = vst.msk [vmem:[%s9973 + $0x8] sm:$0xff] %vm8586, %v9972
  %v9976 = vld [vmem:[%s9] sm:$0x1]
  %v9977 = vld [vmem:[#allocation4] sm:$0xff]
  %v9978 = vld [vmem:[#allocation4 + $0x8] sm:$0xff]
  %v9979 = vpack.c.bf16 %v9977, %v9977
  %v9980 = vpack.c.bf16 %v9978, %v9978
  %v9981 = vld [vmem:[%s8] sm:$0xf]
  %v9982 = vld [vmem:[%s8 + $0x4] sm:$0xf]
  %v9983 = vld [vmem:[%s8 + $0x8] sm:$0xf]
  %v9984 = vld [vmem:[%s8 + $0xc] sm:$0xf]
  %v9985 = vld [vmem:[%s8 + $0x10] sm:$0xf]
  %v9986 = vld [vmem:[%s8 + $0x14] sm:$0xf]
  %v9987 = vld [vmem:[%s8 + $0x18] sm:$0xf]
  %v9988 = vld [vmem:[%s8 + $0x1c] sm:$0xf]
  %v9989 = vld [vmem:[%s8 + $0x20] sm:$0xf]
  %v9990 = vld [vmem:[%s8 + $0x24] sm:$0xf]
  %v9991 = vld [vmem:[%s8 + $0x28] sm:$0xf]
  %v9992 = vld [vmem:[%s8 + $0x2c] sm:$0xf]
  %v9993 = vld [vmem:[%s8 + $0x30] sm:$0xf]
  %v9994 = vld [vmem:[%s8 + $0x34] sm:$0xf]
  %v9995 = vld [vmem:[%s8 + $0x38] sm:$0xf]
  %v9996 = vld [vmem:[%s8 + $0x3c] sm:$0xf]
  %v9997 = vld [vmem:[%s8 + $0x40] sm:$0xf]
  %v9998 = vld [vmem:[%s8 + $0x44] sm:$0xf]
  %v9999 = vld [vmem:[%s8 + $0x48] sm:$0xf]
  %v10000 = vld [vmem:[%s8 + $0x4c] sm:$0xf]
  %v10001 = vld [vmem:[%s8 + $0x50] sm:$0xf]
  %v10002 = vld [vmem:[%s8 + $0x54] sm:$0xf]
  %v10003 = vld [vmem:[%s8 + $0x58] sm:$0xf]
  %v10004 = vld [vmem:[%s8 + $0x5c] sm:$0xf]
  %v10005 = vld [vmem:[%s9279] sm:$0xff]
  %v10006 = vld [vmem:[%s9279 + $0x8] sm:$0xff]
  %v10007 = vpack.c.bf16 %v10005, %v10005
  %v10008 = vpack.c.bf16 %v10006, %v10006
  %s10009 = scalar_lea.vmem %s8, 96
  %v10010 = vld [vmem:[%s10009] sm:$0xf]
  %v10011 = vld [vmem:[%s10009 + $0x4] sm:$0xf]
  %v10012 = vld [vmem:[%s10009 + $0x8] sm:$0xf]
  %v10013 = vld [vmem:[%s10009 + $0xc] sm:$0xf]
  %v10014 = vld [vmem:[%s10009 + $0x10] sm:$0xf]
  %v10015 = vld [vmem:[%s10009 + $0x14] sm:$0xf]
  %v10016 = vld [vmem:[%s10009 + $0x18] sm:$0xf]
  %v10017 = vld [vmem:[%s10009 + $0x1c] sm:$0xf]
  %v10018 = vld [vmem:[%s10009 + $0x20] sm:$0xf]
  %v10019 = vld [vmem:[%s10009 + $0x24] sm:$0xf]
  %v10020 = vld [vmem:[%s10009 + $0x28] sm:$0xf]
  %v10021 = vld [vmem:[%s10009 + $0x2c] sm:$0xf]
  %v10022 = vld [vmem:[%s10009 + $0x30] sm:$0xf]
  %v10023 = vld [vmem:[%s10009 + $0x34] sm:$0xf]
  %v10024 = vld [vmem:[%s10009 + $0x38] sm:$0xf]
  %v10025 = vld [vmem:[%s10009 + $0x3c] sm:$0xf]
  %v10026 = vld [vmem:[%s10009 + $0x40] sm:$0xf]
  %v10027 = vld [vmem:[%s10009 + $0x44] sm:$0xf]
  %v10028 = vld [vmem:[%s10009 + $0x48] sm:$0xf]
  %v10029 = vld [vmem:[%s10009 + $0x4c] sm:$0xf]
  %v10030 = vld [vmem:[%s10009 + $0x50] sm:$0xf]
  %v10031 = vld [vmem:[%s10009 + $0x54] sm:$0xf]
  %v10032 = vld [vmem:[%s10009 + $0x58] sm:$0xf]
  %v10033 = vld [vmem:[%s10009 + $0x5c] sm:$0xf]
  %v10058 = vunpack.c.l.b16 %v10010
  %v10059 = vunpack.c.l.b16 %v10011
  %v10060 = vunpack.c.l.b16 %v10012
  %v10061 = vunpack.c.l.b16 %v10013
  %v10062 = vunpack.c.l.b16 %v10014
  %v10063 = vunpack.c.l.b16 %v10015
  %v10064 = vunpack.c.l.b16 %v10016
  %v10065 = vunpack.c.l.b16 %v10017
  %v10066 = vunpack.c.l.b16 %v10018
  %v10067 = vunpack.c.l.b16 %v10019
  %v10068 = vunpack.c.l.b16 %v10020
  %v10069 = vunpack.c.l.b16 %v10021
  %v10070 = vunpack.c.l.b16 %v10022
  %v10071 = vunpack.c.l.b16 %v10023
  %v10072 = vunpack.c.l.b16 %v10024
  %v10073 = vunpack.c.l.b16 %v10025
  %v10074 = vunpack.c.l.b16 %v10026
  %v10075 = vunpack.c.l.b16 %v10027
  %v10076 = vunpack.c.l.b16 %v10028
  %v10077 = vunpack.c.l.b16 %v10029
  %v10078 = vunpack.c.l.b16 %v10030
  %v10079 = vunpack.c.l.b16 %v10031
  %v10080 = vunpack.c.l.b16 %v10032
  %v10081 = vunpack.c.l.b16 %v10033
  %v10082 = vpack.c.b16 %v10059, %v10058
  %v10083 = vpack.c.b16 %v10061, %v10060
  %v10084 = vpack.c.b16 %v10063, %v10062
  %v10085 = vpack.c.b16 %v10065, %v10064
  %v10086 = vpack.c.b16 %v10067, %v10066
  %v10087 = vpack.c.b16 %v10069, %v10068
  %v10088 = vpack.c.b16 %v10071, %v10070
  %v10089 = vpack.c.b16 %v10073, %v10072
  %v10090 = vpack.c.b16 %v10075, %v10074
  %v10091 = vpack.c.b16 %v10077, %v10076
  %v10092 = vpack.c.b16 %v10079, %v10078
  %v10093 = vpack.c.b16 %v10081, %v10080
  %v10107 = vsel %vm8586, %v10008, 0
  %10109 = vmatpush.bf16.msra.mxu0 %v10089
  %10110 = vmatpush.bf16.msra.mxu0 %v10088
  %10111 = vmatpush.bf16.msra.mxu0 %v10087
  %10112 = vmatpush.bf16.msra.mxu0 %v10086
  %10113 = vmatpush.bf16.msra.mxu0 %v10085
  %10114 = vmatpush.bf16.msra.mxu0 %v10084
  %10115 = vmatpush.bf16.msra.mxu0 %v10083
  %10116 = vmatpush.bf16.msra.mxu0 %v10082
  %10117 = vmatmul.bf16.gmra.mxu0 %v10007
  %v10118 = vpop.f32.mrf.mxu0
  %v10119 = vadd.f32 0.0, %v10118
  %v10120 = vpop.f32.mrf.mxu0
  %10121 = vdwg.mxu0
  %10122 = vmatpush.bf16.msra.mxu0 0
  %10123 = vmatpush.bf16.msra.mxu0 0
  %10124 = vmatpush.bf16.msra.mxu0 0
  %10125 = vmatpush.bf16.msra.mxu0 0
  %10126 = vmatpush.bf16.msra.mxu0 %v10093
  %10127 = vmatpush.bf16.msra.mxu0 %v10092
  %10128 = vmatpush.bf16.msra.mxu0 %v10091
  %10129 = vmatpush.bf16.msra.mxu0 %v10090
  %10130 = vmatmul.bf16.gmra.mxu0 %v10107
  %v10131 = vpop.f32.mrf.mxu0
  %v10132 = vadd.f32 %v10119, %v10131
  %v10133 = vpop.f32.mrf.mxu0
  %10134 = vdwg.mxu0
  %v10159 = vunpack.c.l.b16 %v9981
  %v10160 = vunpack.c.l.b16 %v9982
  %v10161 = vunpack.c.l.b16 %v9983
  %v10162 = vunpack.c.l.b16 %v9984
  %v10163 = vunpack.c.l.b16 %v9985
  %v10164 = vunpack.c.l.b16 %v9986
  %v10165 = vunpack.c.l.b16 %v9987
  %v10166 = vunpack.c.l.b16 %v9988
  %v10167 = vunpack.c.l.b16 %v9989
  %v10168 = vunpack.c.l.b16 %v9990
  %v10169 = vunpack.c.l.b16 %v9991
  %v10170 = vunpack.c.l.b16 %v9992
  %v10171 = vunpack.c.l.b16 %v9993
  %v10172 = vunpack.c.l.b16 %v9994
  %v10173 = vunpack.c.l.b16 %v9995
  %v10174 = vunpack.c.l.b16 %v9996
  %v10175 = vunpack.c.l.b16 %v9997
  %v10176 = vunpack.c.l.b16 %v9998
  %v10177 = vunpack.c.l.b16 %v9999
  %v10178 = vunpack.c.l.b16 %v10000
  %v10179 = vunpack.c.l.b16 %v10001
  %v10180 = vunpack.c.l.b16 %v10002
  %v10181 = vunpack.c.l.b16 %v10003
  %v10182 = vunpack.c.l.b16 %v10004
  %v10183 = vpack.c.b16 %v10160, %v10159
  %v10184 = vpack.c.b16 %v10162, %v10161
  %v10185 = vpack.c.b16 %v10164, %v10163
  %v10186 = vpack.c.b16 %v10166, %v10165
  %v10187 = vpack.c.b16 %v10168, %v10167
  %v10188 = vpack.c.b16 %v10170, %v10169
  %v10189 = vpack.c.b16 %v10172, %v10171
  %v10190 = vpack.c.b16 %v10174, %v10173
  %v10191 = vpack.c.b16 %v10176, %v10175
  %v10192 = vpack.c.b16 %v10178, %v10177
  %v10193 = vpack.c.b16 %v10180, %v10179
  %v10194 = vpack.c.b16 %v10182, %v10181
  %v10208 = vsel %vm8586, %v9980, 0
  %10210 = vmatpush.bf16.msra.mxu0 %v10190
  %10211 = vmatpush.bf16.msra.mxu0 %v10189
  %10212 = vmatpush.bf16.msra.mxu0 %v10188
  %10213 = vmatpush.bf16.msra.mxu0 %v10187
  %10214 = vmatpush.bf16.msra.mxu0 %v10186
  %10215 = vmatpush.bf16.msra.mxu0 %v10185
  %10216 = vmatpush.bf16.msra.mxu0 %v10184
  %10217 = vmatpush.bf16.msra.mxu0 %v10183
  %10218 = vmatmul.bf16.gmra.mxu0 %v9979
  %v10219 = vpop.f32.mrf.mxu0
  %v10220 = vadd.f32 %v10132, %v10219
  %v10221 = vpop.f32.mrf.mxu0
  %10222 = vdwg.mxu0
  %10223 = vmatpush.bf16.msra.mxu0 0
  %10224 = vmatpush.bf16.msra.mxu0 0
  %10225 = vmatpush.bf16.msra.mxu0 0
  %10226 = vmatpush.bf16.msra.mxu0 0
  %10227 = vmatpush.bf16.msra.mxu0 %v10194
  %10228 = vmatpush.bf16.msra.mxu0 %v10193
  %10229 = vmatpush.bf16.msra.mxu0 %v10192
  %10230 = vmatpush.bf16.msra.mxu0 %v10191
  %10231 = vmatmul.bf16.gmra.mxu0 %v10208
  %v10232 = vpop.f32.mrf.mxu0
  %v10233 = vadd.f32 %v10220, %v10232
  %v10234 = vpop.f32.mrf.mxu0
  %10235 = vdwg.mxu0
  %v10236 = vld [vmem:[%s9973] sm:$0xff]
  %v10237 = vld [vmem:[%s9973 + $0x8] sm:$0xff]
  %v10238 = vpack.c.bf16 %v10236, %v10236
  %v10239 = vpack.c.bf16 %v10237, %v10237
  %s10240 = scalar_lea.vmem %s8, 192
  %v10241 = vld [vmem:[%s10240] sm:$0xf]
  %v10242 = vld [vmem:[%s10240 + $0x4] sm:$0xf]
  %v10243 = vld [vmem:[%s10240 + $0x8] sm:$0xf]
  %v10244 = vld [vmem:[%s10240 + $0xc] sm:$0xf]
  %v10245 = vld [vmem:[%s10240 + $0x10] sm:$0xf]
  %v10246 = vld [vmem:[%s10240 + $0x14] sm:$0xf]
  %v10247 = vld [vmem:[%s10240 + $0x18] sm:$0xf]
  %v10248 = vld [vmem:[%s10240 + $0x1c] sm:$0xf]
  %v10249 = vld [vmem:[%s10240 + $0x20] sm:$0xf]
  %v10250 = vld [vmem:[%s10240 + $0x24] sm:$0xf]
  %v10251 = vld [vmem:[%s10240 + $0x28] sm:$0xf]
  %v10252 = vld [vmem:[%s10240 + $0x2c] sm:$0xf]
  %v10253 = vld [vmem:[%s10240 + $0x30] sm:$0xf]
  %v10254 = vld [vmem:[%s10240 + $0x34] sm:$0xf]
  %v10255 = vld [vmem:[%s10240 + $0x38] sm:$0xf]
  %v10256 = vld [vmem:[%s10240 + $0x3c] sm:$0xf]
  %v10257 = vld [vmem:[%s10240 + $0x40] sm:$0xf]
  %v10258 = vld [vmem:[%s10240 + $0x44] sm:$0xf]
  %v10259 = vld [vmem:[%s10240 + $0x48] sm:$0xf]
  %v10260 = vld [vmem:[%s10240 + $0x4c] sm:$0xf]
  %v10261 = vld [vmem:[%s10240 + $0x50] sm:$0xf]
  %v10262 = vld [vmem:[%s10240 + $0x54] sm:$0xf]
  %v10263 = vld [vmem:[%s10240 + $0x58] sm:$0xf]
  %v10264 = vld [vmem:[%s10240 + $0x5c] sm:$0xf]
  %v10289 = vunpack.c.l.b16 %v10241
  %v10290 = vunpack.c.l.b16 %v10242
  %v10291 = vunpack.c.l.b16 %v10243
  %v10292 = vunpack.c.l.b16 %v10244
  %v10293 = vunpack.c.l.b16 %v10245
  %v10294 = vunpack.c.l.b16 %v10246
  %v10295 = vunpack.c.l.b16 %v10247
  %v10296 = vunpack.c.l.b16 %v10248
  %v10297 = vunpack.c.l.b16 %v10249
  %v10298 = vunpack.c.l.b16 %v10250
  %v10299 = vunpack.c.l.b16 %v10251
  %v10300 = vunpack.c.l.b16 %v10252
  %v10301 = vunpack.c.l.b16 %v10253
  %v10302 = vunpack.c.l.b16 %v10254
  %v10303 = vunpack.c.l.b16 %v10255
  %v10304 = vunpack.c.l.b16 %v10256
  %v10305 = vunpack.c.l.b16 %v10257
  %v10306 = vunpack.c.l.b16 %v10258
  %v10307 = vunpack.c.l.b16 %v10259
  %v10308 = vunpack.c.l.b16 %v10260
  %v10309 = vunpack.c.l.b16 %v10261
  %v10310 = vunpack.c.l.b16 %v10262
  %v10311 = vunpack.c.l.b16 %v10263
  %v10312 = vunpack.c.l.b16 %v10264
  %v10313 = vpack.c.b16 %v10290, %v10289
  %v10314 = vpack.c.b16 %v10292, %v10291
  %v10315 = vpack.c.b16 %v10294, %v10293
  %v10316 = vpack.c.b16 %v10296, %v10295
  %v10317 = vpack.c.b16 %v10298, %v10297
  %v10318 = vpack.c.b16 %v10300, %v10299
  %v10319 = vpack.c.b16 %v10302, %v10301
  %v10320 = vpack.c.b16 %v10304, %v10303
  %v10321 = vpack.c.b16 %v10306, %v10305
  %v10322 = vpack.c.b16 %v10308, %v10307
  %v10323 = vpack.c.b16 %v10310, %v10309
  %v10324 = vpack.c.b16 %v10312, %v10311
  %v10338 = vsel %vm8586, %v10239, 0
  %10340 = vmatpush.bf16.msra.mxu0 %v10320
  %10341 = vmatpush.bf16.msra.mxu0 %v10319
  %10342 = vmatpush.bf16.msra.mxu0 %v10318
  %10343 = vmatpush.bf16.msra.mxu0 %v10317
  %10344 = vmatpush.bf16.msra.mxu0 %v10316
  %10345 = vmatpush.bf16.msra.mxu0 %v10315
  %10346 = vmatpush.bf16.msra.mxu0 %v10314
  %10347 = vmatpush.bf16.msra.mxu0 %v10313
  %10348 = vmatmul.bf16.gmra.mxu0 %v10238
  %v10349 = vpop.f32.mrf.mxu0
  %v10350 = vadd.f32 0.0, %v10349
  %v10351 = vpop.f32.mrf.mxu0
  %10352 = vdwg.mxu0
  %10353 = vmatpush.bf16.msra.mxu0 0
  %10354 = vmatpush.bf16.msra.mxu0 0
  %10355 = vmatpush.bf16.msra.mxu0 0
  %10356 = vmatpush.bf16.msra.mxu0 0
  %10357 = vmatpush.bf16.msra.mxu0 %v10324
  %10358 = vmatpush.bf16.msra.mxu0 %v10323
  %10359 = vmatpush.bf16.msra.mxu0 %v10322
  %10360 = vmatpush.bf16.msra.mxu0 %v10321
  %10361 = vmatmul.bf16.gmra.mxu0 %v10338
  %v10362 = vpop.f32.mrf.mxu0
  %v10363 = vadd.f32 %v10350, %v10362
  %v10364 = vpop.f32.mrf.mxu0
  %10365 = vdwg.mxu0
  %v10366 = vadd.f32 %v10233, %v10363
  %v10368 = vperm.slane %v9976, 0
  %v10370 = vadd.f32 %v10366, %v10368
  %vm10371 = vcmp.gt.f32.partialorder %v10370, 0.0
  %v10372 = vmul.f32 %v10370, 0.01
  %v10373 = vsel %vm10371, %v10370, %v10372
  %v10374 = vpack.c.bf16 %v10373, %v10373
  %v10375 = vld [vmem:[%s10] sm:$0xf]
  %v10376 = vld [vmem:[%s10 + $0x4] sm:$0xf]
  %v10377 = vld [vmem:[%s10 + $0x8] sm:$0xf]
  %v10378 = vld [vmem:[%s10 + $0xc] sm:$0xf]
  %v10379 = vld [vmem:[%s10 + $0x10] sm:$0xf]
  %v10380 = vld [vmem:[%s10 + $0x14] sm:$0xf]
  %v10381 = vld [vmem:[%s10 + $0x18] sm:$0xf]
  %v10382 = vld [vmem:[%s10 + $0x1c] sm:$0xf]
  %v10383 = vld [vmem:[%s10 + $0x20] sm:$0xf]
  %v10384 = vld [vmem:[%s10 + $0x24] sm:$0xf]
  %v10385 = vld [vmem:[%s10 + $0x28] sm:$0xf]
  %v10386 = vld [vmem:[%s10 + $0x2c] sm:$0xf]
  %v10387 = vld [vmem:[%s10 + $0x30] sm:$0xf]
  %v10388 = vld [vmem:[%s10 + $0x34] sm:$0xf]
  %v10389 = vld [vmem:[%s10 + $0x38] sm:$0xf]
  %v10390 = vld [vmem:[%s10 + $0x3c] sm:$0xf]
  %v10391 = vld [vmem:[%s1] sm:$0xff]
  %v10392 = vpack.c.bf16 %v10391, %v10391
  %v10393 = vld [vmem:[%s11] sm:$0xf]
  %vm10394 = vcmask 64512
  %v10396 = vsel %vm10394, %v10392, 0
  %vm10398 = vcmask 1043456
  %v10400 = vsel %vm10398, %v10393, 0
  %10402 = vmatpush.bf16.msra.mxu0 0
  %10403 = vmatpush.bf16.msra.mxu0 0
  %10404 = vmatpush.bf16.msra.mxu0 0
  %10405 = vmatpush.bf16.msra.mxu0 0
  %10406 = vmatpush.bf16.msra.mxu0 0
  %10407 = vmatpush.bf16.msra.mxu0 0
  %10408 = vmatpush.bf16.msra.mxu0 0
  %10409 = vmatpush.bf16.msra.mxu0 %v10400
  %10410 = vmatmul.bf16.gmra.mxu0 %v10396
  %v10411 = vpop.f32.mrf.mxu0
  %v10412 = vadd.f32 0.0, %v10411
  %v10413 = vpop.f32.mrf.mxu0
  %10414 = vdwg.mxu0
  %v10431 = vunpack.c.l.b16 %v10375
  %v10432 = vunpack.c.l.b16 %v10376
  %v10433 = vunpack.c.l.b16 %v10377
  %v10434 = vunpack.c.l.b16 %v10378
  %v10435 = vunpack.c.l.b16 %v10379
  %v10436 = vunpack.c.l.b16 %v10380
  %v10437 = vunpack.c.l.b16 %v10381
  %v10438 = vunpack.c.l.b16 %v10382
  %v10439 = vunpack.c.l.b16 %v10383
  %v10440 = vunpack.c.l.b16 %v10384
  %v10441 = vunpack.c.l.b16 %v10385
  %v10442 = vunpack.c.l.b16 %v10386
  %v10443 = vunpack.c.l.b16 %v10387
  %v10444 = vunpack.c.l.b16 %v10388
  %v10445 = vunpack.c.l.b16 %v10389
  %v10446 = vunpack.c.l.b16 %v10390
  %v10447 = vpack.c.b16 %v10432, %v10431
  %v10448 = vpack.c.b16 %v10434, %v10433
  %v10449 = vpack.c.b16 %v10436, %v10435
  %v10450 = vpack.c.b16 %v10438, %v10437
  %v10451 = vpack.c.b16 %v10440, %v10439
  %v10452 = vpack.c.b16 %v10442, %v10441
  %v10453 = vpack.c.b16 %v10444, %v10443
  %v10454 = vpack.c.b16 %v10446, %v10445
  %10463 = vmatpush.bf16.msra.mxu0 %v10454
  %10464 = vmatpush.bf16.msra.mxu0 %v10453
  %10465 = vmatpush.bf16.msra.mxu0 %v10452
  %10466 = vmatpush.bf16.msra.mxu0 %v10451
  %10467 = vmatpush.bf16.msra.mxu0 %v10450
  %10468 = vmatpush.bf16.msra.mxu0 %v10449
  %10469 = vmatpush.bf16.msra.mxu0 %v10448
  %10470 = vmatpush.bf16.msra.mxu0 %v10447
  %10471 = vmatmul.bf16.gmra.mxu0 %v10374
  %v10472 = vpop.f32.mrf.mxu0
  %v10473 = vadd.f32 %v10412, %v10472
  %v10474 = vpop.f32.mrf.mxu0
  %10475 = vdwg.mxu0
  %v10476 = vld [vmem:[%s12] sm:$0x1]
  %v10478 = vperm.slane %v10476, 0
  %v10480 = vadd.f32 %v10473, %v10478
  %vm10481 = vcmp.gt.f32.partialorder %v10480, 0.0
  %v10482 = vmul.f32 %v10480, 0.01
  %v10483 = vsel %vm10481, %v10480, %v10482
  %v10484 = vpack.c.bf16 %v10483, %v10483
  %v10485 = vld [vmem:[%s13] sm:$0xf]
  %v10486 = vld [vmem:[%s13 + $0x4] sm:$0xf]
  %v10487 = vld [vmem:[%s13 + $0x8] sm:$0xf]
  %v10488 = vld [vmem:[%s13 + $0xc] sm:$0xf]
  %v10489 = vld [vmem:[%s13 + $0x10] sm:$0xf]
  %v10490 = vld [vmem:[%s13 + $0x14] sm:$0xf]
  %v10491 = vld [vmem:[%s13 + $0x18] sm:$0xf]
  %v10492 = vld [vmem:[%s13 + $0x1c] sm:$0xf]
  %v10493 = vld [vmem:[%s14] sm:$0x1]
  %v10495 = vperm.slane %v10493, 0
  %v10505 = vunpack.c.l.b16 %v10485
  %v10506 = vunpack.c.l.b16 %v10486
  %v10507 = vunpack.c.l.b16 %v10487
  %v10508 = vunpack.c.l.b16 %v10488
  %v10509 = vunpack.c.l.b16 %v10489
  %v10510 = vunpack.c.l.b16 %v10490
  %v10511 = vunpack.c.l.b16 %v10491
  %v10512 = vunpack.c.l.b16 %v10492
  %v10513 = vpack.c.b16 %v10506, %v10505
  %v10514 = vpack.c.b16 %v10508, %v10507
  %v10515 = vpack.c.b16 %v10510, %v10509
  %v10516 = vpack.c.b16 %v10512, %v10511
  %v10522 = vsel %vm8586, %v10484, 0
  %10524 = vmatpush.bf16.msra.mxu0 0
  %10525 = vmatpush.bf16.msra.mxu0 0
  %10526 = vmatpush.bf16.msra.mxu0 0
  %10527 = vmatpush.bf16.msra.mxu0 0
  %10528 = vmatpush.bf16.msra.mxu0 %v10516
  %10529 = vmatpush.bf16.msra.mxu0 %v10515
  %10530 = vmatpush.bf16.msra.mxu0 %v10514
  %10531 = vmatpush.bf16.msra.mxu0 %v10513
  %10532 = vmatmul.bf16.gmra.mxu0 %v10522
  %v10533 = vpop.f32.mrf.mxu0
  %v10534 = vadd.f32 %v10495, %v10533
  %v10535 = vpop.f32.mrf.mxu0
  %10536 = vdwg.mxu0
  %vm10537 = vcmp.gt.f32.partialorder %v10534, 0.0
  %v10538 = vmul.f32 %v10534, 0.01
  %v10539 = vsel %vm10537, %v10534, %v10538
  %v10540 = vld [vmem:[%s15] sm:$0x1]
  %v10542 = vperm.slane %v10540, 0
  %v10544 = vmul.f32 %v10539, %v10542
  %v10545 = vsel %vm94, %v10544, 0.0
  %10546 = vadd.xlane.f32.xlu0 %v10545
  %v10547 = vpop.xlane.xlu0 %10546
  %v10548 = vld [vmem:[#allocation5] sm:$0x1]
  %v10550 = vperm.slane %v10548, 0
  %v10552 = vadd.f32 %v10547, %v10550
  %vm10553 = vcmask 7168
  %10554 = vst.msk [vmem:[%s17] sm:$0xff] %vm10553, %v10552
  // Predicated region
  $region70: #{discriminator_forward.1} parent=0 // pred_check
    _
  $region71: #{discriminator_forward.1} parent=0 // pred_check_branch
    %10556 = sbr.rel (0) target = $region73
  $region72: #{discriminator_forward.1} parent=0 // pred_region
    _
  $region73: #{discriminator_forward.1} parent=0 // pred_fallthru
    _
  // Predicated region
  $region74: #{discriminator_forward.1} parent=0 // pred_check
    _
  $region75: #{discriminator_forward.1} parent=0 // pred_check_branch
    %10558 = sbr.rel (0) target = $region77
  $region76: #{discriminator_forward.1} parent=0 // pred_region
    _
  $region77: #{discriminator_forward.1} parent=0 // pred_fallthru
    _

</llo_original>
